<compile_context>
chip_gen: v5e
topology: v5e:2x2
jax: 0.10.0
libtpu: 0.0.40
codegen_flags: <defaults>
</compile_context>

<pallas_src>
import functools

import jax
import jax.numpy as jnp
from jax.experimental import pallas as pl
from jax.experimental.pallas import tpu as pltpu


def _bmm_kernel(a_ref, b_ref, o_ref, *, precision):
    # a_ref: (HPB, M, K), b_ref: (HPB, K, N), o_ref: (HPB, M, N)
    hpb = a_ref.shape[0]
    # Static unroll over the (small) heads-per-block dim; each jnp.dot is a
    # full (M, K) x (K, N) MXU matmul with explicit precision and f32
    # accumulation.
    for h in range(hpb):
        o_ref[h] = jnp.dot(
            a_ref[h],
            b_ref[h],
            preferred_element_type=jnp.float32,
            precision=precision,
        ).astype(o_ref.dtype)


def batched_matmul(a, b, *, precision=jax.lax.Precision.HIGHEST):
    """a: (B, H, M, K), b: (B, H, K, N) -> (B, H, M, N)"""
    B, H, M, K = a.shape
    _, _, K2, N = b.shape
    assert K == K2, "inner dims must match"
    BH = B * H

    # Prefer exactly 2 grid steps: feeds both TensorCores on v7x while keeping
    # serial grid-step overhead minimal on single-core v5e/v6e.
    if BH % 2 == 0:
        heads_per_block = BH // 2
    else:
        heads_per_block = 1
    grid = (BH // heads_per_block,)

    a3 = a.reshape(BH, M, K)
    b3 = b.reshape(BH, K, N)

    out_dtype = a.dtype
    cost = pl.CostEstimate(
        flops=2 * BH * M * K * N,
        bytes_accessed=(
            BH * M * K * jnp.dtype(a.dtype).itemsize
            + BH * K * N * jnp.dtype(b.dtype).itemsize
            + BH * M * N * jnp.dtype(out_dtype).itemsize
        ),
        transcendentals=0,
    )

    kernel = functools.partial(_bmm_kernel, precision=precision)

    out3 = pl.pallas_call(
        kernel,
        out_shape=jax.ShapeDtypeStruct((BH, M, N), out_dtype),
        grid_spec=pltpu.PrefetchScalarGridSpec(
            num_scalar_prefetch=0,
            grid=grid,
            in_specs=[
                pl.BlockSpec((heads_per_block, M, K), lambda g: (g, 0, 0)),
                pl.BlockSpec((heads_per_block, K, N), lambda g: (g, 0, 0)),
            ],
            out_specs=pl.BlockSpec((heads_per_block, M, N), lambda g: (g, 0, 0)),
        ),
        compiler_params=pltpu.CompilerParams(
            dimension_semantics=("parallel",)
        ),
        cost_estimate=cost,
    )(a3, b3)
    return out3.reshape(B, H, M, N)


if __name__ == "__main__":
    key = jax.random.PRNGKey(0)
    k1, k2 = jax.random.split(key)
    # Shapes match the PyTorch module's inputs.
    x509 = jax.random.normal(k1, (1, 4, 384, 64), dtype=jnp.float32)
    x510 = jax.random.normal(k2, (1, 4, 64, 384), dtype=jnp.float32)

    out = batched_matmul(x509, x510)
    out = jax.block_until_ready(out)

    # Sanity check against a plain JAX reference computed at the same
    # (highest / f32-quality) precision the kernel uses.
    ref = jnp.matmul(x509, x510, precision=jax.lax.Precision.HIGHEST)
    assert out.shape == (1, 4, 384, 384)
    assert jnp.allclose(out, ref, atol=1e-4, rtol=1e-4)

    print("KERNEL_OK")
</pallas_src>

<mosaic_0001>
module attributes {stable_mosaic.version = 11 : i64} {
  func.func @_bmm_kernel(%arg0: i32, %arg1: memref<2x384x64xf32, #tpu.memory_space<vmem>>, %arg2: memref<2x64x384xf32, #tpu.memory_space<vmem>>, %arg3: memref<2x384x384xf32, #tpu.memory_space<vmem>>) attributes {dimension_semantics = [#tpu.dimension_semantics<parallel>], iteration_bounds = array<i64: 2>, scalar_prefetch = 0 : i64, scratch_operands = 0 : i64, tpu.core_type = #tpu.core_type<tc>, window_params = [{transform_indices = @transform_0, window_bounds = array<i64: 2, 384, 64>}, {transform_indices = @transform_1, window_bounds = array<i64: 2, 64, 384>}, {transform_indices = @transform_2, window_bounds = array<i64: 2, 384, 384>}]} {
    %c0 = arith.constant 0 : index
    %c0_0 = arith.constant 0 : index
    %c0_1 = arith.constant 0 : index
    %0 = vector.load %arg1[%c0, %c0_0, %c0_1] : memref<2x384x64xf32, #tpu.memory_space<vmem>>, vector<1x384x64xf32>
    %1 = vector.shape_cast %0 : vector<1x384x64xf32> to vector<384x64xf32>
    %c0_2 = arith.constant 0 : index
    %c0_3 = arith.constant 0 : index
    %c0_4 = arith.constant 0 : index
    %2 = vector.load %arg2[%c0_2, %c0_3, %c0_4] : memref<2x64x384xf32, #tpu.memory_space<vmem>>, vector<1x64x384xf32>
    %3 = vector.shape_cast %2 : vector<1x64x384xf32> to vector<64x384xf32>
    %cst = arith.constant dense<0.000000e+00> : vector<384x384xf32>
    %4 = tpu.matmul %1, %3, %cst {dimension_numbers = #tpu.dot_dimension_numbers<[1], [0], [0], [1], [0, 0, 1, 1], [], []>, precision = #tpu.contract_precision<fp32>} : vector<384x64xf32>, vector<64x384xf32>, vector<384x384xf32> -> vector<384x384xf32>
    %c0_5 = arith.constant 0 : index
    %c0_6 = arith.constant 0 : index
    %c0_7 = arith.constant 0 : index
    %5 = vector.load %arg3[%c0_5, %c0_6, %c0_7] : memref<2x384x384xf32, #tpu.memory_space<vmem>>, vector<1x384x384xf32>
    %6 = vector.shape_cast %5 : vector<1x384x384xf32> to vector<384x384xf32>
    %7 = vector.shape_cast %4 : vector<384x384xf32> to vector<1x384x384xf32>
    tpu.vector_store %arg3[%c0_5, %c0_6, %c0_7], %7 {strides = array<i32>} : memref<2x384x384xf32, #tpu.memory_space<vmem>>, vector<1x384x384xf32>,
    %c1 = arith.constant 1 : index
    %c0_8 = arith.constant 0 : index
    %c0_9 = arith.constant 0 : index
    %8 = vector.load %arg1[%c1, %c0_8, %c0_9] : memref<2x384x64xf32, #tpu.memory_space<vmem>>, vector<1x384x64xf32>
    %9 = vector.shape_cast %8 : vector<1x384x64xf32> to vector<384x64xf32>
    %c1_10 = arith.constant 1 : index
    %c0_11 = arith.constant 0 : index
    %c0_12 = arith.constant 0 : index
    %10 = vector.load %arg2[%c1_10, %c0_11, %c0_12] : memref<2x64x384xf32, #tpu.memory_space<vmem>>, vector<1x64x384xf32>
    %11 = vector.shape_cast %10 : vector<1x64x384xf32> to vector<64x384xf32>
    %cst_13 = arith.constant dense<0.000000e+00> : vector<384x384xf32>
    %12 = tpu.matmul %9, %11, %cst_13 {dimension_numbers = #tpu.dot_dimension_numbers<[1], [0], [0], [1], [0, 0, 1, 1], [], []>, precision = #tpu.contract_precision<fp32>} : vector<384x64xf32>, vector<64x384xf32>, vector<384x384xf32> -> vector<384x384xf32>
    %c1_14 = arith.constant 1 : index
    %c0_15 = arith.constant 0 : index
    %c0_16 = arith.constant 0 : index
    %13 = vector.load %arg3[%c1_14, %c0_15, %c0_16] : memref<2x384x384xf32, #tpu.memory_space<vmem>>, vector<1x384x384xf32>
    %14 = vector.shape_cast %13 : vector<1x384x384xf32> to vector<384x384xf32>
    %15 = vector.shape_cast %12 : vector<384x384xf32> to vector<1x384x384xf32>
    tpu.vector_store %arg3[%c1_14, %c0_15, %c0_16], %15 {strides = array<i32>} : memref<2x384x384xf32, #tpu.memory_space<vmem>>, vector<1x384x384xf32>,
    return
  }
  func.func @transform_0(%arg0: i32) -> (i32, i32, i32) {
    %c0_i32 = arith.constant 0 : i32
    %c0_i32_0 = arith.constant 0 : i32
    %c0_i32_1 = arith.constant 0 : i32
    return %arg0, %c0_i32, %c0_i32_0 : i32, i32, i32
  }
  func.func @transform_1(%arg0: i32) -> (i32, i32, i32) {
    %c0_i32 = arith.constant 0 : i32
    %c0_i32_0 = arith.constant 0 : i32
    %c0_i32_1 = arith.constant 0 : i32
    return %arg0, %c0_i32, %c0_i32_0 : i32, i32, i32
  }
  func.func @transform_2(%arg0: i32) -> (i32, i32, i32) {
    %c0_i32 = arith.constant 0 : i32
    %c0_i32_0 = arith.constant 0 : i32
    %c0_i32_1 = arith.constant 0 : i32
    return %arg0, %c0_i32, %c0_i32_0 : i32, i32, i32
  }
}

</mosaic_0001>

<llo_original>
// kernel: tpu_custom_call.1
$region0: #{tpu_custom_call.1}
  #allocation0 [shape = 'u32[]', space=smem, size = 0x4, offset = 0x4, fixed_abs, tag = 'smem constant byte address 0x4 - core index']
  #allocation1 [shape = 'u32[72,128]{1,0:T(1,128)}', space=vmem, size = 0x9000, scoped, tag = 'internal scratch']
  %s0 = inlined_call_operand.vmem [shape: f32[4,384,64], index: 0, kind: input, shape index: {}]
  %s1 = inlined_call_operand.hbm [shape: f32[4,64,384], index: 1, kind: input, shape index: {}]
  %s2 = inlined_call_operand.hbm [shape: f32[4,384,384], index: 2, kind: output, shape index: {}]
  %s3 = sld [smem:[#allocation0]]
  $region45: #{tpu_custom_call.1} parent=0
    _
  %s5 = ssub.s32 1, %s3
  %s6 = scalar_select 0, %s5, %s3
  $region1: #{tpu_custom_call.1} parent=0
    #allocation2 [shape = 'u8[393216]{0}', space=vmem, size = 0x60000, scoped, tag = 'input window, operand 1']
    #allocation3 [shape = 's32[2]{0}', space=sflag, size = 0x8, scoped, tag = 'scoped memory for tpu_custom_call.1']
    #allocation4 [shape = 's32[2]{0}', space=sflag, size = 0x8, scoped, tag = 'scoped memory for tpu_custom_call.1']
    #allocation5 [shape = 'u8[2359296]{0}', space=vmem, size = 0x240000, scoped, tag = 'output window, operand 0']
    %7 = vsyncpa [#allocation3], 0
    %s8 = scalar_lea.sflag [#allocation3], 1
    %9 = vsyncpa %s8, 0
    %10 = vsyncpa [#allocation4], 0
    %s11 = scalar_lea.sflag [#allocation4], 1
    %12 = vsyncpa %s11, 0
    loop: start=0, step=1, limit=4
    $region2: #{tpu_custom_call.1} parent=1 // loop_pre_header
      _
    $region3: #{tpu_custom_call.1} parent=1 // loop_header
      %s14 = sphi 0, %s18
      %p15 = scmp.ge.s32.totalorder %s14, 4
      %s24 = sphi 0, %s26
      %s27 = sphi 0, %s24
      %s28 = sphi 0, %s27
      %s44 = sphi 0, %s28
      %s50 = sphi 0, %s52
      %s53 = sphi 0, %s50
      %s54 = sphi 0, %s53
      %s70 = sphi 0, %s54
      %s76 = sphi 0, %s78
      %s79 = sphi 0, %s76
      %s80 = sphi 0, %s79
      %s96 = sphi 0, %s80
    $region4: #{tpu_custom_call.1} parent=1 // loop_header_branch
      %17 = sbr.rel (%p15) target = $region8
    $region5: #{tpu_custom_call.1} parent=1 // loop_body
      %s19 = ssub.s32 %s14, 1
      %s20 = ssub.s32 %s14, 2
      %s21 = sadd.s32 %s14, 1
      %s22 = ssub.s32 %s14, %s21
      %p23 = scmp.eq.s32.totalorder %s22, 0
      %s25 = sadd.s32 %s24, 1
      %s26 = scalar_select %p23, %s24, %s25
      %p29 = pneg %p23
      %p30 = scmp.eq.s32.totalorder %s14, 1
      %p31 = por %p29, %p30
      %p32 = scmp.ne.s32.totalorder %s24, %s27
      %p33 = scmp.eq.s32.totalorder %s14, 0
      %p34 = por %p32, %p33
      %p35 = scmp.ne.s32.totalorder %s24, %s27
      %p36 = scmp.eq.s32.totalorder %s19, 1
      %p37 = por %p35, %p36
      %p38 = scmp.ne.s32.totalorder %s27, %s28
      %p39 = scmp.eq.s32.totalorder %s19, 0
      %p40 = por %p38, %p39
      %p41 = scmp.ne.s32.totalorder %s27, %s28
      %p42 = scmp.eq.s32.totalorder %s20, 1
      %p43 = por %p41, %p42
      %p45 = scmp.ne.s32.totalorder %s28, %s44
      %p46 = scmp.eq.s32.totalorder %s20, 0
      %p47 = por %p45, %p46
      %s48 = ssub.s32 %s14, %s21
      %p49 = scmp.eq.s32.totalorder %s48, 0
      %s51 = sadd.s32 %s50, 1
      %s52 = scalar_select %p49, %s50, %s51
      %p55 = pneg %p49
      %p56 = scmp.eq.s32.totalorder %s14, 1
      %p57 = por %p55, %p56
      %p58 = scmp.ne.s32.totalorder %s50, %s53
      %p59 = scmp.eq.s32.totalorder %s14, 0
      %p60 = por %p58, %p59
      %p61 = scmp.ne.s32.totalorder %s50, %s53
      %p62 = scmp.eq.s32.totalorder %s19, 1
      %p63 = por %p61, %p62
      %p64 = scmp.ne.s32.totalorder %s53, %s54
      %p65 = scmp.eq.s32.totalorder %s19, 0
      %p66 = por %p64, %p65
      %p67 = scmp.ne.s32.totalorder %s53, %s54
      %p68 = scmp.eq.s32.totalorder %s20, 1
      %p69 = por %p67, %p68
      %p71 = scmp.ne.s32.totalorder %s54, %s70
      %p72 = scmp.eq.s32.totalorder %s20, 0
      %p73 = por %p71, %p72
      %s74 = ssub.s32 %s14, %s21
      %p75 = scmp.eq.s32.totalorder %s74, 0
      %s77 = sadd.s32 %s76, 1
      %s78 = scalar_select %p75, %s76, %s77
      %p81 = pneg %p75
      %p82 = scmp.eq.s32.totalorder %s14, 1
      %p83 = por %p81, %p82
      %p84 = scmp.ne.s32.totalorder %s76, %s79
      %p85 = scmp.eq.s32.totalorder %s14, 0
      %p86 = por %p84, %p85
      %p87 = scmp.ne.s32.totalorder %s76, %s79
      %p88 = scmp.eq.s32.totalorder %s19, 1
      %p89 = por %p87, %p88
      %p90 = scmp.ne.s32.totalorder %s79, %s80
      %p91 = scmp.eq.s32.totalorder %s19, 0
      %p92 = por %p90, %p91
      %p93 = scmp.ne.s32.totalorder %s79, %s80
      %p94 = scmp.eq.s32.totalorder %s20, 1
      %p95 = por %p93, %p94
      %p97 = scmp.ne.s32.totalorder %s80, %s96
      %p98 = scmp.eq.s32.totalorder %s20, 0
      %p99 = por %p97, %p98
      %p100 = scmp.le.s32.totalorder 1, %s14
      %p101 = scmp.lt.s32.totalorder %s14, 3
      %p102 = pnand %p100, %p101
      %p103 = pneg %p102
      // Predicated region
      $region9: #{tpu_custom_call.1} parent=5 // pred_check
        _
      $region10: #{tpu_custom_call.1} parent=5 // pred_check_branch
        %105 = sbr.rel (%p102) target = $region12
      $region11: #{tpu_custom_call.1} parent=5 // pred_region
        %s106 = ssub.s32 %s14, 1
      $region12: #{tpu_custom_call.1} parent=5 // pred_fallthru
        _
      %p107 = scmp.lt.s32.totalorder %s14, 2
      // Predicated region
      $region13: #{tpu_custom_call.1} parent=5 // pred_check
        %p108 = pneg %p107
      $region14: #{tpu_custom_call.1} parent=5 // pred_check_branch
        %110 = sbr.rel (%p108) target = $region16
      $region15: #{tpu_custom_call.1} parent=5 // pred_region
        // Predicated region
        $region17: #{tpu_custom_call.1} parent=15 // pred_check
          %p111 = pneg %p34
        $region18: #{tpu_custom_call.1} parent=15 // pred_check_branch
          %113 = sbr.rel (%p111) target = $region20
        $region19: #{tpu_custom_call.1} parent=15 // pred_region
          %s114 = smul.u32 2, %s14
          %p115 = scmp.lt.s32.totalorder %s114, 3
          %s116 = scalar_select %p115, %s114, 3
          %s117 = smul.addr %s116, 48
          %s118 = smul.addr %s117, 8
          %s119 = scalar_lea.vmem %s0, %s118
          %s120 = smul.u32 2, %s14
        $region20: #{tpu_custom_call.1} parent=15 // pred_fallthru
          _
        // Predicated region
        $region21: #{tpu_custom_call.1} parent=15 // pred_check
          %p121 = pneg %p60
        $region22: #{tpu_custom_call.1} parent=15 // pred_check_branch
          %123 = sbr.rel (%p121) target = $region24
        $region23: #{tpu_custom_call.1} parent=15 // pred_region
          %s124 = sand.u32 %s50, 1
          %s125 = scalar_lea.sflag [#allocation3], %s124
          %s126 = sand.u32 %s50, 1
          %s127 = smul.addr %s126, 384
          %s128 = scalar_lea.vmem [#allocation2], %s127
          %s129 = smul.u32 2, %s14
          %131 = vsyncadd %s125, 0
          %s132 = smul.addr %s129, 24
          %s133 = smul.addr %s132, 8
          %s134 = scalar_lea.hbm %s1, %s133
          %s135 = sshll.u32 %s134, 4
          %s136 = int_to_ptr.hbm [resolvable:$true] %s135
          %s137 = sshll.u32 %s128, 4
          %s138 = int_to_ptr.vmem [resolvable:$true] %s137
          %143 = dma.hbm_to_vmem [thread:$0]  %s136, 6144, %s138, %s125, 384, 384, 24
        $region24: #{tpu_custom_call.1} parent=15 // pred_fallthru
          _
      $region16: #{tpu_custom_call.1} parent=5 // pred_fallthru
        _
      %p144 = scmp.le.s32.totalorder 1, %s14
      %p145 = scmp.lt.s32.totalorder %s14, 3
      %p146 = pnand %p144, %p145
      %p147 = pneg %p146
      // Predicated region
      $region25: #{tpu_custom_call.1} parent=5 // pred_check
        _
      $region26: #{tpu_custom_call.1} parent=5 // pred_check_branch
        %149 = sbr.rel (%p146) target = $region28
      $region27: #{tpu_custom_call.1} parent=5 // pred_region
        %s150 = ssub.s32 %s14, 1
        %s151 = sand.u32 %s53, 1
        %s152 = scalar_lea.sflag [#allocation3], %s151
        %s153 = sand.u32 %s53, 1
        %s154 = smul.addr %s153, 384
        %s155 = scalar_lea.vmem [#allocation2], %s154
        // Predicated region
        $region29: #{tpu_custom_call.1} parent=27 // pred_check
          %p156 = pneg %p66
        $region30: #{tpu_custom_call.1} parent=27 // pred_check_branch
          %158 = sbr.rel (%p156) target = $region32
        $region31: #{tpu_custom_call.1} parent=27 // pred_region
          %160 = dma.done %s152, 6144
        $region32: #{tpu_custom_call.1} parent=27 // pred_fallthru
          _
        %s161 = smul.u32 2, %s19
        %p162 = scmp.lt.s32.totalorder %s161, 3
        %s163 = scalar_select %p162, %s161, 3
        %s164 = smul.addr %s163, 48
        %s165 = smul.addr %s164, 8
        %s166 = scalar_lea.vmem %s0, %s165
        %p167 = pneg %p40
        %p168 = pneg %p37
        %s169 = sand.u32 %s53, 1
        %s170 = scalar_lea.sflag [#allocation3], %s169
        %s171 = sand.u32 %s53, 1
        %s172 = smul.addr %s171, 384
        %s173 = scalar_lea.vmem [#allocation2], %s172
        %p174 = pneg %p66
        %p175 = pneg %p63
        %p176 = pneg %p92
        %p177 = pneg %p89
        %s178 = sand.u32 %s79, 1
        %s179 = scalar_lea.sflag [#allocation4], %s178
        %s180 = sand.u32 %s79, 1
        %s181 = smul.addr %s180, 2304
        %s182 = scalar_lea.vmem [#allocation5], %s181
        %s183 = smul.u32 2, %s19
        %p184 = scmp.lt.s32.totalorder %s183, 3
        %s185 = scalar_select %p184, %s183, 3
        %s186 = smul.addr %s185, 48
        %s187 = smul.addr %s186, 8
        %s188 = scalar_lea.vmem %s0, %s187
        %s189 = smul.u32 2, %s19
        %s190 = smul.u32 2, %s19
        %s191 = smul.u32 2, %s19
        %v192 = vld [vmem:[%s188] sm:$0xff]
        %v193 = vld [vmem:[%s188 + $0x8] sm:$0xff]
        %v194 = vld [vmem:[%s188 + $0x10] sm:$0xff]
        %v195 = vld [vmem:[%s188 + $0x18] sm:$0xff]
        %v196 = vld [vmem:[%s188 + $0x20] sm:$0xff]
        %v197 = vld [vmem:[%s188 + $0x28] sm:$0xff]
        %v198 = vld [vmem:[%s188 + $0x30] sm:$0xff]
        %v199 = vld [vmem:[%s188 + $0x38] sm:$0xff]
        %v200 = vld [vmem:[%s188 + $0x40] sm:$0xff]
        %v201 = vld [vmem:[%s188 + $0x48] sm:$0xff]
        %v202 = vld [vmem:[%s188 + $0x50] sm:$0xff]
        %v203 = vld [vmem:[%s188 + $0x58] sm:$0xff]
        %v204 = vld [vmem:[%s188 + $0x60] sm:$0xff]
        %v205 = vld [vmem:[%s188 + $0x68] sm:$0xff]
        %v206 = vld [vmem:[%s188 + $0x70] sm:$0xff]
        %v207 = vld [vmem:[%s188 + $0x78] sm:$0xff]
        %v208 = vld [vmem:[%s188 + $0x80] sm:$0xff]
        %v209 = vld [vmem:[%s188 + $0x88] sm:$0xff]
        %v210 = vld [vmem:[%s188 + $0x90] sm:$0xff]
        %v211 = vld [vmem:[%s188 + $0x98] sm:$0xff]
        %v212 = vld [vmem:[%s188 + $0xa0] sm:$0xff]
        %v213 = vld [vmem:[%s188 + $0xa8] sm:$0xff]
        %v214 = vld [vmem:[%s188 + $0xb0] sm:$0xff]
        %v215 = vld [vmem:[%s188 + $0xb8] sm:$0xff]
        %v216 = vld [vmem:[%s188 + $0xc0] sm:$0xff]
        %v217 = vld [vmem:[%s188 + $0xc8] sm:$0xff]
        %v218 = vld [vmem:[%s188 + $0xd0] sm:$0xff]
        %v219 = vld [vmem:[%s188 + $0xd8] sm:$0xff]
        %v220 = vld [vmem:[%s188 + $0xe0] sm:$0xff]
        %v221 = vld [vmem:[%s188 + $0xe8] sm:$0xff]
        %v222 = vld [vmem:[%s188 + $0xf0] sm:$0xff]
        %v223 = vld [vmem:[%s188 + $0xf8] sm:$0xff]
        %v224 = vld [vmem:[%s188 + $0x100] sm:$0xff]
        %v225 = vld [vmem:[%s188 + $0x108] sm:$0xff]
        %v226 = vld [vmem:[%s188 + $0x110] sm:$0xff]
        %v227 = vld [vmem:[%s188 + $0x118] sm:$0xff]
        %v228 = vld [vmem:[%s188 + $0x120] sm:$0xff]
        %v229 = vld [vmem:[%s188 + $0x128] sm:$0xff]
        %v230 = vld [vmem:[%s188 + $0x130] sm:$0xff]
        %v231 = vld [vmem:[%s188 + $0x138] sm:$0xff]
        %v232 = vld [vmem:[%s188 + $0x140] sm:$0xff]
        %v233 = vld [vmem:[%s188 + $0x148] sm:$0xff]
        %v234 = vld [vmem:[%s188 + $0x150] sm:$0xff]
        %v235 = vld [vmem:[%s188 + $0x158] sm:$0xff]
        %v236 = vld [vmem:[%s188 + $0x160] sm:$0xff]
        %v237 = vld [vmem:[%s188 + $0x168] sm:$0xff]
        %v238 = vld [vmem:[%s188 + $0x170] sm:$0xff]
        %v239 = vld [vmem:[%s188 + $0x178] sm:$0xff]
        %v240 = vld [vmem:[%s155] sm:$0xff]
        %v241 = vld [vmem:[%s155 + $0x8] sm:$0xff]
        %v242 = vld [vmem:[%s155 + $0x10] sm:$0xff]
        %v243 = vld [vmem:[%s155 + $0x18] sm:$0xff]
        %v244 = vld [vmem:[%s155 + $0x20] sm:$0xff]
        %v245 = vld [vmem:[%s155 + $0x28] sm:$0xff]
        %v246 = vld [vmem:[%s155 + $0x30] sm:$0xff]
        %v247 = vld [vmem:[%s155 + $0x38] sm:$0xff]
        %v248 = vld [vmem:[%s155 + $0x40] sm:$0xff]
        %v249 = vld [vmem:[%s155 + $0x48] sm:$0xff]
        %v250 = vld [vmem:[%s155 + $0x50] sm:$0xff]
        %v251 = vld [vmem:[%s155 + $0x58] sm:$0xff]
        %v252 = vld [vmem:[%s155 + $0x60] sm:$0xff]
        %v253 = vld [vmem:[%s155 + $0x68] sm:$0xff]
        %v254 = vld [vmem:[%s155 + $0x70] sm:$0xff]
        %v255 = vld [vmem:[%s155 + $0x78] sm:$0xff]
        %v256 = vld [vmem:[%s155 + $0x80] sm:$0xff]
        %v257 = vld [vmem:[%s155 + $0x88] sm:$0xff]
        %v258 = vld [vmem:[%s155 + $0x90] sm:$0xff]
        %v259 = vld [vmem:[%s155 + $0x98] sm:$0xff]
        %v260 = vld [vmem:[%s155 + $0xa0] sm:$0xff]
        %v261 = vld [vmem:[%s155 + $0xa8] sm:$0xff]
        %v262 = vld [vmem:[%s155 + $0xb0] sm:$0xff]
        %v263 = vld [vmem:[%s155 + $0xb8] sm:$0xff]
        %vm264 = vcmask 523264
        %v266 = vsel %vm264, %v192, 0
        %v269 = vsel %vm264, %v193, 0
        %v272 = vsel %vm264, %v194, 0
        %v275 = vsel %vm264, %v195, 0
        %v278 = vsel %vm264, %v196, 0
        %v281 = vsel %vm264, %v197, 0
        %v284 = vsel %vm264, %v198, 0
        %v287 = vsel %vm264, %v199, 0
        %v290 = vsel %vm264, %v200, 0
        %v293 = vsel %vm264, %v201, 0
        %v296 = vsel %vm264, %v202, 0
        %v299 = vsel %vm264, %v203, 0
        %v302 = vsel %vm264, %v204, 0
        %v305 = vsel %vm264, %v205, 0
        %v308 = vsel %vm264, %v206, 0
        %v311 = vsel %vm264, %v207, 0
        %v314 = vsel %vm264, %v208, 0
        %v317 = vsel %vm264, %v209, 0
        %v320 = vsel %vm264, %v210, 0
        %v323 = vsel %vm264, %v211, 0
        %v326 = vsel %vm264, %v212, 0
        %v329 = vsel %vm264, %v213, 0
        %v332 = vsel %vm264, %v214, 0
        %v335 = vsel %vm264, %v215, 0
        %v338 = vsel %vm264, %v216, 0
        %v341 = vsel %vm264, %v217, 0
        %v344 = vsel %vm264, %v218, 0
        %v347 = vsel %vm264, %v219, 0
        %v350 = vsel %vm264, %v220, 0
        %v353 = vsel %vm264, %v221, 0
        %v356 = vsel %vm264, %v222, 0
        %v359 = vsel %vm264, %v223, 0
        %v362 = vsel %vm264, %v224, 0
        %v365 = vsel %vm264, %v225, 0
        %v368 = vsel %vm264, %v226, 0
        %v371 = vsel %vm264, %v227, 0
        %v374 = vsel %vm264, %v228, 0
        %v377 = vsel %vm264, %v229, 0
        %v380 = vsel %vm264, %v230, 0
        %v383 = vsel %vm264, %v231, 0
        %v386 = vsel %vm264, %v232, 0
        %v389 = vsel %vm264, %v233, 0
        %v392 = vsel %vm264, %v234, 0
        %v395 = vsel %vm264, %v235, 0
        %v398 = vsel %vm264, %v236, 0
        %v401 = vsel %vm264, %v237, 0
        %v404 = vsel %vm264, %v238, 0
        %v407 = vsel %vm264, %v239, 0
        %409 = vmatpush.msra.mxu0 0.0
        %410 = vmatpush.msra.mxu0 0.0
        %411 = vmatpush.msra.mxu0 0.0
        %412 = vmatpush.msra.mxu0 0.0
        %413 = vmatpush.msra.mxu0 0.0
        %414 = vmatpush.msra.mxu0 0.0
        %415 = vmatpush.msra.mxu0 0.0
        %416 = vmatpush.msra.mxu0 0.0
        %v417 = vand.u32 %v261, 4294901760
        %418 = vmatpush.msra.mxu0 %v417
        %v419 = vand.u32 %v258, 4294901760
        %420 = vmatpush.msra.mxu0 %v419
        %v421 = vand.u32 %v255, 4294901760
        %422 = vmatpush.msra.mxu0 %v421
        %v423 = vand.u32 %v252, 4294901760
        %424 = vmatpush.msra.mxu0 %v423
        %v425 = vand.u32 %v249, 4294901760
        %426 = vmatpush.msra.mxu0 %v425
        %v427 = vand.u32 %v246, 4294901760
        %428 = vmatpush.msra.mxu0 %v427
        %v429 = vand.u32 %v243, 4294901760
        %430 = vmatpush.msra.mxu0 %v429
        %v431 = vand.u32 %v240, 4294901760
        %432 = vmatpush.msra.mxu0 %v431
        %v433 = vand.u32 %v266, 4294901760
        %v434 = vsub.f32 %v266, %v433
        %v435 = vand.u32 %v434, 4294901760
        %v436 = vsub.f32 %v434, %v435
        %v437 = vand.u32 %v436, 4294901760
        %438 = vmatmul.f32.gmra.mxu0 %v437
        %v439 = vpop.f32.mrf.mxu0
        %v440 = vadd.f32 0.0, %v439
        %v441 = vand.u32 %v269, 4294901760
        %v442 = vsub.f32 %v269, %v441
        %v443 = vand.u32 %v442, 4294901760
        %v444 = vsub.f32 %v442, %v443
        %v445 = vand.u32 %v444, 4294901760
        %446 = vmatmul.f32.gmra.mxu0 %v445
        %v447 = vpop.f32.mrf.mxu0
        %v448 = vadd.f32 0.0, %v447
        %v449 = vand.u32 %v272, 4294901760
        %v450 = vsub.f32 %v272, %v449
        %v451 = vand.u32 %v450, 4294901760
        %v452 = vsub.f32 %v450, %v451
        %v453 = vand.u32 %v452, 4294901760
        %454 = vmatmul.f32.gmra.mxu0 %v453
        %v455 = vpop.f32.mrf.mxu0
        %v456 = vadd.f32 0.0, %v455
        %v457 = vand.u32 %v275, 4294901760
        %v458 = vsub.f32 %v275, %v457
        %v459 = vand.u32 %v458, 4294901760
        %v460 = vsub.f32 %v458, %v459
        %v461 = vand.u32 %v460, 4294901760
        %462 = vmatmul.f32.gmra.mxu0 %v461
        %v463 = vpop.f32.mrf.mxu0
        %v464 = vadd.f32 0.0, %v463
        %v465 = vand.u32 %v278, 4294901760
        %v466 = vsub.f32 %v278, %v465
        %v467 = vand.u32 %v466, 4294901760
        %v468 = vsub.f32 %v466, %v467
        %v469 = vand.u32 %v468, 4294901760
        %470 = vmatmul.f32.gmra.mxu0 %v469
        %v471 = vpop.f32.mrf.mxu0
        %v472 = vadd.f32 0.0, %v471
        %v473 = vand.u32 %v281, 4294901760
        %v474 = vsub.f32 %v281, %v473
        %v475 = vand.u32 %v474, 4294901760
        %v476 = vsub.f32 %v474, %v475
        %v477 = vand.u32 %v476, 4294901760
        %478 = vmatmul.f32.gmra.mxu0 %v477
        %v479 = vpop.f32.mrf.mxu0
        %v480 = vadd.f32 0.0, %v479
        %v481 = vand.u32 %v284, 4294901760
        %v482 = vsub.f32 %v284, %v481
        %v483 = vand.u32 %v482, 4294901760
        %v484 = vsub.f32 %v482, %v483
        %v485 = vand.u32 %v484, 4294901760
        %486 = vmatmul.f32.gmra.mxu0 %v485
        %v487 = vpop.f32.mrf.mxu0
        %v488 = vadd.f32 0.0, %v487
        %v489 = vand.u32 %v287, 4294901760
        %v490 = vsub.f32 %v287, %v489
        %v491 = vand.u32 %v490, 4294901760
        %v492 = vsub.f32 %v490, %v491
        %v493 = vand.u32 %v492, 4294901760
        %494 = vmatmul.f32.gmra.mxu0 %v493
        %v495 = vpop.f32.mrf.mxu0
        %v496 = vadd.f32 0.0, %v495
        %v497 = vand.u32 %v290, 4294901760
        %v498 = vsub.f32 %v290, %v497
        %v499 = vand.u32 %v498, 4294901760
        %v500 = vsub.f32 %v498, %v499
        %v501 = vand.u32 %v500, 4294901760
        %502 = vmatmul.f32.gmra.mxu0 %v501
        %v503 = vpop.f32.mrf.mxu0
        %v504 = vadd.f32 0.0, %v503
        %v505 = vand.u32 %v293, 4294901760
        %v506 = vsub.f32 %v293, %v505
        %v507 = vand.u32 %v506, 4294901760
        %v508 = vsub.f32 %v506, %v507
        %v509 = vand.u32 %v508, 4294901760
        %510 = vmatmul.f32.gmra.mxu0 %v509
        %v511 = vpop.f32.mrf.mxu0
        %v512 = vadd.f32 0.0, %v511
        %v513 = vand.u32 %v296, 4294901760
        %v514 = vsub.f32 %v296, %v513
        %v515 = vand.u32 %v514, 4294901760
        %v516 = vsub.f32 %v514, %v515
        %v517 = vand.u32 %v516, 4294901760
        %518 = vmatmul.f32.gmra.mxu0 %v517
        %v519 = vpop.f32.mrf.mxu0
        %v520 = vadd.f32 0.0, %v519
        %v521 = vand.u32 %v299, 4294901760
        %v522 = vsub.f32 %v299, %v521
        %v523 = vand.u32 %v522, 4294901760
        %v524 = vsub.f32 %v522, %v523
        %v525 = vand.u32 %v524, 4294901760
        %526 = vmatmul.f32.gmra.mxu0 %v525
        %v527 = vpop.f32.mrf.mxu0
        %v528 = vadd.f32 0.0, %v527
        %v529 = vand.u32 %v302, 4294901760
        %v530 = vsub.f32 %v302, %v529
        %v531 = vand.u32 %v530, 4294901760
        %v532 = vsub.f32 %v530, %v531
        %v533 = vand.u32 %v532, 4294901760
        %534 = vmatmul.f32.gmra.mxu0 %v533
        %v535 = vpop.f32.mrf.mxu0
        %v536 = vadd.f32 0.0, %v535
        %v537 = vand.u32 %v305, 4294901760
        %v538 = vsub.f32 %v305, %v537
        %v539 = vand.u32 %v538, 4294901760
        %v540 = vsub.f32 %v538, %v539
        %v541 = vand.u32 %v540, 4294901760
        %542 = vmatmul.f32.gmra.mxu0 %v541
        %v543 = vpop.f32.mrf.mxu0
        %v544 = vadd.f32 0.0, %v543
        %v545 = vand.u32 %v308, 4294901760
        %v546 = vsub.f32 %v308, %v545
        %v547 = vand.u32 %v546, 4294901760
        %v548 = vsub.f32 %v546, %v547
        %v549 = vand.u32 %v548, 4294901760
        %550 = vmatmul.f32.gmra.mxu0 %v549
        %v551 = vpop.f32.mrf.mxu0
        %v552 = vadd.f32 0.0, %v551
        %v553 = vand.u32 %v311, 4294901760
        %v554 = vsub.f32 %v311, %v553
        %v555 = vand.u32 %v554, 4294901760
        %v556 = vsub.f32 %v554, %v555
        %v557 = vand.u32 %v556, 4294901760
        %558 = vmatmul.f32.gmra.mxu0 %v557
        %v559 = vpop.f32.mrf.mxu0
        %v560 = vadd.f32 0.0, %v559
        %v561 = vand.u32 %v314, 4294901760
        %v562 = vsub.f32 %v314, %v561
        %v563 = vand.u32 %v562, 4294901760
        %v564 = vsub.f32 %v562, %v563
        %v565 = vand.u32 %v564, 4294901760
        %566 = vmatmul.f32.gmra.mxu0 %v565
        %v567 = vpop.f32.mrf.mxu0
        %v568 = vadd.f32 0.0, %v567
        %v569 = vand.u32 %v317, 4294901760
        %v570 = vsub.f32 %v317, %v569
        %v571 = vand.u32 %v570, 4294901760
        %v572 = vsub.f32 %v570, %v571
        %v573 = vand.u32 %v572, 4294901760
        %574 = vmatmul.f32.gmra.mxu0 %v573
        %v575 = vpop.f32.mrf.mxu0
        %v576 = vadd.f32 0.0, %v575
        %v577 = vand.u32 %v320, 4294901760
        %v578 = vsub.f32 %v320, %v577
        %v579 = vand.u32 %v578, 4294901760
        %v580 = vsub.f32 %v578, %v579
        %v581 = vand.u32 %v580, 4294901760
        %582 = vmatmul.f32.gmra.mxu0 %v581
        %v583 = vpop.f32.mrf.mxu0
        %v584 = vadd.f32 0.0, %v583
        %v585 = vand.u32 %v323, 4294901760
        %v586 = vsub.f32 %v323, %v585
        %v587 = vand.u32 %v586, 4294901760
        %v588 = vsub.f32 %v586, %v587
        %v589 = vand.u32 %v588, 4294901760
        %590 = vmatmul.f32.gmra.mxu0 %v589
        %v591 = vpop.f32.mrf.mxu0
        %v592 = vadd.f32 0.0, %v591
        %v593 = vand.u32 %v326, 4294901760
        %v594 = vsub.f32 %v326, %v593
        %v595 = vand.u32 %v594, 4294901760
        %v596 = vsub.f32 %v594, %v595
        %v597 = vand.u32 %v596, 4294901760
        %598 = vmatmul.f32.gmra.mxu0 %v597
        %v599 = vpop.f32.mrf.mxu0
        %v600 = vadd.f32 0.0, %v599
        %v601 = vand.u32 %v329, 4294901760
        %v602 = vsub.f32 %v329, %v601
        %v603 = vand.u32 %v602, 4294901760
        %v604 = vsub.f32 %v602, %v603
        %v605 = vand.u32 %v604, 4294901760
        %606 = vmatmul.f32.gmra.mxu0 %v605
        %v607 = vpop.f32.mrf.mxu0
        %v608 = vadd.f32 0.0, %v607
        %v609 = vand.u32 %v332, 4294901760
        %v610 = vsub.f32 %v332, %v609
        %v611 = vand.u32 %v610, 4294901760
        %v612 = vsub.f32 %v610, %v611
        %v613 = vand.u32 %v612, 4294901760
        %614 = vmatmul.f32.gmra.mxu0 %v613
        %v615 = vpop.f32.mrf.mxu0
        %v616 = vadd.f32 0.0, %v615
        %v617 = vand.u32 %v335, 4294901760
        %v618 = vsub.f32 %v335, %v617
        %v619 = vand.u32 %v618, 4294901760
        %v620 = vsub.f32 %v618, %v619
        %v621 = vand.u32 %v620, 4294901760
        %622 = vmatmul.f32.gmra.mxu0 %v621
        %v623 = vpop.f32.mrf.mxu0
        %v624 = vadd.f32 0.0, %v623
        %v625 = vand.u32 %v338, 4294901760
        %v626 = vsub.f32 %v338, %v625
        %v627 = vand.u32 %v626, 4294901760
        %v628 = vsub.f32 %v626, %v627
        %v629 = vand.u32 %v628, 4294901760
        %630 = vmatmul.f32.gmra.mxu0 %v629
        %v631 = vpop.f32.mrf.mxu0
        %v632 = vadd.f32 0.0, %v631
        %v633 = vand.u32 %v341, 4294901760
        %v634 = vsub.f32 %v341, %v633
        %v635 = vand.u32 %v634, 4294901760
        %v636 = vsub.f32 %v634, %v635
        %v637 = vand.u32 %v636, 4294901760
        %638 = vmatmul.f32.gmra.mxu0 %v637
        %v639 = vpop.f32.mrf.mxu0
        %v640 = vadd.f32 0.0, %v639
        %v641 = vand.u32 %v344, 4294901760
        %v642 = vsub.f32 %v344, %v641
        %v643 = vand.u32 %v642, 4294901760
        %v644 = vsub.f32 %v642, %v643
        %v645 = vand.u32 %v644, 4294901760
        %646 = vmatmul.f32.gmra.mxu0 %v645
        %v647 = vpop.f32.mrf.mxu0
        %v648 = vadd.f32 0.0, %v647
        %v649 = vand.u32 %v347, 4294901760
        %v650 = vsub.f32 %v347, %v649
        %v651 = vand.u32 %v650, 4294901760
        %v652 = vsub.f32 %v650, %v651
        %v653 = vand.u32 %v652, 4294901760
        %654 = vmatmul.f32.gmra.mxu0 %v653
        %v655 = vpop.f32.mrf.mxu0
        %v656 = vadd.f32 0.0, %v655
        %v657 = vand.u32 %v350, 4294901760
        %v658 = vsub.f32 %v350, %v657
        %v659 = vand.u32 %v658, 4294901760
        %v660 = vsub.f32 %v658, %v659
        %v661 = vand.u32 %v660, 4294901760
        %662 = vmatmul.f32.gmra.mxu0 %v661
        %v663 = vpop.f32.mrf.mxu0
        %v664 = vadd.f32 0.0, %v663
        %v665 = vand.u32 %v353, 4294901760
        %v666 = vsub.f32 %v353, %v665
        %v667 = vand.u32 %v666, 4294901760
        %v668 = vsub.f32 %v666, %v667
        %v669 = vand.u32 %v668, 4294901760
        %670 = vmatmul.f32.gmra.mxu0 %v669
        %v671 = vpop.f32.mrf.mxu0
        %v672 = vadd.f32 0.0, %v671
        %v673 = vand.u32 %v356, 4294901760
        %v674 = vsub.f32 %v356, %v673
        %v675 = vand.u32 %v674, 4294901760
        %v676 = vsub.f32 %v674, %v675
        %v677 = vand.u32 %v676, 4294901760
        %678 = vmatmul.f32.gmra.mxu0 %v677
        %v679 = vpop.f32.mrf.mxu0
        %v680 = vadd.f32 0.0, %v679
        %v681 = vand.u32 %v359, 4294901760
        %v682 = vsub.f32 %v359, %v681
        %v683 = vand.u32 %v682, 4294901760
        %v684 = vsub.f32 %v682, %v683
        %v685 = vand.u32 %v684, 4294901760
        %686 = vmatmul.f32.gmra.mxu0 %v685
        %v687 = vpop.f32.mrf.mxu0
        %v688 = vadd.f32 0.0, %v687
        %v689 = vand.u32 %v362, 4294901760
        %v690 = vsub.f32 %v362, %v689
        %v691 = vand.u32 %v690, 4294901760
        %v692 = vsub.f32 %v690, %v691
        %v693 = vand.u32 %v692, 4294901760
        %694 = vmatmul.f32.gmra.mxu0 %v693
        %v695 = vpop.f32.mrf.mxu0
        %v696 = vadd.f32 0.0, %v695
        %v697 = vand.u32 %v365, 4294901760
        %v698 = vsub.f32 %v365, %v697
        %v699 = vand.u32 %v698, 4294901760
        %v700 = vsub.f32 %v698, %v699
        %v701 = vand.u32 %v700, 4294901760
        %702 = vmatmul.f32.gmra.mxu0 %v701
        %v703 = vpop.f32.mrf.mxu0
        %v704 = vadd.f32 0.0, %v703
        %v705 = vand.u32 %v368, 4294901760
        %v706 = vsub.f32 %v368, %v705
        %v707 = vand.u32 %v706, 4294901760
        %v708 = vsub.f32 %v706, %v707
        %v709 = vand.u32 %v708, 4294901760
        %710 = vmatmul.f32.gmra.mxu0 %v709
        %v711 = vpop.f32.mrf.mxu0
        %v712 = vadd.f32 0.0, %v711
        %v713 = vand.u32 %v371, 4294901760
        %v714 = vsub.f32 %v371, %v713
        %v715 = vand.u32 %v714, 4294901760
        %v716 = vsub.f32 %v714, %v715
        %v717 = vand.u32 %v716, 4294901760
        %718 = vmatmul.f32.gmra.mxu0 %v717
        %v719 = vpop.f32.mrf.mxu0
        %v720 = vadd.f32 0.0, %v719
        %v721 = vand.u32 %v374, 4294901760
        %v722 = vsub.f32 %v374, %v721
        %v723 = vand.u32 %v722, 4294901760
        %v724 = vsub.f32 %v722, %v723
        %v725 = vand.u32 %v724, 4294901760
        %726 = vmatmul.f32.gmra.mxu0 %v725
        %v727 = vpop.f32.mrf.mxu0
        %v728 = vadd.f32 0.0, %v727
        %v729 = vand.u32 %v377, 4294901760
        %v730 = vsub.f32 %v377, %v729
        %v731 = vand.u32 %v730, 4294901760
        %v732 = vsub.f32 %v730, %v731
        %v733 = vand.u32 %v732, 4294901760
        %734 = vmatmul.f32.gmra.mxu0 %v733
        %v735 = vpop.f32.mrf.mxu0
        %v736 = vadd.f32 0.0, %v735
        %v737 = vand.u32 %v380, 4294901760
        %v738 = vsub.f32 %v380, %v737
        %v739 = vand.u32 %v738, 4294901760
        %v740 = vsub.f32 %v738, %v739
        %v741 = vand.u32 %v740, 4294901760
        %742 = vmatmul.f32.gmra.mxu0 %v741
        %v743 = vpop.f32.mrf.mxu0
        %v744 = vadd.f32 0.0, %v743
        %v745 = vand.u32 %v383, 4294901760
        %v746 = vsub.f32 %v383, %v745
        %v747 = vand.u32 %v746, 4294901760
        %v748 = vsub.f32 %v746, %v747
        %v749 = vand.u32 %v748, 4294901760
        %750 = vmatmul.f32.gmra.mxu0 %v749
        %v751 = vpop.f32.mrf.mxu0
        %v752 = vadd.f32 0.0, %v751
        %v753 = vand.u32 %v386, 4294901760
        %v754 = vsub.f32 %v386, %v753
        %v755 = vand.u32 %v754, 4294901760
        %v756 = vsub.f32 %v754, %v755
        %v757 = vand.u32 %v756, 4294901760
        %758 = vmatmul.f32.gmra.mxu0 %v757
        %v759 = vpop.f32.mrf.mxu0
        %v760 = vadd.f32 0.0, %v759
        %v761 = vand.u32 %v389, 4294901760
        %v762 = vsub.f32 %v389, %v761
        %v763 = vand.u32 %v762, 4294901760
        %v764 = vsub.f32 %v762, %v763
        %v765 = vand.u32 %v764, 4294901760
        %766 = vmatmul.f32.gmra.mxu0 %v765
        %v767 = vpop.f32.mrf.mxu0
        %v768 = vadd.f32 0.0, %v767
        %v769 = vand.u32 %v392, 4294901760
        %v770 = vsub.f32 %v392, %v769
        %v771 = vand.u32 %v770, 4294901760
        %v772 = vsub.f32 %v770, %v771
        %v773 = vand.u32 %v772, 4294901760
        %774 = vmatmul.f32.gmra.mxu0 %v773
        %v775 = vpop.f32.mrf.mxu0
        %v776 = vadd.f32 0.0, %v775
        %v777 = vand.u32 %v395, 4294901760
        %v778 = vsub.f32 %v395, %v777
        %v779 = vand.u32 %v778, 4294901760
        %v780 = vsub.f32 %v778, %v779
        %v781 = vand.u32 %v780, 4294901760
        %782 = vmatmul.f32.gmra.mxu0 %v781
        %v783 = vpop.f32.mrf.mxu0
        %v784 = vadd.f32 0.0, %v783
        %v785 = vand.u32 %v398, 4294901760
        %v786 = vsub.f32 %v398, %v785
        %v787 = vand.u32 %v786, 4294901760
        %v788 = vsub.f32 %v786, %v787
        %v789 = vand.u32 %v788, 4294901760
        %790 = vmatmul.f32.gmra.mxu0 %v789
        %v791 = vpop.f32.mrf.mxu0
        %v792 = vadd.f32 0.0, %v791
        %v793 = vand.u32 %v401, 4294901760
        %v794 = vsub.f32 %v401, %v793
        %v795 = vand.u32 %v794, 4294901760
        %v796 = vsub.f32 %v794, %v795
        %v797 = vand.u32 %v796, 4294901760
        %798 = vmatmul.f32.gmra.mxu0 %v797
        %v799 = vpop.f32.mrf.mxu0
        %v800 = vadd.f32 0.0, %v799
        %v801 = vand.u32 %v404, 4294901760
        %v802 = vsub.f32 %v404, %v801
        %v803 = vand.u32 %v802, 4294901760
        %v804 = vsub.f32 %v802, %v803
        %v805 = vand.u32 %v804, 4294901760
        %806 = vmatmul.f32.gmra.mxu0 %v805
        %v807 = vpop.f32.mrf.mxu0
        %v808 = vadd.f32 0.0, %v807
        %v809 = vand.u32 %v407, 4294901760
        %v810 = vsub.f32 %v407, %v809
        %v811 = vand.u32 %v810, 4294901760
        %v812 = vsub.f32 %v810, %v811
        %v813 = vand.u32 %v812, 4294901760
        %814 = vmatmul.f32.gmra.mxu0 %v813
        %v815 = vpop.f32.mrf.mxu0
        %v816 = vadd.f32 0.0, %v815
        %817 = vdwg.mxu0
        %818 = vmatpush.msra.mxu0 0.0
        %819 = vmatpush.msra.mxu0 0.0
        %820 = vmatpush.msra.mxu0 0.0
        %821 = vmatpush.msra.mxu0 0.0
        %822 = vmatpush.msra.mxu0 0.0
        %823 = vmatpush.msra.mxu0 0.0
        %824 = vmatpush.msra.mxu0 0.0
        %825 = vmatpush.msra.mxu0 0.0
        %v826 = vand.u32 %v261, 4294901760
        %v827 = vsub.f32 %v261, %v826
        %v828 = vand.u32 %v827, 4294901760
        %v829 = vsub.f32 %v827, %v828
        %v830 = vand.u32 %v829, 4294901760
        %831 = vmatpush.msra.mxu0 %v830
        %v832 = vand.u32 %v258, 4294901760
        %v833 = vsub.f32 %v258, %v832
        %v834 = vand.u32 %v833, 4294901760
        %v835 = vsub.f32 %v833, %v834
        %v836 = vand.u32 %v835, 4294901760
        %837 = vmatpush.msra.mxu0 %v836
        %v838 = vand.u32 %v255, 4294901760
        %v839 = vsub.f32 %v255, %v838
        %v840 = vand.u32 %v839, 4294901760
        %v841 = vsub.f32 %v839, %v840
        %v842 = vand.u32 %v841, 4294901760
        %843 = vmatpush.msra.mxu0 %v842
        %v844 = vand.u32 %v252, 4294901760
        %v845 = vsub.f32 %v252, %v844
        %v846 = vand.u32 %v845, 4294901760
        %v847 = vsub.f32 %v845, %v846
        %v848 = vand.u32 %v847, 4294901760
        %849 = vmatpush.msra.mxu0 %v848
        %v850 = vand.u32 %v249, 4294901760
        %v851 = vsub.f32 %v249, %v850
        %v852 = vand.u32 %v851, 4294901760
        %v853 = vsub.f32 %v851, %v852
        %v854 = vand.u32 %v853, 4294901760
        %855 = vmatpush.msra.mxu0 %v854
        %v856 = vand.u32 %v246, 4294901760
        %v857 = vsub.f32 %v246, %v856
        %v858 = vand.u32 %v857, 4294901760
        %v859 = vsub.f32 %v857, %v858
        %v860 = vand.u32 %v859, 4294901760
        %861 = vmatpush.msra.mxu0 %v860
        %v862 = vand.u32 %v243, 4294901760
        %v863 = vsub.f32 %v243, %v862
        %v864 = vand.u32 %v863, 4294901760
        %v865 = vsub.f32 %v863, %v864
        %v866 = vand.u32 %v865, 4294901760
        %867 = vmatpush.msra.mxu0 %v866
        %v868 = vand.u32 %v240, 4294901760
        %v869 = vsub.f32 %v240, %v868
        %v870 = vand.u32 %v869, 4294901760
        %v871 = vsub.f32 %v869, %v870
        %v872 = vand.u32 %v871, 4294901760
        %873 = vmatpush.msra.mxu0 %v872
        %v874 = vand.u32 %v266, 4294901760
        %875 = vmatmul.f32.gmra.mxu0 %v874
        %v876 = vpop.f32.mrf.mxu0
        %v877 = vadd.f32 %v440, %v876
        %v878 = vand.u32 %v269, 4294901760
        %879 = vmatmul.f32.gmra.mxu0 %v878
        %v880 = vpop.f32.mrf.mxu0
        %v881 = vadd.f32 %v448, %v880
        %v882 = vand.u32 %v272, 4294901760
        %883 = vmatmul.f32.gmra.mxu0 %v882
        %v884 = vpop.f32.mrf.mxu0
        %v885 = vadd.f32 %v456, %v884
        %v886 = vand.u32 %v275, 4294901760
        %887 = vmatmul.f32.gmra.mxu0 %v886
        %v888 = vpop.f32.mrf.mxu0
        %v889 = vadd.f32 %v464, %v888
        %v890 = vand.u32 %v278, 4294901760
        %891 = vmatmul.f32.gmra.mxu0 %v890
        %v892 = vpop.f32.mrf.mxu0
        %v893 = vadd.f32 %v472, %v892
        %v894 = vand.u32 %v281, 4294901760
        %895 = vmatmul.f32.gmra.mxu0 %v894
        %v896 = vpop.f32.mrf.mxu0
        %v897 = vadd.f32 %v480, %v896
        %v898 = vand.u32 %v284, 4294901760
        %899 = vmatmul.f32.gmra.mxu0 %v898
        %v900 = vpop.f32.mrf.mxu0
        %v901 = vadd.f32 %v488, %v900
        %v902 = vand.u32 %v287, 4294901760
        %903 = vmatmul.f32.gmra.mxu0 %v902
        %v904 = vpop.f32.mrf.mxu0
        %v905 = vadd.f32 %v496, %v904
        %v906 = vand.u32 %v290, 4294901760
        %907 = vmatmul.f32.gmra.mxu0 %v906
        %v908 = vpop.f32.mrf.mxu0
        %v909 = vadd.f32 %v504, %v908
        %v910 = vand.u32 %v293, 4294901760
        %911 = vmatmul.f32.gmra.mxu0 %v910
        %v912 = vpop.f32.mrf.mxu0
        %v913 = vadd.f32 %v512, %v912
        %v914 = vand.u32 %v296, 4294901760
        %915 = vmatmul.f32.gmra.mxu0 %v914
        %v916 = vpop.f32.mrf.mxu0
        %v917 = vadd.f32 %v520, %v916
        %v918 = vand.u32 %v299, 4294901760
        %919 = vmatmul.f32.gmra.mxu0 %v918
        %v920 = vpop.f32.mrf.mxu0
        %v921 = vadd.f32 %v528, %v920
        %v922 = vand.u32 %v302, 4294901760
        %923 = vmatmul.f32.gmra.mxu0 %v922
        %v924 = vpop.f32.mrf.mxu0
        %v925 = vadd.f32 %v536, %v924
        %v926 = vand.u32 %v305, 4294901760
        %927 = vmatmul.f32.gmra.mxu0 %v926
        %v928 = vpop.f32.mrf.mxu0
        %v929 = vadd.f32 %v544, %v928
        %v930 = vand.u32 %v308, 4294901760
        %931 = vmatmul.f32.gmra.mxu0 %v930
        %v932 = vpop.f32.mrf.mxu0
        %v933 = vadd.f32 %v552, %v932
        %v934 = vand.u32 %v311, 4294901760
        %935 = vmatmul.f32.gmra.mxu0 %v934
        %v936 = vpop.f32.mrf.mxu0
        %v937 = vadd.f32 %v560, %v936
        %v938 = vand.u32 %v314, 4294901760
        %939 = vmatmul.f32.gmra.mxu0 %v938
        %v940 = vpop.f32.mrf.mxu0
        %v941 = vadd.f32 %v568, %v940
        %v942 = vand.u32 %v317, 4294901760
        %943 = vmatmul.f32.gmra.mxu0 %v942
        %v944 = vpop.f32.mrf.mxu0
        %v945 = vadd.f32 %v576, %v944
        %v946 = vand.u32 %v320, 4294901760
        %947 = vmatmul.f32.gmra.mxu0 %v946
        %v948 = vpop.f32.mrf.mxu0
        %v949 = vadd.f32 %v584, %v948
        %v950 = vand.u32 %v323, 4294901760
        %951 = vmatmul.f32.gmra.mxu0 %v950
        %v952 = vpop.f32.mrf.mxu0
        %v953 = vadd.f32 %v592, %v952
        %v954 = vand.u32 %v326, 4294901760
        %955 = vmatmul.f32.gmra.mxu0 %v954
        %v956 = vpop.f32.mrf.mxu0
        %v957 = vadd.f32 %v600, %v956
        %v958 = vand.u32 %v329, 4294901760
        %959 = vmatmul.f32.gmra.mxu0 %v958
        %v960 = vpop.f32.mrf.mxu0
        %v961 = vadd.f32 %v608, %v960
        %v962 = vand.u32 %v332, 4294901760
        %963 = vmatmul.f32.gmra.mxu0 %v962
        %v964 = vpop.f32.mrf.mxu0
        %v965 = vadd.f32 %v616, %v964
        %v966 = vand.u32 %v335, 4294901760
        %967 = vmatmul.f32.gmra.mxu0 %v966
        %v968 = vpop.f32.mrf.mxu0
        %v969 = vadd.f32 %v624, %v968
        %v970 = vand.u32 %v338, 4294901760
        %971 = vmatmul.f32.gmra.mxu0 %v970
        %v972 = vpop.f32.mrf.mxu0
        %v973 = vadd.f32 %v632, %v972
        %v974 = vand.u32 %v341, 4294901760
        %975 = vmatmul.f32.gmra.mxu0 %v974
        %v976 = vpop.f32.mrf.mxu0
        %v977 = vadd.f32 %v640, %v976
        %v978 = vand.u32 %v344, 4294901760
        %979 = vmatmul.f32.gmra.mxu0 %v978
        %v980 = vpop.f32.mrf.mxu0
        %v981 = vadd.f32 %v648, %v980
        %v982 = vand.u32 %v347, 4294901760
        %983 = vmatmul.f32.gmra.mxu0 %v982
        %v984 = vpop.f32.mrf.mxu0
        %v985 = vadd.f32 %v656, %v984
        %v986 = vand.u32 %v350, 4294901760
        %987 = vmatmul.f32.gmra.mxu0 %v986
        %v988 = vpop.f32.mrf.mxu0
        %v989 = vadd.f32 %v664, %v988
        %v990 = vand.u32 %v353, 4294901760
        %991 = vmatmul.f32.gmra.mxu0 %v990
        %v992 = vpop.f32.mrf.mxu0
        %v993 = vadd.f32 %v672, %v992
        %v994 = vand.u32 %v356, 4294901760
        %995 = vmatmul.f32.gmra.mxu0 %v994
        %v996 = vpop.f32.mrf.mxu0
        %v997 = vadd.f32 %v680, %v996
        %v998 = vand.u32 %v359, 4294901760
        %999 = vmatmul.f32.gmra.mxu0 %v998
        %v1000 = vpop.f32.mrf.mxu0
        %v1001 = vadd.f32 %v688, %v1000
        %v1002 = vand.u32 %v362, 4294901760
        %1003 = vmatmul.f32.gmra.mxu0 %v1002
        %v1004 = vpop.f32.mrf.mxu0
        %v1005 = vadd.f32 %v696, %v1004
        %v1006 = vand.u32 %v365, 4294901760
        %1007 = vmatmul.f32.gmra.mxu0 %v1006
        %v1008 = vpop.f32.mrf.mxu0
        %v1009 = vadd.f32 %v704, %v1008
        %v1010 = vand.u32 %v368, 4294901760
        %1011 = vmatmul.f32.gmra.mxu0 %v1010
        %v1012 = vpop.f32.mrf.mxu0
        %v1013 = vadd.f32 %v712, %v1012
        %v1014 = vand.u32 %v371, 4294901760
        %1015 = vmatmul.f32.gmra.mxu0 %v1014
        %v1016 = vpop.f32.mrf.mxu0
        %v1017 = vadd.f32 %v720, %v1016
        %v1018 = vand.u32 %v374, 4294901760
        %1019 = vmatmul.f32.gmra.mxu0 %v1018
        %v1020 = vpop.f32.mrf.mxu0
        %v1021 = vadd.f32 %v728, %v1020
        %v1022 = vand.u32 %v377, 4294901760
        %1023 = vmatmul.f32.gmra.mxu0 %v1022
        %v1024 = vpop.f32.mrf.mxu0
        %v1025 = vadd.f32 %v736, %v1024
        %v1026 = vand.u32 %v380, 4294901760
        %1027 = vmatmul.f32.gmra.mxu0 %v1026
        %v1028 = vpop.f32.mrf.mxu0
        %v1029 = vadd.f32 %v744, %v1028
        %v1030 = vand.u32 %v383, 4294901760
        %1031 = vmatmul.f32.gmra.mxu0 %v1030
        %v1032 = vpop.f32.mrf.mxu0
        %v1033 = vadd.f32 %v752, %v1032
        %v1034 = vand.u32 %v386, 4294901760
        %1035 = vmatmul.f32.gmra.mxu0 %v1034
        %v1036 = vpop.f32.mrf.mxu0
        %v1037 = vadd.f32 %v760, %v1036
        %v1038 = vand.u32 %v389, 4294901760
        %1039 = vmatmul.f32.gmra.mxu0 %v1038
        %v1040 = vpop.f32.mrf.mxu0
        %v1041 = vadd.f32 %v768, %v1040
        %v1042 = vand.u32 %v392, 4294901760
        %1043 = vmatmul.f32.gmra.mxu0 %v1042
        %v1044 = vpop.f32.mrf.mxu0
        %v1045 = vadd.f32 %v776, %v1044
        %v1046 = vand.u32 %v395, 4294901760
        %1047 = vmatmul.f32.gmra.mxu0 %v1046
        %v1048 = vpop.f32.mrf.mxu0
        %v1049 = vadd.f32 %v784, %v1048
        %v1050 = vand.u32 %v398, 4294901760
        %1051 = vmatmul.f32.gmra.mxu0 %v1050
        %v1052 = vpop.f32.mrf.mxu0
        %v1053 = vadd.f32 %v792, %v1052
        %v1054 = vand.u32 %v401, 4294901760
        %1055 = vmatmul.f32.gmra.mxu0 %v1054
        %v1056 = vpop.f32.mrf.mxu0
        %v1057 = vadd.f32 %v800, %v1056
        %v1058 = vand.u32 %v404, 4294901760
        %1059 = vmatmul.f32.gmra.mxu0 %v1058
        %v1060 = vpop.f32.mrf.mxu0
        %v1061 = vadd.f32 %v808, %v1060
        %v1062 = vand.u32 %v407, 4294901760
        %1063 = vmatmul.f32.gmra.mxu0 %v1062
        %v1064 = vpop.f32.mrf.mxu0
        %v1065 = vadd.f32 %v816, %v1064
        %1066 = vdwg.mxu0
        %1067 = vmatpush.msra.mxu0 0.0
        %1068 = vmatpush.msra.mxu0 0.0
        %1069 = vmatpush.msra.mxu0 0.0
        %1070 = vmatpush.msra.mxu0 0.0
        %1071 = vmatpush.msra.mxu0 0.0
        %1072 = vmatpush.msra.mxu0 0.0
        %1073 = vmatpush.msra.mxu0 0.0
        %1074 = vmatpush.msra.mxu0 0.0
        %v1075 = vand.u32 %v261, 4294901760
        %v1076 = vsub.f32 %v261, %v1075
        %1077 = vmatpush.msra.mxu0 %v1076
        %v1078 = vand.u32 %v258, 4294901760
        %v1079 = vsub.f32 %v258, %v1078
        %1080 = vmatpush.msra.mxu0 %v1079
        %v1081 = vand.u32 %v255, 4294901760
        %v1082 = vsub.f32 %v255, %v1081
        %1083 = vmatpush.msra.mxu0 %v1082
        %v1084 = vand.u32 %v252, 4294901760
        %v1085 = vsub.f32 %v252, %v1084
        %1086 = vmatpush.msra.mxu0 %v1085
        %v1087 = vand.u32 %v249, 4294901760
        %v1088 = vsub.f32 %v249, %v1087
        %1089 = vmatpush.msra.mxu0 %v1088
        %v1090 = vand.u32 %v246, 4294901760
        %v1091 = vsub.f32 %v246, %v1090
        %1092 = vmatpush.msra.mxu0 %v1091
        %v1093 = vand.u32 %v243, 4294901760
        %v1094 = vsub.f32 %v243, %v1093
        %1095 = vmatpush.msra.mxu0 %v1094
        %v1096 = vand.u32 %v240, 4294901760
        %v1097 = vsub.f32 %v240, %v1096
        %1098 = vmatpush.msra.mxu0 %v1097
        %v1099 = vand.u32 %v266, 4294901760
        %v1100 = vsub.f32 %v266, %v1099
        %1101 = vmatmul.f32.gmra.mxu0 %v1100
        %v1102 = vpop.f32.mrf.mxu0
        %v1103 = vadd.f32 %v877, %v1102
        %v1104 = vand.u32 %v269, 4294901760
        %v1105 = vsub.f32 %v269, %v1104
        %1106 = vmatmul.f32.gmra.mxu0 %v1105
        %v1107 = vpop.f32.mrf.mxu0
        %v1108 = vadd.f32 %v881, %v1107
        %v1109 = vand.u32 %v272, 4294901760
        %v1110 = vsub.f32 %v272, %v1109
        %1111 = vmatmul.f32.gmra.mxu0 %v1110
        %v1112 = vpop.f32.mrf.mxu0
        %v1113 = vadd.f32 %v885, %v1112
        %v1114 = vand.u32 %v275, 4294901760
        %v1115 = vsub.f32 %v275, %v1114
        %1116 = vmatmul.f32.gmra.mxu0 %v1115
        %v1117 = vpop.f32.mrf.mxu0
        %v1118 = vadd.f32 %v889, %v1117
        %v1119 = vand.u32 %v278, 4294901760
        %v1120 = vsub.f32 %v278, %v1119
        %1121 = vmatmul.f32.gmra.mxu0 %v1120
        %v1122 = vpop.f32.mrf.mxu0
        %v1123 = vadd.f32 %v893, %v1122
        %v1124 = vand.u32 %v281, 4294901760
        %v1125 = vsub.f32 %v281, %v1124
        %1126 = vmatmul.f32.gmra.mxu0 %v1125
        %v1127 = vpop.f32.mrf.mxu0
        %v1128 = vadd.f32 %v897, %v1127
        %v1129 = vand.u32 %v284, 4294901760
        %v1130 = vsub.f32 %v284, %v1129
        %1131 = vmatmul.f32.gmra.mxu0 %v1130
        %v1132 = vpop.f32.mrf.mxu0
        %v1133 = vadd.f32 %v901, %v1132
        %v1134 = vand.u32 %v287, 4294901760
        %v1135 = vsub.f32 %v287, %v1134
        %1136 = vmatmul.f32.gmra.mxu0 %v1135
        %v1137 = vpop.f32.mrf.mxu0
        %v1138 = vadd.f32 %v905, %v1137
        %v1139 = vand.u32 %v290, 4294901760
        %v1140 = vsub.f32 %v290, %v1139
        %1141 = vmatmul.f32.gmra.mxu0 %v1140
        %v1142 = vpop.f32.mrf.mxu0
        %v1143 = vadd.f32 %v909, %v1142
        %v1144 = vand.u32 %v293, 4294901760
        %v1145 = vsub.f32 %v293, %v1144
        %1146 = vmatmul.f32.gmra.mxu0 %v1145
        %v1147 = vpop.f32.mrf.mxu0
        %v1148 = vadd.f32 %v913, %v1147
        %v1149 = vand.u32 %v296, 4294901760
        %v1150 = vsub.f32 %v296, %v1149
        %1151 = vmatmul.f32.gmra.mxu0 %v1150
        %v1152 = vpop.f32.mrf.mxu0
        %v1153 = vadd.f32 %v917, %v1152
        %v1154 = vand.u32 %v299, 4294901760
        %v1155 = vsub.f32 %v299, %v1154
        %1156 = vmatmul.f32.gmra.mxu0 %v1155
        %v1157 = vpop.f32.mrf.mxu0
        %v1158 = vadd.f32 %v921, %v1157
        %v1159 = vand.u32 %v302, 4294901760
        %v1160 = vsub.f32 %v302, %v1159
        %1161 = vmatmul.f32.gmra.mxu0 %v1160
        %v1162 = vpop.f32.mrf.mxu0
        %v1163 = vadd.f32 %v925, %v1162
        %v1164 = vand.u32 %v305, 4294901760
        %v1165 = vsub.f32 %v305, %v1164
        %1166 = vmatmul.f32.gmra.mxu0 %v1165
        %v1167 = vpop.f32.mrf.mxu0
        %v1168 = vadd.f32 %v929, %v1167
        %v1169 = vand.u32 %v308, 4294901760
        %v1170 = vsub.f32 %v308, %v1169
        %1171 = vmatmul.f32.gmra.mxu0 %v1170
        %v1172 = vpop.f32.mrf.mxu0
        %v1173 = vadd.f32 %v933, %v1172
        %v1174 = vand.u32 %v311, 4294901760
        %v1175 = vsub.f32 %v311, %v1174
        %1176 = vmatmul.f32.gmra.mxu0 %v1175
        %v1177 = vpop.f32.mrf.mxu0
        %v1178 = vadd.f32 %v937, %v1177
        %v1179 = vand.u32 %v314, 4294901760
        %v1180 = vsub.f32 %v314, %v1179
        %1181 = vmatmul.f32.gmra.mxu0 %v1180
        %v1182 = vpop.f32.mrf.mxu0
        %v1183 = vadd.f32 %v941, %v1182
        %v1184 = vand.u32 %v317, 4294901760
        %v1185 = vsub.f32 %v317, %v1184
        %1186 = vmatmul.f32.gmra.mxu0 %v1185
        %v1187 = vpop.f32.mrf.mxu0
        %v1188 = vadd.f32 %v945, %v1187
        %v1189 = vand.u32 %v320, 4294901760
        %v1190 = vsub.f32 %v320, %v1189
        %1191 = vmatmul.f32.gmra.mxu0 %v1190
        %v1192 = vpop.f32.mrf.mxu0
        %v1193 = vadd.f32 %v949, %v1192
        %v1194 = vand.u32 %v323, 4294901760
        %v1195 = vsub.f32 %v323, %v1194
        %1196 = vmatmul.f32.gmra.mxu0 %v1195
        %v1197 = vpop.f32.mrf.mxu0
        %v1198 = vadd.f32 %v953, %v1197
        %v1199 = vand.u32 %v326, 4294901760
        %v1200 = vsub.f32 %v326, %v1199
        %1201 = vmatmul.f32.gmra.mxu0 %v1200
        %v1202 = vpop.f32.mrf.mxu0
        %v1203 = vadd.f32 %v957, %v1202
        %v1204 = vand.u32 %v329, 4294901760
        %v1205 = vsub.f32 %v329, %v1204
        %1206 = vmatmul.f32.gmra.mxu0 %v1205
        %v1207 = vpop.f32.mrf.mxu0
        %v1208 = vadd.f32 %v961, %v1207
        %v1209 = vand.u32 %v332, 4294901760
        %v1210 = vsub.f32 %v332, %v1209
        %1211 = vmatmul.f32.gmra.mxu0 %v1210
        %v1212 = vpop.f32.mrf.mxu0
        %v1213 = vadd.f32 %v965, %v1212
        %v1214 = vand.u32 %v335, 4294901760
        %v1215 = vsub.f32 %v335, %v1214
        %1216 = vmatmul.f32.gmra.mxu0 %v1215
        %v1217 = vpop.f32.mrf.mxu0
        %v1218 = vadd.f32 %v969, %v1217
        %v1219 = vand.u32 %v338, 4294901760
        %v1220 = vsub.f32 %v338, %v1219
        %1221 = vmatmul.f32.gmra.mxu0 %v1220
        %v1222 = vpop.f32.mrf.mxu0
        %v1223 = vadd.f32 %v973, %v1222
        %v1224 = vand.u32 %v341, 4294901760
        %v1225 = vsub.f32 %v341, %v1224
        %1226 = vmatmul.f32.gmra.mxu0 %v1225
        %v1227 = vpop.f32.mrf.mxu0
        %v1228 = vadd.f32 %v977, %v1227
        %v1229 = vand.u32 %v344, 4294901760
        %v1230 = vsub.f32 %v344, %v1229
        %1231 = vmatmul.f32.gmra.mxu0 %v1230
        %v1232 = vpop.f32.mrf.mxu0
        %v1233 = vadd.f32 %v981, %v1232
        %v1234 = vand.u32 %v347, 4294901760
        %v1235 = vsub.f32 %v347, %v1234
        %1236 = vmatmul.f32.gmra.mxu0 %v1235
        %v1237 = vpop.f32.mrf.mxu0
        %v1238 = vadd.f32 %v985, %v1237
        %v1239 = vand.u32 %v350, 4294901760
        %v1240 = vsub.f32 %v350, %v1239
        %1241 = vmatmul.f32.gmra.mxu0 %v1240
        %v1242 = vpop.f32.mrf.mxu0
        %v1243 = vadd.f32 %v989, %v1242
        %v1244 = vand.u32 %v353, 4294901760
        %v1245 = vsub.f32 %v353, %v1244
        %1246 = vmatmul.f32.gmra.mxu0 %v1245
        %v1247 = vpop.f32.mrf.mxu0
        %v1248 = vadd.f32 %v993, %v1247
        %v1249 = vand.u32 %v356, 4294901760
        %v1250 = vsub.f32 %v356, %v1249
        %1251 = vmatmul.f32.gmra.mxu0 %v1250
        %v1252 = vpop.f32.mrf.mxu0
        %v1253 = vadd.f32 %v997, %v1252
        %v1254 = vand.u32 %v359, 4294901760
        %v1255 = vsub.f32 %v359, %v1254
        %1256 = vmatmul.f32.gmra.mxu0 %v1255
        %v1257 = vpop.f32.mrf.mxu0
        %v1258 = vadd.f32 %v1001, %v1257
        %v1259 = vand.u32 %v362, 4294901760
        %v1260 = vsub.f32 %v362, %v1259
        %1261 = vmatmul.f32.gmra.mxu0 %v1260
        %v1262 = vpop.f32.mrf.mxu0
        %v1263 = vadd.f32 %v1005, %v1262
        %v1264 = vand.u32 %v365, 4294901760
        %v1265 = vsub.f32 %v365, %v1264
        %1266 = vmatmul.f32.gmra.mxu0 %v1265
        %v1267 = vpop.f32.mrf.mxu0
        %v1268 = vadd.f32 %v1009, %v1267
        %v1269 = vand.u32 %v368, 4294901760
        %v1270 = vsub.f32 %v368, %v1269
        %1271 = vmatmul.f32.gmra.mxu0 %v1270
        %v1272 = vpop.f32.mrf.mxu0
        %v1273 = vadd.f32 %v1013, %v1272
        %v1274 = vand.u32 %v371, 4294901760
        %v1275 = vsub.f32 %v371, %v1274
        %1276 = vmatmul.f32.gmra.mxu0 %v1275
        %v1277 = vpop.f32.mrf.mxu0
        %v1278 = vadd.f32 %v1017, %v1277
        %v1279 = vand.u32 %v374, 4294901760
        %v1280 = vsub.f32 %v374, %v1279
        %1281 = vmatmul.f32.gmra.mxu0 %v1280
        %v1282 = vpop.f32.mrf.mxu0
        %v1283 = vadd.f32 %v1021, %v1282
        %v1284 = vand.u32 %v377, 4294901760
        %v1285 = vsub.f32 %v377, %v1284
        %1286 = vmatmul.f32.gmra.mxu0 %v1285
        %v1287 = vpop.f32.mrf.mxu0
        %v1288 = vadd.f32 %v1025, %v1287
        %v1289 = vand.u32 %v380, 4294901760
        %v1290 = vsub.f32 %v380, %v1289
        %1291 = vmatmul.f32.gmra.mxu0 %v1290
        %v1292 = vpop.f32.mrf.mxu0
        %v1293 = vadd.f32 %v1029, %v1292
        %v1294 = vand.u32 %v383, 4294901760
        %v1295 = vsub.f32 %v383, %v1294
        %1296 = vmatmul.f32.gmra.mxu0 %v1295
        %v1297 = vpop.f32.mrf.mxu0
        %v1298 = vadd.f32 %v1033, %v1297
        %v1299 = vand.u32 %v386, 4294901760
        %v1300 = vsub.f32 %v386, %v1299
        %1301 = vmatmul.f32.gmra.mxu0 %v1300
        %v1302 = vpop.f32.mrf.mxu0
        %v1303 = vadd.f32 %v1037, %v1302
        %v1304 = vand.u32 %v389, 4294901760
        %v1305 = vsub.f32 %v389, %v1304
        %1306 = vmatmul.f32.gmra.mxu0 %v1305
        %v1307 = vpop.f32.mrf.mxu0
        %v1308 = vadd.f32 %v1041, %v1307
        %v1309 = vand.u32 %v392, 4294901760
        %v1310 = vsub.f32 %v392, %v1309
        %1311 = vmatmul.f32.gmra.mxu0 %v1310
        %v1312 = vpop.f32.mrf.mxu0
        %v1313 = vadd.f32 %v1045, %v1312
        %v1314 = vand.u32 %v395, 4294901760
        %v1315 = vsub.f32 %v395, %v1314
        %1316 = vmatmul.f32.gmra.mxu0 %v1315
        %v1317 = vpop.f32.mrf.mxu0
        %v1318 = vadd.f32 %v1049, %v1317
        %v1319 = vand.u32 %v398, 4294901760
        %v1320 = vsub.f32 %v398, %v1319
        %1321 = vmatmul.f32.gmra.mxu0 %v1320
        %v1322 = vpop.f32.mrf.mxu0
        %v1323 = vadd.f32 %v1053, %v1322
        %v1324 = vand.u32 %v401, 4294901760
        %v1325 = vsub.f32 %v401, %v1324
        %1326 = vmatmul.f32.gmra.mxu0 %v1325
        %v1327 = vpop.f32.mrf.mxu0
        %v1328 = vadd.f32 %v1057, %v1327
        %v1329 = vand.u32 %v404, 4294901760
        %v1330 = vsub.f32 %v404, %v1329
        %1331 = vmatmul.f32.gmra.mxu0 %v1330
        %v1332 = vpop.f32.mrf.mxu0
        %v1333 = vadd.f32 %v1061, %v1332
        %v1334 = vand.u32 %v407, 4294901760
        %v1335 = vsub.f32 %v407, %v1334
        %1336 = vmatmul.f32.gmra.mxu0 %v1335
        %v1337 = vpop.f32.mrf.mxu0
        %v1338 = vadd.f32 %v1065, %v1337
        %1339 = vdwg.mxu0
        %1340 = vmatpush.msra.mxu0 0.0
        %1341 = vmatpush.msra.mxu0 0.0
        %1342 = vmatpush.msra.mxu0 0.0
        %1343 = vmatpush.msra.mxu0 0.0
        %1344 = vmatpush.msra.mxu0 0.0
        %1345 = vmatpush.msra.mxu0 0.0
        %1346 = vmatpush.msra.mxu0 0.0
        %1347 = vmatpush.msra.mxu0 0.0
        %v1348 = vand.u32 %v261, 4294901760
        %1349 = vmatpush.msra.mxu0 %v1348
        %v1350 = vand.u32 %v258, 4294901760
        %1351 = vmatpush.msra.mxu0 %v1350
        %v1352 = vand.u32 %v255, 4294901760
        %1353 = vmatpush.msra.mxu0 %v1352
        %v1354 = vand.u32 %v252, 4294901760
        %1355 = vmatpush.msra.mxu0 %v1354
        %v1356 = vand.u32 %v249, 4294901760
        %1357 = vmatpush.msra.mxu0 %v1356
        %v1358 = vand.u32 %v246, 4294901760
        %1359 = vmatpush.msra.mxu0 %v1358
        %v1360 = vand.u32 %v243, 4294901760
        %1361 = vmatpush.msra.mxu0 %v1360
        %v1362 = vand.u32 %v240, 4294901760
        %1363 = vmatpush.msra.mxu0 %v1362
        %v1364 = vand.u32 %v266, 4294901760
        %v1365 = vsub.f32 %v266, %v1364
        %v1366 = vand.u32 %v1365, 4294901760
        %1367 = vmatmul.f32.gmra.mxu0 %v1366
        %v1368 = vpop.f32.mrf.mxu0
        %v1369 = vadd.f32 %v1103, %v1368
        %v1370 = vand.u32 %v269, 4294901760
        %v1371 = vsub.f32 %v269, %v1370
        %v1372 = vand.u32 %v1371, 4294901760
        %1373 = vmatmul.f32.gmra.mxu0 %v1372
        %v1374 = vpop.f32.mrf.mxu0
        %v1375 = vadd.f32 %v1108, %v1374
        %v1376 = vand.u32 %v272, 4294901760
        %v1377 = vsub.f32 %v272, %v1376
        %v1378 = vand.u32 %v1377, 4294901760
        %1379 = vmatmul.f32.gmra.mxu0 %v1378
        %v1380 = vpop.f32.mrf.mxu0
        %v1381 = vadd.f32 %v1113, %v1380
        %v1382 = vand.u32 %v275, 4294901760
        %v1383 = vsub.f32 %v275, %v1382
        %v1384 = vand.u32 %v1383, 4294901760
        %1385 = vmatmul.f32.gmra.mxu0 %v1384
        %v1386 = vpop.f32.mrf.mxu0
        %v1387 = vadd.f32 %v1118, %v1386
        %v1388 = vand.u32 %v278, 4294901760
        %v1389 = vsub.f32 %v278, %v1388
        %v1390 = vand.u32 %v1389, 4294901760
        %1391 = vmatmul.f32.gmra.mxu0 %v1390
        %v1392 = vpop.f32.mrf.mxu0
        %v1393 = vadd.f32 %v1123, %v1392
        %v1394 = vand.u32 %v281, 4294901760
        %v1395 = vsub.f32 %v281, %v1394
        %v1396 = vand.u32 %v1395, 4294901760
        %1397 = vmatmul.f32.gmra.mxu0 %v1396
        %v1398 = vpop.f32.mrf.mxu0
        %v1399 = vadd.f32 %v1128, %v1398
        %v1400 = vand.u32 %v284, 4294901760
        %v1401 = vsub.f32 %v284, %v1400
        %v1402 = vand.u32 %v1401, 4294901760
        %1403 = vmatmul.f32.gmra.mxu0 %v1402
        %v1404 = vpop.f32.mrf.mxu0
        %v1405 = vadd.f32 %v1133, %v1404
        %v1406 = vand.u32 %v287, 4294901760
        %v1407 = vsub.f32 %v287, %v1406
        %v1408 = vand.u32 %v1407, 4294901760
        %1409 = vmatmul.f32.gmra.mxu0 %v1408
        %v1410 = vpop.f32.mrf.mxu0
        %v1411 = vadd.f32 %v1138, %v1410
        %v1412 = vand.u32 %v290, 4294901760
        %v1413 = vsub.f32 %v290, %v1412
        %v1414 = vand.u32 %v1413, 4294901760
        %1415 = vmatmul.f32.gmra.mxu0 %v1414
        %v1416 = vpop.f32.mrf.mxu0
        %v1417 = vadd.f32 %v1143, %v1416
        %v1418 = vand.u32 %v293, 4294901760
        %v1419 = vsub.f32 %v293, %v1418
        %v1420 = vand.u32 %v1419, 4294901760
        %1421 = vmatmul.f32.gmra.mxu0 %v1420
        %v1422 = vpop.f32.mrf.mxu0
        %v1423 = vadd.f32 %v1148, %v1422
        %v1424 = vand.u32 %v296, 4294901760
        %v1425 = vsub.f32 %v296, %v1424
        %v1426 = vand.u32 %v1425, 4294901760
        %1427 = vmatmul.f32.gmra.mxu0 %v1426
        %v1428 = vpop.f32.mrf.mxu0
        %v1429 = vadd.f32 %v1153, %v1428
        %v1430 = vand.u32 %v299, 4294901760
        %v1431 = vsub.f32 %v299, %v1430
        %v1432 = vand.u32 %v1431, 4294901760
        %1433 = vmatmul.f32.gmra.mxu0 %v1432
        %v1434 = vpop.f32.mrf.mxu0
        %v1435 = vadd.f32 %v1158, %v1434
        %v1436 = vand.u32 %v302, 4294901760
        %v1437 = vsub.f32 %v302, %v1436
        %v1438 = vand.u32 %v1437, 4294901760
        %1439 = vmatmul.f32.gmra.mxu0 %v1438
        %v1440 = vpop.f32.mrf.mxu0
        %v1441 = vadd.f32 %v1163, %v1440
        %v1442 = vand.u32 %v305, 4294901760
        %v1443 = vsub.f32 %v305, %v1442
        %v1444 = vand.u32 %v1443, 4294901760
        %1445 = vmatmul.f32.gmra.mxu0 %v1444
        %v1446 = vpop.f32.mrf.mxu0
        %v1447 = vadd.f32 %v1168, %v1446
        %v1448 = vand.u32 %v308, 4294901760
        %v1449 = vsub.f32 %v308, %v1448
        %v1450 = vand.u32 %v1449, 4294901760
        %1451 = vmatmul.f32.gmra.mxu0 %v1450
        %v1452 = vpop.f32.mrf.mxu0
        %v1453 = vadd.f32 %v1173, %v1452
        %v1454 = vand.u32 %v311, 4294901760
        %v1455 = vsub.f32 %v311, %v1454
        %v1456 = vand.u32 %v1455, 4294901760
        %1457 = vmatmul.f32.gmra.mxu0 %v1456
        %v1458 = vpop.f32.mrf.mxu0
        %v1459 = vadd.f32 %v1178, %v1458
        %v1460 = vand.u32 %v314, 4294901760
        %v1461 = vsub.f32 %v314, %v1460
        %v1462 = vand.u32 %v1461, 4294901760
        %1463 = vmatmul.f32.gmra.mxu0 %v1462
        %v1464 = vpop.f32.mrf.mxu0
        %v1465 = vadd.f32 %v1183, %v1464
        %v1466 = vand.u32 %v317, 4294901760
        %v1467 = vsub.f32 %v317, %v1466
        %v1468 = vand.u32 %v1467, 4294901760
        %1469 = vmatmul.f32.gmra.mxu0 %v1468
        %v1470 = vpop.f32.mrf.mxu0
        %v1471 = vadd.f32 %v1188, %v1470
        %v1472 = vand.u32 %v320, 4294901760
        %v1473 = vsub.f32 %v320, %v1472
        %v1474 = vand.u32 %v1473, 4294901760
        %1475 = vmatmul.f32.gmra.mxu0 %v1474
        %v1476 = vpop.f32.mrf.mxu0
        %v1477 = vadd.f32 %v1193, %v1476
        %v1478 = vand.u32 %v323, 4294901760
        %v1479 = vsub.f32 %v323, %v1478
        %v1480 = vand.u32 %v1479, 4294901760
        %1481 = vmatmul.f32.gmra.mxu0 %v1480
        %v1482 = vpop.f32.mrf.mxu0
        %v1483 = vadd.f32 %v1198, %v1482
        %v1484 = vand.u32 %v326, 4294901760
        %v1485 = vsub.f32 %v326, %v1484
        %v1486 = vand.u32 %v1485, 4294901760
        %1487 = vmatmul.f32.gmra.mxu0 %v1486
        %v1488 = vpop.f32.mrf.mxu0
        %v1489 = vadd.f32 %v1203, %v1488
        %v1490 = vand.u32 %v329, 4294901760
        %v1491 = vsub.f32 %v329, %v1490
        %v1492 = vand.u32 %v1491, 4294901760
        %1493 = vmatmul.f32.gmra.mxu0 %v1492
        %v1494 = vpop.f32.mrf.mxu0
        %v1495 = vadd.f32 %v1208, %v1494
        %v1496 = vand.u32 %v332, 4294901760
        %v1497 = vsub.f32 %v332, %v1496
        %v1498 = vand.u32 %v1497, 4294901760
        %1499 = vmatmul.f32.gmra.mxu0 %v1498
        %v1500 = vpop.f32.mrf.mxu0
        %v1501 = vadd.f32 %v1213, %v1500
        %v1502 = vand.u32 %v335, 4294901760
        %v1503 = vsub.f32 %v335, %v1502
        %v1504 = vand.u32 %v1503, 4294901760
        %1505 = vmatmul.f32.gmra.mxu0 %v1504
        %v1506 = vpop.f32.mrf.mxu0
        %v1507 = vadd.f32 %v1218, %v1506
        %v1508 = vand.u32 %v338, 4294901760
        %v1509 = vsub.f32 %v338, %v1508
        %v1510 = vand.u32 %v1509, 4294901760
        %1511 = vmatmul.f32.gmra.mxu0 %v1510
        %v1512 = vpop.f32.mrf.mxu0
        %v1513 = vadd.f32 %v1223, %v1512
        %v1514 = vand.u32 %v341, 4294901760
        %v1515 = vsub.f32 %v341, %v1514
        %v1516 = vand.u32 %v1515, 4294901760
        %1517 = vmatmul.f32.gmra.mxu0 %v1516
        %v1518 = vpop.f32.mrf.mxu0
        %v1519 = vadd.f32 %v1228, %v1518
        %v1520 = vand.u32 %v344, 4294901760
        %v1521 = vsub.f32 %v344, %v1520
        %v1522 = vand.u32 %v1521, 4294901760
        %1523 = vmatmul.f32.gmra.mxu0 %v1522
        %v1524 = vpop.f32.mrf.mxu0
        %v1525 = vadd.f32 %v1233, %v1524
        %v1526 = vand.u32 %v347, 4294901760
        %v1527 = vsub.f32 %v347, %v1526
        %v1528 = vand.u32 %v1527, 4294901760
        %1529 = vmatmul.f32.gmra.mxu0 %v1528
        %v1530 = vpop.f32.mrf.mxu0
        %v1531 = vadd.f32 %v1238, %v1530
        %v1532 = vand.u32 %v350, 4294901760
        %v1533 = vsub.f32 %v350, %v1532
        %v1534 = vand.u32 %v1533, 4294901760
        %1535 = vmatmul.f32.gmra.mxu0 %v1534
        %v1536 = vpop.f32.mrf.mxu0
        %v1537 = vadd.f32 %v1243, %v1536
        %v1538 = vand.u32 %v353, 4294901760
        %v1539 = vsub.f32 %v353, %v1538
        %v1540 = vand.u32 %v1539, 4294901760
        %1541 = vmatmul.f32.gmra.mxu0 %v1540
        %v1542 = vpop.f32.mrf.mxu0
        %v1543 = vadd.f32 %v1248, %v1542
        %v1544 = vand.u32 %v356, 4294901760
        %v1545 = vsub.f32 %v356, %v1544
        %v1546 = vand.u32 %v1545, 4294901760
        %1547 = vmatmul.f32.gmra.mxu0 %v1546
        %v1548 = vpop.f32.mrf.mxu0
        %v1549 = vadd.f32 %v1253, %v1548
        %v1550 = vand.u32 %v359, 4294901760
        %v1551 = vsub.f32 %v359, %v1550
        %v1552 = vand.u32 %v1551, 4294901760
        %1553 = vmatmul.f32.gmra.mxu0 %v1552
        %v1554 = vpop.f32.mrf.mxu0
        %v1555 = vadd.f32 %v1258, %v1554
        %v1556 = vand.u32 %v362, 4294901760
        %v1557 = vsub.f32 %v362, %v1556
        %v1558 = vand.u32 %v1557, 4294901760
        %1559 = vmatmul.f32.gmra.mxu0 %v1558
        %v1560 = vpop.f32.mrf.mxu0
        %v1561 = vadd.f32 %v1263, %v1560
        %v1562 = vand.u32 %v365, 4294901760
        %v1563 = vsub.f32 %v365, %v1562
        %v1564 = vand.u32 %v1563, 4294901760
        %1565 = vmatmul.f32.gmra.mxu0 %v1564
        %v1566 = vpop.f32.mrf.mxu0
        %v1567 = vadd.f32 %v1268, %v1566
        %v1568 = vand.u32 %v368, 4294901760
        %v1569 = vsub.f32 %v368, %v1568
        %v1570 = vand.u32 %v1569, 4294901760
        %1571 = vmatmul.f32.gmra.mxu0 %v1570
        %v1572 = vpop.f32.mrf.mxu0
        %v1573 = vadd.f32 %v1273, %v1572
        %v1574 = vand.u32 %v371, 4294901760
        %v1575 = vsub.f32 %v371, %v1574
        %v1576 = vand.u32 %v1575, 4294901760
        %1577 = vmatmul.f32.gmra.mxu0 %v1576
        %v1578 = vpop.f32.mrf.mxu0
        %v1579 = vadd.f32 %v1278, %v1578
        %v1580 = vand.u32 %v374, 4294901760
        %v1581 = vsub.f32 %v374, %v1580
        %v1582 = vand.u32 %v1581, 4294901760
        %1583 = vmatmul.f32.gmra.mxu0 %v1582
        %v1584 = vpop.f32.mrf.mxu0
        %v1585 = vadd.f32 %v1283, %v1584
        %v1586 = vand.u32 %v377, 4294901760
        %v1587 = vsub.f32 %v377, %v1586
        %v1588 = vand.u32 %v1587, 4294901760
        %1589 = vmatmul.f32.gmra.mxu0 %v1588
        %v1590 = vpop.f32.mrf.mxu0
        %v1591 = vadd.f32 %v1288, %v1590
        %v1592 = vand.u32 %v380, 4294901760
        %v1593 = vsub.f32 %v380, %v1592
        %v1594 = vand.u32 %v1593, 4294901760
        %1595 = vmatmul.f32.gmra.mxu0 %v1594
        %v1596 = vpop.f32.mrf.mxu0
        %v1597 = vadd.f32 %v1293, %v1596
        %v1598 = vand.u32 %v383, 4294901760
        %v1599 = vsub.f32 %v383, %v1598
        %v1600 = vand.u32 %v1599, 4294901760
        %1601 = vmatmul.f32.gmra.mxu0 %v1600
        %v1602 = vpop.f32.mrf.mxu0
        %v1603 = vadd.f32 %v1298, %v1602
        %v1604 = vand.u32 %v386, 4294901760
        %v1605 = vsub.f32 %v386, %v1604
        %v1606 = vand.u32 %v1605, 4294901760
        %1607 = vmatmul.f32.gmra.mxu0 %v1606
        %v1608 = vpop.f32.mrf.mxu0
        %v1609 = vadd.f32 %v1303, %v1608
        %v1610 = vand.u32 %v389, 4294901760
        %v1611 = vsub.f32 %v389, %v1610
        %v1612 = vand.u32 %v1611, 4294901760
        %1613 = vmatmul.f32.gmra.mxu0 %v1612
        %v1614 = vpop.f32.mrf.mxu0
        %v1615 = vadd.f32 %v1308, %v1614
        %v1616 = vand.u32 %v392, 4294901760
        %v1617 = vsub.f32 %v392, %v1616
        %v1618 = vand.u32 %v1617, 4294901760
        %1619 = vmatmul.f32.gmra.mxu0 %v1618
        %v1620 = vpop.f32.mrf.mxu0
        %v1621 = vadd.f32 %v1313, %v1620
        %v1622 = vand.u32 %v395, 4294901760
        %v1623 = vsub.f32 %v395, %v1622
        %v1624 = vand.u32 %v1623, 4294901760
        %1625 = vmatmul.f32.gmra.mxu0 %v1624
        %v1626 = vpop.f32.mrf.mxu0
        %v1627 = vadd.f32 %v1318, %v1626
        %v1628 = vand.u32 %v398, 4294901760
        %v1629 = vsub.f32 %v398, %v1628
        %v1630 = vand.u32 %v1629, 4294901760
        %1631 = vmatmul.f32.gmra.mxu0 %v1630
        %v1632 = vpop.f32.mrf.mxu0
        %v1633 = vadd.f32 %v1323, %v1632
        %v1634 = vand.u32 %v401, 4294901760
        %v1635 = vsub.f32 %v401, %v1634
        %v1636 = vand.u32 %v1635, 4294901760
        %1637 = vmatmul.f32.gmra.mxu0 %v1636
        %v1638 = vpop.f32.mrf.mxu0
        %v1639 = vadd.f32 %v1328, %v1638
        %v1640 = vand.u32 %v404, 4294901760
        %v1641 = vsub.f32 %v404, %v1640
        %v1642 = vand.u32 %v1641, 4294901760
        %1643 = vmatmul.f32.gmra.mxu0 %v1642
        %v1644 = vpop.f32.mrf.mxu0
        %v1645 = vadd.f32 %v1333, %v1644
        %v1646 = vand.u32 %v407, 4294901760
        %v1647 = vsub.f32 %v407, %v1646
        %v1648 = vand.u32 %v1647, 4294901760
        %1649 = vmatmul.f32.gmra.mxu0 %v1648
        %v1650 = vpop.f32.mrf.mxu0
        %v1651 = vadd.f32 %v1338, %v1650
        %1652 = vdwg.mxu0
        %1653 = vmatpush.msra.mxu0 0.0
        %1654 = vmatpush.msra.mxu0 0.0
        %1655 = vmatpush.msra.mxu0 0.0
        %1656 = vmatpush.msra.mxu0 0.0
        %1657 = vmatpush.msra.mxu0 0.0
        %1658 = vmatpush.msra.mxu0 0.0
        %1659 = vmatpush.msra.mxu0 0.0
        %1660 = vmatpush.msra.mxu0 0.0
        %v1661 = vand.u32 %v261, 4294901760
        %v1662 = vsub.f32 %v261, %v1661
        %v1663 = vand.u32 %v1662, 4294901760
        %1664 = vmatpush.msra.mxu0 %v1663
        %v1665 = vand.u32 %v258, 4294901760
        %v1666 = vsub.f32 %v258, %v1665
        %v1667 = vand.u32 %v1666, 4294901760
        %1668 = vmatpush.msra.mxu0 %v1667
        %v1669 = vand.u32 %v255, 4294901760
        %v1670 = vsub.f32 %v255, %v1669
        %v1671 = vand.u32 %v1670, 4294901760
        %1672 = vmatpush.msra.mxu0 %v1671
        %v1673 = vand.u32 %v252, 4294901760
        %v1674 = vsub.f32 %v252, %v1673
        %v1675 = vand.u32 %v1674, 4294901760
        %1676 = vmatpush.msra.mxu0 %v1675
        %v1677 = vand.u32 %v249, 4294901760
        %v1678 = vsub.f32 %v249, %v1677
        %v1679 = vand.u32 %v1678, 4294901760
        %1680 = vmatpush.msra.mxu0 %v1679
        %v1681 = vand.u32 %v246, 4294901760
        %v1682 = vsub.f32 %v246, %v1681
        %v1683 = vand.u32 %v1682, 4294901760
        %1684 = vmatpush.msra.mxu0 %v1683
        %v1685 = vand.u32 %v243, 4294901760
        %v1686 = vsub.f32 %v243, %v1685
        %v1687 = vand.u32 %v1686, 4294901760
        %1688 = vmatpush.msra.mxu0 %v1687
        %v1689 = vand.u32 %v240, 4294901760
        %v1690 = vsub.f32 %v240, %v1689
        %v1691 = vand.u32 %v1690, 4294901760
        %1692 = vmatpush.msra.mxu0 %v1691
        %v1693 = vand.u32 %v266, 4294901760
        %1694 = vmatmul.f32.gmra.mxu0 %v1693
        %v1695 = vpop.f32.mrf.mxu0
        %v1696 = vadd.f32 %v1369, %v1695
        %v1697 = vand.u32 %v269, 4294901760
        %1698 = vmatmul.f32.gmra.mxu0 %v1697
        %v1699 = vpop.f32.mrf.mxu0
        %v1700 = vadd.f32 %v1375, %v1699
        %v1701 = vand.u32 %v272, 4294901760
        %1702 = vmatmul.f32.gmra.mxu0 %v1701
        %v1703 = vpop.f32.mrf.mxu0
        %v1704 = vadd.f32 %v1381, %v1703
        %v1705 = vand.u32 %v275, 4294901760
        %1706 = vmatmul.f32.gmra.mxu0 %v1705
        %v1707 = vpop.f32.mrf.mxu0
        %v1708 = vadd.f32 %v1387, %v1707
        %v1709 = vand.u32 %v278, 4294901760
        %1710 = vmatmul.f32.gmra.mxu0 %v1709
        %v1711 = vpop.f32.mrf.mxu0
        %v1712 = vadd.f32 %v1393, %v1711
        %v1713 = vand.u32 %v281, 4294901760
        %1714 = vmatmul.f32.gmra.mxu0 %v1713
        %v1715 = vpop.f32.mrf.mxu0
        %v1716 = vadd.f32 %v1399, %v1715
        %v1717 = vand.u32 %v284, 4294901760
        %1718 = vmatmul.f32.gmra.mxu0 %v1717
        %v1719 = vpop.f32.mrf.mxu0
        %v1720 = vadd.f32 %v1405, %v1719
        %v1721 = vand.u32 %v287, 4294901760
        %1722 = vmatmul.f32.gmra.mxu0 %v1721
        %v1723 = vpop.f32.mrf.mxu0
        %v1724 = vadd.f32 %v1411, %v1723
        %v1725 = vand.u32 %v290, 4294901760
        %1726 = vmatmul.f32.gmra.mxu0 %v1725
        %v1727 = vpop.f32.mrf.mxu0
        %v1728 = vadd.f32 %v1417, %v1727
        %v1729 = vand.u32 %v293, 4294901760
        %1730 = vmatmul.f32.gmra.mxu0 %v1729
        %v1731 = vpop.f32.mrf.mxu0
        %v1732 = vadd.f32 %v1423, %v1731
        %v1733 = vand.u32 %v296, 4294901760
        %1734 = vmatmul.f32.gmra.mxu0 %v1733
        %v1735 = vpop.f32.mrf.mxu0
        %v1736 = vadd.f32 %v1429, %v1735
        %v1737 = vand.u32 %v299, 4294901760
        %1738 = vmatmul.f32.gmra.mxu0 %v1737
        %v1739 = vpop.f32.mrf.mxu0
        %v1740 = vadd.f32 %v1435, %v1739
        %v1741 = vand.u32 %v302, 4294901760
        %1742 = vmatmul.f32.gmra.mxu0 %v1741
        %v1743 = vpop.f32.mrf.mxu0
        %v1744 = vadd.f32 %v1441, %v1743
        %v1745 = vand.u32 %v305, 4294901760
        %1746 = vmatmul.f32.gmra.mxu0 %v1745
        %v1747 = vpop.f32.mrf.mxu0
        %v1748 = vadd.f32 %v1447, %v1747
        %v1749 = vand.u32 %v308, 4294901760
        %1750 = vmatmul.f32.gmra.mxu0 %v1749
        %v1751 = vpop.f32.mrf.mxu0
        %v1752 = vadd.f32 %v1453, %v1751
        %v1753 = vand.u32 %v311, 4294901760
        %1754 = vmatmul.f32.gmra.mxu0 %v1753
        %v1755 = vpop.f32.mrf.mxu0
        %v1756 = vadd.f32 %v1459, %v1755
        %v1757 = vand.u32 %v314, 4294901760
        %1758 = vmatmul.f32.gmra.mxu0 %v1757
        %v1759 = vpop.f32.mrf.mxu0
        %v1760 = vadd.f32 %v1465, %v1759
        %v1761 = vand.u32 %v317, 4294901760
        %1762 = vmatmul.f32.gmra.mxu0 %v1761
        %v1763 = vpop.f32.mrf.mxu0
        %v1764 = vadd.f32 %v1471, %v1763
        %v1765 = vand.u32 %v320, 4294901760
        %1766 = vmatmul.f32.gmra.mxu0 %v1765
        %v1767 = vpop.f32.mrf.mxu0
        %v1768 = vadd.f32 %v1477, %v1767
        %v1769 = vand.u32 %v323, 4294901760
        %1770 = vmatmul.f32.gmra.mxu0 %v1769
        %v1771 = vpop.f32.mrf.mxu0
        %v1772 = vadd.f32 %v1483, %v1771
        %v1773 = vand.u32 %v326, 4294901760
        %1774 = vmatmul.f32.gmra.mxu0 %v1773
        %v1775 = vpop.f32.mrf.mxu0
        %v1776 = vadd.f32 %v1489, %v1775
        %v1777 = vand.u32 %v329, 4294901760
        %1778 = vmatmul.f32.gmra.mxu0 %v1777
        %v1779 = vpop.f32.mrf.mxu0
        %v1780 = vadd.f32 %v1495, %v1779
        %v1781 = vand.u32 %v332, 4294901760
        %1782 = vmatmul.f32.gmra.mxu0 %v1781
        %v1783 = vpop.f32.mrf.mxu0
        %v1784 = vadd.f32 %v1501, %v1783
        %v1785 = vand.u32 %v335, 4294901760
        %1786 = vmatmul.f32.gmra.mxu0 %v1785
        %v1787 = vpop.f32.mrf.mxu0
        %v1788 = vadd.f32 %v1507, %v1787
        %v1789 = vand.u32 %v338, 4294901760
        %1790 = vmatmul.f32.gmra.mxu0 %v1789
        %v1791 = vpop.f32.mrf.mxu0
        %v1792 = vadd.f32 %v1513, %v1791
        %v1793 = vand.u32 %v341, 4294901760
        %1794 = vmatmul.f32.gmra.mxu0 %v1793
        %v1795 = vpop.f32.mrf.mxu0
        %v1796 = vadd.f32 %v1519, %v1795
        %v1797 = vand.u32 %v344, 4294901760
        %1798 = vmatmul.f32.gmra.mxu0 %v1797
        %v1799 = vpop.f32.mrf.mxu0
        %v1800 = vadd.f32 %v1525, %v1799
        %v1801 = vand.u32 %v347, 4294901760
        %1802 = vmatmul.f32.gmra.mxu0 %v1801
        %v1803 = vpop.f32.mrf.mxu0
        %v1804 = vadd.f32 %v1531, %v1803
        %v1805 = vand.u32 %v350, 4294901760
        %1806 = vmatmul.f32.gmra.mxu0 %v1805
        %v1807 = vpop.f32.mrf.mxu0
        %v1808 = vadd.f32 %v1537, %v1807
        %v1809 = vand.u32 %v353, 4294901760
        %1810 = vmatmul.f32.gmra.mxu0 %v1809
        %v1811 = vpop.f32.mrf.mxu0
        %v1812 = vadd.f32 %v1543, %v1811
        %v1813 = vand.u32 %v356, 4294901760
        %1814 = vmatmul.f32.gmra.mxu0 %v1813
        %v1815 = vpop.f32.mrf.mxu0
        %v1816 = vadd.f32 %v1549, %v1815
        %v1817 = vand.u32 %v359, 4294901760
        %1818 = vmatmul.f32.gmra.mxu0 %v1817
        %v1819 = vpop.f32.mrf.mxu0
        %v1820 = vadd.f32 %v1555, %v1819
        %v1821 = vand.u32 %v362, 4294901760
        %1822 = vmatmul.f32.gmra.mxu0 %v1821
        %v1823 = vpop.f32.mrf.mxu0
        %v1824 = vadd.f32 %v1561, %v1823
        %v1825 = vand.u32 %v365, 4294901760
        %1826 = vmatmul.f32.gmra.mxu0 %v1825
        %v1827 = vpop.f32.mrf.mxu0
        %v1828 = vadd.f32 %v1567, %v1827
        %v1829 = vand.u32 %v368, 4294901760
        %1830 = vmatmul.f32.gmra.mxu0 %v1829
        %v1831 = vpop.f32.mrf.mxu0
        %v1832 = vadd.f32 %v1573, %v1831
        %v1833 = vand.u32 %v371, 4294901760
        %1834 = vmatmul.f32.gmra.mxu0 %v1833
        %v1835 = vpop.f32.mrf.mxu0
        %v1836 = vadd.f32 %v1579, %v1835
        %v1837 = vand.u32 %v374, 4294901760
        %1838 = vmatmul.f32.gmra.mxu0 %v1837
        %v1839 = vpop.f32.mrf.mxu0
        %v1840 = vadd.f32 %v1585, %v1839
        %v1841 = vand.u32 %v377, 4294901760
        %1842 = vmatmul.f32.gmra.mxu0 %v1841
        %v1843 = vpop.f32.mrf.mxu0
        %v1844 = vadd.f32 %v1591, %v1843
        %v1845 = vand.u32 %v380, 4294901760
        %1846 = vmatmul.f32.gmra.mxu0 %v1845
        %v1847 = vpop.f32.mrf.mxu0
        %v1848 = vadd.f32 %v1597, %v1847
        %v1849 = vand.u32 %v383, 4294901760
        %1850 = vmatmul.f32.gmra.mxu0 %v1849
        %v1851 = vpop.f32.mrf.mxu0
        %v1852 = vadd.f32 %v1603, %v1851
        %v1853 = vand.u32 %v386, 4294901760
        %1854 = vmatmul.f32.gmra.mxu0 %v1853
        %v1855 = vpop.f32.mrf.mxu0
        %v1856 = vadd.f32 %v1609, %v1855
        %v1857 = vand.u32 %v389, 4294901760
        %1858 = vmatmul.f32.gmra.mxu0 %v1857
        %v1859 = vpop.f32.mrf.mxu0
        %v1860 = vadd.f32 %v1615, %v1859
        %v1861 = vand.u32 %v392, 4294901760
        %1862 = vmatmul.f32.gmra.mxu0 %v1861
        %v1863 = vpop.f32.mrf.mxu0
        %v1864 = vadd.f32 %v1621, %v1863
        %v1865 = vand.u32 %v395, 4294901760
        %1866 = vmatmul.f32.gmra.mxu0 %v1865
        %v1867 = vpop.f32.mrf.mxu0
        %v1868 = vadd.f32 %v1627, %v1867
        %v1869 = vand.u32 %v398, 4294901760
        %1870 = vmatmul.f32.gmra.mxu0 %v1869
        %v1871 = vpop.f32.mrf.mxu0
        %v1872 = vadd.f32 %v1633, %v1871
        %v1873 = vand.u32 %v401, 4294901760
        %1874 = vmatmul.f32.gmra.mxu0 %v1873
        %v1875 = vpop.f32.mrf.mxu0
        %v1876 = vadd.f32 %v1639, %v1875
        %v1877 = vand.u32 %v404, 4294901760
        %1878 = vmatmul.f32.gmra.mxu0 %v1877
        %v1879 = vpop.f32.mrf.mxu0
        %v1880 = vadd.f32 %v1645, %v1879
        %v1881 = vand.u32 %v407, 4294901760
        %1882 = vmatmul.f32.gmra.mxu0 %v1881
        %v1883 = vpop.f32.mrf.mxu0
        %v1884 = vadd.f32 %v1651, %v1883
        %1885 = vdwg.mxu0
        %1886 = vmatpush.msra.mxu0 0.0
        %1887 = vmatpush.msra.mxu0 0.0
        %1888 = vmatpush.msra.mxu0 0.0
        %1889 = vmatpush.msra.mxu0 0.0
        %1890 = vmatpush.msra.mxu0 0.0
        %1891 = vmatpush.msra.mxu0 0.0
        %1892 = vmatpush.msra.mxu0 0.0
        %1893 = vmatpush.msra.mxu0 0.0
        %v1894 = vand.u32 %v261, 4294901760
        %1895 = vmatpush.msra.mxu0 %v1894
        %v1896 = vand.u32 %v258, 4294901760
        %1897 = vmatpush.msra.mxu0 %v1896
        %v1898 = vand.u32 %v255, 4294901760
        %1899 = vmatpush.msra.mxu0 %v1898
        %v1900 = vand.u32 %v252, 4294901760
        %1901 = vmatpush.msra.mxu0 %v1900
        %v1902 = vand.u32 %v249, 4294901760
        %1903 = vmatpush.msra.mxu0 %v1902
        %v1904 = vand.u32 %v246, 4294901760
        %1905 = vmatpush.msra.mxu0 %v1904
        %v1906 = vand.u32 %v243, 4294901760
        %1907 = vmatpush.msra.mxu0 %v1906
        %v1908 = vand.u32 %v240, 4294901760
        %1909 = vmatpush.msra.mxu0 %v1908
        %v1910 = vand.u32 %v266, 4294901760
        %1911 = vmatmul.f32.gmra.mxu0 %v1910
        %v1912 = vpop.f32.mrf.mxu0
        %v1913 = vadd.f32 %v1696, %v1912
        %v1914 = vand.u32 %v269, 4294901760
        %1915 = vmatmul.f32.gmra.mxu0 %v1914
        %v1916 = vpop.f32.mrf.mxu0
        %v1917 = vadd.f32 %v1700, %v1916
        %v1918 = vand.u32 %v272, 4294901760
        %1919 = vmatmul.f32.gmra.mxu0 %v1918
        %v1920 = vpop.f32.mrf.mxu0
        %v1921 = vadd.f32 %v1704, %v1920
        %v1922 = vand.u32 %v275, 4294901760
        %1923 = vmatmul.f32.gmra.mxu0 %v1922
        %v1924 = vpop.f32.mrf.mxu0
        %v1925 = vadd.f32 %v1708, %v1924
        %v1926 = vand.u32 %v278, 4294901760
        %1927 = vmatmul.f32.gmra.mxu0 %v1926
        %v1928 = vpop.f32.mrf.mxu0
        %v1929 = vadd.f32 %v1712, %v1928
        %v1930 = vand.u32 %v281, 4294901760
        %1931 = vmatmul.f32.gmra.mxu0 %v1930
        %v1932 = vpop.f32.mrf.mxu0
        %v1933 = vadd.f32 %v1716, %v1932
        %v1934 = vand.u32 %v284, 4294901760
        %1935 = vmatmul.f32.gmra.mxu0 %v1934
        %v1936 = vpop.f32.mrf.mxu0
        %v1937 = vadd.f32 %v1720, %v1936
        %v1938 = vand.u32 %v287, 4294901760
        %1939 = vmatmul.f32.gmra.mxu0 %v1938
        %v1940 = vpop.f32.mrf.mxu0
        %v1941 = vadd.f32 %v1724, %v1940
        %v1942 = vand.u32 %v290, 4294901760
        %1943 = vmatmul.f32.gmra.mxu0 %v1942
        %v1944 = vpop.f32.mrf.mxu0
        %v1945 = vadd.f32 %v1728, %v1944
        %v1946 = vand.u32 %v293, 4294901760
        %1947 = vmatmul.f32.gmra.mxu0 %v1946
        %v1948 = vpop.f32.mrf.mxu0
        %v1949 = vadd.f32 %v1732, %v1948
        %v1950 = vand.u32 %v296, 4294901760
        %1951 = vmatmul.f32.gmra.mxu0 %v1950
        %v1952 = vpop.f32.mrf.mxu0
        %v1953 = vadd.f32 %v1736, %v1952
        %v1954 = vand.u32 %v299, 4294901760
        %1955 = vmatmul.f32.gmra.mxu0 %v1954
        %v1956 = vpop.f32.mrf.mxu0
        %v1957 = vadd.f32 %v1740, %v1956
        %v1958 = vand.u32 %v302, 4294901760
        %1959 = vmatmul.f32.gmra.mxu0 %v1958
        %v1960 = vpop.f32.mrf.mxu0
        %v1961 = vadd.f32 %v1744, %v1960
        %v1962 = vand.u32 %v305, 4294901760
        %1963 = vmatmul.f32.gmra.mxu0 %v1962
        %v1964 = vpop.f32.mrf.mxu0
        %v1965 = vadd.f32 %v1748, %v1964
        %v1966 = vand.u32 %v308, 4294901760
        %1967 = vmatmul.f32.gmra.mxu0 %v1966
        %v1968 = vpop.f32.mrf.mxu0
        %v1969 = vadd.f32 %v1752, %v1968
        %v1970 = vand.u32 %v311, 4294901760
        %1971 = vmatmul.f32.gmra.mxu0 %v1970
        %v1972 = vpop.f32.mrf.mxu0
        %v1973 = vadd.f32 %v1756, %v1972
        %v1974 = vand.u32 %v314, 4294901760
        %1975 = vmatmul.f32.gmra.mxu0 %v1974
        %v1976 = vpop.f32.mrf.mxu0
        %v1977 = vadd.f32 %v1760, %v1976
        %v1978 = vand.u32 %v317, 4294901760
        %1979 = vmatmul.f32.gmra.mxu0 %v1978
        %v1980 = vpop.f32.mrf.mxu0
        %v1981 = vadd.f32 %v1764, %v1980
        %v1982 = vand.u32 %v320, 4294901760
        %1983 = vmatmul.f32.gmra.mxu0 %v1982
        %v1984 = vpop.f32.mrf.mxu0
        %v1985 = vadd.f32 %v1768, %v1984
        %v1986 = vand.u32 %v323, 4294901760
        %1987 = vmatmul.f32.gmra.mxu0 %v1986
        %v1988 = vpop.f32.mrf.mxu0
        %v1989 = vadd.f32 %v1772, %v1988
        %v1990 = vand.u32 %v326, 4294901760
        %1991 = vmatmul.f32.gmra.mxu0 %v1990
        %v1992 = vpop.f32.mrf.mxu0
        %v1993 = vadd.f32 %v1776, %v1992
        %v1994 = vand.u32 %v329, 4294901760
        %1995 = vmatmul.f32.gmra.mxu0 %v1994
        %v1996 = vpop.f32.mrf.mxu0
        %v1997 = vadd.f32 %v1780, %v1996
        %v1998 = vand.u32 %v332, 4294901760
        %1999 = vmatmul.f32.gmra.mxu0 %v1998
        %v2000 = vpop.f32.mrf.mxu0
        %v2001 = vadd.f32 %v1784, %v2000
        %v2002 = vand.u32 %v335, 4294901760
        %2003 = vmatmul.f32.gmra.mxu0 %v2002
        %v2004 = vpop.f32.mrf.mxu0
        %v2005 = vadd.f32 %v1788, %v2004
        %v2006 = vand.u32 %v338, 4294901760
        %2007 = vmatmul.f32.gmra.mxu0 %v2006
        %v2008 = vpop.f32.mrf.mxu0
        %v2009 = vadd.f32 %v1792, %v2008
        %v2010 = vand.u32 %v341, 4294901760
        %2011 = vmatmul.f32.gmra.mxu0 %v2010
        %v2012 = vpop.f32.mrf.mxu0
        %v2013 = vadd.f32 %v1796, %v2012
        %v2014 = vand.u32 %v344, 4294901760
        %2015 = vmatmul.f32.gmra.mxu0 %v2014
        %v2016 = vpop.f32.mrf.mxu0
        %v2017 = vadd.f32 %v1800, %v2016
        %v2018 = vand.u32 %v347, 4294901760
        %2019 = vmatmul.f32.gmra.mxu0 %v2018
        %v2020 = vpop.f32.mrf.mxu0
        %v2021 = vadd.f32 %v1804, %v2020
        %v2022 = vand.u32 %v350, 4294901760
        %2023 = vmatmul.f32.gmra.mxu0 %v2022
        %v2024 = vpop.f32.mrf.mxu0
        %v2025 = vadd.f32 %v1808, %v2024
        %v2026 = vand.u32 %v353, 4294901760
        %2027 = vmatmul.f32.gmra.mxu0 %v2026
        %v2028 = vpop.f32.mrf.mxu0
        %v2029 = vadd.f32 %v1812, %v2028
        %v2030 = vand.u32 %v356, 4294901760
        %2031 = vmatmul.f32.gmra.mxu0 %v2030
        %v2032 = vpop.f32.mrf.mxu0
        %v2033 = vadd.f32 %v1816, %v2032
        %v2034 = vand.u32 %v359, 4294901760
        %2035 = vmatmul.f32.gmra.mxu0 %v2034
        %v2036 = vpop.f32.mrf.mxu0
        %v2037 = vadd.f32 %v1820, %v2036
        %v2038 = vand.u32 %v362, 4294901760
        %2039 = vmatmul.f32.gmra.mxu0 %v2038
        %v2040 = vpop.f32.mrf.mxu0
        %v2041 = vadd.f32 %v1824, %v2040
        %v2042 = vand.u32 %v365, 4294901760
        %2043 = vmatmul.f32.gmra.mxu0 %v2042
        %v2044 = vpop.f32.mrf.mxu0
        %v2045 = vadd.f32 %v1828, %v2044
        %v2046 = vand.u32 %v368, 4294901760
        %2047 = vmatmul.f32.gmra.mxu0 %v2046
        %v2048 = vpop.f32.mrf.mxu0
        %v2049 = vadd.f32 %v1832, %v2048
        %v2050 = vand.u32 %v371, 4294901760
        %2051 = vmatmul.f32.gmra.mxu0 %v2050
        %v2052 = vpop.f32.mrf.mxu0
        %v2053 = vadd.f32 %v1836, %v2052
        %v2054 = vand.u32 %v374, 4294901760
        %2055 = vmatmul.f32.gmra.mxu0 %v2054
        %v2056 = vpop.f32.mrf.mxu0
        %v2057 = vadd.f32 %v1840, %v2056
        %v2058 = vand.u32 %v377, 4294901760
        %2059 = vmatmul.f32.gmra.mxu0 %v2058
        %v2060 = vpop.f32.mrf.mxu0
        %v2061 = vadd.f32 %v1844, %v2060
        %v2062 = vand.u32 %v380, 4294901760
        %2063 = vmatmul.f32.gmra.mxu0 %v2062
        %v2064 = vpop.f32.mrf.mxu0
        %v2065 = vadd.f32 %v1848, %v2064
        %v2066 = vand.u32 %v383, 4294901760
        %2067 = vmatmul.f32.gmra.mxu0 %v2066
        %v2068 = vpop.f32.mrf.mxu0
        %v2069 = vadd.f32 %v1852, %v2068
        %v2070 = vand.u32 %v386, 4294901760
        %2071 = vmatmul.f32.gmra.mxu0 %v2070
        %v2072 = vpop.f32.mrf.mxu0
        %v2073 = vadd.f32 %v1856, %v2072
        %v2074 = vand.u32 %v389, 4294901760
        %2075 = vmatmul.f32.gmra.mxu0 %v2074
        %v2076 = vpop.f32.mrf.mxu0
        %v2077 = vadd.f32 %v1860, %v2076
        %v2078 = vand.u32 %v392, 4294901760
        %2079 = vmatmul.f32.gmra.mxu0 %v2078
        %v2080 = vpop.f32.mrf.mxu0
        %v2081 = vadd.f32 %v1864, %v2080
        %v2082 = vand.u32 %v395, 4294901760
        %2083 = vmatmul.f32.gmra.mxu0 %v2082
        %v2084 = vpop.f32.mrf.mxu0
        %v2085 = vadd.f32 %v1868, %v2084
        %v2086 = vand.u32 %v398, 4294901760
        %2087 = vmatmul.f32.gmra.mxu0 %v2086
        %v2088 = vpop.f32.mrf.mxu0
        %v2089 = vadd.f32 %v1872, %v2088
        %v2090 = vand.u32 %v401, 4294901760
        %2091 = vmatmul.f32.gmra.mxu0 %v2090
        %v2092 = vpop.f32.mrf.mxu0
        %v2093 = vadd.f32 %v1876, %v2092
        %v2094 = vand.u32 %v404, 4294901760
        %2095 = vmatmul.f32.gmra.mxu0 %v2094
        %v2096 = vpop.f32.mrf.mxu0
        %v2097 = vadd.f32 %v1880, %v2096
        %v2098 = vand.u32 %v407, 4294901760
        %2099 = vmatmul.f32.gmra.mxu0 %v2098
        %v2100 = vpop.f32.mrf.mxu0
        %v2101 = vadd.f32 %v1884, %v2100
        %2102 = vdwg.mxu0
        %2103 = vmatpush.msra.mxu0 0.0
        %2104 = vmatpush.msra.mxu0 0.0
        %2105 = vmatpush.msra.mxu0 0.0
        %2106 = vmatpush.msra.mxu0 0.0
        %2107 = vmatpush.msra.mxu0 0.0
        %2108 = vmatpush.msra.mxu0 0.0
        %2109 = vmatpush.msra.mxu0 0.0
        %2110 = vmatpush.msra.mxu0 0.0
        %v2111 = vand.u32 %v262, 4294901760
        %2112 = vmatpush.msra.mxu0 %v2111
        %v2113 = vand.u32 %v259, 4294901760
        %2114 = vmatpush.msra.mxu0 %v2113
        %v2115 = vand.u32 %v256, 4294901760
        %2116 = vmatpush.msra.mxu0 %v2115
        %v2117 = vand.u32 %v253, 4294901760
        %2118 = vmatpush.msra.mxu0 %v2117
        %v2119 = vand.u32 %v250, 4294901760
        %2120 = vmatpush.msra.mxu0 %v2119
        %v2121 = vand.u32 %v247, 4294901760
        %2122 = vmatpush.msra.mxu0 %v2121
        %v2123 = vand.u32 %v244, 4294901760
        %2124 = vmatpush.msra.mxu0 %v2123
        %v2125 = vand.u32 %v241, 4294901760
        %2126 = vmatpush.msra.mxu0 %v2125
        %v2127 = vand.u32 %v266, 4294901760
        %v2128 = vsub.f32 %v266, %v2127
        %v2129 = vand.u32 %v2128, 4294901760
        %v2130 = vsub.f32 %v2128, %v2129
        %v2131 = vand.u32 %v2130, 4294901760
        %2132 = vmatmul.f32.gmra.mxu0 %v2131
        %v2133 = vpop.f32.mrf.mxu0
        %v2134 = vadd.f32 0.0, %v2133
        %v2135 = vand.u32 %v269, 4294901760
        %v2136 = vsub.f32 %v269, %v2135
        %v2137 = vand.u32 %v2136, 4294901760
        %v2138 = vsub.f32 %v2136, %v2137
        %v2139 = vand.u32 %v2138, 4294901760
        %2140 = vmatmul.f32.gmra.mxu0 %v2139
        %v2141 = vpop.f32.mrf.mxu0
        %v2142 = vadd.f32 0.0, %v2141
        %v2143 = vand.u32 %v272, 4294901760
        %v2144 = vsub.f32 %v272, %v2143
        %v2145 = vand.u32 %v2144, 4294901760
        %v2146 = vsub.f32 %v2144, %v2145
        %v2147 = vand.u32 %v2146, 4294901760
        %2148 = vmatmul.f32.gmra.mxu0 %v2147
        %v2149 = vpop.f32.mrf.mxu0
        %v2150 = vadd.f32 0.0, %v2149
        %v2151 = vand.u32 %v275, 4294901760
        %v2152 = vsub.f32 %v275, %v2151
        %v2153 = vand.u32 %v2152, 4294901760
        %v2154 = vsub.f32 %v2152, %v2153
        %v2155 = vand.u32 %v2154, 4294901760
        %2156 = vmatmul.f32.gmra.mxu0 %v2155
        %v2157 = vpop.f32.mrf.mxu0
        %v2158 = vadd.f32 0.0, %v2157
        %v2159 = vand.u32 %v278, 4294901760
        %v2160 = vsub.f32 %v278, %v2159
        %v2161 = vand.u32 %v2160, 4294901760
        %v2162 = vsub.f32 %v2160, %v2161
        %v2163 = vand.u32 %v2162, 4294901760
        %2164 = vmatmul.f32.gmra.mxu0 %v2163
        %v2165 = vpop.f32.mrf.mxu0
        %v2166 = vadd.f32 0.0, %v2165
        %v2167 = vand.u32 %v281, 4294901760
        %v2168 = vsub.f32 %v281, %v2167
        %v2169 = vand.u32 %v2168, 4294901760
        %v2170 = vsub.f32 %v2168, %v2169
        %v2171 = vand.u32 %v2170, 4294901760
        %2172 = vmatmul.f32.gmra.mxu0 %v2171
        %v2173 = vpop.f32.mrf.mxu0
        %v2174 = vadd.f32 0.0, %v2173
        %v2175 = vand.u32 %v284, 4294901760
        %v2176 = vsub.f32 %v284, %v2175
        %v2177 = vand.u32 %v2176, 4294901760
        %v2178 = vsub.f32 %v2176, %v2177
        %v2179 = vand.u32 %v2178, 4294901760
        %2180 = vmatmul.f32.gmra.mxu0 %v2179
        %v2181 = vpop.f32.mrf.mxu0
        %v2182 = vadd.f32 0.0, %v2181
        %v2183 = vand.u32 %v287, 4294901760
        %v2184 = vsub.f32 %v287, %v2183
        %v2185 = vand.u32 %v2184, 4294901760
        %v2186 = vsub.f32 %v2184, %v2185
        %v2187 = vand.u32 %v2186, 4294901760
        %2188 = vmatmul.f32.gmra.mxu0 %v2187
        %v2189 = vpop.f32.mrf.mxu0
        %v2190 = vadd.f32 0.0, %v2189
        %v2191 = vand.u32 %v290, 4294901760
        %v2192 = vsub.f32 %v290, %v2191
        %v2193 = vand.u32 %v2192, 4294901760
        %v2194 = vsub.f32 %v2192, %v2193
        %v2195 = vand.u32 %v2194, 4294901760
        %2196 = vmatmul.f32.gmra.mxu0 %v2195
        %v2197 = vpop.f32.mrf.mxu0
        %v2198 = vadd.f32 0.0, %v2197
        %v2199 = vand.u32 %v293, 4294901760
        %v2200 = vsub.f32 %v293, %v2199
        %v2201 = vand.u32 %v2200, 4294901760
        %v2202 = vsub.f32 %v2200, %v2201
        %v2203 = vand.u32 %v2202, 4294901760
        %2204 = vmatmul.f32.gmra.mxu0 %v2203
        %v2205 = vpop.f32.mrf.mxu0
        %v2206 = vadd.f32 0.0, %v2205
        %v2207 = vand.u32 %v296, 4294901760
        %v2208 = vsub.f32 %v296, %v2207
        %v2209 = vand.u32 %v2208, 4294901760
        %v2210 = vsub.f32 %v2208, %v2209
        %v2211 = vand.u32 %v2210, 4294901760
        %2212 = vmatmul.f32.gmra.mxu0 %v2211
        %v2213 = vpop.f32.mrf.mxu0
        %v2214 = vadd.f32 0.0, %v2213
        %v2215 = vand.u32 %v299, 4294901760
        %v2216 = vsub.f32 %v299, %v2215
        %v2217 = vand.u32 %v2216, 4294901760
        %v2218 = vsub.f32 %v2216, %v2217
        %v2219 = vand.u32 %v2218, 4294901760
        %2220 = vmatmul.f32.gmra.mxu0 %v2219
        %v2221 = vpop.f32.mrf.mxu0
        %v2222 = vadd.f32 0.0, %v2221
        %v2223 = vand.u32 %v302, 4294901760
        %v2224 = vsub.f32 %v302, %v2223
        %v2225 = vand.u32 %v2224, 4294901760
        %v2226 = vsub.f32 %v2224, %v2225
        %v2227 = vand.u32 %v2226, 4294901760
        %2228 = vmatmul.f32.gmra.mxu0 %v2227
        %v2229 = vpop.f32.mrf.mxu0
        %v2230 = vadd.f32 0.0, %v2229
        %v2231 = vand.u32 %v305, 4294901760
        %v2232 = vsub.f32 %v305, %v2231
        %v2233 = vand.u32 %v2232, 4294901760
        %v2234 = vsub.f32 %v2232, %v2233
        %v2235 = vand.u32 %v2234, 4294901760
        %2236 = vmatmul.f32.gmra.mxu0 %v2235
        %v2237 = vpop.f32.mrf.mxu0
        %v2238 = vadd.f32 0.0, %v2237
        %v2239 = vand.u32 %v308, 4294901760
        %v2240 = vsub.f32 %v308, %v2239
        %v2241 = vand.u32 %v2240, 4294901760
        %v2242 = vsub.f32 %v2240, %v2241
        %v2243 = vand.u32 %v2242, 4294901760
        %2244 = vmatmul.f32.gmra.mxu0 %v2243
        %v2245 = vpop.f32.mrf.mxu0
        %v2246 = vadd.f32 0.0, %v2245
        %v2247 = vand.u32 %v311, 4294901760
        %v2248 = vsub.f32 %v311, %v2247
        %v2249 = vand.u32 %v2248, 4294901760
        %v2250 = vsub.f32 %v2248, %v2249
        %v2251 = vand.u32 %v2250, 4294901760
        %2252 = vmatmul.f32.gmra.mxu0 %v2251
        %v2253 = vpop.f32.mrf.mxu0
        %v2254 = vadd.f32 0.0, %v2253
        %v2255 = vand.u32 %v314, 4294901760
        %v2256 = vsub.f32 %v314, %v2255
        %v2257 = vand.u32 %v2256, 4294901760
        %v2258 = vsub.f32 %v2256, %v2257
        %v2259 = vand.u32 %v2258, 4294901760
        %2260 = vmatmul.f32.gmra.mxu0 %v2259
        %v2261 = vpop.f32.mrf.mxu0
        %v2262 = vadd.f32 0.0, %v2261
        %v2263 = vand.u32 %v317, 4294901760
        %v2264 = vsub.f32 %v317, %v2263
        %v2265 = vand.u32 %v2264, 4294901760
        %v2266 = vsub.f32 %v2264, %v2265
        %v2267 = vand.u32 %v2266, 4294901760
        %2268 = vmatmul.f32.gmra.mxu0 %v2267
        %v2269 = vpop.f32.mrf.mxu0
        %v2270 = vadd.f32 0.0, %v2269
        %v2271 = vand.u32 %v320, 4294901760
        %v2272 = vsub.f32 %v320, %v2271
        %v2273 = vand.u32 %v2272, 4294901760
        %v2274 = vsub.f32 %v2272, %v2273
        %v2275 = vand.u32 %v2274, 4294901760
        %2276 = vmatmul.f32.gmra.mxu0 %v2275
        %v2277 = vpop.f32.mrf.mxu0
        %v2278 = vadd.f32 0.0, %v2277
        %v2279 = vand.u32 %v323, 4294901760
        %v2280 = vsub.f32 %v323, %v2279
        %v2281 = vand.u32 %v2280, 4294901760
        %v2282 = vsub.f32 %v2280, %v2281
        %v2283 = vand.u32 %v2282, 4294901760
        %2284 = vmatmul.f32.gmra.mxu0 %v2283
        %v2285 = vpop.f32.mrf.mxu0
        %v2286 = vadd.f32 0.0, %v2285
        %v2287 = vand.u32 %v326, 4294901760
        %v2288 = vsub.f32 %v326, %v2287
        %v2289 = vand.u32 %v2288, 4294901760
        %v2290 = vsub.f32 %v2288, %v2289
        %v2291 = vand.u32 %v2290, 4294901760
        %2292 = vmatmul.f32.gmra.mxu0 %v2291
        %v2293 = vpop.f32.mrf.mxu0
        %v2294 = vadd.f32 0.0, %v2293
        %v2295 = vand.u32 %v329, 4294901760
        %v2296 = vsub.f32 %v329, %v2295
        %v2297 = vand.u32 %v2296, 4294901760
        %v2298 = vsub.f32 %v2296, %v2297
        %v2299 = vand.u32 %v2298, 4294901760
        %2300 = vmatmul.f32.gmra.mxu0 %v2299
        %v2301 = vpop.f32.mrf.mxu0
        %v2302 = vadd.f32 0.0, %v2301
        %v2303 = vand.u32 %v332, 4294901760
        %v2304 = vsub.f32 %v332, %v2303
        %v2305 = vand.u32 %v2304, 4294901760
        %v2306 = vsub.f32 %v2304, %v2305
        %v2307 = vand.u32 %v2306, 4294901760
        %2308 = vmatmul.f32.gmra.mxu0 %v2307
        %v2309 = vpop.f32.mrf.mxu0
        %v2310 = vadd.f32 0.0, %v2309
        %v2311 = vand.u32 %v335, 4294901760
        %v2312 = vsub.f32 %v335, %v2311
        %v2313 = vand.u32 %v2312, 4294901760
        %v2314 = vsub.f32 %v2312, %v2313
        %v2315 = vand.u32 %v2314, 4294901760
        %2316 = vmatmul.f32.gmra.mxu0 %v2315
        %v2317 = vpop.f32.mrf.mxu0
        %v2318 = vadd.f32 0.0, %v2317
        %v2319 = vand.u32 %v338, 4294901760
        %v2320 = vsub.f32 %v338, %v2319
        %v2321 = vand.u32 %v2320, 4294901760
        %v2322 = vsub.f32 %v2320, %v2321
        %v2323 = vand.u32 %v2322, 4294901760
        %2324 = vmatmul.f32.gmra.mxu0 %v2323
        %v2325 = vpop.f32.mrf.mxu0
        %v2326 = vadd.f32 0.0, %v2325
        %v2327 = vand.u32 %v341, 4294901760
        %v2328 = vsub.f32 %v341, %v2327
        %v2329 = vand.u32 %v2328, 4294901760
        %v2330 = vsub.f32 %v2328, %v2329
        %v2331 = vand.u32 %v2330, 4294901760
        %2332 = vmatmul.f32.gmra.mxu0 %v2331
        %v2333 = vpop.f32.mrf.mxu0
        %v2334 = vadd.f32 0.0, %v2333
        %v2335 = vand.u32 %v344, 4294901760
        %v2336 = vsub.f32 %v344, %v2335
        %v2337 = vand.u32 %v2336, 4294901760
        %v2338 = vsub.f32 %v2336, %v2337
        %v2339 = vand.u32 %v2338, 4294901760
        %2340 = vmatmul.f32.gmra.mxu0 %v2339
        %v2341 = vpop.f32.mrf.mxu0
        %v2342 = vadd.f32 0.0, %v2341
        %v2343 = vand.u32 %v347, 4294901760
        %v2344 = vsub.f32 %v347, %v2343
        %v2345 = vand.u32 %v2344, 4294901760
        %v2346 = vsub.f32 %v2344, %v2345
        %v2347 = vand.u32 %v2346, 4294901760
        %2348 = vmatmul.f32.gmra.mxu0 %v2347
        %v2349 = vpop.f32.mrf.mxu0
        %v2350 = vadd.f32 0.0, %v2349
        %v2351 = vand.u32 %v350, 4294901760
        %v2352 = vsub.f32 %v350, %v2351
        %v2353 = vand.u32 %v2352, 4294901760
        %v2354 = vsub.f32 %v2352, %v2353
        %v2355 = vand.u32 %v2354, 4294901760
        %2356 = vmatmul.f32.gmra.mxu0 %v2355
        %v2357 = vpop.f32.mrf.mxu0
        %v2358 = vadd.f32 0.0, %v2357
        %v2359 = vand.u32 %v353, 4294901760
        %v2360 = vsub.f32 %v353, %v2359
        %v2361 = vand.u32 %v2360, 4294901760
        %v2362 = vsub.f32 %v2360, %v2361
        %v2363 = vand.u32 %v2362, 4294901760
        %2364 = vmatmul.f32.gmra.mxu0 %v2363
        %v2365 = vpop.f32.mrf.mxu0
        %v2366 = vadd.f32 0.0, %v2365
        %v2367 = vand.u32 %v356, 4294901760
        %v2368 = vsub.f32 %v356, %v2367
        %v2369 = vand.u32 %v2368, 4294901760
        %v2370 = vsub.f32 %v2368, %v2369
        %v2371 = vand.u32 %v2370, 4294901760
        %2372 = vmatmul.f32.gmra.mxu0 %v2371
        %v2373 = vpop.f32.mrf.mxu0
        %v2374 = vadd.f32 0.0, %v2373
        %v2375 = vand.u32 %v359, 4294901760
        %v2376 = vsub.f32 %v359, %v2375
        %v2377 = vand.u32 %v2376, 4294901760
        %v2378 = vsub.f32 %v2376, %v2377
        %v2379 = vand.u32 %v2378, 4294901760
        %2380 = vmatmul.f32.gmra.mxu0 %v2379
        %v2381 = vpop.f32.mrf.mxu0
        %v2382 = vadd.f32 0.0, %v2381
        %v2383 = vand.u32 %v362, 4294901760
        %v2384 = vsub.f32 %v362, %v2383
        %v2385 = vand.u32 %v2384, 4294901760
        %v2386 = vsub.f32 %v2384, %v2385
        %v2387 = vand.u32 %v2386, 4294901760
        %2388 = vmatmul.f32.gmra.mxu0 %v2387
        %v2389 = vpop.f32.mrf.mxu0
        %v2390 = vadd.f32 0.0, %v2389
        %v2391 = vand.u32 %v365, 4294901760
        %v2392 = vsub.f32 %v365, %v2391
        %v2393 = vand.u32 %v2392, 4294901760
        %v2394 = vsub.f32 %v2392, %v2393
        %v2395 = vand.u32 %v2394, 4294901760
        %2396 = vmatmul.f32.gmra.mxu0 %v2395
        %v2397 = vpop.f32.mrf.mxu0
        %v2398 = vadd.f32 0.0, %v2397
        %v2399 = vand.u32 %v368, 4294901760
        %v2400 = vsub.f32 %v368, %v2399
        %v2401 = vand.u32 %v2400, 4294901760
        %v2402 = vsub.f32 %v2400, %v2401
        %v2403 = vand.u32 %v2402, 4294901760
        %2404 = vmatmul.f32.gmra.mxu0 %v2403
        %v2405 = vpop.f32.mrf.mxu0
        %v2406 = vadd.f32 0.0, %v2405
        %v2407 = vand.u32 %v371, 4294901760
        %v2408 = vsub.f32 %v371, %v2407
        %v2409 = vand.u32 %v2408, 4294901760
        %v2410 = vsub.f32 %v2408, %v2409
        %v2411 = vand.u32 %v2410, 4294901760
        %2412 = vmatmul.f32.gmra.mxu0 %v2411
        %v2413 = vpop.f32.mrf.mxu0
        %v2414 = vadd.f32 0.0, %v2413
        %v2415 = vand.u32 %v374, 4294901760
        %v2416 = vsub.f32 %v374, %v2415
        %v2417 = vand.u32 %v2416, 4294901760
        %v2418 = vsub.f32 %v2416, %v2417
        %v2419 = vand.u32 %v2418, 4294901760
        %2420 = vmatmul.f32.gmra.mxu0 %v2419
        %v2421 = vpop.f32.mrf.mxu0
        %v2422 = vadd.f32 0.0, %v2421
        %v2423 = vand.u32 %v377, 4294901760
        %v2424 = vsub.f32 %v377, %v2423
        %v2425 = vand.u32 %v2424, 4294901760
        %v2426 = vsub.f32 %v2424, %v2425
        %v2427 = vand.u32 %v2426, 4294901760
        %2428 = vmatmul.f32.gmra.mxu0 %v2427
        %v2429 = vpop.f32.mrf.mxu0
        %v2430 = vadd.f32 0.0, %v2429
        %v2431 = vand.u32 %v380, 4294901760
        %v2432 = vsub.f32 %v380, %v2431
        %v2433 = vand.u32 %v2432, 4294901760
        %v2434 = vsub.f32 %v2432, %v2433
        %v2435 = vand.u32 %v2434, 4294901760
        %2436 = vmatmul.f32.gmra.mxu0 %v2435
        %v2437 = vpop.f32.mrf.mxu0
        %v2438 = vadd.f32 0.0, %v2437
        %v2439 = vand.u32 %v383, 4294901760
        %v2440 = vsub.f32 %v383, %v2439
        %v2441 = vand.u32 %v2440, 4294901760
        %v2442 = vsub.f32 %v2440, %v2441
        %v2443 = vand.u32 %v2442, 4294901760
        %2444 = vmatmul.f32.gmra.mxu0 %v2443
        %v2445 = vpop.f32.mrf.mxu0
        %v2446 = vadd.f32 0.0, %v2445
        %v2447 = vand.u32 %v386, 4294901760
        %v2448 = vsub.f32 %v386, %v2447
        %v2449 = vand.u32 %v2448, 4294901760
        %v2450 = vsub.f32 %v2448, %v2449
        %v2451 = vand.u32 %v2450, 4294901760
        %2452 = vmatmul.f32.gmra.mxu0 %v2451
        %v2453 = vpop.f32.mrf.mxu0
        %v2454 = vadd.f32 0.0, %v2453
        %v2455 = vand.u32 %v389, 4294901760
        %v2456 = vsub.f32 %v389, %v2455
        %v2457 = vand.u32 %v2456, 4294901760
        %v2458 = vsub.f32 %v2456, %v2457
        %v2459 = vand.u32 %v2458, 4294901760
        %2460 = vmatmul.f32.gmra.mxu0 %v2459
        %v2461 = vpop.f32.mrf.mxu0
        %v2462 = vadd.f32 0.0, %v2461
        %v2463 = vand.u32 %v392, 4294901760
        %v2464 = vsub.f32 %v392, %v2463
        %v2465 = vand.u32 %v2464, 4294901760
        %v2466 = vsub.f32 %v2464, %v2465
        %v2467 = vand.u32 %v2466, 4294901760
        %2468 = vmatmul.f32.gmra.mxu0 %v2467
        %v2469 = vpop.f32.mrf.mxu0
        %v2470 = vadd.f32 0.0, %v2469
        %v2471 = vand.u32 %v395, 4294901760
        %v2472 = vsub.f32 %v395, %v2471
        %v2473 = vand.u32 %v2472, 4294901760
        %v2474 = vsub.f32 %v2472, %v2473
        %v2475 = vand.u32 %v2474, 4294901760
        %2476 = vmatmul.f32.gmra.mxu0 %v2475
        %v2477 = vpop.f32.mrf.mxu0
        %v2478 = vadd.f32 0.0, %v2477
        %v2479 = vand.u32 %v398, 4294901760
        %v2480 = vsub.f32 %v398, %v2479
        %v2481 = vand.u32 %v2480, 4294901760
        %v2482 = vsub.f32 %v2480, %v2481
        %v2483 = vand.u32 %v2482, 4294901760
        %2484 = vmatmul.f32.gmra.mxu0 %v2483
        %v2485 = vpop.f32.mrf.mxu0
        %v2486 = vadd.f32 0.0, %v2485
        %v2487 = vand.u32 %v401, 4294901760
        %v2488 = vsub.f32 %v401, %v2487
        %v2489 = vand.u32 %v2488, 4294901760
        %v2490 = vsub.f32 %v2488, %v2489
        %v2491 = vand.u32 %v2490, 4294901760
        %2492 = vmatmul.f32.gmra.mxu0 %v2491
        %v2493 = vpop.f32.mrf.mxu0
        %v2494 = vadd.f32 0.0, %v2493
        %v2495 = vand.u32 %v404, 4294901760
        %v2496 = vsub.f32 %v404, %v2495
        %v2497 = vand.u32 %v2496, 4294901760
        %v2498 = vsub.f32 %v2496, %v2497
        %v2499 = vand.u32 %v2498, 4294901760
        %2500 = vmatmul.f32.gmra.mxu0 %v2499
        %v2501 = vpop.f32.mrf.mxu0
        %v2502 = vadd.f32 0.0, %v2501
        %v2503 = vand.u32 %v407, 4294901760
        %v2504 = vsub.f32 %v407, %v2503
        %v2505 = vand.u32 %v2504, 4294901760
        %v2506 = vsub.f32 %v2504, %v2505
        %v2507 = vand.u32 %v2506, 4294901760
        %2508 = vmatmul.f32.gmra.mxu0 %v2507
        %v2509 = vpop.f32.mrf.mxu0
        %v2510 = vadd.f32 0.0, %v2509
        %2511 = vdwg.mxu0
        %2512 = vmatpush.msra.mxu0 0.0
        %2513 = vmatpush.msra.mxu0 0.0
        %2514 = vmatpush.msra.mxu0 0.0
        %2515 = vmatpush.msra.mxu0 0.0
        %2516 = vmatpush.msra.mxu0 0.0
        %2517 = vmatpush.msra.mxu0 0.0
        %2518 = vmatpush.msra.mxu0 0.0
        %2519 = vmatpush.msra.mxu0 0.0
        %v2520 = vand.u32 %v262, 4294901760
        %v2521 = vsub.f32 %v262, %v2520
        %v2522 = vand.u32 %v2521, 4294901760
        %v2523 = vsub.f32 %v2521, %v2522
        %v2524 = vand.u32 %v2523, 4294901760
        %2525 = vmatpush.msra.mxu0 %v2524
        %v2526 = vand.u32 %v259, 4294901760
        %v2527 = vsub.f32 %v259, %v2526
        %v2528 = vand.u32 %v2527, 4294901760
        %v2529 = vsub.f32 %v2527, %v2528
        %v2530 = vand.u32 %v2529, 4294901760
        %2531 = vmatpush.msra.mxu0 %v2530
        %v2532 = vand.u32 %v256, 4294901760
        %v2533 = vsub.f32 %v256, %v2532
        %v2534 = vand.u32 %v2533, 4294901760
        %v2535 = vsub.f32 %v2533, %v2534
        %v2536 = vand.u32 %v2535, 4294901760
        %2537 = vmatpush.msra.mxu0 %v2536
        %v2538 = vand.u32 %v253, 4294901760
        %v2539 = vsub.f32 %v253, %v2538
        %v2540 = vand.u32 %v2539, 4294901760
        %v2541 = vsub.f32 %v2539, %v2540
        %v2542 = vand.u32 %v2541, 4294901760
        %2543 = vmatpush.msra.mxu0 %v2542
        %v2544 = vand.u32 %v250, 4294901760
        %v2545 = vsub.f32 %v250, %v2544
        %v2546 = vand.u32 %v2545, 4294901760
        %v2547 = vsub.f32 %v2545, %v2546
        %v2548 = vand.u32 %v2547, 4294901760
        %2549 = vmatpush.msra.mxu0 %v2548
        %v2550 = vand.u32 %v247, 4294901760
        %v2551 = vsub.f32 %v247, %v2550
        %v2552 = vand.u32 %v2551, 4294901760
        %v2553 = vsub.f32 %v2551, %v2552
        %v2554 = vand.u32 %v2553, 4294901760
        %2555 = vmatpush.msra.mxu0 %v2554
        %v2556 = vand.u32 %v244, 4294901760
        %v2557 = vsub.f32 %v244, %v2556
        %v2558 = vand.u32 %v2557, 4294901760
        %v2559 = vsub.f32 %v2557, %v2558
        %v2560 = vand.u32 %v2559, 4294901760
        %2561 = vmatpush.msra.mxu0 %v2560
        %v2562 = vand.u32 %v241, 4294901760
        %v2563 = vsub.f32 %v241, %v2562
        %v2564 = vand.u32 %v2563, 4294901760
        %v2565 = vsub.f32 %v2563, %v2564
        %v2566 = vand.u32 %v2565, 4294901760
        %2567 = vmatpush.msra.mxu0 %v2566
        %v2568 = vand.u32 %v266, 4294901760
        %2569 = vmatmul.f32.gmra.mxu0 %v2568
        %v2570 = vpop.f32.mrf.mxu0
        %v2571 = vadd.f32 %v2134, %v2570
        %v2572 = vand.u32 %v269, 4294901760
        %2573 = vmatmul.f32.gmra.mxu0 %v2572
        %v2574 = vpop.f32.mrf.mxu0
        %v2575 = vadd.f32 %v2142, %v2574
        %v2576 = vand.u32 %v272, 4294901760
        %2577 = vmatmul.f32.gmra.mxu0 %v2576
        %v2578 = vpop.f32.mrf.mxu0
        %v2579 = vadd.f32 %v2150, %v2578
        %v2580 = vand.u32 %v275, 4294901760
        %2581 = vmatmul.f32.gmra.mxu0 %v2580
        %v2582 = vpop.f32.mrf.mxu0
        %v2583 = vadd.f32 %v2158, %v2582
        %v2584 = vand.u32 %v278, 4294901760
        %2585 = vmatmul.f32.gmra.mxu0 %v2584
        %v2586 = vpop.f32.mrf.mxu0
        %v2587 = vadd.f32 %v2166, %v2586
        %v2588 = vand.u32 %v281, 4294901760
        %2589 = vmatmul.f32.gmra.mxu0 %v2588
        %v2590 = vpop.f32.mrf.mxu0
        %v2591 = vadd.f32 %v2174, %v2590
        %v2592 = vand.u32 %v284, 4294901760
        %2593 = vmatmul.f32.gmra.mxu0 %v2592
        %v2594 = vpop.f32.mrf.mxu0
        %v2595 = vadd.f32 %v2182, %v2594
        %v2596 = vand.u32 %v287, 4294901760
        %2597 = vmatmul.f32.gmra.mxu0 %v2596
        %v2598 = vpop.f32.mrf.mxu0
        %v2599 = vadd.f32 %v2190, %v2598
        %v2600 = vand.u32 %v290, 4294901760
        %2601 = vmatmul.f32.gmra.mxu0 %v2600
        %v2602 = vpop.f32.mrf.mxu0
        %v2603 = vadd.f32 %v2198, %v2602
        %v2604 = vand.u32 %v293, 4294901760
        %2605 = vmatmul.f32.gmra.mxu0 %v2604
        %v2606 = vpop.f32.mrf.mxu0
        %v2607 = vadd.f32 %v2206, %v2606
        %v2608 = vand.u32 %v296, 4294901760
        %2609 = vmatmul.f32.gmra.mxu0 %v2608
        %v2610 = vpop.f32.mrf.mxu0
        %v2611 = vadd.f32 %v2214, %v2610
        %v2612 = vand.u32 %v299, 4294901760
        %2613 = vmatmul.f32.gmra.mxu0 %v2612
        %v2614 = vpop.f32.mrf.mxu0
        %v2615 = vadd.f32 %v2222, %v2614
        %v2616 = vand.u32 %v302, 4294901760
        %2617 = vmatmul.f32.gmra.mxu0 %v2616
        %v2618 = vpop.f32.mrf.mxu0
        %v2619 = vadd.f32 %v2230, %v2618
        %v2620 = vand.u32 %v305, 4294901760
        %2621 = vmatmul.f32.gmra.mxu0 %v2620
        %v2622 = vpop.f32.mrf.mxu0
        %v2623 = vadd.f32 %v2238, %v2622
        %v2624 = vand.u32 %v308, 4294901760
        %2625 = vmatmul.f32.gmra.mxu0 %v2624
        %v2626 = vpop.f32.mrf.mxu0
        %v2627 = vadd.f32 %v2246, %v2626
        %v2628 = vand.u32 %v311, 4294901760
        %2629 = vmatmul.f32.gmra.mxu0 %v2628
        %v2630 = vpop.f32.mrf.mxu0
        %v2631 = vadd.f32 %v2254, %v2630
        %v2632 = vand.u32 %v314, 4294901760
        %2633 = vmatmul.f32.gmra.mxu0 %v2632
        %v2634 = vpop.f32.mrf.mxu0
        %v2635 = vadd.f32 %v2262, %v2634
        %v2636 = vand.u32 %v317, 4294901760
        %2637 = vmatmul.f32.gmra.mxu0 %v2636
        %v2638 = vpop.f32.mrf.mxu0
        %v2639 = vadd.f32 %v2270, %v2638
        %v2640 = vand.u32 %v320, 4294901760
        %2641 = vmatmul.f32.gmra.mxu0 %v2640
        %v2642 = vpop.f32.mrf.mxu0
        %v2643 = vadd.f32 %v2278, %v2642
        %v2644 = vand.u32 %v323, 4294901760
        %2645 = vmatmul.f32.gmra.mxu0 %v2644
        %v2646 = vpop.f32.mrf.mxu0
        %v2647 = vadd.f32 %v2286, %v2646
        %v2648 = vand.u32 %v326, 4294901760
        %2649 = vmatmul.f32.gmra.mxu0 %v2648
        %v2650 = vpop.f32.mrf.mxu0
        %v2651 = vadd.f32 %v2294, %v2650
        %v2652 = vand.u32 %v329, 4294901760
        %2653 = vmatmul.f32.gmra.mxu0 %v2652
        %v2654 = vpop.f32.mrf.mxu0
        %v2655 = vadd.f32 %v2302, %v2654
        %v2656 = vand.u32 %v332, 4294901760
        %2657 = vmatmul.f32.gmra.mxu0 %v2656
        %v2658 = vpop.f32.mrf.mxu0
        %v2659 = vadd.f32 %v2310, %v2658
        %v2660 = vand.u32 %v335, 4294901760
        %2661 = vmatmul.f32.gmra.mxu0 %v2660
        %v2662 = vpop.f32.mrf.mxu0
        %v2663 = vadd.f32 %v2318, %v2662
        %v2664 = vand.u32 %v338, 4294901760
        %2665 = vmatmul.f32.gmra.mxu0 %v2664
        %v2666 = vpop.f32.mrf.mxu0
        %v2667 = vadd.f32 %v2326, %v2666
        %v2668 = vand.u32 %v341, 4294901760
        %2669 = vmatmul.f32.gmra.mxu0 %v2668
        %v2670 = vpop.f32.mrf.mxu0
        %v2671 = vadd.f32 %v2334, %v2670
        %v2672 = vand.u32 %v344, 4294901760
        %2673 = vmatmul.f32.gmra.mxu0 %v2672
        %v2674 = vpop.f32.mrf.mxu0
        %v2675 = vadd.f32 %v2342, %v2674
        %v2676 = vand.u32 %v347, 4294901760
        %2677 = vmatmul.f32.gmra.mxu0 %v2676
        %v2678 = vpop.f32.mrf.mxu0
        %v2679 = vadd.f32 %v2350, %v2678
        %v2680 = vand.u32 %v350, 4294901760
        %2681 = vmatmul.f32.gmra.mxu0 %v2680
        %v2682 = vpop.f32.mrf.mxu0
        %v2683 = vadd.f32 %v2358, %v2682
        %v2684 = vand.u32 %v353, 4294901760
        %2685 = vmatmul.f32.gmra.mxu0 %v2684
        %v2686 = vpop.f32.mrf.mxu0
        %v2687 = vadd.f32 %v2366, %v2686
        %v2688 = vand.u32 %v356, 4294901760
        %2689 = vmatmul.f32.gmra.mxu0 %v2688
        %v2690 = vpop.f32.mrf.mxu0
        %v2691 = vadd.f32 %v2374, %v2690
        %v2692 = vand.u32 %v359, 4294901760
        %2693 = vmatmul.f32.gmra.mxu0 %v2692
        %v2694 = vpop.f32.mrf.mxu0
        %v2695 = vadd.f32 %v2382, %v2694
        %v2696 = vand.u32 %v362, 4294901760
        %2697 = vmatmul.f32.gmra.mxu0 %v2696
        %v2698 = vpop.f32.mrf.mxu0
        %v2699 = vadd.f32 %v2390, %v2698
        %v2700 = vand.u32 %v365, 4294901760
        %2701 = vmatmul.f32.gmra.mxu0 %v2700
        %v2702 = vpop.f32.mrf.mxu0
        %v2703 = vadd.f32 %v2398, %v2702
        %v2704 = vand.u32 %v368, 4294901760
        %2705 = vmatmul.f32.gmra.mxu0 %v2704
        %v2706 = vpop.f32.mrf.mxu0
        %v2707 = vadd.f32 %v2406, %v2706
        %v2708 = vand.u32 %v371, 4294901760
        %2709 = vmatmul.f32.gmra.mxu0 %v2708
        %v2710 = vpop.f32.mrf.mxu0
        %v2711 = vadd.f32 %v2414, %v2710
        %v2712 = vand.u32 %v374, 4294901760
        %2713 = vmatmul.f32.gmra.mxu0 %v2712
        %v2714 = vpop.f32.mrf.mxu0
        %v2715 = vadd.f32 %v2422, %v2714
        %v2716 = vand.u32 %v377, 4294901760
        %2717 = vmatmul.f32.gmra.mxu0 %v2716
        %v2718 = vpop.f32.mrf.mxu0
        %v2719 = vadd.f32 %v2430, %v2718
        %v2720 = vand.u32 %v380, 4294901760
        %2721 = vmatmul.f32.gmra.mxu0 %v2720
        %v2722 = vpop.f32.mrf.mxu0
        %v2723 = vadd.f32 %v2438, %v2722
        %v2724 = vand.u32 %v383, 4294901760
        %2725 = vmatmul.f32.gmra.mxu0 %v2724
        %v2726 = vpop.f32.mrf.mxu0
        %v2727 = vadd.f32 %v2446, %v2726
        %v2728 = vand.u32 %v386, 4294901760
        %2729 = vmatmul.f32.gmra.mxu0 %v2728
        %v2730 = vpop.f32.mrf.mxu0
        %v2731 = vadd.f32 %v2454, %v2730
        %v2732 = vand.u32 %v389, 4294901760
        %2733 = vmatmul.f32.gmra.mxu0 %v2732
        %v2734 = vpop.f32.mrf.mxu0
        %v2735 = vadd.f32 %v2462, %v2734
        %v2736 = vand.u32 %v392, 4294901760
        %2737 = vmatmul.f32.gmra.mxu0 %v2736
        %v2738 = vpop.f32.mrf.mxu0
        %v2739 = vadd.f32 %v2470, %v2738
        %v2740 = vand.u32 %v395, 4294901760
        %2741 = vmatmul.f32.gmra.mxu0 %v2740
        %v2742 = vpop.f32.mrf.mxu0
        %v2743 = vadd.f32 %v2478, %v2742
        %v2744 = vand.u32 %v398, 4294901760
        %2745 = vmatmul.f32.gmra.mxu0 %v2744
        %v2746 = vpop.f32.mrf.mxu0
        %v2747 = vadd.f32 %v2486, %v2746
        %v2748 = vand.u32 %v401, 4294901760
        %2749 = vmatmul.f32.gmra.mxu0 %v2748
        %v2750 = vpop.f32.mrf.mxu0
        %v2751 = vadd.f32 %v2494, %v2750
        %v2752 = vand.u32 %v404, 4294901760
        %2753 = vmatmul.f32.gmra.mxu0 %v2752
        %v2754 = vpop.f32.mrf.mxu0
        %v2755 = vadd.f32 %v2502, %v2754
        %v2756 = vand.u32 %v407, 4294901760
        %2757 = vmatmul.f32.gmra.mxu0 %v2756
        %v2758 = vpop.f32.mrf.mxu0
        %v2759 = vadd.f32 %v2510, %v2758
        %2760 = vdwg.mxu0
        %2761 = vmatpush.msra.mxu0 0.0
        %2762 = vmatpush.msra.mxu0 0.0
        %2763 = vmatpush.msra.mxu0 0.0
        %2764 = vmatpush.msra.mxu0 0.0
        %2765 = vmatpush.msra.mxu0 0.0
        %2766 = vmatpush.msra.mxu0 0.0
        %2767 = vmatpush.msra.mxu0 0.0
        %2768 = vmatpush.msra.mxu0 0.0
        %v2769 = vand.u32 %v262, 4294901760
        %v2770 = vsub.f32 %v262, %v2769
        %2771 = vmatpush.msra.mxu0 %v2770
        %v2772 = vand.u32 %v259, 4294901760
        %v2773 = vsub.f32 %v259, %v2772
        %2774 = vmatpush.msra.mxu0 %v2773
        %v2775 = vand.u32 %v256, 4294901760
        %v2776 = vsub.f32 %v256, %v2775
        %2777 = vmatpush.msra.mxu0 %v2776
        %v2778 = vand.u32 %v253, 4294901760
        %v2779 = vsub.f32 %v253, %v2778
        %2780 = vmatpush.msra.mxu0 %v2779
        %v2781 = vand.u32 %v250, 4294901760
        %v2782 = vsub.f32 %v250, %v2781
        %2783 = vmatpush.msra.mxu0 %v2782
        %v2784 = vand.u32 %v247, 4294901760
        %v2785 = vsub.f32 %v247, %v2784
        %2786 = vmatpush.msra.mxu0 %v2785
        %v2787 = vand.u32 %v244, 4294901760
        %v2788 = vsub.f32 %v244, %v2787
        %2789 = vmatpush.msra.mxu0 %v2788
        %v2790 = vand.u32 %v241, 4294901760
        %v2791 = vsub.f32 %v241, %v2790
        %2792 = vmatpush.msra.mxu0 %v2791
        %v2793 = vand.u32 %v266, 4294901760
        %v2794 = vsub.f32 %v266, %v2793
        %2795 = vmatmul.f32.gmra.mxu0 %v2794
        %v2796 = vpop.f32.mrf.mxu0
        %v2797 = vadd.f32 %v2571, %v2796
        %v2798 = vand.u32 %v269, 4294901760
        %v2799 = vsub.f32 %v269, %v2798
        %2800 = vmatmul.f32.gmra.mxu0 %v2799
        %v2801 = vpop.f32.mrf.mxu0
        %v2802 = vadd.f32 %v2575, %v2801
        %v2803 = vand.u32 %v272, 4294901760
        %v2804 = vsub.f32 %v272, %v2803
        %2805 = vmatmul.f32.gmra.mxu0 %v2804
        %v2806 = vpop.f32.mrf.mxu0
        %v2807 = vadd.f32 %v2579, %v2806
        %v2808 = vand.u32 %v275, 4294901760
        %v2809 = vsub.f32 %v275, %v2808
        %2810 = vmatmul.f32.gmra.mxu0 %v2809
        %v2811 = vpop.f32.mrf.mxu0
        %v2812 = vadd.f32 %v2583, %v2811
        %v2813 = vand.u32 %v278, 4294901760
        %v2814 = vsub.f32 %v278, %v2813
        %2815 = vmatmul.f32.gmra.mxu0 %v2814
        %v2816 = vpop.f32.mrf.mxu0
        %v2817 = vadd.f32 %v2587, %v2816
        %v2818 = vand.u32 %v281, 4294901760
        %v2819 = vsub.f32 %v281, %v2818
        %2820 = vmatmul.f32.gmra.mxu0 %v2819
        %v2821 = vpop.f32.mrf.mxu0
        %v2822 = vadd.f32 %v2591, %v2821
        %v2823 = vand.u32 %v284, 4294901760
        %v2824 = vsub.f32 %v284, %v2823
        %2825 = vmatmul.f32.gmra.mxu0 %v2824
        %v2826 = vpop.f32.mrf.mxu0
        %v2827 = vadd.f32 %v2595, %v2826
        %v2828 = vand.u32 %v287, 4294901760
        %v2829 = vsub.f32 %v287, %v2828
        %2830 = vmatmul.f32.gmra.mxu0 %v2829
        %v2831 = vpop.f32.mrf.mxu0
        %v2832 = vadd.f32 %v2599, %v2831
        %v2833 = vand.u32 %v290, 4294901760
        %v2834 = vsub.f32 %v290, %v2833
        %2835 = vmatmul.f32.gmra.mxu0 %v2834
        %v2836 = vpop.f32.mrf.mxu0
        %v2837 = vadd.f32 %v2603, %v2836
        %v2838 = vand.u32 %v293, 4294901760
        %v2839 = vsub.f32 %v293, %v2838
        %2840 = vmatmul.f32.gmra.mxu0 %v2839
        %v2841 = vpop.f32.mrf.mxu0
        %v2842 = vadd.f32 %v2607, %v2841
        %v2843 = vand.u32 %v296, 4294901760
        %v2844 = vsub.f32 %v296, %v2843
        %2845 = vmatmul.f32.gmra.mxu0 %v2844
        %v2846 = vpop.f32.mrf.mxu0
        %v2847 = vadd.f32 %v2611, %v2846
        %v2848 = vand.u32 %v299, 4294901760
        %v2849 = vsub.f32 %v299, %v2848
        %2850 = vmatmul.f32.gmra.mxu0 %v2849
        %v2851 = vpop.f32.mrf.mxu0
        %v2852 = vadd.f32 %v2615, %v2851
        %v2853 = vand.u32 %v302, 4294901760
        %v2854 = vsub.f32 %v302, %v2853
        %2855 = vmatmul.f32.gmra.mxu0 %v2854
        %v2856 = vpop.f32.mrf.mxu0
        %v2857 = vadd.f32 %v2619, %v2856
        %v2858 = vand.u32 %v305, 4294901760
        %v2859 = vsub.f32 %v305, %v2858
        %2860 = vmatmul.f32.gmra.mxu0 %v2859
        %v2861 = vpop.f32.mrf.mxu0
        %v2862 = vadd.f32 %v2623, %v2861
        %v2863 = vand.u32 %v308, 4294901760
        %v2864 = vsub.f32 %v308, %v2863
        %2865 = vmatmul.f32.gmra.mxu0 %v2864
        %v2866 = vpop.f32.mrf.mxu0
        %v2867 = vadd.f32 %v2627, %v2866
        %v2868 = vand.u32 %v311, 4294901760
        %v2869 = vsub.f32 %v311, %v2868
        %2870 = vmatmul.f32.gmra.mxu0 %v2869
        %v2871 = vpop.f32.mrf.mxu0
        %v2872 = vadd.f32 %v2631, %v2871
        %v2873 = vand.u32 %v314, 4294901760
        %v2874 = vsub.f32 %v314, %v2873
        %2875 = vmatmul.f32.gmra.mxu0 %v2874
        %v2876 = vpop.f32.mrf.mxu0
        %v2877 = vadd.f32 %v2635, %v2876
        %v2878 = vand.u32 %v317, 4294901760
        %v2879 = vsub.f32 %v317, %v2878
        %2880 = vmatmul.f32.gmra.mxu0 %v2879
        %v2881 = vpop.f32.mrf.mxu0
        %v2882 = vadd.f32 %v2639, %v2881
        %v2883 = vand.u32 %v320, 4294901760
        %v2884 = vsub.f32 %v320, %v2883
        %2885 = vmatmul.f32.gmra.mxu0 %v2884
        %v2886 = vpop.f32.mrf.mxu0
        %v2887 = vadd.f32 %v2643, %v2886
        %v2888 = vand.u32 %v323, 4294901760
        %v2889 = vsub.f32 %v323, %v2888
        %2890 = vmatmul.f32.gmra.mxu0 %v2889
        %v2891 = vpop.f32.mrf.mxu0
        %v2892 = vadd.f32 %v2647, %v2891
        %v2893 = vand.u32 %v326, 4294901760
        %v2894 = vsub.f32 %v326, %v2893
        %2895 = vmatmul.f32.gmra.mxu0 %v2894
        %v2896 = vpop.f32.mrf.mxu0
        %v2897 = vadd.f32 %v2651, %v2896
        %v2898 = vand.u32 %v329, 4294901760
        %v2899 = vsub.f32 %v329, %v2898
        %2900 = vmatmul.f32.gmra.mxu0 %v2899
        %v2901 = vpop.f32.mrf.mxu0
        %v2902 = vadd.f32 %v2655, %v2901
        %v2903 = vand.u32 %v332, 4294901760
        %v2904 = vsub.f32 %v332, %v2903
        %2905 = vmatmul.f32.gmra.mxu0 %v2904
        %v2906 = vpop.f32.mrf.mxu0
        %v2907 = vadd.f32 %v2659, %v2906
        %v2908 = vand.u32 %v335, 4294901760
        %v2909 = vsub.f32 %v335, %v2908
        %2910 = vmatmul.f32.gmra.mxu0 %v2909
        %v2911 = vpop.f32.mrf.mxu0
        %v2912 = vadd.f32 %v2663, %v2911
        %v2913 = vand.u32 %v338, 4294901760
        %v2914 = vsub.f32 %v338, %v2913
        %2915 = vmatmul.f32.gmra.mxu0 %v2914
        %v2916 = vpop.f32.mrf.mxu0
        %v2917 = vadd.f32 %v2667, %v2916
        %v2918 = vand.u32 %v341, 4294901760
        %v2919 = vsub.f32 %v341, %v2918
        %2920 = vmatmul.f32.gmra.mxu0 %v2919
        %v2921 = vpop.f32.mrf.mxu0
        %v2922 = vadd.f32 %v2671, %v2921
        %v2923 = vand.u32 %v344, 4294901760
        %v2924 = vsub.f32 %v344, %v2923
        %2925 = vmatmul.f32.gmra.mxu0 %v2924
        %v2926 = vpop.f32.mrf.mxu0
        %v2927 = vadd.f32 %v2675, %v2926
        %v2928 = vand.u32 %v347, 4294901760
        %v2929 = vsub.f32 %v347, %v2928
        %2930 = vmatmul.f32.gmra.mxu0 %v2929
        %v2931 = vpop.f32.mrf.mxu0
        %v2932 = vadd.f32 %v2679, %v2931
        %v2933 = vand.u32 %v350, 4294901760
        %v2934 = vsub.f32 %v350, %v2933
        %2935 = vmatmul.f32.gmra.mxu0 %v2934
        %v2936 = vpop.f32.mrf.mxu0
        %v2937 = vadd.f32 %v2683, %v2936
        %v2938 = vand.u32 %v353, 4294901760
        %v2939 = vsub.f32 %v353, %v2938
        %2940 = vmatmul.f32.gmra.mxu0 %v2939
        %v2941 = vpop.f32.mrf.mxu0
        %v2942 = vadd.f32 %v2687, %v2941
        %v2943 = vand.u32 %v356, 4294901760
        %v2944 = vsub.f32 %v356, %v2943
        %2945 = vmatmul.f32.gmra.mxu0 %v2944
        %v2946 = vpop.f32.mrf.mxu0
        %v2947 = vadd.f32 %v2691, %v2946
        %v2948 = vand.u32 %v359, 4294901760
        %v2949 = vsub.f32 %v359, %v2948
        %2950 = vmatmul.f32.gmra.mxu0 %v2949
        %v2951 = vpop.f32.mrf.mxu0
        %v2952 = vadd.f32 %v2695, %v2951
        %v2953 = vand.u32 %v362, 4294901760
        %v2954 = vsub.f32 %v362, %v2953
        %2955 = vmatmul.f32.gmra.mxu0 %v2954
        %v2956 = vpop.f32.mrf.mxu0
        %v2957 = vadd.f32 %v2699, %v2956
        %v2958 = vand.u32 %v365, 4294901760
        %v2959 = vsub.f32 %v365, %v2958
        %2960 = vmatmul.f32.gmra.mxu0 %v2959
        %v2961 = vpop.f32.mrf.mxu0
        %v2962 = vadd.f32 %v2703, %v2961
        %v2963 = vand.u32 %v368, 4294901760
        %v2964 = vsub.f32 %v368, %v2963
        %2965 = vmatmul.f32.gmra.mxu0 %v2964
        %v2966 = vpop.f32.mrf.mxu0
        %v2967 = vadd.f32 %v2707, %v2966
        %v2968 = vand.u32 %v371, 4294901760
        %v2969 = vsub.f32 %v371, %v2968
        %2970 = vmatmul.f32.gmra.mxu0 %v2969
        %v2971 = vpop.f32.mrf.mxu0
        %v2972 = vadd.f32 %v2711, %v2971
        %v2973 = vand.u32 %v374, 4294901760
        %v2974 = vsub.f32 %v374, %v2973
        %2975 = vmatmul.f32.gmra.mxu0 %v2974
        %v2976 = vpop.f32.mrf.mxu0
        %v2977 = vadd.f32 %v2715, %v2976
        %v2978 = vand.u32 %v377, 4294901760
        %v2979 = vsub.f32 %v377, %v2978
        %2980 = vmatmul.f32.gmra.mxu0 %v2979
        %v2981 = vpop.f32.mrf.mxu0
        %v2982 = vadd.f32 %v2719, %v2981
        %v2983 = vand.u32 %v380, 4294901760
        %v2984 = vsub.f32 %v380, %v2983
        %2985 = vmatmul.f32.gmra.mxu0 %v2984
        %v2986 = vpop.f32.mrf.mxu0
        %v2987 = vadd.f32 %v2723, %v2986
        %v2988 = vand.u32 %v383, 4294901760
        %v2989 = vsub.f32 %v383, %v2988
        %2990 = vmatmul.f32.gmra.mxu0 %v2989
        %v2991 = vpop.f32.mrf.mxu0
        %v2992 = vadd.f32 %v2727, %v2991
        %v2993 = vand.u32 %v386, 4294901760
        %v2994 = vsub.f32 %v386, %v2993
        %2995 = vmatmul.f32.gmra.mxu0 %v2994
        %v2996 = vpop.f32.mrf.mxu0
        %v2997 = vadd.f32 %v2731, %v2996
        %v2998 = vand.u32 %v389, 4294901760
        %v2999 = vsub.f32 %v389, %v2998
        %3000 = vmatmul.f32.gmra.mxu0 %v2999
        %v3001 = vpop.f32.mrf.mxu0
        %v3002 = vadd.f32 %v2735, %v3001
        %v3003 = vand.u32 %v392, 4294901760
        %v3004 = vsub.f32 %v392, %v3003
        %3005 = vmatmul.f32.gmra.mxu0 %v3004
        %v3006 = vpop.f32.mrf.mxu0
        %v3007 = vadd.f32 %v2739, %v3006
        %v3008 = vand.u32 %v395, 4294901760
        %v3009 = vsub.f32 %v395, %v3008
        %3010 = vmatmul.f32.gmra.mxu0 %v3009
        %v3011 = vpop.f32.mrf.mxu0
        %v3012 = vadd.f32 %v2743, %v3011
        %v3013 = vand.u32 %v398, 4294901760
        %v3014 = vsub.f32 %v398, %v3013
        %3015 = vmatmul.f32.gmra.mxu0 %v3014
        %v3016 = vpop.f32.mrf.mxu0
        %v3017 = vadd.f32 %v2747, %v3016
        %v3018 = vand.u32 %v401, 4294901760
        %v3019 = vsub.f32 %v401, %v3018
        %3020 = vmatmul.f32.gmra.mxu0 %v3019
        %v3021 = vpop.f32.mrf.mxu0
        %v3022 = vadd.f32 %v2751, %v3021
        %v3023 = vand.u32 %v404, 4294901760
        %v3024 = vsub.f32 %v404, %v3023
        %3025 = vmatmul.f32.gmra.mxu0 %v3024
        %v3026 = vpop.f32.mrf.mxu0
        %v3027 = vadd.f32 %v2755, %v3026
        %v3028 = vand.u32 %v407, 4294901760
        %v3029 = vsub.f32 %v407, %v3028
        %3030 = vmatmul.f32.gmra.mxu0 %v3029
        %v3031 = vpop.f32.mrf.mxu0
        %v3032 = vadd.f32 %v2759, %v3031
        %3033 = vdwg.mxu0
        %3034 = vmatpush.msra.mxu0 0.0
        %3035 = vmatpush.msra.mxu0 0.0
        %3036 = vmatpush.msra.mxu0 0.0
        %3037 = vmatpush.msra.mxu0 0.0
        %3038 = vmatpush.msra.mxu0 0.0
        %3039 = vmatpush.msra.mxu0 0.0
        %3040 = vmatpush.msra.mxu0 0.0
        %3041 = vmatpush.msra.mxu0 0.0
        %v3042 = vand.u32 %v262, 4294901760
        %3043 = vmatpush.msra.mxu0 %v3042
        %v3044 = vand.u32 %v259, 4294901760
        %3045 = vmatpush.msra.mxu0 %v3044
        %v3046 = vand.u32 %v256, 4294901760
        %3047 = vmatpush.msra.mxu0 %v3046
        %v3048 = vand.u32 %v253, 4294901760
        %3049 = vmatpush.msra.mxu0 %v3048
        %v3050 = vand.u32 %v250, 4294901760
        %3051 = vmatpush.msra.mxu0 %v3050
        %v3052 = vand.u32 %v247, 4294901760
        %3053 = vmatpush.msra.mxu0 %v3052
        %v3054 = vand.u32 %v244, 4294901760
        %3055 = vmatpush.msra.mxu0 %v3054
        %v3056 = vand.u32 %v241, 4294901760
        %3057 = vmatpush.msra.mxu0 %v3056
        %v3058 = vand.u32 %v266, 4294901760
        %v3059 = vsub.f32 %v266, %v3058
        %v3060 = vand.u32 %v3059, 4294901760
        %3061 = vmatmul.f32.gmra.mxu0 %v3060
        %v3062 = vpop.f32.mrf.mxu0
        %v3063 = vadd.f32 %v2797, %v3062
        %v3064 = vand.u32 %v269, 4294901760
        %v3065 = vsub.f32 %v269, %v3064
        %v3066 = vand.u32 %v3065, 4294901760
        %3067 = vmatmul.f32.gmra.mxu0 %v3066
        %v3068 = vpop.f32.mrf.mxu0
        %v3069 = vadd.f32 %v2802, %v3068
        %v3070 = vand.u32 %v272, 4294901760
        %v3071 = vsub.f32 %v272, %v3070
        %v3072 = vand.u32 %v3071, 4294901760
        %3073 = vmatmul.f32.gmra.mxu0 %v3072
        %v3074 = vpop.f32.mrf.mxu0
        %v3075 = vadd.f32 %v2807, %v3074
        %v3076 = vand.u32 %v275, 4294901760
        %v3077 = vsub.f32 %v275, %v3076
        %v3078 = vand.u32 %v3077, 4294901760
        %3079 = vmatmul.f32.gmra.mxu0 %v3078
        %v3080 = vpop.f32.mrf.mxu0
        %v3081 = vadd.f32 %v2812, %v3080
        %v3082 = vand.u32 %v278, 4294901760
        %v3083 = vsub.f32 %v278, %v3082
        %v3084 = vand.u32 %v3083, 4294901760
        %3085 = vmatmul.f32.gmra.mxu0 %v3084
        %v3086 = vpop.f32.mrf.mxu0
        %v3087 = vadd.f32 %v2817, %v3086
        %v3088 = vand.u32 %v281, 4294901760
        %v3089 = vsub.f32 %v281, %v3088
        %v3090 = vand.u32 %v3089, 4294901760
        %3091 = vmatmul.f32.gmra.mxu0 %v3090
        %v3092 = vpop.f32.mrf.mxu0
        %v3093 = vadd.f32 %v2822, %v3092
        %v3094 = vand.u32 %v284, 4294901760
        %v3095 = vsub.f32 %v284, %v3094
        %v3096 = vand.u32 %v3095, 4294901760
        %3097 = vmatmul.f32.gmra.mxu0 %v3096
        %v3098 = vpop.f32.mrf.mxu0
        %v3099 = vadd.f32 %v2827, %v3098
        %v3100 = vand.u32 %v287, 4294901760
        %v3101 = vsub.f32 %v287, %v3100
        %v3102 = vand.u32 %v3101, 4294901760
        %3103 = vmatmul.f32.gmra.mxu0 %v3102
        %v3104 = vpop.f32.mrf.mxu0
        %v3105 = vadd.f32 %v2832, %v3104
        %v3106 = vand.u32 %v290, 4294901760
        %v3107 = vsub.f32 %v290, %v3106
        %v3108 = vand.u32 %v3107, 4294901760
        %3109 = vmatmul.f32.gmra.mxu0 %v3108
        %v3110 = vpop.f32.mrf.mxu0
        %v3111 = vadd.f32 %v2837, %v3110
        %v3112 = vand.u32 %v293, 4294901760
        %v3113 = vsub.f32 %v293, %v3112
        %v3114 = vand.u32 %v3113, 4294901760
        %3115 = vmatmul.f32.gmra.mxu0 %v3114
        %v3116 = vpop.f32.mrf.mxu0
        %v3117 = vadd.f32 %v2842, %v3116
        %v3118 = vand.u32 %v296, 4294901760
        %v3119 = vsub.f32 %v296, %v3118
        %v3120 = vand.u32 %v3119, 4294901760
        %3121 = vmatmul.f32.gmra.mxu0 %v3120
        %v3122 = vpop.f32.mrf.mxu0
        %v3123 = vadd.f32 %v2847, %v3122
        %v3124 = vand.u32 %v299, 4294901760
        %v3125 = vsub.f32 %v299, %v3124
        %v3126 = vand.u32 %v3125, 4294901760
        %3127 = vmatmul.f32.gmra.mxu0 %v3126
        %v3128 = vpop.f32.mrf.mxu0
        %v3129 = vadd.f32 %v2852, %v3128
        %v3130 = vand.u32 %v302, 4294901760
        %v3131 = vsub.f32 %v302, %v3130
        %v3132 = vand.u32 %v3131, 4294901760
        %3133 = vmatmul.f32.gmra.mxu0 %v3132
        %v3134 = vpop.f32.mrf.mxu0
        %v3135 = vadd.f32 %v2857, %v3134
        %v3136 = vand.u32 %v305, 4294901760
        %v3137 = vsub.f32 %v305, %v3136
        %v3138 = vand.u32 %v3137, 4294901760
        %3139 = vmatmul.f32.gmra.mxu0 %v3138
        %v3140 = vpop.f32.mrf.mxu0
        %v3141 = vadd.f32 %v2862, %v3140
        %v3142 = vand.u32 %v308, 4294901760
        %v3143 = vsub.f32 %v308, %v3142
        %v3144 = vand.u32 %v3143, 4294901760
        %3145 = vmatmul.f32.gmra.mxu0 %v3144
        %v3146 = vpop.f32.mrf.mxu0
        %v3147 = vadd.f32 %v2867, %v3146
        %v3148 = vand.u32 %v311, 4294901760
        %v3149 = vsub.f32 %v311, %v3148
        %v3150 = vand.u32 %v3149, 4294901760
        %3151 = vmatmul.f32.gmra.mxu0 %v3150
        %v3152 = vpop.f32.mrf.mxu0
        %v3153 = vadd.f32 %v2872, %v3152
        %v3154 = vand.u32 %v314, 4294901760
        %v3155 = vsub.f32 %v314, %v3154
        %v3156 = vand.u32 %v3155, 4294901760
        %3157 = vmatmul.f32.gmra.mxu0 %v3156
        %v3158 = vpop.f32.mrf.mxu0
        %v3159 = vadd.f32 %v2877, %v3158
        %v3160 = vand.u32 %v317, 4294901760
        %v3161 = vsub.f32 %v317, %v3160
        %v3162 = vand.u32 %v3161, 4294901760
        %3163 = vmatmul.f32.gmra.mxu0 %v3162
        %v3164 = vpop.f32.mrf.mxu0
        %v3165 = vadd.f32 %v2882, %v3164
        %v3166 = vand.u32 %v320, 4294901760
        %v3167 = vsub.f32 %v320, %v3166
        %v3168 = vand.u32 %v3167, 4294901760
        %3169 = vmatmul.f32.gmra.mxu0 %v3168
        %v3170 = vpop.f32.mrf.mxu0
        %v3171 = vadd.f32 %v2887, %v3170
        %v3172 = vand.u32 %v323, 4294901760
        %v3173 = vsub.f32 %v323, %v3172
        %v3174 = vand.u32 %v3173, 4294901760
        %3175 = vmatmul.f32.gmra.mxu0 %v3174
        %v3176 = vpop.f32.mrf.mxu0
        %v3177 = vadd.f32 %v2892, %v3176
        %v3178 = vand.u32 %v326, 4294901760
        %v3179 = vsub.f32 %v326, %v3178
        %v3180 = vand.u32 %v3179, 4294901760
        %3181 = vmatmul.f32.gmra.mxu0 %v3180
        %v3182 = vpop.f32.mrf.mxu0
        %v3183 = vadd.f32 %v2897, %v3182
        %v3184 = vand.u32 %v329, 4294901760
        %v3185 = vsub.f32 %v329, %v3184
        %v3186 = vand.u32 %v3185, 4294901760
        %3187 = vmatmul.f32.gmra.mxu0 %v3186
        %v3188 = vpop.f32.mrf.mxu0
        %v3189 = vadd.f32 %v2902, %v3188
        %v3190 = vand.u32 %v332, 4294901760
        %v3191 = vsub.f32 %v332, %v3190
        %v3192 = vand.u32 %v3191, 4294901760
        %3193 = vmatmul.f32.gmra.mxu0 %v3192
        %v3194 = vpop.f32.mrf.mxu0
        %v3195 = vadd.f32 %v2907, %v3194
        %v3196 = vand.u32 %v335, 4294901760
        %v3197 = vsub.f32 %v335, %v3196
        %v3198 = vand.u32 %v3197, 4294901760
        %3199 = vmatmul.f32.gmra.mxu0 %v3198
        %v3200 = vpop.f32.mrf.mxu0
        %v3201 = vadd.f32 %v2912, %v3200
        %v3202 = vand.u32 %v338, 4294901760
        %v3203 = vsub.f32 %v338, %v3202
        %v3204 = vand.u32 %v3203, 4294901760
        %3205 = vmatmul.f32.gmra.mxu0 %v3204
        %v3206 = vpop.f32.mrf.mxu0
        %v3207 = vadd.f32 %v2917, %v3206
        %v3208 = vand.u32 %v341, 4294901760
        %v3209 = vsub.f32 %v341, %v3208
        %v3210 = vand.u32 %v3209, 4294901760
        %3211 = vmatmul.f32.gmra.mxu0 %v3210
        %v3212 = vpop.f32.mrf.mxu0
        %v3213 = vadd.f32 %v2922, %v3212
        %v3214 = vand.u32 %v344, 4294901760
        %v3215 = vsub.f32 %v344, %v3214
        %v3216 = vand.u32 %v3215, 4294901760
        %3217 = vmatmul.f32.gmra.mxu0 %v3216
        %v3218 = vpop.f32.mrf.mxu0
        %v3219 = vadd.f32 %v2927, %v3218
        %v3220 = vand.u32 %v347, 4294901760
        %v3221 = vsub.f32 %v347, %v3220
        %v3222 = vand.u32 %v3221, 4294901760
        %3223 = vmatmul.f32.gmra.mxu0 %v3222
        %v3224 = vpop.f32.mrf.mxu0
        %v3225 = vadd.f32 %v2932, %v3224
        %v3226 = vand.u32 %v350, 4294901760
        %v3227 = vsub.f32 %v350, %v3226
        %v3228 = vand.u32 %v3227, 4294901760
        %3229 = vmatmul.f32.gmra.mxu0 %v3228
        %v3230 = vpop.f32.mrf.mxu0
        %v3231 = vadd.f32 %v2937, %v3230
        %v3232 = vand.u32 %v353, 4294901760
        %v3233 = vsub.f32 %v353, %v3232
        %v3234 = vand.u32 %v3233, 4294901760
        %3235 = vmatmul.f32.gmra.mxu0 %v3234
        %v3236 = vpop.f32.mrf.mxu0
        %v3237 = vadd.f32 %v2942, %v3236
        %v3238 = vand.u32 %v356, 4294901760
        %v3239 = vsub.f32 %v356, %v3238
        %v3240 = vand.u32 %v3239, 4294901760
        %3241 = vmatmul.f32.gmra.mxu0 %v3240
        %v3242 = vpop.f32.mrf.mxu0
        %v3243 = vadd.f32 %v2947, %v3242
        %v3244 = vand.u32 %v359, 4294901760
        %v3245 = vsub.f32 %v359, %v3244
        %v3246 = vand.u32 %v3245, 4294901760
        %3247 = vmatmul.f32.gmra.mxu0 %v3246
        %v3248 = vpop.f32.mrf.mxu0
        %v3249 = vadd.f32 %v2952, %v3248
        %v3250 = vand.u32 %v362, 4294901760
        %v3251 = vsub.f32 %v362, %v3250
        %v3252 = vand.u32 %v3251, 4294901760
        %3253 = vmatmul.f32.gmra.mxu0 %v3252
        %v3254 = vpop.f32.mrf.mxu0
        %v3255 = vadd.f32 %v2957, %v3254
        %v3256 = vand.u32 %v365, 4294901760
        %v3257 = vsub.f32 %v365, %v3256
        %v3258 = vand.u32 %v3257, 4294901760
        %3259 = vmatmul.f32.gmra.mxu0 %v3258
        %v3260 = vpop.f32.mrf.mxu0
        %v3261 = vadd.f32 %v2962, %v3260
        %v3262 = vand.u32 %v368, 4294901760
        %v3263 = vsub.f32 %v368, %v3262
        %v3264 = vand.u32 %v3263, 4294901760
        %3265 = vmatmul.f32.gmra.mxu0 %v3264
        %v3266 = vpop.f32.mrf.mxu0
        %v3267 = vadd.f32 %v2967, %v3266
        %v3268 = vand.u32 %v371, 4294901760
        %v3269 = vsub.f32 %v371, %v3268
        %v3270 = vand.u32 %v3269, 4294901760
        %3271 = vmatmul.f32.gmra.mxu0 %v3270
        %v3272 = vpop.f32.mrf.mxu0
        %v3273 = vadd.f32 %v2972, %v3272
        %v3274 = vand.u32 %v374, 4294901760
        %v3275 = vsub.f32 %v374, %v3274
        %v3276 = vand.u32 %v3275, 4294901760
        %3277 = vmatmul.f32.gmra.mxu0 %v3276
        %v3278 = vpop.f32.mrf.mxu0
        %v3279 = vadd.f32 %v2977, %v3278
        %v3280 = vand.u32 %v377, 4294901760
        %v3281 = vsub.f32 %v377, %v3280
        %v3282 = vand.u32 %v3281, 4294901760
        %3283 = vmatmul.f32.gmra.mxu0 %v3282
        %v3284 = vpop.f32.mrf.mxu0
        %v3285 = vadd.f32 %v2982, %v3284
        %v3286 = vand.u32 %v380, 4294901760
        %v3287 = vsub.f32 %v380, %v3286
        %v3288 = vand.u32 %v3287, 4294901760
        %3289 = vmatmul.f32.gmra.mxu0 %v3288
        %v3290 = vpop.f32.mrf.mxu0
        %v3291 = vadd.f32 %v2987, %v3290
        %v3292 = vand.u32 %v383, 4294901760
        %v3293 = vsub.f32 %v383, %v3292
        %v3294 = vand.u32 %v3293, 4294901760
        %3295 = vmatmul.f32.gmra.mxu0 %v3294
        %v3296 = vpop.f32.mrf.mxu0
        %v3297 = vadd.f32 %v2992, %v3296
        %v3298 = vand.u32 %v386, 4294901760
        %v3299 = vsub.f32 %v386, %v3298
        %v3300 = vand.u32 %v3299, 4294901760
        %3301 = vmatmul.f32.gmra.mxu0 %v3300
        %v3302 = vpop.f32.mrf.mxu0
        %v3303 = vadd.f32 %v2997, %v3302
        %v3304 = vand.u32 %v389, 4294901760
        %v3305 = vsub.f32 %v389, %v3304
        %v3306 = vand.u32 %v3305, 4294901760
        %3307 = vmatmul.f32.gmra.mxu0 %v3306
        %v3308 = vpop.f32.mrf.mxu0
        %v3309 = vadd.f32 %v3002, %v3308
        %v3310 = vand.u32 %v392, 4294901760
        %v3311 = vsub.f32 %v392, %v3310
        %v3312 = vand.u32 %v3311, 4294901760
        %3313 = vmatmul.f32.gmra.mxu0 %v3312
        %v3314 = vpop.f32.mrf.mxu0
        %v3315 = vadd.f32 %v3007, %v3314
        %v3316 = vand.u32 %v395, 4294901760
        %v3317 = vsub.f32 %v395, %v3316
        %v3318 = vand.u32 %v3317, 4294901760
        %3319 = vmatmul.f32.gmra.mxu0 %v3318
        %v3320 = vpop.f32.mrf.mxu0
        %v3321 = vadd.f32 %v3012, %v3320
        %v3322 = vand.u32 %v398, 4294901760
        %v3323 = vsub.f32 %v398, %v3322
        %v3324 = vand.u32 %v3323, 4294901760
        %3325 = vmatmul.f32.gmra.mxu0 %v3324
        %v3326 = vpop.f32.mrf.mxu0
        %v3327 = vadd.f32 %v3017, %v3326
        %v3328 = vand.u32 %v401, 4294901760
        %v3329 = vsub.f32 %v401, %v3328
        %v3330 = vand.u32 %v3329, 4294901760
        %3331 = vmatmul.f32.gmra.mxu0 %v3330
        %v3332 = vpop.f32.mrf.mxu0
        %v3333 = vadd.f32 %v3022, %v3332
        %v3334 = vand.u32 %v404, 4294901760
        %v3335 = vsub.f32 %v404, %v3334
        %v3336 = vand.u32 %v3335, 4294901760
        %3337 = vmatmul.f32.gmra.mxu0 %v3336
        %v3338 = vpop.f32.mrf.mxu0
        %v3339 = vadd.f32 %v3027, %v3338
        %v3340 = vand.u32 %v407, 4294901760
        %v3341 = vsub.f32 %v407, %v3340
        %v3342 = vand.u32 %v3341, 4294901760
        %3343 = vmatmul.f32.gmra.mxu0 %v3342
        %v3344 = vpop.f32.mrf.mxu0
        %v3345 = vadd.f32 %v3032, %v3344
        %3346 = vdwg.mxu0
        %3347 = vmatpush.msra.mxu0 0.0
        %3348 = vmatpush.msra.mxu0 0.0
        %3349 = vmatpush.msra.mxu0 0.0
        %3350 = vmatpush.msra.mxu0 0.0
        %3351 = vmatpush.msra.mxu0 0.0
        %3352 = vmatpush.msra.mxu0 0.0
        %3353 = vmatpush.msra.mxu0 0.0
        %3354 = vmatpush.msra.mxu0 0.0
        %v3355 = vand.u32 %v262, 4294901760
        %v3356 = vsub.f32 %v262, %v3355
        %v3357 = vand.u32 %v3356, 4294901760
        %3358 = vmatpush.msra.mxu0 %v3357
        %v3359 = vand.u32 %v259, 4294901760
        %v3360 = vsub.f32 %v259, %v3359
        %v3361 = vand.u32 %v3360, 4294901760
        %3362 = vmatpush.msra.mxu0 %v3361
        %v3363 = vand.u32 %v256, 4294901760
        %v3364 = vsub.f32 %v256, %v3363
        %v3365 = vand.u32 %v3364, 4294901760
        %3366 = vmatpush.msra.mxu0 %v3365
        %v3367 = vand.u32 %v253, 4294901760
        %v3368 = vsub.f32 %v253, %v3367
        %v3369 = vand.u32 %v3368, 4294901760
        %3370 = vmatpush.msra.mxu0 %v3369
        %v3371 = vand.u32 %v250, 4294901760
        %v3372 = vsub.f32 %v250, %v3371
        %v3373 = vand.u32 %v3372, 4294901760
        %3374 = vmatpush.msra.mxu0 %v3373
        %v3375 = vand.u32 %v247, 4294901760
        %v3376 = vsub.f32 %v247, %v3375
        %v3377 = vand.u32 %v3376, 4294901760
        %3378 = vmatpush.msra.mxu0 %v3377
        %v3379 = vand.u32 %v244, 4294901760
        %v3380 = vsub.f32 %v244, %v3379
        %v3381 = vand.u32 %v3380, 4294901760
        %3382 = vmatpush.msra.mxu0 %v3381
        %v3383 = vand.u32 %v241, 4294901760
        %v3384 = vsub.f32 %v241, %v3383
        %v3385 = vand.u32 %v3384, 4294901760
        %3386 = vmatpush.msra.mxu0 %v3385
        %v3387 = vand.u32 %v266, 4294901760
        %3388 = vmatmul.f32.gmra.mxu0 %v3387
        %v3389 = vpop.f32.mrf.mxu0
        %v3390 = vadd.f32 %v3063, %v3389
        %v3391 = vand.u32 %v269, 4294901760
        %3392 = vmatmul.f32.gmra.mxu0 %v3391
        %v3393 = vpop.f32.mrf.mxu0
        %v3394 = vadd.f32 %v3069, %v3393
        %v3395 = vand.u32 %v272, 4294901760
        %3396 = vmatmul.f32.gmra.mxu0 %v3395
        %v3397 = vpop.f32.mrf.mxu0
        %v3398 = vadd.f32 %v3075, %v3397
        %v3399 = vand.u32 %v275, 4294901760
        %3400 = vmatmul.f32.gmra.mxu0 %v3399
        %v3401 = vpop.f32.mrf.mxu0
        %v3402 = vadd.f32 %v3081, %v3401
        %v3403 = vand.u32 %v278, 4294901760
        %3404 = vmatmul.f32.gmra.mxu0 %v3403
        %v3405 = vpop.f32.mrf.mxu0
        %v3406 = vadd.f32 %v3087, %v3405
        %v3407 = vand.u32 %v281, 4294901760
        %3408 = vmatmul.f32.gmra.mxu0 %v3407
        %v3409 = vpop.f32.mrf.mxu0
        %v3410 = vadd.f32 %v3093, %v3409
        %v3411 = vand.u32 %v284, 4294901760
        %3412 = vmatmul.f32.gmra.mxu0 %v3411
        %v3413 = vpop.f32.mrf.mxu0
        %v3414 = vadd.f32 %v3099, %v3413
        %v3415 = vand.u32 %v287, 4294901760
        %3416 = vmatmul.f32.gmra.mxu0 %v3415
        %v3417 = vpop.f32.mrf.mxu0
        %v3418 = vadd.f32 %v3105, %v3417
        %v3419 = vand.u32 %v290, 4294901760
        %3420 = vmatmul.f32.gmra.mxu0 %v3419
        %v3421 = vpop.f32.mrf.mxu0
        %v3422 = vadd.f32 %v3111, %v3421
        %v3423 = vand.u32 %v293, 4294901760
        %3424 = vmatmul.f32.gmra.mxu0 %v3423
        %v3425 = vpop.f32.mrf.mxu0
        %v3426 = vadd.f32 %v3117, %v3425
        %v3427 = vand.u32 %v296, 4294901760
        %3428 = vmatmul.f32.gmra.mxu0 %v3427
        %v3429 = vpop.f32.mrf.mxu0
        %v3430 = vadd.f32 %v3123, %v3429
        %v3431 = vand.u32 %v299, 4294901760
        %3432 = vmatmul.f32.gmra.mxu0 %v3431
        %v3433 = vpop.f32.mrf.mxu0
        %v3434 = vadd.f32 %v3129, %v3433
        %v3435 = vand.u32 %v302, 4294901760
        %3436 = vmatmul.f32.gmra.mxu0 %v3435
        %v3437 = vpop.f32.mrf.mxu0
        %v3438 = vadd.f32 %v3135, %v3437
        %v3439 = vand.u32 %v305, 4294901760
        %3440 = vmatmul.f32.gmra.mxu0 %v3439
        %v3441 = vpop.f32.mrf.mxu0
        %v3442 = vadd.f32 %v3141, %v3441
        %v3443 = vand.u32 %v308, 4294901760
        %3444 = vmatmul.f32.gmra.mxu0 %v3443
        %v3445 = vpop.f32.mrf.mxu0
        %v3446 = vadd.f32 %v3147, %v3445
        %v3447 = vand.u32 %v311, 4294901760
        %3448 = vmatmul.f32.gmra.mxu0 %v3447
        %v3449 = vpop.f32.mrf.mxu0
        %v3450 = vadd.f32 %v3153, %v3449
        %v3451 = vand.u32 %v314, 4294901760
        %3452 = vmatmul.f32.gmra.mxu0 %v3451
        %v3453 = vpop.f32.mrf.mxu0
        %v3454 = vadd.f32 %v3159, %v3453
        %v3455 = vand.u32 %v317, 4294901760
        %3456 = vmatmul.f32.gmra.mxu0 %v3455
        %v3457 = vpop.f32.mrf.mxu0
        %v3458 = vadd.f32 %v3165, %v3457
        %v3459 = vand.u32 %v320, 4294901760
        %3460 = vmatmul.f32.gmra.mxu0 %v3459
        %v3461 = vpop.f32.mrf.mxu0
        %v3462 = vadd.f32 %v3171, %v3461
        %v3463 = vand.u32 %v323, 4294901760
        %3464 = vmatmul.f32.gmra.mxu0 %v3463
        %v3465 = vpop.f32.mrf.mxu0
        %v3466 = vadd.f32 %v3177, %v3465
        %v3467 = vand.u32 %v326, 4294901760
        %3468 = vmatmul.f32.gmra.mxu0 %v3467
        %v3469 = vpop.f32.mrf.mxu0
        %v3470 = vadd.f32 %v3183, %v3469
        %v3471 = vand.u32 %v329, 4294901760
        %3472 = vmatmul.f32.gmra.mxu0 %v3471
        %v3473 = vpop.f32.mrf.mxu0
        %v3474 = vadd.f32 %v3189, %v3473
        %v3475 = vand.u32 %v332, 4294901760
        %3476 = vmatmul.f32.gmra.mxu0 %v3475
        %v3477 = vpop.f32.mrf.mxu0
        %v3478 = vadd.f32 %v3195, %v3477
        %v3479 = vand.u32 %v335, 4294901760
        %3480 = vmatmul.f32.gmra.mxu0 %v3479
        %v3481 = vpop.f32.mrf.mxu0
        %v3482 = vadd.f32 %v3201, %v3481
        %v3483 = vand.u32 %v338, 4294901760
        %3484 = vmatmul.f32.gmra.mxu0 %v3483
        %v3485 = vpop.f32.mrf.mxu0
        %v3486 = vadd.f32 %v3207, %v3485
        %v3487 = vand.u32 %v341, 4294901760
        %3488 = vmatmul.f32.gmra.mxu0 %v3487
        %v3489 = vpop.f32.mrf.mxu0
        %v3490 = vadd.f32 %v3213, %v3489
        %v3491 = vand.u32 %v344, 4294901760
        %3492 = vmatmul.f32.gmra.mxu0 %v3491
        %v3493 = vpop.f32.mrf.mxu0
        %v3494 = vadd.f32 %v3219, %v3493
        %v3495 = vand.u32 %v347, 4294901760
        %3496 = vmatmul.f32.gmra.mxu0 %v3495
        %v3497 = vpop.f32.mrf.mxu0
        %v3498 = vadd.f32 %v3225, %v3497
        %v3499 = vand.u32 %v350, 4294901760
        %3500 = vmatmul.f32.gmra.mxu0 %v3499
        %v3501 = vpop.f32.mrf.mxu0
        %v3502 = vadd.f32 %v3231, %v3501
        %v3503 = vand.u32 %v353, 4294901760
        %3504 = vmatmul.f32.gmra.mxu0 %v3503
        %v3505 = vpop.f32.mrf.mxu0
        %v3506 = vadd.f32 %v3237, %v3505
        %v3507 = vand.u32 %v356, 4294901760
        %3508 = vmatmul.f32.gmra.mxu0 %v3507
        %v3509 = vpop.f32.mrf.mxu0
        %v3510 = vadd.f32 %v3243, %v3509
        %v3511 = vand.u32 %v359, 4294901760
        %3512 = vmatmul.f32.gmra.mxu0 %v3511
        %v3513 = vpop.f32.mrf.mxu0
        %v3514 = vadd.f32 %v3249, %v3513
        %v3515 = vand.u32 %v362, 4294901760
        %3516 = vmatmul.f32.gmra.mxu0 %v3515
        %v3517 = vpop.f32.mrf.mxu0
        %v3518 = vadd.f32 %v3255, %v3517
        %v3519 = vand.u32 %v365, 4294901760
        %3520 = vmatmul.f32.gmra.mxu0 %v3519
        %v3521 = vpop.f32.mrf.mxu0
        %v3522 = vadd.f32 %v3261, %v3521
        %v3523 = vand.u32 %v368, 4294901760
        %3524 = vmatmul.f32.gmra.mxu0 %v3523
        %v3525 = vpop.f32.mrf.mxu0
        %v3526 = vadd.f32 %v3267, %v3525
        %v3527 = vand.u32 %v371, 4294901760
        %3528 = vmatmul.f32.gmra.mxu0 %v3527
        %v3529 = vpop.f32.mrf.mxu0
        %v3530 = vadd.f32 %v3273, %v3529
        %v3531 = vand.u32 %v374, 4294901760
        %3532 = vmatmul.f32.gmra.mxu0 %v3531
        %v3533 = vpop.f32.mrf.mxu0
        %v3534 = vadd.f32 %v3279, %v3533
        %v3535 = vand.u32 %v377, 4294901760
        %3536 = vmatmul.f32.gmra.mxu0 %v3535
        %v3537 = vpop.f32.mrf.mxu0
        %v3538 = vadd.f32 %v3285, %v3537
        %v3539 = vand.u32 %v380, 4294901760
        %3540 = vmatmul.f32.gmra.mxu0 %v3539
        %v3541 = vpop.f32.mrf.mxu0
        %v3542 = vadd.f32 %v3291, %v3541
        %v3543 = vand.u32 %v383, 4294901760
        %3544 = vmatmul.f32.gmra.mxu0 %v3543
        %v3545 = vpop.f32.mrf.mxu0
        %v3546 = vadd.f32 %v3297, %v3545
        %v3547 = vand.u32 %v386, 4294901760
        %3548 = vmatmul.f32.gmra.mxu0 %v3547
        %v3549 = vpop.f32.mrf.mxu0
        %v3550 = vadd.f32 %v3303, %v3549
        %v3551 = vand.u32 %v389, 4294901760
        %3552 = vmatmul.f32.gmra.mxu0 %v3551
        %v3553 = vpop.f32.mrf.mxu0
        %v3554 = vadd.f32 %v3309, %v3553
        %v3555 = vand.u32 %v392, 4294901760
        %3556 = vmatmul.f32.gmra.mxu0 %v3555
        %v3557 = vpop.f32.mrf.mxu0
        %v3558 = vadd.f32 %v3315, %v3557
        %v3559 = vand.u32 %v395, 4294901760
        %3560 = vmatmul.f32.gmra.mxu0 %v3559
        %v3561 = vpop.f32.mrf.mxu0
        %v3562 = vadd.f32 %v3321, %v3561
        %v3563 = vand.u32 %v398, 4294901760
        %3564 = vmatmul.f32.gmra.mxu0 %v3563
        %v3565 = vpop.f32.mrf.mxu0
        %v3566 = vadd.f32 %v3327, %v3565
        %v3567 = vand.u32 %v401, 4294901760
        %3568 = vmatmul.f32.gmra.mxu0 %v3567
        %v3569 = vpop.f32.mrf.mxu0
        %v3570 = vadd.f32 %v3333, %v3569
        %v3571 = vand.u32 %v404, 4294901760
        %3572 = vmatmul.f32.gmra.mxu0 %v3571
        %v3573 = vpop.f32.mrf.mxu0
        %v3574 = vadd.f32 %v3339, %v3573
        %v3575 = vand.u32 %v407, 4294901760
        %3576 = vmatmul.f32.gmra.mxu0 %v3575
        %v3577 = vpop.f32.mrf.mxu0
        %v3578 = vadd.f32 %v3345, %v3577
        %3579 = vdwg.mxu0
        %3580 = vmatpush.msra.mxu0 0.0
        %3581 = vmatpush.msra.mxu0 0.0
        %3582 = vmatpush.msra.mxu0 0.0
        %3583 = vmatpush.msra.mxu0 0.0
        %3584 = vmatpush.msra.mxu0 0.0
        %3585 = vmatpush.msra.mxu0 0.0
        %3586 = vmatpush.msra.mxu0 0.0
        %3587 = vmatpush.msra.mxu0 0.0
        %v3588 = vand.u32 %v262, 4294901760
        %3589 = vmatpush.msra.mxu0 %v3588
        %v3590 = vand.u32 %v259, 4294901760
        %3591 = vmatpush.msra.mxu0 %v3590
        %v3592 = vand.u32 %v256, 4294901760
        %3593 = vmatpush.msra.mxu0 %v3592
        %v3594 = vand.u32 %v253, 4294901760
        %3595 = vmatpush.msra.mxu0 %v3594
        %v3596 = vand.u32 %v250, 4294901760
        %3597 = vmatpush.msra.mxu0 %v3596
        %v3598 = vand.u32 %v247, 4294901760
        %3599 = vmatpush.msra.mxu0 %v3598
        %v3600 = vand.u32 %v244, 4294901760
        %3601 = vmatpush.msra.mxu0 %v3600
        %v3602 = vand.u32 %v241, 4294901760
        %3603 = vmatpush.msra.mxu0 %v3602
        %v3604 = vand.u32 %v266, 4294901760
        %3605 = vmatmul.f32.gmra.mxu0 %v3604
        %v3606 = vpop.f32.mrf.mxu0
        %v3607 = vadd.f32 %v3390, %v3606
        %v3608 = vand.u32 %v269, 4294901760
        %3609 = vmatmul.f32.gmra.mxu0 %v3608
        %v3610 = vpop.f32.mrf.mxu0
        %v3611 = vadd.f32 %v3394, %v3610
        %v3612 = vand.u32 %v272, 4294901760
        %3613 = vmatmul.f32.gmra.mxu0 %v3612
        %v3614 = vpop.f32.mrf.mxu0
        %v3615 = vadd.f32 %v3398, %v3614
        %v3616 = vand.u32 %v275, 4294901760
        %3617 = vmatmul.f32.gmra.mxu0 %v3616
        %v3618 = vpop.f32.mrf.mxu0
        %v3619 = vadd.f32 %v3402, %v3618
        %v3620 = vand.u32 %v278, 4294901760
        %3621 = vmatmul.f32.gmra.mxu0 %v3620
        %v3622 = vpop.f32.mrf.mxu0
        %v3623 = vadd.f32 %v3406, %v3622
        %v3624 = vand.u32 %v281, 4294901760
        %3625 = vmatmul.f32.gmra.mxu0 %v3624
        %v3626 = vpop.f32.mrf.mxu0
        %v3627 = vadd.f32 %v3410, %v3626
        %v3628 = vand.u32 %v284, 4294901760
        %3629 = vmatmul.f32.gmra.mxu0 %v3628
        %v3630 = vpop.f32.mrf.mxu0
        %v3631 = vadd.f32 %v3414, %v3630
        %v3632 = vand.u32 %v287, 4294901760
        %3633 = vmatmul.f32.gmra.mxu0 %v3632
        %v3634 = vpop.f32.mrf.mxu0
        %v3635 = vadd.f32 %v3418, %v3634
        %v3636 = vand.u32 %v290, 4294901760
        %3637 = vmatmul.f32.gmra.mxu0 %v3636
        %v3638 = vpop.f32.mrf.mxu0
        %v3639 = vadd.f32 %v3422, %v3638
        %v3640 = vand.u32 %v293, 4294901760
        %3641 = vmatmul.f32.gmra.mxu0 %v3640
        %v3642 = vpop.f32.mrf.mxu0
        %v3643 = vadd.f32 %v3426, %v3642
        %v3644 = vand.u32 %v296, 4294901760
        %3645 = vmatmul.f32.gmra.mxu0 %v3644
        %v3646 = vpop.f32.mrf.mxu0
        %v3647 = vadd.f32 %v3430, %v3646
        %v3648 = vand.u32 %v299, 4294901760
        %3649 = vmatmul.f32.gmra.mxu0 %v3648
        %v3650 = vpop.f32.mrf.mxu0
        %v3651 = vadd.f32 %v3434, %v3650
        %v3652 = vand.u32 %v302, 4294901760
        %3653 = vmatmul.f32.gmra.mxu0 %v3652
        %v3654 = vpop.f32.mrf.mxu0
        %v3655 = vadd.f32 %v3438, %v3654
        %v3656 = vand.u32 %v305, 4294901760
        %3657 = vmatmul.f32.gmra.mxu0 %v3656
        %v3658 = vpop.f32.mrf.mxu0
        %v3659 = vadd.f32 %v3442, %v3658
        %v3660 = vand.u32 %v308, 4294901760
        %3661 = vmatmul.f32.gmra.mxu0 %v3660
        %v3662 = vpop.f32.mrf.mxu0
        %v3663 = vadd.f32 %v3446, %v3662
        %v3664 = vand.u32 %v311, 4294901760
        %3665 = vmatmul.f32.gmra.mxu0 %v3664
        %v3666 = vpop.f32.mrf.mxu0
        %v3667 = vadd.f32 %v3450, %v3666
        %v3668 = vand.u32 %v314, 4294901760
        %3669 = vmatmul.f32.gmra.mxu0 %v3668
        %v3670 = vpop.f32.mrf.mxu0
        %v3671 = vadd.f32 %v3454, %v3670
        %v3672 = vand.u32 %v317, 4294901760
        %3673 = vmatmul.f32.gmra.mxu0 %v3672
        %v3674 = vpop.f32.mrf.mxu0
        %v3675 = vadd.f32 %v3458, %v3674
        %v3676 = vand.u32 %v320, 4294901760
        %3677 = vmatmul.f32.gmra.mxu0 %v3676
        %v3678 = vpop.f32.mrf.mxu0
        %v3679 = vadd.f32 %v3462, %v3678
        %v3680 = vand.u32 %v323, 4294901760
        %3681 = vmatmul.f32.gmra.mxu0 %v3680
        %v3682 = vpop.f32.mrf.mxu0
        %v3683 = vadd.f32 %v3466, %v3682
        %v3684 = vand.u32 %v326, 4294901760
        %3685 = vmatmul.f32.gmra.mxu0 %v3684
        %v3686 = vpop.f32.mrf.mxu0
        %v3687 = vadd.f32 %v3470, %v3686
        %v3688 = vand.u32 %v329, 4294901760
        %3689 = vmatmul.f32.gmra.mxu0 %v3688
        %v3690 = vpop.f32.mrf.mxu0
        %v3691 = vadd.f32 %v3474, %v3690
        %v3692 = vand.u32 %v332, 4294901760
        %3693 = vmatmul.f32.gmra.mxu0 %v3692
        %v3694 = vpop.f32.mrf.mxu0
        %v3695 = vadd.f32 %v3478, %v3694
        %v3696 = vand.u32 %v335, 4294901760
        %3697 = vmatmul.f32.gmra.mxu0 %v3696
        %v3698 = vpop.f32.mrf.mxu0
        %v3699 = vadd.f32 %v3482, %v3698
        %v3700 = vand.u32 %v338, 4294901760
        %3701 = vmatmul.f32.gmra.mxu0 %v3700
        %v3702 = vpop.f32.mrf.mxu0
        %v3703 = vadd.f32 %v3486, %v3702
        %v3704 = vand.u32 %v341, 4294901760
        %3705 = vmatmul.f32.gmra.mxu0 %v3704
        %v3706 = vpop.f32.mrf.mxu0
        %v3707 = vadd.f32 %v3490, %v3706
        %v3708 = vand.u32 %v344, 4294901760
        %3709 = vmatmul.f32.gmra.mxu0 %v3708
        %v3710 = vpop.f32.mrf.mxu0
        %v3711 = vadd.f32 %v3494, %v3710
        %v3712 = vand.u32 %v347, 4294901760
        %3713 = vmatmul.f32.gmra.mxu0 %v3712
        %v3714 = vpop.f32.mrf.mxu0
        %v3715 = vadd.f32 %v3498, %v3714
        %v3716 = vand.u32 %v350, 4294901760
        %3717 = vmatmul.f32.gmra.mxu0 %v3716
        %v3718 = vpop.f32.mrf.mxu0
        %v3719 = vadd.f32 %v3502, %v3718
        %v3720 = vand.u32 %v353, 4294901760
        %3721 = vmatmul.f32.gmra.mxu0 %v3720
        %v3722 = vpop.f32.mrf.mxu0
        %v3723 = vadd.f32 %v3506, %v3722
        %v3724 = vand.u32 %v356, 4294901760
        %3725 = vmatmul.f32.gmra.mxu0 %v3724
        %v3726 = vpop.f32.mrf.mxu0
        %v3727 = vadd.f32 %v3510, %v3726
        %v3728 = vand.u32 %v359, 4294901760
        %3729 = vmatmul.f32.gmra.mxu0 %v3728
        %v3730 = vpop.f32.mrf.mxu0
        %v3731 = vadd.f32 %v3514, %v3730
        %v3732 = vand.u32 %v362, 4294901760
        %3733 = vmatmul.f32.gmra.mxu0 %v3732
        %v3734 = vpop.f32.mrf.mxu0
        %v3735 = vadd.f32 %v3518, %v3734
        %v3736 = vand.u32 %v365, 4294901760
        %3737 = vmatmul.f32.gmra.mxu0 %v3736
        %v3738 = vpop.f32.mrf.mxu0
        %v3739 = vadd.f32 %v3522, %v3738
        %v3740 = vand.u32 %v368, 4294901760
        %3741 = vmatmul.f32.gmra.mxu0 %v3740
        %v3742 = vpop.f32.mrf.mxu0
        %v3743 = vadd.f32 %v3526, %v3742
        %v3744 = vand.u32 %v371, 4294901760
        %3745 = vmatmul.f32.gmra.mxu0 %v3744
        %v3746 = vpop.f32.mrf.mxu0
        %v3747 = vadd.f32 %v3530, %v3746
        %v3748 = vand.u32 %v374, 4294901760
        %3749 = vmatmul.f32.gmra.mxu0 %v3748
        %v3750 = vpop.f32.mrf.mxu0
        %v3751 = vadd.f32 %v3534, %v3750
        %v3752 = vand.u32 %v377, 4294901760
        %3753 = vmatmul.f32.gmra.mxu0 %v3752
        %v3754 = vpop.f32.mrf.mxu0
        %v3755 = vadd.f32 %v3538, %v3754
        %v3756 = vand.u32 %v380, 4294901760
        %3757 = vmatmul.f32.gmra.mxu0 %v3756
        %v3758 = vpop.f32.mrf.mxu0
        %v3759 = vadd.f32 %v3542, %v3758
        %v3760 = vand.u32 %v383, 4294901760
        %3761 = vmatmul.f32.gmra.mxu0 %v3760
        %v3762 = vpop.f32.mrf.mxu0
        %v3763 = vadd.f32 %v3546, %v3762
        %v3764 = vand.u32 %v386, 4294901760
        %3765 = vmatmul.f32.gmra.mxu0 %v3764
        %v3766 = vpop.f32.mrf.mxu0
        %v3767 = vadd.f32 %v3550, %v3766
        %v3768 = vand.u32 %v389, 4294901760
        %3769 = vmatmul.f32.gmra.mxu0 %v3768
        %v3770 = vpop.f32.mrf.mxu0
        %v3771 = vadd.f32 %v3554, %v3770
        %v3772 = vand.u32 %v392, 4294901760
        %3773 = vmatmul.f32.gmra.mxu0 %v3772
        %v3774 = vpop.f32.mrf.mxu0
        %v3775 = vadd.f32 %v3558, %v3774
        %v3776 = vand.u32 %v395, 4294901760
        %3777 = vmatmul.f32.gmra.mxu0 %v3776
        %v3778 = vpop.f32.mrf.mxu0
        %v3779 = vadd.f32 %v3562, %v3778
        %v3780 = vand.u32 %v398, 4294901760
        %3781 = vmatmul.f32.gmra.mxu0 %v3780
        %v3782 = vpop.f32.mrf.mxu0
        %v3783 = vadd.f32 %v3566, %v3782
        %v3784 = vand.u32 %v401, 4294901760
        %3785 = vmatmul.f32.gmra.mxu0 %v3784
        %v3786 = vpop.f32.mrf.mxu0
        %v3787 = vadd.f32 %v3570, %v3786
        %v3788 = vand.u32 %v404, 4294901760
        %3789 = vmatmul.f32.gmra.mxu0 %v3788
        %v3790 = vpop.f32.mrf.mxu0
        %v3791 = vadd.f32 %v3574, %v3790
        %v3792 = vand.u32 %v407, 4294901760
        %3793 = vmatmul.f32.gmra.mxu0 %v3792
        %v3794 = vpop.f32.mrf.mxu0
        %v3795 = vadd.f32 %v3578, %v3794
        %3796 = vdwg.mxu0
        %3797 = vmatpush.msra.mxu0 0.0
        %3798 = vmatpush.msra.mxu0 0.0
        %3799 = vmatpush.msra.mxu0 0.0
        %3800 = vmatpush.msra.mxu0 0.0
        %3801 = vmatpush.msra.mxu0 0.0
        %3802 = vmatpush.msra.mxu0 0.0
        %3803 = vmatpush.msra.mxu0 0.0
        %3804 = vmatpush.msra.mxu0 0.0
        %v3805 = vand.u32 %v263, 4294901760
        %3806 = vmatpush.msra.mxu0 %v3805
        %v3807 = vand.u32 %v260, 4294901760
        %3808 = vmatpush.msra.mxu0 %v3807
        %v3809 = vand.u32 %v257, 4294901760
        %3810 = vmatpush.msra.mxu0 %v3809
        %v3811 = vand.u32 %v254, 4294901760
        %3812 = vmatpush.msra.mxu0 %v3811
        %v3813 = vand.u32 %v251, 4294901760
        %3814 = vmatpush.msra.mxu0 %v3813
        %v3815 = vand.u32 %v248, 4294901760
        %3816 = vmatpush.msra.mxu0 %v3815
        %v3817 = vand.u32 %v245, 4294901760
        %3818 = vmatpush.msra.mxu0 %v3817
        %v3819 = vand.u32 %v242, 4294901760
        %3820 = vmatpush.msra.mxu0 %v3819
        %v3821 = vand.u32 %v266, 4294901760
        %v3822 = vsub.f32 %v266, %v3821
        %v3823 = vand.u32 %v3822, 4294901760
        %v3824 = vsub.f32 %v3822, %v3823
        %v3825 = vand.u32 %v3824, 4294901760
        %3826 = vmatmul.f32.gmra.mxu0 %v3825
        %v3827 = vpop.f32.mrf.mxu0
        %v3828 = vadd.f32 0.0, %v3827
        %v3829 = vand.u32 %v269, 4294901760
        %v3830 = vsub.f32 %v269, %v3829
        %v3831 = vand.u32 %v3830, 4294901760
        %v3832 = vsub.f32 %v3830, %v3831
        %v3833 = vand.u32 %v3832, 4294901760
        %3834 = vmatmul.f32.gmra.mxu0 %v3833
        %v3835 = vpop.f32.mrf.mxu0
        %v3836 = vadd.f32 0.0, %v3835
        %v3837 = vand.u32 %v272, 4294901760
        %v3838 = vsub.f32 %v272, %v3837
        %v3839 = vand.u32 %v3838, 4294901760
        %v3840 = vsub.f32 %v3838, %v3839
        %v3841 = vand.u32 %v3840, 4294901760
        %3842 = vmatmul.f32.gmra.mxu0 %v3841
        %v3843 = vpop.f32.mrf.mxu0
        %v3844 = vadd.f32 0.0, %v3843
        %v3845 = vand.u32 %v275, 4294901760
        %v3846 = vsub.f32 %v275, %v3845
        %v3847 = vand.u32 %v3846, 4294901760
        %v3848 = vsub.f32 %v3846, %v3847
        %v3849 = vand.u32 %v3848, 4294901760
        %3850 = vmatmul.f32.gmra.mxu0 %v3849
        %v3851 = vpop.f32.mrf.mxu0
        %v3852 = vadd.f32 0.0, %v3851
        %v3853 = vand.u32 %v278, 4294901760
        %v3854 = vsub.f32 %v278, %v3853
        %v3855 = vand.u32 %v3854, 4294901760
        %v3856 = vsub.f32 %v3854, %v3855
        %v3857 = vand.u32 %v3856, 4294901760
        %3858 = vmatmul.f32.gmra.mxu0 %v3857
        %v3859 = vpop.f32.mrf.mxu0
        %v3860 = vadd.f32 0.0, %v3859
        %v3861 = vand.u32 %v281, 4294901760
        %v3862 = vsub.f32 %v281, %v3861
        %v3863 = vand.u32 %v3862, 4294901760
        %v3864 = vsub.f32 %v3862, %v3863
        %v3865 = vand.u32 %v3864, 4294901760
        %3866 = vmatmul.f32.gmra.mxu0 %v3865
        %v3867 = vpop.f32.mrf.mxu0
        %v3868 = vadd.f32 0.0, %v3867
        %v3869 = vand.u32 %v284, 4294901760
        %v3870 = vsub.f32 %v284, %v3869
        %v3871 = vand.u32 %v3870, 4294901760
        %v3872 = vsub.f32 %v3870, %v3871
        %v3873 = vand.u32 %v3872, 4294901760
        %3874 = vmatmul.f32.gmra.mxu0 %v3873
        %v3875 = vpop.f32.mrf.mxu0
        %v3876 = vadd.f32 0.0, %v3875
        %v3877 = vand.u32 %v287, 4294901760
        %v3878 = vsub.f32 %v287, %v3877
        %v3879 = vand.u32 %v3878, 4294901760
        %v3880 = vsub.f32 %v3878, %v3879
        %v3881 = vand.u32 %v3880, 4294901760
        %3882 = vmatmul.f32.gmra.mxu0 %v3881
        %v3883 = vpop.f32.mrf.mxu0
        %v3884 = vadd.f32 0.0, %v3883
        %v3885 = vand.u32 %v290, 4294901760
        %v3886 = vsub.f32 %v290, %v3885
        %v3887 = vand.u32 %v3886, 4294901760
        %v3888 = vsub.f32 %v3886, %v3887
        %v3889 = vand.u32 %v3888, 4294901760
        %3890 = vmatmul.f32.gmra.mxu0 %v3889
        %v3891 = vpop.f32.mrf.mxu0
        %v3892 = vadd.f32 0.0, %v3891
        %v3893 = vand.u32 %v293, 4294901760
        %v3894 = vsub.f32 %v293, %v3893
        %v3895 = vand.u32 %v3894, 4294901760
        %v3896 = vsub.f32 %v3894, %v3895
        %v3897 = vand.u32 %v3896, 4294901760
        %3898 = vmatmul.f32.gmra.mxu0 %v3897
        %v3899 = vpop.f32.mrf.mxu0
        %v3900 = vadd.f32 0.0, %v3899
        %v3901 = vand.u32 %v296, 4294901760
        %v3902 = vsub.f32 %v296, %v3901
        %v3903 = vand.u32 %v3902, 4294901760
        %v3904 = vsub.f32 %v3902, %v3903
        %v3905 = vand.u32 %v3904, 4294901760
        %3906 = vmatmul.f32.gmra.mxu0 %v3905
        %v3907 = vpop.f32.mrf.mxu0
        %v3908 = vadd.f32 0.0, %v3907
        %v3909 = vand.u32 %v299, 4294901760
        %v3910 = vsub.f32 %v299, %v3909
        %v3911 = vand.u32 %v3910, 4294901760
        %v3912 = vsub.f32 %v3910, %v3911
        %v3913 = vand.u32 %v3912, 4294901760
        %3914 = vmatmul.f32.gmra.mxu0 %v3913
        %v3915 = vpop.f32.mrf.mxu0
        %v3916 = vadd.f32 0.0, %v3915
        %v3917 = vand.u32 %v302, 4294901760
        %v3918 = vsub.f32 %v302, %v3917
        %v3919 = vand.u32 %v3918, 4294901760
        %v3920 = vsub.f32 %v3918, %v3919
        %v3921 = vand.u32 %v3920, 4294901760
        %3922 = vmatmul.f32.gmra.mxu0 %v3921
        %v3923 = vpop.f32.mrf.mxu0
        %v3924 = vadd.f32 0.0, %v3923
        %v3925 = vand.u32 %v305, 4294901760
        %v3926 = vsub.f32 %v305, %v3925
        %v3927 = vand.u32 %v3926, 4294901760
        %v3928 = vsub.f32 %v3926, %v3927
        %v3929 = vand.u32 %v3928, 4294901760
        %3930 = vmatmul.f32.gmra.mxu0 %v3929
        %v3931 = vpop.f32.mrf.mxu0
        %v3932 = vadd.f32 0.0, %v3931
        %v3933 = vand.u32 %v308, 4294901760
        %v3934 = vsub.f32 %v308, %v3933
        %v3935 = vand.u32 %v3934, 4294901760
        %v3936 = vsub.f32 %v3934, %v3935
        %v3937 = vand.u32 %v3936, 4294901760
        %3938 = vmatmul.f32.gmra.mxu0 %v3937
        %v3939 = vpop.f32.mrf.mxu0
        %v3940 = vadd.f32 0.0, %v3939
        %v3941 = vand.u32 %v311, 4294901760
        %v3942 = vsub.f32 %v311, %v3941
        %v3943 = vand.u32 %v3942, 4294901760
        %v3944 = vsub.f32 %v3942, %v3943
        %v3945 = vand.u32 %v3944, 4294901760
        %3946 = vmatmul.f32.gmra.mxu0 %v3945
        %v3947 = vpop.f32.mrf.mxu0
        %v3948 = vadd.f32 0.0, %v3947
        %v3949 = vand.u32 %v314, 4294901760
        %v3950 = vsub.f32 %v314, %v3949
        %v3951 = vand.u32 %v3950, 4294901760
        %v3952 = vsub.f32 %v3950, %v3951
        %v3953 = vand.u32 %v3952, 4294901760
        %3954 = vmatmul.f32.gmra.mxu0 %v3953
        %v3955 = vpop.f32.mrf.mxu0
        %v3956 = vadd.f32 0.0, %v3955
        %v3957 = vand.u32 %v317, 4294901760
        %v3958 = vsub.f32 %v317, %v3957
        %v3959 = vand.u32 %v3958, 4294901760
        %v3960 = vsub.f32 %v3958, %v3959
        %v3961 = vand.u32 %v3960, 4294901760
        %3962 = vmatmul.f32.gmra.mxu0 %v3961
        %v3963 = vpop.f32.mrf.mxu0
        %v3964 = vadd.f32 0.0, %v3963
        %v3965 = vand.u32 %v320, 4294901760
        %v3966 = vsub.f32 %v320, %v3965
        %v3967 = vand.u32 %v3966, 4294901760
        %v3968 = vsub.f32 %v3966, %v3967
        %v3969 = vand.u32 %v3968, 4294901760
        %3970 = vmatmul.f32.gmra.mxu0 %v3969
        %v3971 = vpop.f32.mrf.mxu0
        %v3972 = vadd.f32 0.0, %v3971
        %v3973 = vand.u32 %v323, 4294901760
        %v3974 = vsub.f32 %v323, %v3973
        %v3975 = vand.u32 %v3974, 4294901760
        %v3976 = vsub.f32 %v3974, %v3975
        %v3977 = vand.u32 %v3976, 4294901760
        %3978 = vmatmul.f32.gmra.mxu0 %v3977
        %v3979 = vpop.f32.mrf.mxu0
        %v3980 = vadd.f32 0.0, %v3979
        %v3981 = vand.u32 %v326, 4294901760
        %v3982 = vsub.f32 %v326, %v3981
        %v3983 = vand.u32 %v3982, 4294901760
        %v3984 = vsub.f32 %v3982, %v3983
        %v3985 = vand.u32 %v3984, 4294901760
        %3986 = vmatmul.f32.gmra.mxu0 %v3985
        %v3987 = vpop.f32.mrf.mxu0
        %v3988 = vadd.f32 0.0, %v3987
        %v3989 = vand.u32 %v329, 4294901760
        %v3990 = vsub.f32 %v329, %v3989
        %v3991 = vand.u32 %v3990, 4294901760
        %v3992 = vsub.f32 %v3990, %v3991
        %v3993 = vand.u32 %v3992, 4294901760
        %3994 = vmatmul.f32.gmra.mxu0 %v3993
        %v3995 = vpop.f32.mrf.mxu0
        %v3996 = vadd.f32 0.0, %v3995
        %v3997 = vand.u32 %v332, 4294901760
        %v3998 = vsub.f32 %v332, %v3997
        %v3999 = vand.u32 %v3998, 4294901760
        %v4000 = vsub.f32 %v3998, %v3999
        %v4001 = vand.u32 %v4000, 4294901760
        %4002 = vmatmul.f32.gmra.mxu0 %v4001
        %v4003 = vpop.f32.mrf.mxu0
        %v4004 = vadd.f32 0.0, %v4003
        %v4005 = vand.u32 %v335, 4294901760
        %v4006 = vsub.f32 %v335, %v4005
        %v4007 = vand.u32 %v4006, 4294901760
        %v4008 = vsub.f32 %v4006, %v4007
        %v4009 = vand.u32 %v4008, 4294901760
        %4010 = vmatmul.f32.gmra.mxu0 %v4009
        %v4011 = vpop.f32.mrf.mxu0
        %v4012 = vadd.f32 0.0, %v4011
        %v4013 = vand.u32 %v338, 4294901760
        %v4014 = vsub.f32 %v338, %v4013
        %v4015 = vand.u32 %v4014, 4294901760
        %v4016 = vsub.f32 %v4014, %v4015
        %v4017 = vand.u32 %v4016, 4294901760
        %4018 = vmatmul.f32.gmra.mxu0 %v4017
        %v4019 = vpop.f32.mrf.mxu0
        %v4020 = vadd.f32 0.0, %v4019
        %v4021 = vand.u32 %v341, 4294901760
        %v4022 = vsub.f32 %v341, %v4021
        %v4023 = vand.u32 %v4022, 4294901760
        %v4024 = vsub.f32 %v4022, %v4023
        %v4025 = vand.u32 %v4024, 4294901760
        %4026 = vmatmul.f32.gmra.mxu0 %v4025
        %v4027 = vpop.f32.mrf.mxu0
        %v4028 = vadd.f32 0.0, %v4027
        %v4029 = vand.u32 %v344, 4294901760
        %v4030 = vsub.f32 %v344, %v4029
        %v4031 = vand.u32 %v4030, 4294901760
        %v4032 = vsub.f32 %v4030, %v4031
        %v4033 = vand.u32 %v4032, 4294901760
        %4034 = vmatmul.f32.gmra.mxu0 %v4033
        %v4035 = vpop.f32.mrf.mxu0
        %v4036 = vadd.f32 0.0, %v4035
        %v4037 = vand.u32 %v347, 4294901760
        %v4038 = vsub.f32 %v347, %v4037
        %v4039 = vand.u32 %v4038, 4294901760
        %v4040 = vsub.f32 %v4038, %v4039
        %v4041 = vand.u32 %v4040, 4294901760
        %4042 = vmatmul.f32.gmra.mxu0 %v4041
        %v4043 = vpop.f32.mrf.mxu0
        %v4044 = vadd.f32 0.0, %v4043
        %v4045 = vand.u32 %v350, 4294901760
        %v4046 = vsub.f32 %v350, %v4045
        %v4047 = vand.u32 %v4046, 4294901760
        %v4048 = vsub.f32 %v4046, %v4047
        %v4049 = vand.u32 %v4048, 4294901760
        %4050 = vmatmul.f32.gmra.mxu0 %v4049
        %v4051 = vpop.f32.mrf.mxu0
        %v4052 = vadd.f32 0.0, %v4051
        %v4053 = vand.u32 %v353, 4294901760
        %v4054 = vsub.f32 %v353, %v4053
        %v4055 = vand.u32 %v4054, 4294901760
        %v4056 = vsub.f32 %v4054, %v4055
        %v4057 = vand.u32 %v4056, 4294901760
        %4058 = vmatmul.f32.gmra.mxu0 %v4057
        %v4059 = vpop.f32.mrf.mxu0
        %v4060 = vadd.f32 0.0, %v4059
        %v4061 = vand.u32 %v356, 4294901760
        %v4062 = vsub.f32 %v356, %v4061
        %v4063 = vand.u32 %v4062, 4294901760
        %v4064 = vsub.f32 %v4062, %v4063
        %v4065 = vand.u32 %v4064, 4294901760
        %4066 = vmatmul.f32.gmra.mxu0 %v4065
        %v4067 = vpop.f32.mrf.mxu0
        %v4068 = vadd.f32 0.0, %v4067
        %v4069 = vand.u32 %v359, 4294901760
        %v4070 = vsub.f32 %v359, %v4069
        %v4071 = vand.u32 %v4070, 4294901760
        %v4072 = vsub.f32 %v4070, %v4071
        %v4073 = vand.u32 %v4072, 4294901760
        %4074 = vmatmul.f32.gmra.mxu0 %v4073
        %v4075 = vpop.f32.mrf.mxu0
        %v4076 = vadd.f32 0.0, %v4075
        %v4077 = vand.u32 %v362, 4294901760
        %v4078 = vsub.f32 %v362, %v4077
        %v4079 = vand.u32 %v4078, 4294901760
        %v4080 = vsub.f32 %v4078, %v4079
        %v4081 = vand.u32 %v4080, 4294901760
        %4082 = vmatmul.f32.gmra.mxu0 %v4081
        %v4083 = vpop.f32.mrf.mxu0
        %v4084 = vadd.f32 0.0, %v4083
        %v4085 = vand.u32 %v365, 4294901760
        %v4086 = vsub.f32 %v365, %v4085
        %v4087 = vand.u32 %v4086, 4294901760
        %v4088 = vsub.f32 %v4086, %v4087
        %v4089 = vand.u32 %v4088, 4294901760
        %4090 = vmatmul.f32.gmra.mxu0 %v4089
        %v4091 = vpop.f32.mrf.mxu0
        %v4092 = vadd.f32 0.0, %v4091
        %v4093 = vand.u32 %v368, 4294901760
        %v4094 = vsub.f32 %v368, %v4093
        %v4095 = vand.u32 %v4094, 4294901760
        %v4096 = vsub.f32 %v4094, %v4095
        %v4097 = vand.u32 %v4096, 4294901760
        %4098 = vmatmul.f32.gmra.mxu0 %v4097
        %v4099 = vpop.f32.mrf.mxu0
        %v4100 = vadd.f32 0.0, %v4099
        %v4101 = vand.u32 %v371, 4294901760
        %v4102 = vsub.f32 %v371, %v4101
        %v4103 = vand.u32 %v4102, 4294901760
        %v4104 = vsub.f32 %v4102, %v4103
        %v4105 = vand.u32 %v4104, 4294901760
        %4106 = vmatmul.f32.gmra.mxu0 %v4105
        %v4107 = vpop.f32.mrf.mxu0
        %v4108 = vadd.f32 0.0, %v4107
        %v4109 = vand.u32 %v374, 4294901760
        %v4110 = vsub.f32 %v374, %v4109
        %v4111 = vand.u32 %v4110, 4294901760
        %v4112 = vsub.f32 %v4110, %v4111
        %v4113 = vand.u32 %v4112, 4294901760
        %4114 = vmatmul.f32.gmra.mxu0 %v4113
        %v4115 = vpop.f32.mrf.mxu0
        %v4116 = vadd.f32 0.0, %v4115
        %v4117 = vand.u32 %v377, 4294901760
        %v4118 = vsub.f32 %v377, %v4117
        %v4119 = vand.u32 %v4118, 4294901760
        %v4120 = vsub.f32 %v4118, %v4119
        %v4121 = vand.u32 %v4120, 4294901760
        %4122 = vmatmul.f32.gmra.mxu0 %v4121
        %v4123 = vpop.f32.mrf.mxu0
        %v4124 = vadd.f32 0.0, %v4123
        %v4125 = vand.u32 %v380, 4294901760
        %v4126 = vsub.f32 %v380, %v4125
        %v4127 = vand.u32 %v4126, 4294901760
        %v4128 = vsub.f32 %v4126, %v4127
        %v4129 = vand.u32 %v4128, 4294901760
        %4130 = vmatmul.f32.gmra.mxu0 %v4129
        %v4131 = vpop.f32.mrf.mxu0
        %v4132 = vadd.f32 0.0, %v4131
        %v4133 = vand.u32 %v383, 4294901760
        %v4134 = vsub.f32 %v383, %v4133
        %v4135 = vand.u32 %v4134, 4294901760
        %v4136 = vsub.f32 %v4134, %v4135
        %v4137 = vand.u32 %v4136, 4294901760
        %4138 = vmatmul.f32.gmra.mxu0 %v4137
        %v4139 = vpop.f32.mrf.mxu0
        %v4140 = vadd.f32 0.0, %v4139
        %v4141 = vand.u32 %v386, 4294901760
        %v4142 = vsub.f32 %v386, %v4141
        %v4143 = vand.u32 %v4142, 4294901760
        %v4144 = vsub.f32 %v4142, %v4143
        %v4145 = vand.u32 %v4144, 4294901760
        %4146 = vmatmul.f32.gmra.mxu0 %v4145
        %v4147 = vpop.f32.mrf.mxu0
        %v4148 = vadd.f32 0.0, %v4147
        %v4149 = vand.u32 %v389, 4294901760
        %v4150 = vsub.f32 %v389, %v4149
        %v4151 = vand.u32 %v4150, 4294901760
        %v4152 = vsub.f32 %v4150, %v4151
        %v4153 = vand.u32 %v4152, 4294901760
        %4154 = vmatmul.f32.gmra.mxu0 %v4153
        %v4155 = vpop.f32.mrf.mxu0
        %v4156 = vadd.f32 0.0, %v4155
        %v4157 = vand.u32 %v392, 4294901760
        %v4158 = vsub.f32 %v392, %v4157
        %v4159 = vand.u32 %v4158, 4294901760
        %v4160 = vsub.f32 %v4158, %v4159
        %v4161 = vand.u32 %v4160, 4294901760
        %4162 = vmatmul.f32.gmra.mxu0 %v4161
        %v4163 = vpop.f32.mrf.mxu0
        %v4164 = vadd.f32 0.0, %v4163
        %v4165 = vand.u32 %v395, 4294901760
        %v4166 = vsub.f32 %v395, %v4165
        %v4167 = vand.u32 %v4166, 4294901760
        %v4168 = vsub.f32 %v4166, %v4167
        %v4169 = vand.u32 %v4168, 4294901760
        %4170 = vmatmul.f32.gmra.mxu0 %v4169
        %v4171 = vpop.f32.mrf.mxu0
        %v4172 = vadd.f32 0.0, %v4171
        %v4173 = vand.u32 %v398, 4294901760
        %v4174 = vsub.f32 %v398, %v4173
        %v4175 = vand.u32 %v4174, 4294901760
        %v4176 = vsub.f32 %v4174, %v4175
        %v4177 = vand.u32 %v4176, 4294901760
        %4178 = vmatmul.f32.gmra.mxu0 %v4177
        %v4179 = vpop.f32.mrf.mxu0
        %v4180 = vadd.f32 0.0, %v4179
        %v4181 = vand.u32 %v401, 4294901760
        %v4182 = vsub.f32 %v401, %v4181
        %v4183 = vand.u32 %v4182, 4294901760
        %v4184 = vsub.f32 %v4182, %v4183
        %v4185 = vand.u32 %v4184, 4294901760
        %4186 = vmatmul.f32.gmra.mxu0 %v4185
        %v4187 = vpop.f32.mrf.mxu0
        %v4188 = vadd.f32 0.0, %v4187
        %v4189 = vand.u32 %v404, 4294901760
        %v4190 = vsub.f32 %v404, %v4189
        %v4191 = vand.u32 %v4190, 4294901760
        %v4192 = vsub.f32 %v4190, %v4191
        %v4193 = vand.u32 %v4192, 4294901760
        %4194 = vmatmul.f32.gmra.mxu0 %v4193
        %v4195 = vpop.f32.mrf.mxu0
        %v4196 = vadd.f32 0.0, %v4195
        %v4197 = vand.u32 %v407, 4294901760
        %v4198 = vsub.f32 %v407, %v4197
        %v4199 = vand.u32 %v4198, 4294901760
        %v4200 = vsub.f32 %v4198, %v4199
        %v4201 = vand.u32 %v4200, 4294901760
        %4202 = vmatmul.f32.gmra.mxu0 %v4201
        %v4203 = vpop.f32.mrf.mxu0
        %v4204 = vadd.f32 0.0, %v4203
        %4205 = vdwg.mxu0
        %4206 = vmatpush.msra.mxu0 0.0
        %4207 = vmatpush.msra.mxu0 0.0
        %4208 = vmatpush.msra.mxu0 0.0
        %4209 = vmatpush.msra.mxu0 0.0
        %4210 = vmatpush.msra.mxu0 0.0
        %4211 = vmatpush.msra.mxu0 0.0
        %4212 = vmatpush.msra.mxu0 0.0
        %4213 = vmatpush.msra.mxu0 0.0
        %v4214 = vand.u32 %v263, 4294901760
        %v4215 = vsub.f32 %v263, %v4214
        %v4216 = vand.u32 %v4215, 4294901760
        %v4217 = vsub.f32 %v4215, %v4216
        %v4218 = vand.u32 %v4217, 4294901760
        %4219 = vmatpush.msra.mxu0 %v4218
        %v4220 = vand.u32 %v260, 4294901760
        %v4221 = vsub.f32 %v260, %v4220
        %v4222 = vand.u32 %v4221, 4294901760
        %v4223 = vsub.f32 %v4221, %v4222
        %v4224 = vand.u32 %v4223, 4294901760
        %4225 = vmatpush.msra.mxu0 %v4224
        %v4226 = vand.u32 %v257, 4294901760
        %v4227 = vsub.f32 %v257, %v4226
        %v4228 = vand.u32 %v4227, 4294901760
        %v4229 = vsub.f32 %v4227, %v4228
        %v4230 = vand.u32 %v4229, 4294901760
        %4231 = vmatpush.msra.mxu0 %v4230
        %v4232 = vand.u32 %v254, 4294901760
        %v4233 = vsub.f32 %v254, %v4232
        %v4234 = vand.u32 %v4233, 4294901760
        %v4235 = vsub.f32 %v4233, %v4234
        %v4236 = vand.u32 %v4235, 4294901760
        %4237 = vmatpush.msra.mxu0 %v4236
        %v4238 = vand.u32 %v251, 4294901760
        %v4239 = vsub.f32 %v251, %v4238
        %v4240 = vand.u32 %v4239, 4294901760
        %v4241 = vsub.f32 %v4239, %v4240
        %v4242 = vand.u32 %v4241, 4294901760
        %4243 = vmatpush.msra.mxu0 %v4242
        %v4244 = vand.u32 %v248, 4294901760
        %v4245 = vsub.f32 %v248, %v4244
        %v4246 = vand.u32 %v4245, 4294901760
        %v4247 = vsub.f32 %v4245, %v4246
        %v4248 = vand.u32 %v4247, 4294901760
        %4249 = vmatpush.msra.mxu0 %v4248
        %v4250 = vand.u32 %v245, 4294901760
        %v4251 = vsub.f32 %v245, %v4250
        %v4252 = vand.u32 %v4251, 4294901760
        %v4253 = vsub.f32 %v4251, %v4252
        %v4254 = vand.u32 %v4253, 4294901760
        %4255 = vmatpush.msra.mxu0 %v4254
        %v4256 = vand.u32 %v242, 4294901760
        %v4257 = vsub.f32 %v242, %v4256
        %v4258 = vand.u32 %v4257, 4294901760
        %v4259 = vsub.f32 %v4257, %v4258
        %v4260 = vand.u32 %v4259, 4294901760
        %4261 = vmatpush.msra.mxu0 %v4260
        %v4262 = vand.u32 %v266, 4294901760
        %4263 = vmatmul.f32.gmra.mxu0 %v4262
        %v4264 = vpop.f32.mrf.mxu0
        %v4265 = vadd.f32 %v3828, %v4264
        %v4266 = vand.u32 %v269, 4294901760
        %4267 = vmatmul.f32.gmra.mxu0 %v4266
        %v4268 = vpop.f32.mrf.mxu0
        %v4269 = vadd.f32 %v3836, %v4268
        %v4270 = vand.u32 %v272, 4294901760
        %4271 = vmatmul.f32.gmra.mxu0 %v4270
        %v4272 = vpop.f32.mrf.mxu0
        %v4273 = vadd.f32 %v3844, %v4272
        %v4274 = vand.u32 %v275, 4294901760
        %4275 = vmatmul.f32.gmra.mxu0 %v4274
        %v4276 = vpop.f32.mrf.mxu0
        %v4277 = vadd.f32 %v3852, %v4276
        %v4278 = vand.u32 %v278, 4294901760
        %4279 = vmatmul.f32.gmra.mxu0 %v4278
        %v4280 = vpop.f32.mrf.mxu0
        %v4281 = vadd.f32 %v3860, %v4280
        %v4282 = vand.u32 %v281, 4294901760
        %4283 = vmatmul.f32.gmra.mxu0 %v4282
        %v4284 = vpop.f32.mrf.mxu0
        %v4285 = vadd.f32 %v3868, %v4284
        %v4286 = vand.u32 %v284, 4294901760
        %4287 = vmatmul.f32.gmra.mxu0 %v4286
        %v4288 = vpop.f32.mrf.mxu0
        %v4289 = vadd.f32 %v3876, %v4288
        %v4290 = vand.u32 %v287, 4294901760
        %4291 = vmatmul.f32.gmra.mxu0 %v4290
        %v4292 = vpop.f32.mrf.mxu0
        %v4293 = vadd.f32 %v3884, %v4292
        %v4294 = vand.u32 %v290, 4294901760
        %4295 = vmatmul.f32.gmra.mxu0 %v4294
        %v4296 = vpop.f32.mrf.mxu0
        %v4297 = vadd.f32 %v3892, %v4296
        %v4298 = vand.u32 %v293, 4294901760
        %4299 = vmatmul.f32.gmra.mxu0 %v4298
        %v4300 = vpop.f32.mrf.mxu0
        %v4301 = vadd.f32 %v3900, %v4300
        %v4302 = vand.u32 %v296, 4294901760
        %4303 = vmatmul.f32.gmra.mxu0 %v4302
        %v4304 = vpop.f32.mrf.mxu0
        %v4305 = vadd.f32 %v3908, %v4304
        %v4306 = vand.u32 %v299, 4294901760
        %4307 = vmatmul.f32.gmra.mxu0 %v4306
        %v4308 = vpop.f32.mrf.mxu0
        %v4309 = vadd.f32 %v3916, %v4308
        %v4310 = vand.u32 %v302, 4294901760
        %4311 = vmatmul.f32.gmra.mxu0 %v4310
        %v4312 = vpop.f32.mrf.mxu0
        %v4313 = vadd.f32 %v3924, %v4312
        %v4314 = vand.u32 %v305, 4294901760
        %4315 = vmatmul.f32.gmra.mxu0 %v4314
        %v4316 = vpop.f32.mrf.mxu0
        %v4317 = vadd.f32 %v3932, %v4316
        %v4318 = vand.u32 %v308, 4294901760
        %4319 = vmatmul.f32.gmra.mxu0 %v4318
        %v4320 = vpop.f32.mrf.mxu0
        %v4321 = vadd.f32 %v3940, %v4320
        %v4322 = vand.u32 %v311, 4294901760
        %4323 = vmatmul.f32.gmra.mxu0 %v4322
        %v4324 = vpop.f32.mrf.mxu0
        %v4325 = vadd.f32 %v3948, %v4324
        %v4326 = vand.u32 %v314, 4294901760
        %4327 = vmatmul.f32.gmra.mxu0 %v4326
        %v4328 = vpop.f32.mrf.mxu0
        %v4329 = vadd.f32 %v3956, %v4328
        %v4330 = vand.u32 %v317, 4294901760
        %4331 = vmatmul.f32.gmra.mxu0 %v4330
        %v4332 = vpop.f32.mrf.mxu0
        %v4333 = vadd.f32 %v3964, %v4332
        %v4334 = vand.u32 %v320, 4294901760
        %4335 = vmatmul.f32.gmra.mxu0 %v4334
        %v4336 = vpop.f32.mrf.mxu0
        %v4337 = vadd.f32 %v3972, %v4336
        %v4338 = vand.u32 %v323, 4294901760
        %4339 = vmatmul.f32.gmra.mxu0 %v4338
        %v4340 = vpop.f32.mrf.mxu0
        %v4341 = vadd.f32 %v3980, %v4340
        %v4342 = vand.u32 %v326, 4294901760
        %4343 = vmatmul.f32.gmra.mxu0 %v4342
        %v4344 = vpop.f32.mrf.mxu0
        %v4345 = vadd.f32 %v3988, %v4344
        %v4346 = vand.u32 %v329, 4294901760
        %4347 = vmatmul.f32.gmra.mxu0 %v4346
        %v4348 = vpop.f32.mrf.mxu0
        %v4349 = vadd.f32 %v3996, %v4348
        %v4350 = vand.u32 %v332, 4294901760
        %4351 = vmatmul.f32.gmra.mxu0 %v4350
        %v4352 = vpop.f32.mrf.mxu0
        %v4353 = vadd.f32 %v4004, %v4352
        %v4354 = vand.u32 %v335, 4294901760
        %4355 = vmatmul.f32.gmra.mxu0 %v4354
        %v4356 = vpop.f32.mrf.mxu0
        %v4357 = vadd.f32 %v4012, %v4356
        %v4358 = vand.u32 %v338, 4294901760
        %4359 = vmatmul.f32.gmra.mxu0 %v4358
        %v4360 = vpop.f32.mrf.mxu0
        %v4361 = vadd.f32 %v4020, %v4360
        %v4362 = vand.u32 %v341, 4294901760
        %4363 = vmatmul.f32.gmra.mxu0 %v4362
        %v4364 = vpop.f32.mrf.mxu0
        %v4365 = vadd.f32 %v4028, %v4364
        %v4366 = vand.u32 %v344, 4294901760
        %4367 = vmatmul.f32.gmra.mxu0 %v4366
        %v4368 = vpop.f32.mrf.mxu0
        %v4369 = vadd.f32 %v4036, %v4368
        %v4370 = vand.u32 %v347, 4294901760
        %4371 = vmatmul.f32.gmra.mxu0 %v4370
        %v4372 = vpop.f32.mrf.mxu0
        %v4373 = vadd.f32 %v4044, %v4372
        %v4374 = vand.u32 %v350, 4294901760
        %4375 = vmatmul.f32.gmra.mxu0 %v4374
        %v4376 = vpop.f32.mrf.mxu0
        %v4377 = vadd.f32 %v4052, %v4376
        %v4378 = vand.u32 %v353, 4294901760
        %4379 = vmatmul.f32.gmra.mxu0 %v4378
        %v4380 = vpop.f32.mrf.mxu0
        %v4381 = vadd.f32 %v4060, %v4380
        %v4382 = vand.u32 %v356, 4294901760
        %4383 = vmatmul.f32.gmra.mxu0 %v4382
        %v4384 = vpop.f32.mrf.mxu0
        %v4385 = vadd.f32 %v4068, %v4384
        %v4386 = vand.u32 %v359, 4294901760
        %4387 = vmatmul.f32.gmra.mxu0 %v4386
        %v4388 = vpop.f32.mrf.mxu0
        %v4389 = vadd.f32 %v4076, %v4388
        %v4390 = vand.u32 %v362, 4294901760
        %4391 = vmatmul.f32.gmra.mxu0 %v4390
        %v4392 = vpop.f32.mrf.mxu0
        %v4393 = vadd.f32 %v4084, %v4392
        %v4394 = vand.u32 %v365, 4294901760
        %4395 = vmatmul.f32.gmra.mxu0 %v4394
        %v4396 = vpop.f32.mrf.mxu0
        %v4397 = vadd.f32 %v4092, %v4396
        %v4398 = vand.u32 %v368, 4294901760
        %4399 = vmatmul.f32.gmra.mxu0 %v4398
        %v4400 = vpop.f32.mrf.mxu0
        %v4401 = vadd.f32 %v4100, %v4400
        %v4402 = vand.u32 %v371, 4294901760
        %4403 = vmatmul.f32.gmra.mxu0 %v4402
        %v4404 = vpop.f32.mrf.mxu0
        %v4405 = vadd.f32 %v4108, %v4404
        %v4406 = vand.u32 %v374, 4294901760
        %4407 = vmatmul.f32.gmra.mxu0 %v4406
        %v4408 = vpop.f32.mrf.mxu0
        %v4409 = vadd.f32 %v4116, %v4408
        %v4410 = vand.u32 %v377, 4294901760
        %4411 = vmatmul.f32.gmra.mxu0 %v4410
        %v4412 = vpop.f32.mrf.mxu0
        %v4413 = vadd.f32 %v4124, %v4412
        %v4414 = vand.u32 %v380, 4294901760
        %4415 = vmatmul.f32.gmra.mxu0 %v4414
        %v4416 = vpop.f32.mrf.mxu0
        %v4417 = vadd.f32 %v4132, %v4416
        %v4418 = vand.u32 %v383, 4294901760
        %4419 = vmatmul.f32.gmra.mxu0 %v4418
        %v4420 = vpop.f32.mrf.mxu0
        %v4421 = vadd.f32 %v4140, %v4420
        %v4422 = vand.u32 %v386, 4294901760
        %4423 = vmatmul.f32.gmra.mxu0 %v4422
        %v4424 = vpop.f32.mrf.mxu0
        %v4425 = vadd.f32 %v4148, %v4424
        %v4426 = vand.u32 %v389, 4294901760
        %4427 = vmatmul.f32.gmra.mxu0 %v4426
        %v4428 = vpop.f32.mrf.mxu0
        %v4429 = vadd.f32 %v4156, %v4428
        %v4430 = vand.u32 %v392, 4294901760
        %4431 = vmatmul.f32.gmra.mxu0 %v4430
        %v4432 = vpop.f32.mrf.mxu0
        %v4433 = vadd.f32 %v4164, %v4432
        %v4434 = vand.u32 %v395, 4294901760
        %4435 = vmatmul.f32.gmra.mxu0 %v4434
        %v4436 = vpop.f32.mrf.mxu0
        %v4437 = vadd.f32 %v4172, %v4436
        %v4438 = vand.u32 %v398, 4294901760
        %4439 = vmatmul.f32.gmra.mxu0 %v4438
        %v4440 = vpop.f32.mrf.mxu0
        %v4441 = vadd.f32 %v4180, %v4440
        %v4442 = vand.u32 %v401, 4294901760
        %4443 = vmatmul.f32.gmra.mxu0 %v4442
        %v4444 = vpop.f32.mrf.mxu0
        %v4445 = vadd.f32 %v4188, %v4444
        %v4446 = vand.u32 %v404, 4294901760
        %4447 = vmatmul.f32.gmra.mxu0 %v4446
        %v4448 = vpop.f32.mrf.mxu0
        %v4449 = vadd.f32 %v4196, %v4448
        %v4450 = vand.u32 %v407, 4294901760
        %4451 = vmatmul.f32.gmra.mxu0 %v4450
        %v4452 = vpop.f32.mrf.mxu0
        %v4453 = vadd.f32 %v4204, %v4452
        %4454 = vdwg.mxu0
        %4455 = vmatpush.msra.mxu0 0.0
        %4456 = vmatpush.msra.mxu0 0.0
        %4457 = vmatpush.msra.mxu0 0.0
        %4458 = vmatpush.msra.mxu0 0.0
        %4459 = vmatpush.msra.mxu0 0.0
        %4460 = vmatpush.msra.mxu0 0.0
        %4461 = vmatpush.msra.mxu0 0.0
        %4462 = vmatpush.msra.mxu0 0.0
        %v4463 = vand.u32 %v263, 4294901760
        %v4464 = vsub.f32 %v263, %v4463
        %4465 = vmatpush.msra.mxu0 %v4464
        %v4466 = vand.u32 %v260, 4294901760
        %v4467 = vsub.f32 %v260, %v4466
        %4468 = vmatpush.msra.mxu0 %v4467
        %v4469 = vand.u32 %v257, 4294901760
        %v4470 = vsub.f32 %v257, %v4469
        %4471 = vmatpush.msra.mxu0 %v4470
        %v4472 = vand.u32 %v254, 4294901760
        %v4473 = vsub.f32 %v254, %v4472
        %4474 = vmatpush.msra.mxu0 %v4473
        %v4475 = vand.u32 %v251, 4294901760
        %v4476 = vsub.f32 %v251, %v4475
        %4477 = vmatpush.msra.mxu0 %v4476
        %v4478 = vand.u32 %v248, 4294901760
        %v4479 = vsub.f32 %v248, %v4478
        %4480 = vmatpush.msra.mxu0 %v4479
        %v4481 = vand.u32 %v245, 4294901760
        %v4482 = vsub.f32 %v245, %v4481
        %4483 = vmatpush.msra.mxu0 %v4482
        %v4484 = vand.u32 %v242, 4294901760
        %v4485 = vsub.f32 %v242, %v4484
        %4486 = vmatpush.msra.mxu0 %v4485
        %v4487 = vand.u32 %v266, 4294901760
        %v4488 = vsub.f32 %v266, %v4487
        %4489 = vmatmul.f32.gmra.mxu0 %v4488
        %v4490 = vpop.f32.mrf.mxu0
        %v4491 = vadd.f32 %v4265, %v4490
        %v4492 = vand.u32 %v269, 4294901760
        %v4493 = vsub.f32 %v269, %v4492
        %4494 = vmatmul.f32.gmra.mxu0 %v4493
        %v4495 = vpop.f32.mrf.mxu0
        %v4496 = vadd.f32 %v4269, %v4495
        %v4497 = vand.u32 %v272, 4294901760
        %v4498 = vsub.f32 %v272, %v4497
        %4499 = vmatmul.f32.gmra.mxu0 %v4498
        %v4500 = vpop.f32.mrf.mxu0
        %v4501 = vadd.f32 %v4273, %v4500
        %v4502 = vand.u32 %v275, 4294901760
        %v4503 = vsub.f32 %v275, %v4502
        %4504 = vmatmul.f32.gmra.mxu0 %v4503
        %v4505 = vpop.f32.mrf.mxu0
        %v4506 = vadd.f32 %v4277, %v4505
        %v4507 = vand.u32 %v278, 4294901760
        %v4508 = vsub.f32 %v278, %v4507
        %4509 = vmatmul.f32.gmra.mxu0 %v4508
        %v4510 = vpop.f32.mrf.mxu0
        %v4511 = vadd.f32 %v4281, %v4510
        %v4512 = vand.u32 %v281, 4294901760
        %v4513 = vsub.f32 %v281, %v4512
        %4514 = vmatmul.f32.gmra.mxu0 %v4513
        %v4515 = vpop.f32.mrf.mxu0
        %v4516 = vadd.f32 %v4285, %v4515
        %v4517 = vand.u32 %v284, 4294901760
        %v4518 = vsub.f32 %v284, %v4517
        %4519 = vmatmul.f32.gmra.mxu0 %v4518
        %v4520 = vpop.f32.mrf.mxu0
        %v4521 = vadd.f32 %v4289, %v4520
        %v4522 = vand.u32 %v287, 4294901760
        %v4523 = vsub.f32 %v287, %v4522
        %4524 = vmatmul.f32.gmra.mxu0 %v4523
        %v4525 = vpop.f32.mrf.mxu0
        %v4526 = vadd.f32 %v4293, %v4525
        %v4527 = vand.u32 %v290, 4294901760
        %v4528 = vsub.f32 %v290, %v4527
        %4529 = vmatmul.f32.gmra.mxu0 %v4528
        %v4530 = vpop.f32.mrf.mxu0
        %v4531 = vadd.f32 %v4297, %v4530
        %v4532 = vand.u32 %v293, 4294901760
        %v4533 = vsub.f32 %v293, %v4532
        %4534 = vmatmul.f32.gmra.mxu0 %v4533
        %v4535 = vpop.f32.mrf.mxu0
        %v4536 = vadd.f32 %v4301, %v4535
        %v4537 = vand.u32 %v296, 4294901760
        %v4538 = vsub.f32 %v296, %v4537
        %4539 = vmatmul.f32.gmra.mxu0 %v4538
        %v4540 = vpop.f32.mrf.mxu0
        %v4541 = vadd.f32 %v4305, %v4540
        %v4542 = vand.u32 %v299, 4294901760
        %v4543 = vsub.f32 %v299, %v4542
        %4544 = vmatmul.f32.gmra.mxu0 %v4543
        %v4545 = vpop.f32.mrf.mxu0
        %v4546 = vadd.f32 %v4309, %v4545
        %v4547 = vand.u32 %v302, 4294901760
        %v4548 = vsub.f32 %v302, %v4547
        %4549 = vmatmul.f32.gmra.mxu0 %v4548
        %v4550 = vpop.f32.mrf.mxu0
        %v4551 = vadd.f32 %v4313, %v4550
        %v4552 = vand.u32 %v305, 4294901760
        %v4553 = vsub.f32 %v305, %v4552
        %4554 = vmatmul.f32.gmra.mxu0 %v4553
        %v4555 = vpop.f32.mrf.mxu0
        %v4556 = vadd.f32 %v4317, %v4555
        %v4557 = vand.u32 %v308, 4294901760
        %v4558 = vsub.f32 %v308, %v4557
        %4559 = vmatmul.f32.gmra.mxu0 %v4558
        %v4560 = vpop.f32.mrf.mxu0
        %v4561 = vadd.f32 %v4321, %v4560
        %v4562 = vand.u32 %v311, 4294901760
        %v4563 = vsub.f32 %v311, %v4562
        %4564 = vmatmul.f32.gmra.mxu0 %v4563
        %v4565 = vpop.f32.mrf.mxu0
        %v4566 = vadd.f32 %v4325, %v4565
        %v4567 = vand.u32 %v314, 4294901760
        %v4568 = vsub.f32 %v314, %v4567
        %4569 = vmatmul.f32.gmra.mxu0 %v4568
        %v4570 = vpop.f32.mrf.mxu0
        %v4571 = vadd.f32 %v4329, %v4570
        %v4572 = vand.u32 %v317, 4294901760
        %v4573 = vsub.f32 %v317, %v4572
        %4574 = vmatmul.f32.gmra.mxu0 %v4573
        %v4575 = vpop.f32.mrf.mxu0
        %v4576 = vadd.f32 %v4333, %v4575
        %v4577 = vand.u32 %v320, 4294901760
        %v4578 = vsub.f32 %v320, %v4577
        %4579 = vmatmul.f32.gmra.mxu0 %v4578
        %v4580 = vpop.f32.mrf.mxu0
        %v4581 = vadd.f32 %v4337, %v4580
        %v4582 = vand.u32 %v323, 4294901760
        %v4583 = vsub.f32 %v323, %v4582
        %4584 = vmatmul.f32.gmra.mxu0 %v4583
        %v4585 = vpop.f32.mrf.mxu0
        %v4586 = vadd.f32 %v4341, %v4585
        %v4587 = vand.u32 %v326, 4294901760
        %v4588 = vsub.f32 %v326, %v4587
        %4589 = vmatmul.f32.gmra.mxu0 %v4588
        %v4590 = vpop.f32.mrf.mxu0
        %v4591 = vadd.f32 %v4345, %v4590
        %v4592 = vand.u32 %v329, 4294901760
        %v4593 = vsub.f32 %v329, %v4592
        %4594 = vmatmul.f32.gmra.mxu0 %v4593
        %v4595 = vpop.f32.mrf.mxu0
        %v4596 = vadd.f32 %v4349, %v4595
        %v4597 = vand.u32 %v332, 4294901760
        %v4598 = vsub.f32 %v332, %v4597
        %4599 = vmatmul.f32.gmra.mxu0 %v4598
        %v4600 = vpop.f32.mrf.mxu0
        %v4601 = vadd.f32 %v4353, %v4600
        %v4602 = vand.u32 %v335, 4294901760
        %v4603 = vsub.f32 %v335, %v4602
        %4604 = vmatmul.f32.gmra.mxu0 %v4603
        %v4605 = vpop.f32.mrf.mxu0
        %v4606 = vadd.f32 %v4357, %v4605
        %v4607 = vand.u32 %v338, 4294901760
        %v4608 = vsub.f32 %v338, %v4607
        %4609 = vmatmul.f32.gmra.mxu0 %v4608
        %v4610 = vpop.f32.mrf.mxu0
        %v4611 = vadd.f32 %v4361, %v4610
        %v4612 = vand.u32 %v341, 4294901760
        %v4613 = vsub.f32 %v341, %v4612
        %4614 = vmatmul.f32.gmra.mxu0 %v4613
        %v4615 = vpop.f32.mrf.mxu0
        %v4616 = vadd.f32 %v4365, %v4615
        %v4617 = vand.u32 %v344, 4294901760
        %v4618 = vsub.f32 %v344, %v4617
        %4619 = vmatmul.f32.gmra.mxu0 %v4618
        %v4620 = vpop.f32.mrf.mxu0
        %v4621 = vadd.f32 %v4369, %v4620
        %v4622 = vand.u32 %v347, 4294901760
        %v4623 = vsub.f32 %v347, %v4622
        %4624 = vmatmul.f32.gmra.mxu0 %v4623
        %v4625 = vpop.f32.mrf.mxu0
        %v4626 = vadd.f32 %v4373, %v4625
        %v4627 = vand.u32 %v350, 4294901760
        %v4628 = vsub.f32 %v350, %v4627
        %4629 = vmatmul.f32.gmra.mxu0 %v4628
        %v4630 = vpop.f32.mrf.mxu0
        %v4631 = vadd.f32 %v4377, %v4630
        %v4632 = vand.u32 %v353, 4294901760
        %v4633 = vsub.f32 %v353, %v4632
        %4634 = vmatmul.f32.gmra.mxu0 %v4633
        %v4635 = vpop.f32.mrf.mxu0
        %v4636 = vadd.f32 %v4381, %v4635
        %v4637 = vand.u32 %v356, 4294901760
        %v4638 = vsub.f32 %v356, %v4637
        %4639 = vmatmul.f32.gmra.mxu0 %v4638
        %v4640 = vpop.f32.mrf.mxu0
        %v4641 = vadd.f32 %v4385, %v4640
        %v4642 = vand.u32 %v359, 4294901760
        %v4643 = vsub.f32 %v359, %v4642
        %4644 = vmatmul.f32.gmra.mxu0 %v4643
        %v4645 = vpop.f32.mrf.mxu0
        %v4646 = vadd.f32 %v4389, %v4645
        %v4647 = vand.u32 %v362, 4294901760
        %v4648 = vsub.f32 %v362, %v4647
        %4649 = vmatmul.f32.gmra.mxu0 %v4648
        %v4650 = vpop.f32.mrf.mxu0
        %v4651 = vadd.f32 %v4393, %v4650
        %v4652 = vand.u32 %v365, 4294901760
        %v4653 = vsub.f32 %v365, %v4652
        %4654 = vmatmul.f32.gmra.mxu0 %v4653
        %v4655 = vpop.f32.mrf.mxu0
        %v4656 = vadd.f32 %v4397, %v4655
        %v4657 = vand.u32 %v368, 4294901760
        %v4658 = vsub.f32 %v368, %v4657
        %4659 = vmatmul.f32.gmra.mxu0 %v4658
        %v4660 = vpop.f32.mrf.mxu0
        %v4661 = vadd.f32 %v4401, %v4660
        %v4662 = vand.u32 %v371, 4294901760
        %v4663 = vsub.f32 %v371, %v4662
        %4664 = vmatmul.f32.gmra.mxu0 %v4663
        %v4665 = vpop.f32.mrf.mxu0
        %v4666 = vadd.f32 %v4405, %v4665
        %v4667 = vand.u32 %v374, 4294901760
        %v4668 = vsub.f32 %v374, %v4667
        %4669 = vmatmul.f32.gmra.mxu0 %v4668
        %v4670 = vpop.f32.mrf.mxu0
        %v4671 = vadd.f32 %v4409, %v4670
        %v4672 = vand.u32 %v377, 4294901760
        %v4673 = vsub.f32 %v377, %v4672
        %4674 = vmatmul.f32.gmra.mxu0 %v4673
        %v4675 = vpop.f32.mrf.mxu0
        %v4676 = vadd.f32 %v4413, %v4675
        %v4677 = vand.u32 %v380, 4294901760
        %v4678 = vsub.f32 %v380, %v4677
        %4679 = vmatmul.f32.gmra.mxu0 %v4678
        %v4680 = vpop.f32.mrf.mxu0
        %v4681 = vadd.f32 %v4417, %v4680
        %v4682 = vand.u32 %v383, 4294901760
        %v4683 = vsub.f32 %v383, %v4682
        %4684 = vmatmul.f32.gmra.mxu0 %v4683
        %v4685 = vpop.f32.mrf.mxu0
        %v4686 = vadd.f32 %v4421, %v4685
        %v4687 = vand.u32 %v386, 4294901760
        %v4688 = vsub.f32 %v386, %v4687
        %4689 = vmatmul.f32.gmra.mxu0 %v4688
        %v4690 = vpop.f32.mrf.mxu0
        %v4691 = vadd.f32 %v4425, %v4690
        %v4692 = vand.u32 %v389, 4294901760
        %v4693 = vsub.f32 %v389, %v4692
        %4694 = vmatmul.f32.gmra.mxu0 %v4693
        %v4695 = vpop.f32.mrf.mxu0
        %v4696 = vadd.f32 %v4429, %v4695
        %v4697 = vand.u32 %v392, 4294901760
        %v4698 = vsub.f32 %v392, %v4697
        %4699 = vmatmul.f32.gmra.mxu0 %v4698
        %v4700 = vpop.f32.mrf.mxu0
        %v4701 = vadd.f32 %v4433, %v4700
        %v4702 = vand.u32 %v395, 4294901760
        %v4703 = vsub.f32 %v395, %v4702
        %4704 = vmatmul.f32.gmra.mxu0 %v4703
        %v4705 = vpop.f32.mrf.mxu0
        %v4706 = vadd.f32 %v4437, %v4705
        %v4707 = vand.u32 %v398, 4294901760
        %v4708 = vsub.f32 %v398, %v4707
        %4709 = vmatmul.f32.gmra.mxu0 %v4708
        %v4710 = vpop.f32.mrf.mxu0
        %v4711 = vadd.f32 %v4441, %v4710
        %v4712 = vand.u32 %v401, 4294901760
        %v4713 = vsub.f32 %v401, %v4712
        %4714 = vmatmul.f32.gmra.mxu0 %v4713
        %v4715 = vpop.f32.mrf.mxu0
        %v4716 = vadd.f32 %v4445, %v4715
        %v4717 = vand.u32 %v404, 4294901760
        %v4718 = vsub.f32 %v404, %v4717
        %4719 = vmatmul.f32.gmra.mxu0 %v4718
        %v4720 = vpop.f32.mrf.mxu0
        %v4721 = vadd.f32 %v4449, %v4720
        %v4722 = vand.u32 %v407, 4294901760
        %v4723 = vsub.f32 %v407, %v4722
        %4724 = vmatmul.f32.gmra.mxu0 %v4723
        %v4725 = vpop.f32.mrf.mxu0
        %v4726 = vadd.f32 %v4453, %v4725
        %4727 = vdwg.mxu0
        %4728 = vmatpush.msra.mxu0 0.0
        %4729 = vmatpush.msra.mxu0 0.0
        %4730 = vmatpush.msra.mxu0 0.0
        %4731 = vmatpush.msra.mxu0 0.0
        %4732 = vmatpush.msra.mxu0 0.0
        %4733 = vmatpush.msra.mxu0 0.0
        %4734 = vmatpush.msra.mxu0 0.0
        %4735 = vmatpush.msra.mxu0 0.0
        %v4736 = vand.u32 %v263, 4294901760
        %4737 = vmatpush.msra.mxu0 %v4736
        %v4738 = vand.u32 %v260, 4294901760
        %4739 = vmatpush.msra.mxu0 %v4738
        %v4740 = vand.u32 %v257, 4294901760
        %4741 = vmatpush.msra.mxu0 %v4740
        %v4742 = vand.u32 %v254, 4294901760
        %4743 = vmatpush.msra.mxu0 %v4742
        %v4744 = vand.u32 %v251, 4294901760
        %4745 = vmatpush.msra.mxu0 %v4744
        %v4746 = vand.u32 %v248, 4294901760
        %4747 = vmatpush.msra.mxu0 %v4746
        %v4748 = vand.u32 %v245, 4294901760
        %4749 = vmatpush.msra.mxu0 %v4748
        %v4750 = vand.u32 %v242, 4294901760
        %4751 = vmatpush.msra.mxu0 %v4750
        %v4752 = vand.u32 %v266, 4294901760
        %v4753 = vsub.f32 %v266, %v4752
        %v4754 = vand.u32 %v4753, 4294901760
        %4755 = vmatmul.f32.gmra.mxu0 %v4754
        %v4756 = vpop.f32.mrf.mxu0
        %v4757 = vadd.f32 %v4491, %v4756
        %v4758 = vand.u32 %v269, 4294901760
        %v4759 = vsub.f32 %v269, %v4758
        %v4760 = vand.u32 %v4759, 4294901760
        %4761 = vmatmul.f32.gmra.mxu0 %v4760
        %v4762 = vpop.f32.mrf.mxu0
        %v4763 = vadd.f32 %v4496, %v4762
        %v4764 = vand.u32 %v272, 4294901760
        %v4765 = vsub.f32 %v272, %v4764
        %v4766 = vand.u32 %v4765, 4294901760
        %4767 = vmatmul.f32.gmra.mxu0 %v4766
        %v4768 = vpop.f32.mrf.mxu0
        %v4769 = vadd.f32 %v4501, %v4768
        %v4770 = vand.u32 %v275, 4294901760
        %v4771 = vsub.f32 %v275, %v4770
        %v4772 = vand.u32 %v4771, 4294901760
        %4773 = vmatmul.f32.gmra.mxu0 %v4772
        %v4774 = vpop.f32.mrf.mxu0
        %v4775 = vadd.f32 %v4506, %v4774
        %v4776 = vand.u32 %v278, 4294901760
        %v4777 = vsub.f32 %v278, %v4776
        %v4778 = vand.u32 %v4777, 4294901760
        %4779 = vmatmul.f32.gmra.mxu0 %v4778
        %v4780 = vpop.f32.mrf.mxu0
        %v4781 = vadd.f32 %v4511, %v4780
        %v4782 = vand.u32 %v281, 4294901760
        %v4783 = vsub.f32 %v281, %v4782
        %v4784 = vand.u32 %v4783, 4294901760
        %4785 = vmatmul.f32.gmra.mxu0 %v4784
        %v4786 = vpop.f32.mrf.mxu0
        %v4787 = vadd.f32 %v4516, %v4786
        %v4788 = vand.u32 %v284, 4294901760
        %v4789 = vsub.f32 %v284, %v4788
        %v4790 = vand.u32 %v4789, 4294901760
        %4791 = vmatmul.f32.gmra.mxu0 %v4790
        %v4792 = vpop.f32.mrf.mxu0
        %v4793 = vadd.f32 %v4521, %v4792
        %v4794 = vand.u32 %v287, 4294901760
        %v4795 = vsub.f32 %v287, %v4794
        %v4796 = vand.u32 %v4795, 4294901760
        %4797 = vmatmul.f32.gmra.mxu0 %v4796
        %v4798 = vpop.f32.mrf.mxu0
        %v4799 = vadd.f32 %v4526, %v4798
        %v4800 = vand.u32 %v290, 4294901760
        %v4801 = vsub.f32 %v290, %v4800
        %v4802 = vand.u32 %v4801, 4294901760
        %4803 = vmatmul.f32.gmra.mxu0 %v4802
        %v4804 = vpop.f32.mrf.mxu0
        %v4805 = vadd.f32 %v4531, %v4804
        %v4806 = vand.u32 %v293, 4294901760
        %v4807 = vsub.f32 %v293, %v4806
        %v4808 = vand.u32 %v4807, 4294901760
        %4809 = vmatmul.f32.gmra.mxu0 %v4808
        %v4810 = vpop.f32.mrf.mxu0
        %v4811 = vadd.f32 %v4536, %v4810
        %v4812 = vand.u32 %v296, 4294901760
        %v4813 = vsub.f32 %v296, %v4812
        %v4814 = vand.u32 %v4813, 4294901760
        %4815 = vmatmul.f32.gmra.mxu0 %v4814
        %v4816 = vpop.f32.mrf.mxu0
        %v4817 = vadd.f32 %v4541, %v4816
        %v4818 = vand.u32 %v299, 4294901760
        %v4819 = vsub.f32 %v299, %v4818
        %v4820 = vand.u32 %v4819, 4294901760
        %4821 = vmatmul.f32.gmra.mxu0 %v4820
        %v4822 = vpop.f32.mrf.mxu0
        %v4823 = vadd.f32 %v4546, %v4822
        %v4824 = vand.u32 %v302, 4294901760
        %v4825 = vsub.f32 %v302, %v4824
        %v4826 = vand.u32 %v4825, 4294901760
        %4827 = vmatmul.f32.gmra.mxu0 %v4826
        %v4828 = vpop.f32.mrf.mxu0
        %v4829 = vadd.f32 %v4551, %v4828
        %v4830 = vand.u32 %v305, 4294901760
        %v4831 = vsub.f32 %v305, %v4830
        %v4832 = vand.u32 %v4831, 4294901760
        %4833 = vmatmul.f32.gmra.mxu0 %v4832
        %v4834 = vpop.f32.mrf.mxu0
        %v4835 = vadd.f32 %v4556, %v4834
        %v4836 = vand.u32 %v308, 4294901760
        %v4837 = vsub.f32 %v308, %v4836
        %v4838 = vand.u32 %v4837, 4294901760
        %4839 = vmatmul.f32.gmra.mxu0 %v4838
        %v4840 = vpop.f32.mrf.mxu0
        %v4841 = vadd.f32 %v4561, %v4840
        %v4842 = vand.u32 %v311, 4294901760
        %v4843 = vsub.f32 %v311, %v4842
        %v4844 = vand.u32 %v4843, 4294901760
        %4845 = vmatmul.f32.gmra.mxu0 %v4844
        %v4846 = vpop.f32.mrf.mxu0
        %v4847 = vadd.f32 %v4566, %v4846
        %v4848 = vand.u32 %v314, 4294901760
        %v4849 = vsub.f32 %v314, %v4848
        %v4850 = vand.u32 %v4849, 4294901760
        %4851 = vmatmul.f32.gmra.mxu0 %v4850
        %v4852 = vpop.f32.mrf.mxu0
        %v4853 = vadd.f32 %v4571, %v4852
        %v4854 = vand.u32 %v317, 4294901760
        %v4855 = vsub.f32 %v317, %v4854
        %v4856 = vand.u32 %v4855, 4294901760
        %4857 = vmatmul.f32.gmra.mxu0 %v4856
        %v4858 = vpop.f32.mrf.mxu0
        %v4859 = vadd.f32 %v4576, %v4858
        %v4860 = vand.u32 %v320, 4294901760
        %v4861 = vsub.f32 %v320, %v4860
        %v4862 = vand.u32 %v4861, 4294901760
        %4863 = vmatmul.f32.gmra.mxu0 %v4862
        %v4864 = vpop.f32.mrf.mxu0
        %v4865 = vadd.f32 %v4581, %v4864
        %v4866 = vand.u32 %v323, 4294901760
        %v4867 = vsub.f32 %v323, %v4866
        %v4868 = vand.u32 %v4867, 4294901760
        %4869 = vmatmul.f32.gmra.mxu0 %v4868
        %v4870 = vpop.f32.mrf.mxu0
        %v4871 = vadd.f32 %v4586, %v4870
        %v4872 = vand.u32 %v326, 4294901760
        %v4873 = vsub.f32 %v326, %v4872
        %v4874 = vand.u32 %v4873, 4294901760
        %4875 = vmatmul.f32.gmra.mxu0 %v4874
        %v4876 = vpop.f32.mrf.mxu0
        %v4877 = vadd.f32 %v4591, %v4876
        %v4878 = vand.u32 %v329, 4294901760
        %v4879 = vsub.f32 %v329, %v4878
        %v4880 = vand.u32 %v4879, 4294901760
        %4881 = vmatmul.f32.gmra.mxu0 %v4880
        %v4882 = vpop.f32.mrf.mxu0
        %v4883 = vadd.f32 %v4596, %v4882
        %v4884 = vand.u32 %v332, 4294901760
        %v4885 = vsub.f32 %v332, %v4884
        %v4886 = vand.u32 %v4885, 4294901760
        %4887 = vmatmul.f32.gmra.mxu0 %v4886
        %v4888 = vpop.f32.mrf.mxu0
        %v4889 = vadd.f32 %v4601, %v4888
        %v4890 = vand.u32 %v335, 4294901760
        %v4891 = vsub.f32 %v335, %v4890
        %v4892 = vand.u32 %v4891, 4294901760
        %4893 = vmatmul.f32.gmra.mxu0 %v4892
        %v4894 = vpop.f32.mrf.mxu0
        %v4895 = vadd.f32 %v4606, %v4894
        %v4896 = vand.u32 %v338, 4294901760
        %v4897 = vsub.f32 %v338, %v4896
        %v4898 = vand.u32 %v4897, 4294901760
        %4899 = vmatmul.f32.gmra.mxu0 %v4898
        %v4900 = vpop.f32.mrf.mxu0
        %v4901 = vadd.f32 %v4611, %v4900
        %v4902 = vand.u32 %v341, 4294901760
        %v4903 = vsub.f32 %v341, %v4902
        %v4904 = vand.u32 %v4903, 4294901760
        %4905 = vmatmul.f32.gmra.mxu0 %v4904
        %v4906 = vpop.f32.mrf.mxu0
        %v4907 = vadd.f32 %v4616, %v4906
        %v4908 = vand.u32 %v344, 4294901760
        %v4909 = vsub.f32 %v344, %v4908
        %v4910 = vand.u32 %v4909, 4294901760
        %4911 = vmatmul.f32.gmra.mxu0 %v4910
        %v4912 = vpop.f32.mrf.mxu0
        %v4913 = vadd.f32 %v4621, %v4912
        %v4914 = vand.u32 %v347, 4294901760
        %v4915 = vsub.f32 %v347, %v4914
        %v4916 = vand.u32 %v4915, 4294901760
        %4917 = vmatmul.f32.gmra.mxu0 %v4916
        %v4918 = vpop.f32.mrf.mxu0
        %v4919 = vadd.f32 %v4626, %v4918
        %v4920 = vand.u32 %v350, 4294901760
        %v4921 = vsub.f32 %v350, %v4920
        %v4922 = vand.u32 %v4921, 4294901760
        %4923 = vmatmul.f32.gmra.mxu0 %v4922
        %v4924 = vpop.f32.mrf.mxu0
        %v4925 = vadd.f32 %v4631, %v4924
        %v4926 = vand.u32 %v353, 4294901760
        %v4927 = vsub.f32 %v353, %v4926
        %v4928 = vand.u32 %v4927, 4294901760
        %4929 = vmatmul.f32.gmra.mxu0 %v4928
        %v4930 = vpop.f32.mrf.mxu0
        %v4931 = vadd.f32 %v4636, %v4930
        %v4932 = vand.u32 %v356, 4294901760
        %v4933 = vsub.f32 %v356, %v4932
        %v4934 = vand.u32 %v4933, 4294901760
        %4935 = vmatmul.f32.gmra.mxu0 %v4934
        %v4936 = vpop.f32.mrf.mxu0
        %v4937 = vadd.f32 %v4641, %v4936
        %v4938 = vand.u32 %v359, 4294901760
        %v4939 = vsub.f32 %v359, %v4938
        %v4940 = vand.u32 %v4939, 4294901760
        %4941 = vmatmul.f32.gmra.mxu0 %v4940
        %v4942 = vpop.f32.mrf.mxu0
        %v4943 = vadd.f32 %v4646, %v4942
        %v4944 = vand.u32 %v362, 4294901760
        %v4945 = vsub.f32 %v362, %v4944
        %v4946 = vand.u32 %v4945, 4294901760
        %4947 = vmatmul.f32.gmra.mxu0 %v4946
        %v4948 = vpop.f32.mrf.mxu0
        %v4949 = vadd.f32 %v4651, %v4948
        %v4950 = vand.u32 %v365, 4294901760
        %v4951 = vsub.f32 %v365, %v4950
        %v4952 = vand.u32 %v4951, 4294901760
        %4953 = vmatmul.f32.gmra.mxu0 %v4952
        %v4954 = vpop.f32.mrf.mxu0
        %v4955 = vadd.f32 %v4656, %v4954
        %v4956 = vand.u32 %v368, 4294901760
        %v4957 = vsub.f32 %v368, %v4956
        %v4958 = vand.u32 %v4957, 4294901760
        %4959 = vmatmul.f32.gmra.mxu0 %v4958
        %v4960 = vpop.f32.mrf.mxu0
        %v4961 = vadd.f32 %v4661, %v4960
        %v4962 = vand.u32 %v371, 4294901760
        %v4963 = vsub.f32 %v371, %v4962
        %v4964 = vand.u32 %v4963, 4294901760
        %4965 = vmatmul.f32.gmra.mxu0 %v4964
        %v4966 = vpop.f32.mrf.mxu0
        %v4967 = vadd.f32 %v4666, %v4966
        %v4968 = vand.u32 %v374, 4294901760
        %v4969 = vsub.f32 %v374, %v4968
        %v4970 = vand.u32 %v4969, 4294901760
        %4971 = vmatmul.f32.gmra.mxu0 %v4970
        %v4972 = vpop.f32.mrf.mxu0
        %v4973 = vadd.f32 %v4671, %v4972
        %v4974 = vand.u32 %v377, 4294901760
        %v4975 = vsub.f32 %v377, %v4974
        %v4976 = vand.u32 %v4975, 4294901760
        %4977 = vmatmul.f32.gmra.mxu0 %v4976
        %v4978 = vpop.f32.mrf.mxu0
        %v4979 = vadd.f32 %v4676, %v4978
        %v4980 = vand.u32 %v380, 4294901760
        %v4981 = vsub.f32 %v380, %v4980
        %v4982 = vand.u32 %v4981, 4294901760
        %4983 = vmatmul.f32.gmra.mxu0 %v4982
        %v4984 = vpop.f32.mrf.mxu0
        %v4985 = vadd.f32 %v4681, %v4984
        %v4986 = vand.u32 %v383, 4294901760
        %v4987 = vsub.f32 %v383, %v4986
        %v4988 = vand.u32 %v4987, 4294901760
        %4989 = vmatmul.f32.gmra.mxu0 %v4988
        %v4990 = vpop.f32.mrf.mxu0
        %v4991 = vadd.f32 %v4686, %v4990
        %v4992 = vand.u32 %v386, 4294901760
        %v4993 = vsub.f32 %v386, %v4992
        %v4994 = vand.u32 %v4993, 4294901760
        %4995 = vmatmul.f32.gmra.mxu0 %v4994
        %v4996 = vpop.f32.mrf.mxu0
        %v4997 = vadd.f32 %v4691, %v4996
        %v4998 = vand.u32 %v389, 4294901760
        %v4999 = vsub.f32 %v389, %v4998
        %v5000 = vand.u32 %v4999, 4294901760
        %5001 = vmatmul.f32.gmra.mxu0 %v5000
        %v5002 = vpop.f32.mrf.mxu0
        %v5003 = vadd.f32 %v4696, %v5002
        %v5004 = vand.u32 %v392, 4294901760
        %v5005 = vsub.f32 %v392, %v5004
        %v5006 = vand.u32 %v5005, 4294901760
        %5007 = vmatmul.f32.gmra.mxu0 %v5006
        %v5008 = vpop.f32.mrf.mxu0
        %v5009 = vadd.f32 %v4701, %v5008
        %v5010 = vand.u32 %v395, 4294901760
        %v5011 = vsub.f32 %v395, %v5010
        %v5012 = vand.u32 %v5011, 4294901760
        %5013 = vmatmul.f32.gmra.mxu0 %v5012
        %v5014 = vpop.f32.mrf.mxu0
        %v5015 = vadd.f32 %v4706, %v5014
        %v5016 = vand.u32 %v398, 4294901760
        %v5017 = vsub.f32 %v398, %v5016
        %v5018 = vand.u32 %v5017, 4294901760
        %5019 = vmatmul.f32.gmra.mxu0 %v5018
        %v5020 = vpop.f32.mrf.mxu0
        %v5021 = vadd.f32 %v4711, %v5020
        %v5022 = vand.u32 %v401, 4294901760
        %v5023 = vsub.f32 %v401, %v5022
        %v5024 = vand.u32 %v5023, 4294901760
        %5025 = vmatmul.f32.gmra.mxu0 %v5024
        %v5026 = vpop.f32.mrf.mxu0
        %v5027 = vadd.f32 %v4716, %v5026
        %v5028 = vand.u32 %v404, 4294901760
        %v5029 = vsub.f32 %v404, %v5028
        %v5030 = vand.u32 %v5029, 4294901760
        %5031 = vmatmul.f32.gmra.mxu0 %v5030
        %v5032 = vpop.f32.mrf.mxu0
        %v5033 = vadd.f32 %v4721, %v5032
        %v5034 = vand.u32 %v407, 4294901760
        %v5035 = vsub.f32 %v407, %v5034
        %v5036 = vand.u32 %v5035, 4294901760
        %5037 = vmatmul.f32.gmra.mxu0 %v5036
        %v5038 = vpop.f32.mrf.mxu0
        %v5039 = vadd.f32 %v4726, %v5038
        %5040 = vdwg.mxu0
        %5041 = vmatpush.msra.mxu0 0.0
        %5042 = vmatpush.msra.mxu0 0.0
        %5043 = vmatpush.msra.mxu0 0.0
        %5044 = vmatpush.msra.mxu0 0.0
        %5045 = vmatpush.msra.mxu0 0.0
        %5046 = vmatpush.msra.mxu0 0.0
        %5047 = vmatpush.msra.mxu0 0.0
        %5048 = vmatpush.msra.mxu0 0.0
        %v5049 = vand.u32 %v263, 4294901760
        %v5050 = vsub.f32 %v263, %v5049
        %v5051 = vand.u32 %v5050, 4294901760
        %5052 = vmatpush.msra.mxu0 %v5051
        %v5053 = vand.u32 %v260, 4294901760
        %v5054 = vsub.f32 %v260, %v5053
        %v5055 = vand.u32 %v5054, 4294901760
        %5056 = vmatpush.msra.mxu0 %v5055
        %v5057 = vand.u32 %v257, 4294901760
        %v5058 = vsub.f32 %v257, %v5057
        %v5059 = vand.u32 %v5058, 4294901760
        %5060 = vmatpush.msra.mxu0 %v5059
        %v5061 = vand.u32 %v254, 4294901760
        %v5062 = vsub.f32 %v254, %v5061
        %v5063 = vand.u32 %v5062, 4294901760
        %5064 = vmatpush.msra.mxu0 %v5063
        %v5065 = vand.u32 %v251, 4294901760
        %v5066 = vsub.f32 %v251, %v5065
        %v5067 = vand.u32 %v5066, 4294901760
        %5068 = vmatpush.msra.mxu0 %v5067
        %v5069 = vand.u32 %v248, 4294901760
        %v5070 = vsub.f32 %v248, %v5069
        %v5071 = vand.u32 %v5070, 4294901760
        %5072 = vmatpush.msra.mxu0 %v5071
        %v5073 = vand.u32 %v245, 4294901760
        %v5074 = vsub.f32 %v245, %v5073
        %v5075 = vand.u32 %v5074, 4294901760
        %5076 = vmatpush.msra.mxu0 %v5075
        %v5077 = vand.u32 %v242, 4294901760
        %v5078 = vsub.f32 %v242, %v5077
        %v5079 = vand.u32 %v5078, 4294901760
        %5080 = vmatpush.msra.mxu0 %v5079
        %v5081 = vand.u32 %v266, 4294901760
        %5082 = vmatmul.f32.gmra.mxu0 %v5081
        %v5083 = vpop.f32.mrf.mxu0
        %v5084 = vadd.f32 %v4757, %v5083
        %v5085 = vand.u32 %v269, 4294901760
        %5086 = vmatmul.f32.gmra.mxu0 %v5085
        %v5087 = vpop.f32.mrf.mxu0
        %v5088 = vadd.f32 %v4763, %v5087
        %v5089 = vand.u32 %v272, 4294901760
        %5090 = vmatmul.f32.gmra.mxu0 %v5089
        %v5091 = vpop.f32.mrf.mxu0
        %v5092 = vadd.f32 %v4769, %v5091
        %v5093 = vand.u32 %v275, 4294901760
        %5094 = vmatmul.f32.gmra.mxu0 %v5093
        %v5095 = vpop.f32.mrf.mxu0
        %v5096 = vadd.f32 %v4775, %v5095
        %v5097 = vand.u32 %v278, 4294901760
        %5098 = vmatmul.f32.gmra.mxu0 %v5097
        %v5099 = vpop.f32.mrf.mxu0
        %v5100 = vadd.f32 %v4781, %v5099
        %v5101 = vand.u32 %v281, 4294901760
        %5102 = vmatmul.f32.gmra.mxu0 %v5101
        %v5103 = vpop.f32.mrf.mxu0
        %v5104 = vadd.f32 %v4787, %v5103
        %v5105 = vand.u32 %v284, 4294901760
        %5106 = vmatmul.f32.gmra.mxu0 %v5105
        %v5107 = vpop.f32.mrf.mxu0
        %v5108 = vadd.f32 %v4793, %v5107
        %v5109 = vand.u32 %v287, 4294901760
        %5110 = vmatmul.f32.gmra.mxu0 %v5109
        %v5111 = vpop.f32.mrf.mxu0
        %v5112 = vadd.f32 %v4799, %v5111
        %v5113 = vand.u32 %v290, 4294901760
        %5114 = vmatmul.f32.gmra.mxu0 %v5113
        %v5115 = vpop.f32.mrf.mxu0
        %v5116 = vadd.f32 %v4805, %v5115
        %v5117 = vand.u32 %v293, 4294901760
        %5118 = vmatmul.f32.gmra.mxu0 %v5117
        %v5119 = vpop.f32.mrf.mxu0
        %v5120 = vadd.f32 %v4811, %v5119
        %v5121 = vand.u32 %v296, 4294901760
        %5122 = vmatmul.f32.gmra.mxu0 %v5121
        %v5123 = vpop.f32.mrf.mxu0
        %v5124 = vadd.f32 %v4817, %v5123
        %v5125 = vand.u32 %v299, 4294901760
        %5126 = vmatmul.f32.gmra.mxu0 %v5125
        %v5127 = vpop.f32.mrf.mxu0
        %v5128 = vadd.f32 %v4823, %v5127
        %v5129 = vand.u32 %v302, 4294901760
        %5130 = vmatmul.f32.gmra.mxu0 %v5129
        %v5131 = vpop.f32.mrf.mxu0
        %v5132 = vadd.f32 %v4829, %v5131
        %v5133 = vand.u32 %v305, 4294901760
        %5134 = vmatmul.f32.gmra.mxu0 %v5133
        %v5135 = vpop.f32.mrf.mxu0
        %v5136 = vadd.f32 %v4835, %v5135
        %v5137 = vand.u32 %v308, 4294901760
        %5138 = vmatmul.f32.gmra.mxu0 %v5137
        %v5139 = vpop.f32.mrf.mxu0
        %v5140 = vadd.f32 %v4841, %v5139
        %v5141 = vand.u32 %v311, 4294901760
        %5142 = vmatmul.f32.gmra.mxu0 %v5141
        %v5143 = vpop.f32.mrf.mxu0
        %v5144 = vadd.f32 %v4847, %v5143
        %v5145 = vand.u32 %v314, 4294901760
        %5146 = vmatmul.f32.gmra.mxu0 %v5145
        %v5147 = vpop.f32.mrf.mxu0
        %v5148 = vadd.f32 %v4853, %v5147
        %v5149 = vand.u32 %v317, 4294901760
        %5150 = vmatmul.f32.gmra.mxu0 %v5149
        %v5151 = vpop.f32.mrf.mxu0
        %v5152 = vadd.f32 %v4859, %v5151
        %v5153 = vand.u32 %v320, 4294901760
        %5154 = vmatmul.f32.gmra.mxu0 %v5153
        %v5155 = vpop.f32.mrf.mxu0
        %v5156 = vadd.f32 %v4865, %v5155
        %v5157 = vand.u32 %v323, 4294901760
        %5158 = vmatmul.f32.gmra.mxu0 %v5157
        %v5159 = vpop.f32.mrf.mxu0
        %v5160 = vadd.f32 %v4871, %v5159
        %v5161 = vand.u32 %v326, 4294901760
        %5162 = vmatmul.f32.gmra.mxu0 %v5161
        %v5163 = vpop.f32.mrf.mxu0
        %v5164 = vadd.f32 %v4877, %v5163
        %v5165 = vand.u32 %v329, 4294901760
        %5166 = vmatmul.f32.gmra.mxu0 %v5165
        %v5167 = vpop.f32.mrf.mxu0
        %v5168 = vadd.f32 %v4883, %v5167
        %v5169 = vand.u32 %v332, 4294901760
        %5170 = vmatmul.f32.gmra.mxu0 %v5169
        %v5171 = vpop.f32.mrf.mxu0
        %v5172 = vadd.f32 %v4889, %v5171
        %v5173 = vand.u32 %v335, 4294901760
        %5174 = vmatmul.f32.gmra.mxu0 %v5173
        %v5175 = vpop.f32.mrf.mxu0
        %v5176 = vadd.f32 %v4895, %v5175
        %v5177 = vand.u32 %v338, 4294901760
        %5178 = vmatmul.f32.gmra.mxu0 %v5177
        %v5179 = vpop.f32.mrf.mxu0
        %v5180 = vadd.f32 %v4901, %v5179
        %v5181 = vand.u32 %v341, 4294901760
        %5182 = vmatmul.f32.gmra.mxu0 %v5181
        %v5183 = vpop.f32.mrf.mxu0
        %v5184 = vadd.f32 %v4907, %v5183
        %v5185 = vand.u32 %v344, 4294901760
        %5186 = vmatmul.f32.gmra.mxu0 %v5185
        %v5187 = vpop.f32.mrf.mxu0
        %v5188 = vadd.f32 %v4913, %v5187
        %v5189 = vand.u32 %v347, 4294901760
        %5190 = vmatmul.f32.gmra.mxu0 %v5189
        %v5191 = vpop.f32.mrf.mxu0
        %v5192 = vadd.f32 %v4919, %v5191
        %v5193 = vand.u32 %v350, 4294901760
        %5194 = vmatmul.f32.gmra.mxu0 %v5193
        %v5195 = vpop.f32.mrf.mxu0
        %v5196 = vadd.f32 %v4925, %v5195
        %v5197 = vand.u32 %v353, 4294901760
        %5198 = vmatmul.f32.gmra.mxu0 %v5197
        %v5199 = vpop.f32.mrf.mxu0
        %v5200 = vadd.f32 %v4931, %v5199
        %v5201 = vand.u32 %v356, 4294901760
        %5202 = vmatmul.f32.gmra.mxu0 %v5201
        %v5203 = vpop.f32.mrf.mxu0
        %v5204 = vadd.f32 %v4937, %v5203
        %v5205 = vand.u32 %v359, 4294901760
        %5206 = vmatmul.f32.gmra.mxu0 %v5205
        %v5207 = vpop.f32.mrf.mxu0
        %v5208 = vadd.f32 %v4943, %v5207
        %v5209 = vand.u32 %v362, 4294901760
        %5210 = vmatmul.f32.gmra.mxu0 %v5209
        %v5211 = vpop.f32.mrf.mxu0
        %v5212 = vadd.f32 %v4949, %v5211
        %v5213 = vand.u32 %v365, 4294901760
        %5214 = vmatmul.f32.gmra.mxu0 %v5213
        %v5215 = vpop.f32.mrf.mxu0
        %v5216 = vadd.f32 %v4955, %v5215
        %v5217 = vand.u32 %v368, 4294901760
        %5218 = vmatmul.f32.gmra.mxu0 %v5217
        %v5219 = vpop.f32.mrf.mxu0
        %v5220 = vadd.f32 %v4961, %v5219
        %v5221 = vand.u32 %v371, 4294901760
        %5222 = vmatmul.f32.gmra.mxu0 %v5221
        %v5223 = vpop.f32.mrf.mxu0
        %v5224 = vadd.f32 %v4967, %v5223
        %v5225 = vand.u32 %v374, 4294901760
        %5226 = vmatmul.f32.gmra.mxu0 %v5225
        %v5227 = vpop.f32.mrf.mxu0
        %v5228 = vadd.f32 %v4973, %v5227
        %v5229 = vand.u32 %v377, 4294901760
        %5230 = vmatmul.f32.gmra.mxu0 %v5229
        %v5231 = vpop.f32.mrf.mxu0
        %v5232 = vadd.f32 %v4979, %v5231
        %v5233 = vand.u32 %v380, 4294901760
        %5234 = vmatmul.f32.gmra.mxu0 %v5233
        %v5235 = vpop.f32.mrf.mxu0
        %v5236 = vadd.f32 %v4985, %v5235
        %v5237 = vand.u32 %v383, 4294901760
        %5238 = vmatmul.f32.gmra.mxu0 %v5237
        %v5239 = vpop.f32.mrf.mxu0
        %v5240 = vadd.f32 %v4991, %v5239
        %v5241 = vand.u32 %v386, 4294901760
        %5242 = vmatmul.f32.gmra.mxu0 %v5241
        %v5243 = vpop.f32.mrf.mxu0
        %v5244 = vadd.f32 %v4997, %v5243
        %v5245 = vand.u32 %v389, 4294901760
        %5246 = vmatmul.f32.gmra.mxu0 %v5245
        %v5247 = vpop.f32.mrf.mxu0
        %v5248 = vadd.f32 %v5003, %v5247
        %v5249 = vand.u32 %v392, 4294901760
        %5250 = vmatmul.f32.gmra.mxu0 %v5249
        %v5251 = vpop.f32.mrf.mxu0
        %v5252 = vadd.f32 %v5009, %v5251
        %v5253 = vand.u32 %v395, 4294901760
        %5254 = vmatmul.f32.gmra.mxu0 %v5253
        %v5255 = vpop.f32.mrf.mxu0
        %v5256 = vadd.f32 %v5015, %v5255
        %v5257 = vand.u32 %v398, 4294901760
        %5258 = vmatmul.f32.gmra.mxu0 %v5257
        %v5259 = vpop.f32.mrf.mxu0
        %v5260 = vadd.f32 %v5021, %v5259
        %v5261 = vand.u32 %v401, 4294901760
        %5262 = vmatmul.f32.gmra.mxu0 %v5261
        %v5263 = vpop.f32.mrf.mxu0
        %v5264 = vadd.f32 %v5027, %v5263
        %v5265 = vand.u32 %v404, 4294901760
        %5266 = vmatmul.f32.gmra.mxu0 %v5265
        %v5267 = vpop.f32.mrf.mxu0
        %v5268 = vadd.f32 %v5033, %v5267
        %v5269 = vand.u32 %v407, 4294901760
        %5270 = vmatmul.f32.gmra.mxu0 %v5269
        %v5271 = vpop.f32.mrf.mxu0
        %v5272 = vadd.f32 %v5039, %v5271
        %5273 = vdwg.mxu0
        %5274 = vmatpush.msra.mxu0 0.0
        %5275 = vmatpush.msra.mxu0 0.0
        %5276 = vmatpush.msra.mxu0 0.0
        %5277 = vmatpush.msra.mxu0 0.0
        %5278 = vmatpush.msra.mxu0 0.0
        %5279 = vmatpush.msra.mxu0 0.0
        %5280 = vmatpush.msra.mxu0 0.0
        %5281 = vmatpush.msra.mxu0 0.0
        %v5282 = vand.u32 %v263, 4294901760
        %5283 = vmatpush.msra.mxu0 %v5282
        %v5284 = vand.u32 %v260, 4294901760
        %5285 = vmatpush.msra.mxu0 %v5284
        %v5286 = vand.u32 %v257, 4294901760
        %5287 = vmatpush.msra.mxu0 %v5286
        %v5288 = vand.u32 %v254, 4294901760
        %5289 = vmatpush.msra.mxu0 %v5288
        %v5290 = vand.u32 %v251, 4294901760
        %5291 = vmatpush.msra.mxu0 %v5290
        %v5292 = vand.u32 %v248, 4294901760
        %5293 = vmatpush.msra.mxu0 %v5292
        %v5294 = vand.u32 %v245, 4294901760
        %5295 = vmatpush.msra.mxu0 %v5294
        %v5296 = vand.u32 %v242, 4294901760
        %5297 = vmatpush.msra.mxu0 %v5296
        %v5298 = vand.u32 %v266, 4294901760
        %5299 = vmatmul.f32.gmra.mxu0 %v5298
        %v5300 = vpop.f32.mrf.mxu0
        %v5301 = vadd.f32 %v5084, %v5300
        %v5302 = vand.u32 %v269, 4294901760
        %5303 = vmatmul.f32.gmra.mxu0 %v5302
        %v5304 = vpop.f32.mrf.mxu0
        %v5305 = vadd.f32 %v5088, %v5304
        %v5306 = vand.u32 %v272, 4294901760
        %5307 = vmatmul.f32.gmra.mxu0 %v5306
        %v5308 = vpop.f32.mrf.mxu0
        %v5309 = vadd.f32 %v5092, %v5308
        %v5310 = vand.u32 %v275, 4294901760
        %5311 = vmatmul.f32.gmra.mxu0 %v5310
        %v5312 = vpop.f32.mrf.mxu0
        %v5313 = vadd.f32 %v5096, %v5312
        %v5314 = vand.u32 %v278, 4294901760
        %5315 = vmatmul.f32.gmra.mxu0 %v5314
        %v5316 = vpop.f32.mrf.mxu0
        %v5317 = vadd.f32 %v5100, %v5316
        %v5318 = vand.u32 %v281, 4294901760
        %5319 = vmatmul.f32.gmra.mxu0 %v5318
        %v5320 = vpop.f32.mrf.mxu0
        %v5321 = vadd.f32 %v5104, %v5320
        %v5322 = vand.u32 %v284, 4294901760
        %5323 = vmatmul.f32.gmra.mxu0 %v5322
        %v5324 = vpop.f32.mrf.mxu0
        %v5325 = vadd.f32 %v5108, %v5324
        %v5326 = vand.u32 %v287, 4294901760
        %5327 = vmatmul.f32.gmra.mxu0 %v5326
        %v5328 = vpop.f32.mrf.mxu0
        %v5329 = vadd.f32 %v5112, %v5328
        %v5330 = vand.u32 %v290, 4294901760
        %5331 = vmatmul.f32.gmra.mxu0 %v5330
        %v5332 = vpop.f32.mrf.mxu0
        %v5333 = vadd.f32 %v5116, %v5332
        %v5334 = vand.u32 %v293, 4294901760
        %5335 = vmatmul.f32.gmra.mxu0 %v5334
        %v5336 = vpop.f32.mrf.mxu0
        %v5337 = vadd.f32 %v5120, %v5336
        %v5338 = vand.u32 %v296, 4294901760
        %5339 = vmatmul.f32.gmra.mxu0 %v5338
        %v5340 = vpop.f32.mrf.mxu0
        %v5341 = vadd.f32 %v5124, %v5340
        %v5342 = vand.u32 %v299, 4294901760
        %5343 = vmatmul.f32.gmra.mxu0 %v5342
        %v5344 = vpop.f32.mrf.mxu0
        %v5345 = vadd.f32 %v5128, %v5344
        %v5346 = vand.u32 %v302, 4294901760
        %5347 = vmatmul.f32.gmra.mxu0 %v5346
        %v5348 = vpop.f32.mrf.mxu0
        %v5349 = vadd.f32 %v5132, %v5348
        %v5350 = vand.u32 %v305, 4294901760
        %5351 = vmatmul.f32.gmra.mxu0 %v5350
        %v5352 = vpop.f32.mrf.mxu0
        %v5353 = vadd.f32 %v5136, %v5352
        %v5354 = vand.u32 %v308, 4294901760
        %5355 = vmatmul.f32.gmra.mxu0 %v5354
        %v5356 = vpop.f32.mrf.mxu0
        %v5357 = vadd.f32 %v5140, %v5356
        %v5358 = vand.u32 %v311, 4294901760
        %5359 = vmatmul.f32.gmra.mxu0 %v5358
        %v5360 = vpop.f32.mrf.mxu0
        %v5361 = vadd.f32 %v5144, %v5360
        %v5362 = vand.u32 %v314, 4294901760
        %5363 = vmatmul.f32.gmra.mxu0 %v5362
        %v5364 = vpop.f32.mrf.mxu0
        %v5365 = vadd.f32 %v5148, %v5364
        %v5366 = vand.u32 %v317, 4294901760
        %5367 = vmatmul.f32.gmra.mxu0 %v5366
        %v5368 = vpop.f32.mrf.mxu0
        %v5369 = vadd.f32 %v5152, %v5368
        %v5370 = vand.u32 %v320, 4294901760
        %5371 = vmatmul.f32.gmra.mxu0 %v5370
        %v5372 = vpop.f32.mrf.mxu0
        %v5373 = vadd.f32 %v5156, %v5372
        %v5374 = vand.u32 %v323, 4294901760
        %5375 = vmatmul.f32.gmra.mxu0 %v5374
        %v5376 = vpop.f32.mrf.mxu0
        %v5377 = vadd.f32 %v5160, %v5376
        %v5378 = vand.u32 %v326, 4294901760
        %5379 = vmatmul.f32.gmra.mxu0 %v5378
        %v5380 = vpop.f32.mrf.mxu0
        %v5381 = vadd.f32 %v5164, %v5380
        %v5382 = vand.u32 %v329, 4294901760
        %5383 = vmatmul.f32.gmra.mxu0 %v5382
        %v5384 = vpop.f32.mrf.mxu0
        %v5385 = vadd.f32 %v5168, %v5384
        %v5386 = vand.u32 %v332, 4294901760
        %5387 = vmatmul.f32.gmra.mxu0 %v5386
        %v5388 = vpop.f32.mrf.mxu0
        %v5389 = vadd.f32 %v5172, %v5388
        %v5390 = vand.u32 %v335, 4294901760
        %5391 = vmatmul.f32.gmra.mxu0 %v5390
        %v5392 = vpop.f32.mrf.mxu0
        %v5393 = vadd.f32 %v5176, %v5392
        %v5394 = vand.u32 %v338, 4294901760
        %5395 = vmatmul.f32.gmra.mxu0 %v5394
        %v5396 = vpop.f32.mrf.mxu0
        %v5397 = vadd.f32 %v5180, %v5396
        %v5398 = vand.u32 %v341, 4294901760
        %5399 = vmatmul.f32.gmra.mxu0 %v5398
        %v5400 = vpop.f32.mrf.mxu0
        %v5401 = vadd.f32 %v5184, %v5400
        %v5402 = vand.u32 %v344, 4294901760
        %5403 = vmatmul.f32.gmra.mxu0 %v5402
        %v5404 = vpop.f32.mrf.mxu0
        %v5405 = vadd.f32 %v5188, %v5404
        %v5406 = vand.u32 %v347, 4294901760
        %5407 = vmatmul.f32.gmra.mxu0 %v5406
        %v5408 = vpop.f32.mrf.mxu0
        %v5409 = vadd.f32 %v5192, %v5408
        %v5410 = vand.u32 %v350, 4294901760
        %5411 = vmatmul.f32.gmra.mxu0 %v5410
        %v5412 = vpop.f32.mrf.mxu0
        %v5413 = vadd.f32 %v5196, %v5412
        %v5414 = vand.u32 %v353, 4294901760
        %5415 = vmatmul.f32.gmra.mxu0 %v5414
        %v5416 = vpop.f32.mrf.mxu0
        %v5417 = vadd.f32 %v5200, %v5416
        %v5418 = vand.u32 %v356, 4294901760
        %5419 = vmatmul.f32.gmra.mxu0 %v5418
        %v5420 = vpop.f32.mrf.mxu0
        %v5421 = vadd.f32 %v5204, %v5420
        %v5422 = vand.u32 %v359, 4294901760
        %5423 = vmatmul.f32.gmra.mxu0 %v5422
        %v5424 = vpop.f32.mrf.mxu0
        %v5425 = vadd.f32 %v5208, %v5424
        %v5426 = vand.u32 %v362, 4294901760
        %5427 = vmatmul.f32.gmra.mxu0 %v5426
        %v5428 = vpop.f32.mrf.mxu0
        %v5429 = vadd.f32 %v5212, %v5428
        %v5430 = vand.u32 %v365, 4294901760
        %5431 = vmatmul.f32.gmra.mxu0 %v5430
        %v5432 = vpop.f32.mrf.mxu0
        %v5433 = vadd.f32 %v5216, %v5432
        %v5434 = vand.u32 %v368, 4294901760
        %5435 = vmatmul.f32.gmra.mxu0 %v5434
        %v5436 = vpop.f32.mrf.mxu0
        %v5437 = vadd.f32 %v5220, %v5436
        %v5438 = vand.u32 %v371, 4294901760
        %5439 = vmatmul.f32.gmra.mxu0 %v5438
        %v5440 = vpop.f32.mrf.mxu0
        %v5441 = vadd.f32 %v5224, %v5440
        %v5442 = vand.u32 %v374, 4294901760
        %5443 = vmatmul.f32.gmra.mxu0 %v5442
        %v5444 = vpop.f32.mrf.mxu0
        %v5445 = vadd.f32 %v5228, %v5444
        %v5446 = vand.u32 %v377, 4294901760
        %5447 = vmatmul.f32.gmra.mxu0 %v5446
        %v5448 = vpop.f32.mrf.mxu0
        %v5449 = vadd.f32 %v5232, %v5448
        %v5450 = vand.u32 %v380, 4294901760
        %5451 = vmatmul.f32.gmra.mxu0 %v5450
        %v5452 = vpop.f32.mrf.mxu0
        %v5453 = vadd.f32 %v5236, %v5452
        %v5454 = vand.u32 %v383, 4294901760
        %5455 = vmatmul.f32.gmra.mxu0 %v5454
        %v5456 = vpop.f32.mrf.mxu0
        %v5457 = vadd.f32 %v5240, %v5456
        %v5458 = vand.u32 %v386, 4294901760
        %5459 = vmatmul.f32.gmra.mxu0 %v5458
        %v5460 = vpop.f32.mrf.mxu0
        %v5461 = vadd.f32 %v5244, %v5460
        %v5462 = vand.u32 %v389, 4294901760
        %5463 = vmatmul.f32.gmra.mxu0 %v5462
        %v5464 = vpop.f32.mrf.mxu0
        %v5465 = vadd.f32 %v5248, %v5464
        %v5466 = vand.u32 %v392, 4294901760
        %5467 = vmatmul.f32.gmra.mxu0 %v5466
        %v5468 = vpop.f32.mrf.mxu0
        %v5469 = vadd.f32 %v5252, %v5468
        %v5470 = vand.u32 %v395, 4294901760
        %5471 = vmatmul.f32.gmra.mxu0 %v5470
        %v5472 = vpop.f32.mrf.mxu0
        %v5473 = vadd.f32 %v5256, %v5472
        %v5474 = vand.u32 %v398, 4294901760
        %5475 = vmatmul.f32.gmra.mxu0 %v5474
        %v5476 = vpop.f32.mrf.mxu0
        %v5477 = vadd.f32 %v5260, %v5476
        %v5478 = vand.u32 %v401, 4294901760
        %5479 = vmatmul.f32.gmra.mxu0 %v5478
        %v5480 = vpop.f32.mrf.mxu0
        %v5481 = vadd.f32 %v5264, %v5480
        %v5482 = vand.u32 %v404, 4294901760
        %5483 = vmatmul.f32.gmra.mxu0 %v5482
        %v5484 = vpop.f32.mrf.mxu0
        %v5485 = vadd.f32 %v5268, %v5484
        %v5486 = vand.u32 %v407, 4294901760
        %5487 = vmatmul.f32.gmra.mxu0 %v5486
        %v5488 = vpop.f32.mrf.mxu0
        %v5489 = vadd.f32 %v5272, %v5488
        %5490 = vdwg.mxu0
        %5491 = vst [vmem:[%s182] sm:$0xff] %v1913
        %5492 = vst [vmem:[%s182 + $0x8] sm:$0xff] %v3607
        %5493 = vst [vmem:[%s182 + $0x10] sm:$0xff] %v5301
        %5494 = vst [vmem:[%s182 + $0x18] sm:$0xff] %v1917
        %5495 = vst [vmem:[%s182 + $0x20] sm:$0xff] %v3611
        %5496 = vst [vmem:[%s182 + $0x28] sm:$0xff] %v5305
        %5497 = vst [vmem:[%s182 + $0x30] sm:$0xff] %v1921
        %5498 = vst [vmem:[%s182 + $0x38] sm:$0xff] %v3615
        %5499 = vst [vmem:[%s182 + $0x40] sm:$0xff] %v5309
        %5500 = vst [vmem:[%s182 + $0x48] sm:$0xff] %v1925
        %5501 = vst [vmem:[%s182 + $0x50] sm:$0xff] %v3619
        %5502 = vst [vmem:[%s182 + $0x58] sm:$0xff] %v5313
        %5503 = vst [vmem:[%s182 + $0x60] sm:$0xff] %v1929
        %5504 = vst [vmem:[%s182 + $0x68] sm:$0xff] %v3623
        %5505 = vst [vmem:[%s182 + $0x70] sm:$0xff] %v5317
        %5506 = vst [vmem:[%s182 + $0x78] sm:$0xff] %v1933
        %5507 = vst [vmem:[%s182 + $0x80] sm:$0xff] %v3627
        %5508 = vst [vmem:[%s182 + $0x88] sm:$0xff] %v5321
        %5509 = vst [vmem:[%s182 + $0x90] sm:$0xff] %v1937
        %5510 = vst [vmem:[%s182 + $0x98] sm:$0xff] %v3631
        %5511 = vst [vmem:[%s182 + $0xa0] sm:$0xff] %v5325
        %5512 = vst [vmem:[%s182 + $0xa8] sm:$0xff] %v1941
        %5513 = vst [vmem:[%s182 + $0xb0] sm:$0xff] %v3635
        %5514 = vst [vmem:[%s182 + $0xb8] sm:$0xff] %v5329
        %5515 = vst [vmem:[%s182 + $0xc0] sm:$0xff] %v1945
        %5516 = vst [vmem:[%s182 + $0xc8] sm:$0xff] %v3639
        %5517 = vst [vmem:[%s182 + $0xd0] sm:$0xff] %v5333
        %5518 = vst [vmem:[%s182 + $0xd8] sm:$0xff] %v1949
        %5519 = vst [vmem:[%s182 + $0xe0] sm:$0xff] %v3643
        %5520 = vst [vmem:[%s182 + $0xe8] sm:$0xff] %v5337
        %5521 = vst [vmem:[%s182 + $0xf0] sm:$0xff] %v1953
        %5522 = vst [vmem:[%s182 + $0xf8] sm:$0xff] %v3647
        %5523 = vst [vmem:[%s182 + $0x100] sm:$0xff] %v5341
        %5524 = vst [vmem:[%s182 + $0x108] sm:$0xff] %v1957
        %5525 = vst [vmem:[%s182 + $0x110] sm:$0xff] %v3651
        %5526 = vst [vmem:[%s182 + $0x118] sm:$0xff] %v5345
        %5527 = vst [vmem:[%s182 + $0x120] sm:$0xff] %v1961
        %5528 = vst [vmem:[%s182 + $0x128] sm:$0xff] %v3655
        %5529 = vst [vmem:[%s182 + $0x130] sm:$0xff] %v5349
        %5530 = vst [vmem:[%s182 + $0x138] sm:$0xff] %v1965
        %5531 = vst [vmem:[%s182 + $0x140] sm:$0xff] %v3659
        %5532 = vst [vmem:[%s182 + $0x148] sm:$0xff] %v5353
        %5533 = vst [vmem:[%s182 + $0x150] sm:$0xff] %v1969
        %5534 = vst [vmem:[%s182 + $0x158] sm:$0xff] %v3663
        %5535 = vst [vmem:[%s182 + $0x160] sm:$0xff] %v5357
        %5536 = vst [vmem:[%s182 + $0x168] sm:$0xff] %v1973
        %5537 = vst [vmem:[%s182 + $0x170] sm:$0xff] %v3667
        %5538 = vst [vmem:[%s182 + $0x178] sm:$0xff] %v5361
        %5539 = vst [vmem:[%s182 + $0x180] sm:$0xff] %v1977
        %5540 = vst [vmem:[%s182 + $0x188] sm:$0xff] %v3671
        %5541 = vst [vmem:[%s182 + $0x190] sm:$0xff] %v5365
        %5542 = vst [vmem:[%s182 + $0x198] sm:$0xff] %v1981
        %5543 = vst [vmem:[%s182 + $0x1a0] sm:$0xff] %v3675
        %5544 = vst [vmem:[%s182 + $0x1a8] sm:$0xff] %v5369
        %5545 = vst [vmem:[%s182 + $0x1b0] sm:$0xff] %v1985
        %5546 = vst [vmem:[%s182 + $0x1b8] sm:$0xff] %v3679
        %5547 = vst [vmem:[%s182 + $0x1c0] sm:$0xff] %v5373
        %5548 = vst [vmem:[%s182 + $0x1c8] sm:$0xff] %v1989
        %5549 = vst [vmem:[%s182 + $0x1d0] sm:$0xff] %v3683
        %5550 = vst [vmem:[%s182 + $0x1d8] sm:$0xff] %v5377
        %5551 = vst [vmem:[%s182 + $0x1e0] sm:$0xff] %v1993
        %5552 = vst [vmem:[%s182 + $0x1e8] sm:$0xff] %v3687
        %5553 = vst [vmem:[%s182 + $0x1f0] sm:$0xff] %v5381
        %5554 = vst [vmem:[%s182 + $0x1f8] sm:$0xff] %v1997
        %5555 = vst [vmem:[%s182 + $0x200] sm:$0xff] %v3691
        %5556 = vst [vmem:[%s182 + $0x208] sm:$0xff] %v5385
        %5557 = vst [vmem:[%s182 + $0x210] sm:$0xff] %v2001
        %5558 = vst [vmem:[%s182 + $0x218] sm:$0xff] %v3695
        %5559 = vst [vmem:[%s182 + $0x220] sm:$0xff] %v5389
        %5560 = vst [vmem:[%s182 + $0x228] sm:$0xff] %v2005
        %5561 = vst [vmem:[%s182 + $0x230] sm:$0xff] %v3699
        %5562 = vst [vmem:[%s182 + $0x238] sm:$0xff] %v5393
        %5563 = vst [vmem:[%s182 + $0x240] sm:$0xff] %v2009
        %5564 = vst [vmem:[%s182 + $0x248] sm:$0xff] %v3703
        %5565 = vst [vmem:[%s182 + $0x250] sm:$0xff] %v5397
        %5566 = vst [vmem:[%s182 + $0x258] sm:$0xff] %v2013
        %5567 = vst [vmem:[%s182 + $0x260] sm:$0xff] %v3707
        %5568 = vst [vmem:[%s182 + $0x268] sm:$0xff] %v5401
        %5569 = vst [vmem:[%s182 + $0x270] sm:$0xff] %v2017
        %5570 = vst [vmem:[%s182 + $0x278] sm:$0xff] %v3711
        %5571 = vst [vmem:[%s182 + $0x280] sm:$0xff] %v5405
        %5572 = vst [vmem:[%s182 + $0x288] sm:$0xff] %v2021
        %5573 = vst [vmem:[%s182 + $0x290] sm:$0xff] %v3715
        %5574 = vst [vmem:[%s182 + $0x298] sm:$0xff] %v5409
        %5575 = vst [vmem:[%s182 + $0x2a0] sm:$0xff] %v2025
        %5576 = vst [vmem:[%s182 + $0x2a8] sm:$0xff] %v3719
        %5577 = vst [vmem:[%s182 + $0x2b0] sm:$0xff] %v5413
        %5578 = vst [vmem:[%s182 + $0x2b8] sm:$0xff] %v2029
        %5579 = vst [vmem:[%s182 + $0x2c0] sm:$0xff] %v3723
        %5580 = vst [vmem:[%s182 + $0x2c8] sm:$0xff] %v5417
        %5581 = vst [vmem:[%s182 + $0x2d0] sm:$0xff] %v2033
        %5582 = vst [vmem:[%s182 + $0x2d8] sm:$0xff] %v3727
        %5583 = vst [vmem:[%s182 + $0x2e0] sm:$0xff] %v5421
        %5584 = vst [vmem:[%s182 + $0x2e8] sm:$0xff] %v2037
        %5585 = vst [vmem:[%s182 + $0x2f0] sm:$0xff] %v3731
        %5586 = vst [vmem:[%s182 + $0x2f8] sm:$0xff] %v5425
        %5587 = vst [vmem:[%s182 + $0x300] sm:$0xff] %v2041
        %5588 = vst [vmem:[%s182 + $0x308] sm:$0xff] %v3735
        %5589 = vst [vmem:[%s182 + $0x310] sm:$0xff] %v5429
        %5590 = vst [vmem:[%s182 + $0x318] sm:$0xff] %v2045
        %5591 = vst [vmem:[%s182 + $0x320] sm:$0xff] %v3739
        %5592 = vst [vmem:[%s182 + $0x328] sm:$0xff] %v5433
        %5593 = vst [vmem:[%s182 + $0x330] sm:$0xff] %v2049
        %5594 = vst [vmem:[%s182 + $0x338] sm:$0xff] %v3743
        %5595 = vst [vmem:[%s182 + $0x340] sm:$0xff] %v5437
        %5596 = vst [vmem:[%s182 + $0x348] sm:$0xff] %v2053
        %5597 = vst [vmem:[%s182 + $0x350] sm:$0xff] %v3747
        %5598 = vst [vmem:[%s182 + $0x358] sm:$0xff] %v5441
        %5599 = vst [vmem:[%s182 + $0x360] sm:$0xff] %v2057
        %5600 = vst [vmem:[%s182 + $0x368] sm:$0xff] %v3751
        %5601 = vst [vmem:[%s182 + $0x370] sm:$0xff] %v5445
        %5602 = vst [vmem:[%s182 + $0x378] sm:$0xff] %v2061
        %5603 = vst [vmem:[%s182 + $0x380] sm:$0xff] %v3755
        %5604 = vst [vmem:[%s182 + $0x388] sm:$0xff] %v5449
        %5605 = vst [vmem:[%s182 + $0x390] sm:$0xff] %v2065
        %5606 = vst [vmem:[%s182 + $0x398] sm:$0xff] %v3759
        %5607 = vst [vmem:[%s182 + $0x3a0] sm:$0xff] %v5453
        %5608 = vst [vmem:[%s182 + $0x3a8] sm:$0xff] %v2069
        %5609 = vst [vmem:[%s182 + $0x3b0] sm:$0xff] %v3763
        %5610 = vst [vmem:[%s182 + $0x3b8] sm:$0xff] %v5457
        %5611 = vst [vmem:[%s182 + $0x3c0] sm:$0xff] %v2073
        %5612 = vst [vmem:[%s182 + $0x3c8] sm:$0xff] %v3767
        %5613 = vst [vmem:[%s182 + $0x3d0] sm:$0xff] %v5461
        %5614 = vst [vmem:[%s182 + $0x3d8] sm:$0xff] %v2077
        %5615 = vst [vmem:[%s182 + $0x3e0] sm:$0xff] %v3771
        %5616 = vst [vmem:[%s182 + $0x3e8] sm:$0xff] %v5465
        %5617 = vst [vmem:[%s182 + $0x3f0] sm:$0xff] %v2081
        %5618 = vst [vmem:[%s182 + $0x3f8] sm:$0xff] %v3775
        %5619 = vst [vmem:[%s182 + $0x400] sm:$0xff] %v5469
        %5620 = vst [vmem:[%s182 + $0x408] sm:$0xff] %v2085
        %5621 = vst [vmem:[%s182 + $0x410] sm:$0xff] %v3779
        %5622 = vst [vmem:[%s182 + $0x418] sm:$0xff] %v5473
        %5623 = vst [vmem:[%s182 + $0x420] sm:$0xff] %v2089
        %5624 = vst [vmem:[%s182 + $0x428] sm:$0xff] %v3783
        %5625 = vst [vmem:[%s182 + $0x430] sm:$0xff] %v5477
        %5626 = vst [vmem:[%s182 + $0x438] sm:$0xff] %v2093
        %5627 = vst [vmem:[%s182 + $0x440] sm:$0xff] %v3787
        %5628 = vst [vmem:[%s182 + $0x448] sm:$0xff] %v5481
        %5629 = vst [vmem:[%s182 + $0x450] sm:$0xff] %v2097
        %5630 = vst [vmem:[%s182 + $0x458] sm:$0xff] %v3791
        %5631 = vst [vmem:[%s182 + $0x460] sm:$0xff] %v5485
        %5632 = vst [vmem:[%s182 + $0x468] sm:$0xff] %v2101
        %5633 = vst [vmem:[%s182 + $0x470] sm:$0xff] %v3795
        %5634 = vst [vmem:[%s182 + $0x478] sm:$0xff] %v5489
        %s5635 = scalar_lea.vmem %s188, 384
        %v5636 = vld [vmem:[%s5635] sm:$0xff]
        %v5637 = vld [vmem:[%s5635 + $0x8] sm:$0xff]
        %v5638 = vld [vmem:[%s5635 + $0x10] sm:$0xff]
        %v5639 = vld [vmem:[%s5635 + $0x18] sm:$0xff]
        %v5640 = vld [vmem:[%s5635 + $0x20] sm:$0xff]
        %v5641 = vld [vmem:[%s5635 + $0x28] sm:$0xff]
        %v5642 = vld [vmem:[%s5635 + $0x30] sm:$0xff]
        %v5643 = vld [vmem:[%s5635 + $0x38] sm:$0xff]
        %v5644 = vld [vmem:[%s5635 + $0x40] sm:$0xff]
        %v5645 = vld [vmem:[%s5635 + $0x48] sm:$0xff]
        %v5646 = vld [vmem:[%s5635 + $0x50] sm:$0xff]
        %v5647 = vld [vmem:[%s5635 + $0x58] sm:$0xff]
        %v5648 = vld [vmem:[%s5635 + $0x60] sm:$0xff]
        %v5649 = vld [vmem:[%s5635 + $0x68] sm:$0xff]
        %v5650 = vld [vmem:[%s5635 + $0x70] sm:$0xff]
        %v5651 = vld [vmem:[%s5635 + $0x78] sm:$0xff]
        %v5652 = vld [vmem:[%s5635 + $0x80] sm:$0xff]
        %v5653 = vld [vmem:[%s5635 + $0x88] sm:$0xff]
        %v5654 = vld [vmem:[%s5635 + $0x90] sm:$0xff]
        %v5655 = vld [vmem:[%s5635 + $0x98] sm:$0xff]
        %v5656 = vld [vmem:[%s5635 + $0xa0] sm:$0xff]
        %v5657 = vld [vmem:[%s5635 + $0xa8] sm:$0xff]
        %v5658 = vld [vmem:[%s5635 + $0xb0] sm:$0xff]
        %v5659 = vld [vmem:[%s5635 + $0xb8] sm:$0xff]
        %v5660 = vld [vmem:[%s5635 + $0xc0] sm:$0xff]
        %v5661 = vld [vmem:[%s5635 + $0xc8] sm:$0xff]
        %v5662 = vld [vmem:[%s5635 + $0xd0] sm:$0xff]
        %v5663 = vld [vmem:[%s5635 + $0xd8] sm:$0xff]
        %v5664 = vld [vmem:[%s5635 + $0xe0] sm:$0xff]
        %v5665 = vld [vmem:[%s5635 + $0xe8] sm:$0xff]
        %v5666 = vld [vmem:[%s5635 + $0xf0] sm:$0xff]
        %v5667 = vld [vmem:[%s5635 + $0xf8] sm:$0xff]
        %v5668 = vld [vmem:[%s5635 + $0x100] sm:$0xff]
        %v5669 = vld [vmem:[%s5635 + $0x108] sm:$0xff]
        %v5670 = vld [vmem:[%s5635 + $0x110] sm:$0xff]
        %v5671 = vld [vmem:[%s5635 + $0x118] sm:$0xff]
        %v5672 = vld [vmem:[%s5635 + $0x120] sm:$0xff]
        %v5673 = vld [vmem:[%s5635 + $0x128] sm:$0xff]
        %v5674 = vld [vmem:[%s5635 + $0x130] sm:$0xff]
        %v5675 = vld [vmem:[%s5635 + $0x138] sm:$0xff]
        %v5676 = vld [vmem:[%s5635 + $0x140] sm:$0xff]
        %v5677 = vld [vmem:[%s5635 + $0x148] sm:$0xff]
        %v5678 = vld [vmem:[%s5635 + $0x150] sm:$0xff]
        %v5679 = vld [vmem:[%s5635 + $0x158] sm:$0xff]
        %v5680 = vld [vmem:[%s5635 + $0x160] sm:$0xff]
        %v5681 = vld [vmem:[%s5635 + $0x168] sm:$0xff]
        %v5682 = vld [vmem:[%s5635 + $0x170] sm:$0xff]
        %v5683 = vld [vmem:[%s5635 + $0x178] sm:$0xff]
        %s5684 = scalar_lea.vmem %s155, 192 [#allocation2]
        %v5685 = vld [vmem:[%s5684] sm:$0xff]
        %v5686 = vld [vmem:[%s5684 + $0x8] sm:$0xff]
        %v5687 = vld [vmem:[%s5684 + $0x10] sm:$0xff]
        %v5688 = vld [vmem:[%s5684 + $0x18] sm:$0xff]
        %v5689 = vld [vmem:[%s5684 + $0x20] sm:$0xff]
        %v5690 = vld [vmem:[%s5684 + $0x28] sm:$0xff]
        %v5691 = vld [vmem:[%s5684 + $0x30] sm:$0xff]
        %v5692 = vld [vmem:[%s5684 + $0x38] sm:$0xff]
        %v5693 = vld [vmem:[%s5684 + $0x40] sm:$0xff]
        %v5694 = vld [vmem:[%s5684 + $0x48] sm:$0xff]
        %v5695 = vld [vmem:[%s5684 + $0x50] sm:$0xff]
        %v5696 = vld [vmem:[%s5684 + $0x58] sm:$0xff]
        %v5697 = vld [vmem:[%s5684 + $0x60] sm:$0xff]
        %v5698 = vld [vmem:[%s5684 + $0x68] sm:$0xff]
        %v5699 = vld [vmem:[%s5684 + $0x70] sm:$0xff]
        %v5700 = vld [vmem:[%s5684 + $0x78] sm:$0xff]
        %v5701 = vld [vmem:[%s5684 + $0x80] sm:$0xff]
        %v5702 = vld [vmem:[%s5684 + $0x88] sm:$0xff]
        %v5703 = vld [vmem:[%s5684 + $0x90] sm:$0xff]
        %v5704 = vld [vmem:[%s5684 + $0x98] sm:$0xff]
        %v5705 = vld [vmem:[%s5684 + $0xa0] sm:$0xff]
        %v5706 = vld [vmem:[%s5684 + $0xa8] sm:$0xff]
        %v5707 = vld [vmem:[%s5684 + $0xb0] sm:$0xff]
        %v5708 = vld [vmem:[%s5684 + $0xb8] sm:$0xff]
        %v5710 = vsel %vm264, %v5636, 0
        %v5713 = vsel %vm264, %v5637, 0
        %v5716 = vsel %vm264, %v5638, 0
        %v5719 = vsel %vm264, %v5639, 0
        %v5722 = vsel %vm264, %v5640, 0
        %v5725 = vsel %vm264, %v5641, 0
        %v5728 = vsel %vm264, %v5642, 0
        %v5731 = vsel %vm264, %v5643, 0
        %v5734 = vsel %vm264, %v5644, 0
        %v5737 = vsel %vm264, %v5645, 0
        %v5740 = vsel %vm264, %v5646, 0
        %v5743 = vsel %vm264, %v5647, 0
        %v5746 = vsel %vm264, %v5648, 0
        %v5749 = vsel %vm264, %v5649, 0
        %v5752 = vsel %vm264, %v5650, 0
        %v5755 = vsel %vm264, %v5651, 0
        %v5758 = vsel %vm264, %v5652, 0
        %v5761 = vsel %vm264, %v5653, 0
        %v5764 = vsel %vm264, %v5654, 0
        %v5767 = vsel %vm264, %v5655, 0
        %v5770 = vsel %vm264, %v5656, 0
        %v5773 = vsel %vm264, %v5657, 0
        %v5776 = vsel %vm264, %v5658, 0
        %v5779 = vsel %vm264, %v5659, 0
        %v5782 = vsel %vm264, %v5660, 0
        %v5785 = vsel %vm264, %v5661, 0
        %v5788 = vsel %vm264, %v5662, 0
        %v5791 = vsel %vm264, %v5663, 0
        %v5794 = vsel %vm264, %v5664, 0
        %v5797 = vsel %vm264, %v5665, 0
        %v5800 = vsel %vm264, %v5666, 0
        %v5803 = vsel %vm264, %v5667, 0
        %v5806 = vsel %vm264, %v5668, 0
        %v5809 = vsel %vm264, %v5669, 0
        %v5812 = vsel %vm264, %v5670, 0
        %v5815 = vsel %vm264, %v5671, 0
        %v5818 = vsel %vm264, %v5672, 0
        %v5821 = vsel %vm264, %v5673, 0
        %v5824 = vsel %vm264, %v5674, 0
        %v5827 = vsel %vm264, %v5675, 0
        %v5830 = vsel %vm264, %v5676, 0
        %v5833 = vsel %vm264, %v5677, 0
        %v5836 = vsel %vm264, %v5678, 0
        %v5839 = vsel %vm264, %v5679, 0
        %v5842 = vsel %vm264, %v5680, 0
        %v5845 = vsel %vm264, %v5681, 0
        %v5848 = vsel %vm264, %v5682, 0
        %v5851 = vsel %vm264, %v5683, 0
        %5853 = vmatpush.msra.mxu0 0.0
        %5854 = vmatpush.msra.mxu0 0.0
        %5855 = vmatpush.msra.mxu0 0.0
        %5856 = vmatpush.msra.mxu0 0.0
        %5857 = vmatpush.msra.mxu0 0.0
        %5858 = vmatpush.msra.mxu0 0.0
        %5859 = vmatpush.msra.mxu0 0.0
        %5860 = vmatpush.msra.mxu0 0.0
        %v5861 = vand.u32 %v5706, 4294901760
        %5862 = vmatpush.msra.mxu0 %v5861
        %v5863 = vand.u32 %v5703, 4294901760
        %5864 = vmatpush.msra.mxu0 %v5863
        %v5865 = vand.u32 %v5700, 4294901760
        %5866 = vmatpush.msra.mxu0 %v5865
        %v5867 = vand.u32 %v5697, 4294901760
        %5868 = vmatpush.msra.mxu0 %v5867
        %v5869 = vand.u32 %v5694, 4294901760
        %5870 = vmatpush.msra.mxu0 %v5869
        %v5871 = vand.u32 %v5691, 4294901760
        %5872 = vmatpush.msra.mxu0 %v5871
        %v5873 = vand.u32 %v5688, 4294901760
        %5874 = vmatpush.msra.mxu0 %v5873
        %v5875 = vand.u32 %v5685, 4294901760
        %5876 = vmatpush.msra.mxu0 %v5875
        %v5877 = vand.u32 %v5710, 4294901760
        %v5878 = vsub.f32 %v5710, %v5877
        %v5879 = vand.u32 %v5878, 4294901760
        %v5880 = vsub.f32 %v5878, %v5879
        %v5881 = vand.u32 %v5880, 4294901760
        %5882 = vmatmul.f32.gmra.mxu0 %v5881
        %v5883 = vpop.f32.mrf.mxu0
        %v5884 = vadd.f32 0.0, %v5883
        %v5885 = vand.u32 %v5713, 4294901760
        %v5886 = vsub.f32 %v5713, %v5885
        %v5887 = vand.u32 %v5886, 4294901760
        %v5888 = vsub.f32 %v5886, %v5887
        %v5889 = vand.u32 %v5888, 4294901760
        %5890 = vmatmul.f32.gmra.mxu0 %v5889
        %v5891 = vpop.f32.mrf.mxu0
        %v5892 = vadd.f32 0.0, %v5891
        %v5893 = vand.u32 %v5716, 4294901760
        %v5894 = vsub.f32 %v5716, %v5893
        %v5895 = vand.u32 %v5894, 4294901760
        %v5896 = vsub.f32 %v5894, %v5895
        %v5897 = vand.u32 %v5896, 4294901760
        %5898 = vmatmul.f32.gmra.mxu0 %v5897
        %v5899 = vpop.f32.mrf.mxu0
        %v5900 = vadd.f32 0.0, %v5899
        %v5901 = vand.u32 %v5719, 4294901760
        %v5902 = vsub.f32 %v5719, %v5901
        %v5903 = vand.u32 %v5902, 4294901760
        %v5904 = vsub.f32 %v5902, %v5903
        %v5905 = vand.u32 %v5904, 4294901760
        %5906 = vmatmul.f32.gmra.mxu0 %v5905
        %v5907 = vpop.f32.mrf.mxu0
        %v5908 = vadd.f32 0.0, %v5907
        %v5909 = vand.u32 %v5722, 4294901760
        %v5910 = vsub.f32 %v5722, %v5909
        %v5911 = vand.u32 %v5910, 4294901760
        %v5912 = vsub.f32 %v5910, %v5911
        %v5913 = vand.u32 %v5912, 4294901760
        %5914 = vmatmul.f32.gmra.mxu0 %v5913
        %v5915 = vpop.f32.mrf.mxu0
        %v5916 = vadd.f32 0.0, %v5915
        %v5917 = vand.u32 %v5725, 4294901760
        %v5918 = vsub.f32 %v5725, %v5917
        %v5919 = vand.u32 %v5918, 4294901760
        %v5920 = vsub.f32 %v5918, %v5919
        %v5921 = vand.u32 %v5920, 4294901760
        %5922 = vmatmul.f32.gmra.mxu0 %v5921
        %v5923 = vpop.f32.mrf.mxu0
        %v5924 = vadd.f32 0.0, %v5923
        %v5925 = vand.u32 %v5728, 4294901760
        %v5926 = vsub.f32 %v5728, %v5925
        %v5927 = vand.u32 %v5926, 4294901760
        %v5928 = vsub.f32 %v5926, %v5927
        %v5929 = vand.u32 %v5928, 4294901760
        %5930 = vmatmul.f32.gmra.mxu0 %v5929
        %v5931 = vpop.f32.mrf.mxu0
        %v5932 = vadd.f32 0.0, %v5931
        %v5933 = vand.u32 %v5731, 4294901760
        %v5934 = vsub.f32 %v5731, %v5933
        %v5935 = vand.u32 %v5934, 4294901760
        %v5936 = vsub.f32 %v5934, %v5935
        %v5937 = vand.u32 %v5936, 4294901760
        %5938 = vmatmul.f32.gmra.mxu0 %v5937
        %v5939 = vpop.f32.mrf.mxu0
        %v5940 = vadd.f32 0.0, %v5939
        %v5941 = vand.u32 %v5734, 4294901760
        %v5942 = vsub.f32 %v5734, %v5941
        %v5943 = vand.u32 %v5942, 4294901760
        %v5944 = vsub.f32 %v5942, %v5943
        %v5945 = vand.u32 %v5944, 4294901760
        %5946 = vmatmul.f32.gmra.mxu0 %v5945
        %v5947 = vpop.f32.mrf.mxu0
        %v5948 = vadd.f32 0.0, %v5947
        %v5949 = vand.u32 %v5737, 4294901760
        %v5950 = vsub.f32 %v5737, %v5949
        %v5951 = vand.u32 %v5950, 4294901760
        %v5952 = vsub.f32 %v5950, %v5951
        %v5953 = vand.u32 %v5952, 4294901760
        %5954 = vmatmul.f32.gmra.mxu0 %v5953
        %v5955 = vpop.f32.mrf.mxu0
        %v5956 = vadd.f32 0.0, %v5955
        %v5957 = vand.u32 %v5740, 4294901760
        %v5958 = vsub.f32 %v5740, %v5957
        %v5959 = vand.u32 %v5958, 4294901760
        %v5960 = vsub.f32 %v5958, %v5959
        %v5961 = vand.u32 %v5960, 4294901760
        %5962 = vmatmul.f32.gmra.mxu0 %v5961
        %v5963 = vpop.f32.mrf.mxu0
        %v5964 = vadd.f32 0.0, %v5963
        %v5965 = vand.u32 %v5743, 4294901760
        %v5966 = vsub.f32 %v5743, %v5965
        %v5967 = vand.u32 %v5966, 4294901760
        %v5968 = vsub.f32 %v5966, %v5967
        %v5969 = vand.u32 %v5968, 4294901760
        %5970 = vmatmul.f32.gmra.mxu0 %v5969
        %v5971 = vpop.f32.mrf.mxu0
        %v5972 = vadd.f32 0.0, %v5971
        %v5973 = vand.u32 %v5746, 4294901760
        %v5974 = vsub.f32 %v5746, %v5973
        %v5975 = vand.u32 %v5974, 4294901760
        %v5976 = vsub.f32 %v5974, %v5975
        %v5977 = vand.u32 %v5976, 4294901760
        %5978 = vmatmul.f32.gmra.mxu0 %v5977
        %v5979 = vpop.f32.mrf.mxu0
        %v5980 = vadd.f32 0.0, %v5979
        %v5981 = vand.u32 %v5749, 4294901760
        %v5982 = vsub.f32 %v5749, %v5981
        %v5983 = vand.u32 %v5982, 4294901760
        %v5984 = vsub.f32 %v5982, %v5983
        %v5985 = vand.u32 %v5984, 4294901760
        %5986 = vmatmul.f32.gmra.mxu0 %v5985
        %v5987 = vpop.f32.mrf.mxu0
        %v5988 = vadd.f32 0.0, %v5987
        %v5989 = vand.u32 %v5752, 4294901760
        %v5990 = vsub.f32 %v5752, %v5989
        %v5991 = vand.u32 %v5990, 4294901760
        %v5992 = vsub.f32 %v5990, %v5991
        %v5993 = vand.u32 %v5992, 4294901760
        %5994 = vmatmul.f32.gmra.mxu0 %v5993
        %v5995 = vpop.f32.mrf.mxu0
        %v5996 = vadd.f32 0.0, %v5995
        %v5997 = vand.u32 %v5755, 4294901760
        %v5998 = vsub.f32 %v5755, %v5997
        %v5999 = vand.u32 %v5998, 4294901760
        %v6000 = vsub.f32 %v5998, %v5999
        %v6001 = vand.u32 %v6000, 4294901760
        %6002 = vmatmul.f32.gmra.mxu0 %v6001
        %v6003 = vpop.f32.mrf.mxu0
        %v6004 = vadd.f32 0.0, %v6003
        %v6005 = vand.u32 %v5758, 4294901760
        %v6006 = vsub.f32 %v5758, %v6005
        %v6007 = vand.u32 %v6006, 4294901760
        %v6008 = vsub.f32 %v6006, %v6007
        %v6009 = vand.u32 %v6008, 4294901760
        %6010 = vmatmul.f32.gmra.mxu0 %v6009
        %v6011 = vpop.f32.mrf.mxu0
        %v6012 = vadd.f32 0.0, %v6011
        %v6013 = vand.u32 %v5761, 4294901760
        %v6014 = vsub.f32 %v5761, %v6013
        %v6015 = vand.u32 %v6014, 4294901760
        %v6016 = vsub.f32 %v6014, %v6015
        %v6017 = vand.u32 %v6016, 4294901760
        %6018 = vmatmul.f32.gmra.mxu0 %v6017
        %v6019 = vpop.f32.mrf.mxu0
        %v6020 = vadd.f32 0.0, %v6019
        %v6021 = vand.u32 %v5764, 4294901760
        %v6022 = vsub.f32 %v5764, %v6021
        %v6023 = vand.u32 %v6022, 4294901760
        %v6024 = vsub.f32 %v6022, %v6023
        %v6025 = vand.u32 %v6024, 4294901760
        %6026 = vmatmul.f32.gmra.mxu0 %v6025
        %v6027 = vpop.f32.mrf.mxu0
        %v6028 = vadd.f32 0.0, %v6027
        %v6029 = vand.u32 %v5767, 4294901760
        %v6030 = vsub.f32 %v5767, %v6029
        %v6031 = vand.u32 %v6030, 4294901760
        %v6032 = vsub.f32 %v6030, %v6031
        %v6033 = vand.u32 %v6032, 4294901760
        %6034 = vmatmul.f32.gmra.mxu0 %v6033
        %v6035 = vpop.f32.mrf.mxu0
        %v6036 = vadd.f32 0.0, %v6035
        %v6037 = vand.u32 %v5770, 4294901760
        %v6038 = vsub.f32 %v5770, %v6037
        %v6039 = vand.u32 %v6038, 4294901760
        %v6040 = vsub.f32 %v6038, %v6039
        %v6041 = vand.u32 %v6040, 4294901760
        %6042 = vmatmul.f32.gmra.mxu0 %v6041
        %v6043 = vpop.f32.mrf.mxu0
        %v6044 = vadd.f32 0.0, %v6043
        %v6045 = vand.u32 %v5773, 4294901760
        %v6046 = vsub.f32 %v5773, %v6045
        %v6047 = vand.u32 %v6046, 4294901760
        %v6048 = vsub.f32 %v6046, %v6047
        %v6049 = vand.u32 %v6048, 4294901760
        %6050 = vmatmul.f32.gmra.mxu0 %v6049
        %v6051 = vpop.f32.mrf.mxu0
        %v6052 = vadd.f32 0.0, %v6051
        %v6053 = vand.u32 %v5776, 4294901760
        %v6054 = vsub.f32 %v5776, %v6053
        %v6055 = vand.u32 %v6054, 4294901760
        %v6056 = vsub.f32 %v6054, %v6055
        %v6057 = vand.u32 %v6056, 4294901760
        %6058 = vmatmul.f32.gmra.mxu0 %v6057
        %v6059 = vpop.f32.mrf.mxu0
        %v6060 = vadd.f32 0.0, %v6059
        %v6061 = vand.u32 %v5779, 4294901760
        %v6062 = vsub.f32 %v5779, %v6061
        %v6063 = vand.u32 %v6062, 4294901760
        %v6064 = vsub.f32 %v6062, %v6063
        %v6065 = vand.u32 %v6064, 4294901760
        %6066 = vmatmul.f32.gmra.mxu0 %v6065
        %v6067 = vpop.f32.mrf.mxu0
        %v6068 = vadd.f32 0.0, %v6067
        %v6069 = vand.u32 %v5782, 4294901760
        %v6070 = vsub.f32 %v5782, %v6069
        %v6071 = vand.u32 %v6070, 4294901760
        %v6072 = vsub.f32 %v6070, %v6071
        %v6073 = vand.u32 %v6072, 4294901760
        %6074 = vmatmul.f32.gmra.mxu0 %v6073
        %v6075 = vpop.f32.mrf.mxu0
        %v6076 = vadd.f32 0.0, %v6075
        %v6077 = vand.u32 %v5785, 4294901760
        %v6078 = vsub.f32 %v5785, %v6077
        %v6079 = vand.u32 %v6078, 4294901760
        %v6080 = vsub.f32 %v6078, %v6079
        %v6081 = vand.u32 %v6080, 4294901760
        %6082 = vmatmul.f32.gmra.mxu0 %v6081
        %v6083 = vpop.f32.mrf.mxu0
        %v6084 = vadd.f32 0.0, %v6083
        %v6085 = vand.u32 %v5788, 4294901760
        %v6086 = vsub.f32 %v5788, %v6085
        %v6087 = vand.u32 %v6086, 4294901760
        %v6088 = vsub.f32 %v6086, %v6087
        %v6089 = vand.u32 %v6088, 4294901760
        %6090 = vmatmul.f32.gmra.mxu0 %v6089
        %v6091 = vpop.f32.mrf.mxu0
        %v6092 = vadd.f32 0.0, %v6091
        %v6093 = vand.u32 %v5791, 4294901760
        %v6094 = vsub.f32 %v5791, %v6093
        %v6095 = vand.u32 %v6094, 4294901760
        %v6096 = vsub.f32 %v6094, %v6095
        %v6097 = vand.u32 %v6096, 4294901760
        %6098 = vmatmul.f32.gmra.mxu0 %v6097
        %v6099 = vpop.f32.mrf.mxu0
        %v6100 = vadd.f32 0.0, %v6099
        %v6101 = vand.u32 %v5794, 4294901760
        %v6102 = vsub.f32 %v5794, %v6101
        %v6103 = vand.u32 %v6102, 4294901760
        %v6104 = vsub.f32 %v6102, %v6103
        %v6105 = vand.u32 %v6104, 4294901760
        %6106 = vmatmul.f32.gmra.mxu0 %v6105
        %v6107 = vpop.f32.mrf.mxu0
        %v6108 = vadd.f32 0.0, %v6107
        %v6109 = vand.u32 %v5797, 4294901760
        %v6110 = vsub.f32 %v5797, %v6109
        %v6111 = vand.u32 %v6110, 4294901760
        %v6112 = vsub.f32 %v6110, %v6111
        %v6113 = vand.u32 %v6112, 4294901760
        %6114 = vmatmul.f32.gmra.mxu0 %v6113
        %v6115 = vpop.f32.mrf.mxu0
        %v6116 = vadd.f32 0.0, %v6115
        %v6117 = vand.u32 %v5800, 4294901760
        %v6118 = vsub.f32 %v5800, %v6117
        %v6119 = vand.u32 %v6118, 4294901760
        %v6120 = vsub.f32 %v6118, %v6119
        %v6121 = vand.u32 %v6120, 4294901760
        %6122 = vmatmul.f32.gmra.mxu0 %v6121
        %v6123 = vpop.f32.mrf.mxu0
        %v6124 = vadd.f32 0.0, %v6123
        %v6125 = vand.u32 %v5803, 4294901760
        %v6126 = vsub.f32 %v5803, %v6125
        %v6127 = vand.u32 %v6126, 4294901760
        %v6128 = vsub.f32 %v6126, %v6127
        %v6129 = vand.u32 %v6128, 4294901760
        %6130 = vmatmul.f32.gmra.mxu0 %v6129
        %v6131 = vpop.f32.mrf.mxu0
        %v6132 = vadd.f32 0.0, %v6131
        %v6133 = vand.u32 %v5806, 4294901760
        %v6134 = vsub.f32 %v5806, %v6133
        %v6135 = vand.u32 %v6134, 4294901760
        %v6136 = vsub.f32 %v6134, %v6135
        %v6137 = vand.u32 %v6136, 4294901760
        %6138 = vmatmul.f32.gmra.mxu0 %v6137
        %v6139 = vpop.f32.mrf.mxu0
        %v6140 = vadd.f32 0.0, %v6139
        %v6141 = vand.u32 %v5809, 4294901760
        %v6142 = vsub.f32 %v5809, %v6141
        %v6143 = vand.u32 %v6142, 4294901760
        %v6144 = vsub.f32 %v6142, %v6143
        %v6145 = vand.u32 %v6144, 4294901760
        %6146 = vmatmul.f32.gmra.mxu0 %v6145
        %v6147 = vpop.f32.mrf.mxu0
        %v6148 = vadd.f32 0.0, %v6147
        %v6149 = vand.u32 %v5812, 4294901760
        %v6150 = vsub.f32 %v5812, %v6149
        %v6151 = vand.u32 %v6150, 4294901760
        %v6152 = vsub.f32 %v6150, %v6151
        %v6153 = vand.u32 %v6152, 4294901760
        %6154 = vmatmul.f32.gmra.mxu0 %v6153
        %v6155 = vpop.f32.mrf.mxu0
        %v6156 = vadd.f32 0.0, %v6155
        %v6157 = vand.u32 %v5815, 4294901760
        %v6158 = vsub.f32 %v5815, %v6157
        %v6159 = vand.u32 %v6158, 4294901760
        %v6160 = vsub.f32 %v6158, %v6159
        %v6161 = vand.u32 %v6160, 4294901760
        %6162 = vmatmul.f32.gmra.mxu0 %v6161
        %v6163 = vpop.f32.mrf.mxu0
        %v6164 = vadd.f32 0.0, %v6163
        %v6165 = vand.u32 %v5818, 4294901760
        %v6166 = vsub.f32 %v5818, %v6165
        %v6167 = vand.u32 %v6166, 4294901760
        %v6168 = vsub.f32 %v6166, %v6167
        %v6169 = vand.u32 %v6168, 4294901760
        %6170 = vmatmul.f32.gmra.mxu0 %v6169
        %v6171 = vpop.f32.mrf.mxu0
        %v6172 = vadd.f32 0.0, %v6171
        %v6173 = vand.u32 %v5821, 4294901760
        %v6174 = vsub.f32 %v5821, %v6173
        %v6175 = vand.u32 %v6174, 4294901760
        %v6176 = vsub.f32 %v6174, %v6175
        %v6177 = vand.u32 %v6176, 4294901760
        %6178 = vmatmul.f32.gmra.mxu0 %v6177
        %v6179 = vpop.f32.mrf.mxu0
        %v6180 = vadd.f32 0.0, %v6179
        %v6181 = vand.u32 %v5824, 4294901760
        %v6182 = vsub.f32 %v5824, %v6181
        %v6183 = vand.u32 %v6182, 4294901760
        %v6184 = vsub.f32 %v6182, %v6183
        %v6185 = vand.u32 %v6184, 4294901760
        %6186 = vmatmul.f32.gmra.mxu0 %v6185
        %v6187 = vpop.f32.mrf.mxu0
        %v6188 = vadd.f32 0.0, %v6187
        %v6189 = vand.u32 %v5827, 4294901760
        %v6190 = vsub.f32 %v5827, %v6189
        %v6191 = vand.u32 %v6190, 4294901760
        %v6192 = vsub.f32 %v6190, %v6191
        %v6193 = vand.u32 %v6192, 4294901760
        %6194 = vmatmul.f32.gmra.mxu0 %v6193
        %v6195 = vpop.f32.mrf.mxu0
        %v6196 = vadd.f32 0.0, %v6195
        %v6197 = vand.u32 %v5830, 4294901760
        %v6198 = vsub.f32 %v5830, %v6197
        %v6199 = vand.u32 %v6198, 4294901760
        %v6200 = vsub.f32 %v6198, %v6199
        %v6201 = vand.u32 %v6200, 4294901760
        %6202 = vmatmul.f32.gmra.mxu0 %v6201
        %v6203 = vpop.f32.mrf.mxu0
        %v6204 = vadd.f32 0.0, %v6203
        %v6205 = vand.u32 %v5833, 4294901760
        %v6206 = vsub.f32 %v5833, %v6205
        %v6207 = vand.u32 %v6206, 4294901760
        %v6208 = vsub.f32 %v6206, %v6207
        %v6209 = vand.u32 %v6208, 4294901760
        %6210 = vmatmul.f32.gmra.mxu0 %v6209
        %v6211 = vpop.f32.mrf.mxu0
        %v6212 = vadd.f32 0.0, %v6211
        %v6213 = vand.u32 %v5836, 4294901760
        %v6214 = vsub.f32 %v5836, %v6213
        %v6215 = vand.u32 %v6214, 4294901760
        %v6216 = vsub.f32 %v6214, %v6215
        %v6217 = vand.u32 %v6216, 4294901760
        %6218 = vmatmul.f32.gmra.mxu0 %v6217
        %v6219 = vpop.f32.mrf.mxu0
        %v6220 = vadd.f32 0.0, %v6219
        %v6221 = vand.u32 %v5839, 4294901760
        %v6222 = vsub.f32 %v5839, %v6221
        %v6223 = vand.u32 %v6222, 4294901760
        %v6224 = vsub.f32 %v6222, %v6223
        %v6225 = vand.u32 %v6224, 4294901760
        %6226 = vmatmul.f32.gmra.mxu0 %v6225
        %v6227 = vpop.f32.mrf.mxu0
        %v6228 = vadd.f32 0.0, %v6227
        %v6229 = vand.u32 %v5842, 4294901760
        %v6230 = vsub.f32 %v5842, %v6229
        %v6231 = vand.u32 %v6230, 4294901760
        %v6232 = vsub.f32 %v6230, %v6231
        %v6233 = vand.u32 %v6232, 4294901760
        %6234 = vmatmul.f32.gmra.mxu0 %v6233
        %v6235 = vpop.f32.mrf.mxu0
        %v6236 = vadd.f32 0.0, %v6235
        %v6237 = vand.u32 %v5845, 4294901760
        %v6238 = vsub.f32 %v5845, %v6237
        %v6239 = vand.u32 %v6238, 4294901760
        %v6240 = vsub.f32 %v6238, %v6239
        %v6241 = vand.u32 %v6240, 4294901760
        %6242 = vmatmul.f32.gmra.mxu0 %v6241
        %v6243 = vpop.f32.mrf.mxu0
        %v6244 = vadd.f32 0.0, %v6243
        %v6245 = vand.u32 %v5848, 4294901760
        %v6246 = vsub.f32 %v5848, %v6245
        %v6247 = vand.u32 %v6246, 4294901760
        %v6248 = vsub.f32 %v6246, %v6247
        %v6249 = vand.u32 %v6248, 4294901760
        %6250 = vmatmul.f32.gmra.mxu0 %v6249
        %v6251 = vpop.f32.mrf.mxu0
        %v6252 = vadd.f32 0.0, %v6251
        %v6253 = vand.u32 %v5851, 4294901760
        %v6254 = vsub.f32 %v5851, %v6253
        %v6255 = vand.u32 %v6254, 4294901760
        %v6256 = vsub.f32 %v6254, %v6255
        %v6257 = vand.u32 %v6256, 4294901760
        %6258 = vmatmul.f32.gmra.mxu0 %v6257
        %v6259 = vpop.f32.mrf.mxu0
        %v6260 = vadd.f32 0.0, %v6259
        %6261 = vdwg.mxu0
        %6262 = vmatpush.msra.mxu0 0.0
        %6263 = vmatpush.msra.mxu0 0.0
        %6264 = vmatpush.msra.mxu0 0.0
        %6265 = vmatpush.msra.mxu0 0.0
        %6266 = vmatpush.msra.mxu0 0.0
        %6267 = vmatpush.msra.mxu0 0.0
        %6268 = vmatpush.msra.mxu0 0.0
        %6269 = vmatpush.msra.mxu0 0.0
        %v6270 = vand.u32 %v5706, 4294901760
        %v6271 = vsub.f32 %v5706, %v6270
        %v6272 = vand.u32 %v6271, 4294901760
        %v6273 = vsub.f32 %v6271, %v6272
        %v6274 = vand.u32 %v6273, 4294901760
        %6275 = vmatpush.msra.mxu0 %v6274
        %v6276 = vand.u32 %v5703, 4294901760
        %v6277 = vsub.f32 %v5703, %v6276
        %v6278 = vand.u32 %v6277, 4294901760
        %v6279 = vsub.f32 %v6277, %v6278
        %v6280 = vand.u32 %v6279, 4294901760
        %6281 = vmatpush.msra.mxu0 %v6280
        %v6282 = vand.u32 %v5700, 4294901760
        %v6283 = vsub.f32 %v5700, %v6282
        %v6284 = vand.u32 %v6283, 4294901760
        %v6285 = vsub.f32 %v6283, %v6284
        %v6286 = vand.u32 %v6285, 4294901760
        %6287 = vmatpush.msra.mxu0 %v6286
        %v6288 = vand.u32 %v5697, 4294901760
        %v6289 = vsub.f32 %v5697, %v6288
        %v6290 = vand.u32 %v6289, 4294901760
        %v6291 = vsub.f32 %v6289, %v6290
        %v6292 = vand.u32 %v6291, 4294901760
        %6293 = vmatpush.msra.mxu0 %v6292
        %v6294 = vand.u32 %v5694, 4294901760
        %v6295 = vsub.f32 %v5694, %v6294
        %v6296 = vand.u32 %v6295, 4294901760
        %v6297 = vsub.f32 %v6295, %v6296
        %v6298 = vand.u32 %v6297, 4294901760
        %6299 = vmatpush.msra.mxu0 %v6298
        %v6300 = vand.u32 %v5691, 4294901760
        %v6301 = vsub.f32 %v5691, %v6300
        %v6302 = vand.u32 %v6301, 4294901760
        %v6303 = vsub.f32 %v6301, %v6302
        %v6304 = vand.u32 %v6303, 4294901760
        %6305 = vmatpush.msra.mxu0 %v6304
        %v6306 = vand.u32 %v5688, 4294901760
        %v6307 = vsub.f32 %v5688, %v6306
        %v6308 = vand.u32 %v6307, 4294901760
        %v6309 = vsub.f32 %v6307, %v6308
        %v6310 = vand.u32 %v6309, 4294901760
        %6311 = vmatpush.msra.mxu0 %v6310
        %v6312 = vand.u32 %v5685, 4294901760
        %v6313 = vsub.f32 %v5685, %v6312
        %v6314 = vand.u32 %v6313, 4294901760
        %v6315 = vsub.f32 %v6313, %v6314
        %v6316 = vand.u32 %v6315, 4294901760
        %6317 = vmatpush.msra.mxu0 %v6316
        %v6318 = vand.u32 %v5710, 4294901760
        %6319 = vmatmul.f32.gmra.mxu0 %v6318
        %v6320 = vpop.f32.mrf.mxu0
        %v6321 = vadd.f32 %v5884, %v6320
        %v6322 = vand.u32 %v5713, 4294901760
        %6323 = vmatmul.f32.gmra.mxu0 %v6322
        %v6324 = vpop.f32.mrf.mxu0
        %v6325 = vadd.f32 %v5892, %v6324
        %v6326 = vand.u32 %v5716, 4294901760
        %6327 = vmatmul.f32.gmra.mxu0 %v6326
        %v6328 = vpop.f32.mrf.mxu0
        %v6329 = vadd.f32 %v5900, %v6328
        %v6330 = vand.u32 %v5719, 4294901760
        %6331 = vmatmul.f32.gmra.mxu0 %v6330
        %v6332 = vpop.f32.mrf.mxu0
        %v6333 = vadd.f32 %v5908, %v6332
        %v6334 = vand.u32 %v5722, 4294901760
        %6335 = vmatmul.f32.gmra.mxu0 %v6334
        %v6336 = vpop.f32.mrf.mxu0
        %v6337 = vadd.f32 %v5916, %v6336
        %v6338 = vand.u32 %v5725, 4294901760
        %6339 = vmatmul.f32.gmra.mxu0 %v6338
        %v6340 = vpop.f32.mrf.mxu0
        %v6341 = vadd.f32 %v5924, %v6340
        %v6342 = vand.u32 %v5728, 4294901760
        %6343 = vmatmul.f32.gmra.mxu0 %v6342
        %v6344 = vpop.f32.mrf.mxu0
        %v6345 = vadd.f32 %v5932, %v6344
        %v6346 = vand.u32 %v5731, 4294901760
        %6347 = vmatmul.f32.gmra.mxu0 %v6346
        %v6348 = vpop.f32.mrf.mxu0
        %v6349 = vadd.f32 %v5940, %v6348
        %v6350 = vand.u32 %v5734, 4294901760
        %6351 = vmatmul.f32.gmra.mxu0 %v6350
        %v6352 = vpop.f32.mrf.mxu0
        %v6353 = vadd.f32 %v5948, %v6352
        %v6354 = vand.u32 %v5737, 4294901760
        %6355 = vmatmul.f32.gmra.mxu0 %v6354
        %v6356 = vpop.f32.mrf.mxu0
        %v6357 = vadd.f32 %v5956, %v6356
        %v6358 = vand.u32 %v5740, 4294901760
        %6359 = vmatmul.f32.gmra.mxu0 %v6358
        %v6360 = vpop.f32.mrf.mxu0
        %v6361 = vadd.f32 %v5964, %v6360
        %v6362 = vand.u32 %v5743, 4294901760
        %6363 = vmatmul.f32.gmra.mxu0 %v6362
        %v6364 = vpop.f32.mrf.mxu0
        %v6365 = vadd.f32 %v5972, %v6364
        %v6366 = vand.u32 %v5746, 4294901760
        %6367 = vmatmul.f32.gmra.mxu0 %v6366
        %v6368 = vpop.f32.mrf.mxu0
        %v6369 = vadd.f32 %v5980, %v6368
        %v6370 = vand.u32 %v5749, 4294901760
        %6371 = vmatmul.f32.gmra.mxu0 %v6370
        %v6372 = vpop.f32.mrf.mxu0
        %v6373 = vadd.f32 %v5988, %v6372
        %v6374 = vand.u32 %v5752, 4294901760
        %6375 = vmatmul.f32.gmra.mxu0 %v6374
        %v6376 = vpop.f32.mrf.mxu0
        %v6377 = vadd.f32 %v5996, %v6376
        %v6378 = vand.u32 %v5755, 4294901760
        %6379 = vmatmul.f32.gmra.mxu0 %v6378
        %v6380 = vpop.f32.mrf.mxu0
        %v6381 = vadd.f32 %v6004, %v6380
        %v6382 = vand.u32 %v5758, 4294901760
        %6383 = vmatmul.f32.gmra.mxu0 %v6382
        %v6384 = vpop.f32.mrf.mxu0
        %v6385 = vadd.f32 %v6012, %v6384
        %v6386 = vand.u32 %v5761, 4294901760
        %6387 = vmatmul.f32.gmra.mxu0 %v6386
        %v6388 = vpop.f32.mrf.mxu0
        %v6389 = vadd.f32 %v6020, %v6388
        %v6390 = vand.u32 %v5764, 4294901760
        %6391 = vmatmul.f32.gmra.mxu0 %v6390
        %v6392 = vpop.f32.mrf.mxu0
        %v6393 = vadd.f32 %v6028, %v6392
        %v6394 = vand.u32 %v5767, 4294901760
        %6395 = vmatmul.f32.gmra.mxu0 %v6394
        %v6396 = vpop.f32.mrf.mxu0
        %v6397 = vadd.f32 %v6036, %v6396
        %v6398 = vand.u32 %v5770, 4294901760
        %6399 = vmatmul.f32.gmra.mxu0 %v6398
        %v6400 = vpop.f32.mrf.mxu0
        %v6401 = vadd.f32 %v6044, %v6400
        %v6402 = vand.u32 %v5773, 4294901760
        %6403 = vmatmul.f32.gmra.mxu0 %v6402
        %v6404 = vpop.f32.mrf.mxu0
        %v6405 = vadd.f32 %v6052, %v6404
        %v6406 = vand.u32 %v5776, 4294901760
        %6407 = vmatmul.f32.gmra.mxu0 %v6406
        %v6408 = vpop.f32.mrf.mxu0
        %v6409 = vadd.f32 %v6060, %v6408
        %v6410 = vand.u32 %v5779, 4294901760
        %6411 = vmatmul.f32.gmra.mxu0 %v6410
        %v6412 = vpop.f32.mrf.mxu0
        %v6413 = vadd.f32 %v6068, %v6412
        %v6414 = vand.u32 %v5782, 4294901760
        %6415 = vmatmul.f32.gmra.mxu0 %v6414
        %v6416 = vpop.f32.mrf.mxu0
        %v6417 = vadd.f32 %v6076, %v6416
        %v6418 = vand.u32 %v5785, 4294901760
        %6419 = vmatmul.f32.gmra.mxu0 %v6418
        %v6420 = vpop.f32.mrf.mxu0
        %v6421 = vadd.f32 %v6084, %v6420
        %v6422 = vand.u32 %v5788, 4294901760
        %6423 = vmatmul.f32.gmra.mxu0 %v6422
        %v6424 = vpop.f32.mrf.mxu0
        %v6425 = vadd.f32 %v6092, %v6424
        %v6426 = vand.u32 %v5791, 4294901760
        %6427 = vmatmul.f32.gmra.mxu0 %v6426
        %v6428 = vpop.f32.mrf.mxu0
        %v6429 = vadd.f32 %v6100, %v6428
        %v6430 = vand.u32 %v5794, 4294901760
        %6431 = vmatmul.f32.gmra.mxu0 %v6430
        %v6432 = vpop.f32.mrf.mxu0
        %v6433 = vadd.f32 %v6108, %v6432
        %v6434 = vand.u32 %v5797, 4294901760
        %6435 = vmatmul.f32.gmra.mxu0 %v6434
        %v6436 = vpop.f32.mrf.mxu0
        %v6437 = vadd.f32 %v6116, %v6436
        %v6438 = vand.u32 %v5800, 4294901760
        %6439 = vmatmul.f32.gmra.mxu0 %v6438
        %v6440 = vpop.f32.mrf.mxu0
        %v6441 = vadd.f32 %v6124, %v6440
        %v6442 = vand.u32 %v5803, 4294901760
        %6443 = vmatmul.f32.gmra.mxu0 %v6442
        %v6444 = vpop.f32.mrf.mxu0
        %v6445 = vadd.f32 %v6132, %v6444
        %v6446 = vand.u32 %v5806, 4294901760
        %6447 = vmatmul.f32.gmra.mxu0 %v6446
        %v6448 = vpop.f32.mrf.mxu0
        %v6449 = vadd.f32 %v6140, %v6448
        %v6450 = vand.u32 %v5809, 4294901760
        %6451 = vmatmul.f32.gmra.mxu0 %v6450
        %v6452 = vpop.f32.mrf.mxu0
        %v6453 = vadd.f32 %v6148, %v6452
        %v6454 = vand.u32 %v5812, 4294901760
        %6455 = vmatmul.f32.gmra.mxu0 %v6454
        %v6456 = vpop.f32.mrf.mxu0
        %v6457 = vadd.f32 %v6156, %v6456
        %v6458 = vand.u32 %v5815, 4294901760
        %6459 = vmatmul.f32.gmra.mxu0 %v6458
        %v6460 = vpop.f32.mrf.mxu0
        %v6461 = vadd.f32 %v6164, %v6460
        %v6462 = vand.u32 %v5818, 4294901760
        %6463 = vmatmul.f32.gmra.mxu0 %v6462
        %v6464 = vpop.f32.mrf.mxu0
        %v6465 = vadd.f32 %v6172, %v6464
        %v6466 = vand.u32 %v5821, 4294901760
        %6467 = vmatmul.f32.gmra.mxu0 %v6466
        %v6468 = vpop.f32.mrf.mxu0
        %v6469 = vadd.f32 %v6180, %v6468
        %v6470 = vand.u32 %v5824, 4294901760
        %6471 = vmatmul.f32.gmra.mxu0 %v6470
        %v6472 = vpop.f32.mrf.mxu0
        %v6473 = vadd.f32 %v6188, %v6472
        %v6474 = vand.u32 %v5827, 4294901760
        %6475 = vmatmul.f32.gmra.mxu0 %v6474
        %v6476 = vpop.f32.mrf.mxu0
        %v6477 = vadd.f32 %v6196, %v6476
        %v6478 = vand.u32 %v5830, 4294901760
        %6479 = vmatmul.f32.gmra.mxu0 %v6478
        %v6480 = vpop.f32.mrf.mxu0
        %v6481 = vadd.f32 %v6204, %v6480
        %v6482 = vand.u32 %v5833, 4294901760
        %6483 = vmatmul.f32.gmra.mxu0 %v6482
        %v6484 = vpop.f32.mrf.mxu0
        %v6485 = vadd.f32 %v6212, %v6484
        %v6486 = vand.u32 %v5836, 4294901760
        %6487 = vmatmul.f32.gmra.mxu0 %v6486
        %v6488 = vpop.f32.mrf.mxu0
        %v6489 = vadd.f32 %v6220, %v6488
        %v6490 = vand.u32 %v5839, 4294901760
        %6491 = vmatmul.f32.gmra.mxu0 %v6490
        %v6492 = vpop.f32.mrf.mxu0
        %v6493 = vadd.f32 %v6228, %v6492
        %v6494 = vand.u32 %v5842, 4294901760
        %6495 = vmatmul.f32.gmra.mxu0 %v6494
        %v6496 = vpop.f32.mrf.mxu0
        %v6497 = vadd.f32 %v6236, %v6496
        %v6498 = vand.u32 %v5845, 4294901760
        %6499 = vmatmul.f32.gmra.mxu0 %v6498
        %v6500 = vpop.f32.mrf.mxu0
        %v6501 = vadd.f32 %v6244, %v6500
        %v6502 = vand.u32 %v5848, 4294901760
        %6503 = vmatmul.f32.gmra.mxu0 %v6502
        %v6504 = vpop.f32.mrf.mxu0
        %v6505 = vadd.f32 %v6252, %v6504
        %v6506 = vand.u32 %v5851, 4294901760
        %6507 = vmatmul.f32.gmra.mxu0 %v6506
        %v6508 = vpop.f32.mrf.mxu0
        %v6509 = vadd.f32 %v6260, %v6508
        %6510 = vdwg.mxu0
        %6511 = vmatpush.msra.mxu0 0.0
        %6512 = vmatpush.msra.mxu0 0.0
        %6513 = vmatpush.msra.mxu0 0.0
        %6514 = vmatpush.msra.mxu0 0.0
        %6515 = vmatpush.msra.mxu0 0.0
        %6516 = vmatpush.msra.mxu0 0.0
        %6517 = vmatpush.msra.mxu0 0.0
        %6518 = vmatpush.msra.mxu0 0.0
        %v6519 = vand.u32 %v5706, 4294901760
        %v6520 = vsub.f32 %v5706, %v6519
        %6521 = vmatpush.msra.mxu0 %v6520
        %v6522 = vand.u32 %v5703, 4294901760
        %v6523 = vsub.f32 %v5703, %v6522
        %6524 = vmatpush.msra.mxu0 %v6523
        %v6525 = vand.u32 %v5700, 4294901760
        %v6526 = vsub.f32 %v5700, %v6525
        %6527 = vmatpush.msra.mxu0 %v6526
        %v6528 = vand.u32 %v5697, 4294901760
        %v6529 = vsub.f32 %v5697, %v6528
        %6530 = vmatpush.msra.mxu0 %v6529
        %v6531 = vand.u32 %v5694, 4294901760
        %v6532 = vsub.f32 %v5694, %v6531
        %6533 = vmatpush.msra.mxu0 %v6532
        %v6534 = vand.u32 %v5691, 4294901760
        %v6535 = vsub.f32 %v5691, %v6534
        %6536 = vmatpush.msra.mxu0 %v6535
        %v6537 = vand.u32 %v5688, 4294901760
        %v6538 = vsub.f32 %v5688, %v6537
        %6539 = vmatpush.msra.mxu0 %v6538
        %v6540 = vand.u32 %v5685, 4294901760
        %v6541 = vsub.f32 %v5685, %v6540
        %6542 = vmatpush.msra.mxu0 %v6541
        %v6543 = vand.u32 %v5710, 4294901760
        %v6544 = vsub.f32 %v5710, %v6543
        %6545 = vmatmul.f32.gmra.mxu0 %v6544
        %v6546 = vpop.f32.mrf.mxu0
        %v6547 = vadd.f32 %v6321, %v6546
        %v6548 = vand.u32 %v5713, 4294901760
        %v6549 = vsub.f32 %v5713, %v6548
        %6550 = vmatmul.f32.gmra.mxu0 %v6549
        %v6551 = vpop.f32.mrf.mxu0
        %v6552 = vadd.f32 %v6325, %v6551
        %v6553 = vand.u32 %v5716, 4294901760
        %v6554 = vsub.f32 %v5716, %v6553
        %6555 = vmatmul.f32.gmra.mxu0 %v6554
        %v6556 = vpop.f32.mrf.mxu0
        %v6557 = vadd.f32 %v6329, %v6556
        %v6558 = vand.u32 %v5719, 4294901760
        %v6559 = vsub.f32 %v5719, %v6558
        %6560 = vmatmul.f32.gmra.mxu0 %v6559
        %v6561 = vpop.f32.mrf.mxu0
        %v6562 = vadd.f32 %v6333, %v6561
        %v6563 = vand.u32 %v5722, 4294901760
        %v6564 = vsub.f32 %v5722, %v6563
        %6565 = vmatmul.f32.gmra.mxu0 %v6564
        %v6566 = vpop.f32.mrf.mxu0
        %v6567 = vadd.f32 %v6337, %v6566
        %v6568 = vand.u32 %v5725, 4294901760
        %v6569 = vsub.f32 %v5725, %v6568
        %6570 = vmatmul.f32.gmra.mxu0 %v6569
        %v6571 = vpop.f32.mrf.mxu0
        %v6572 = vadd.f32 %v6341, %v6571
        %v6573 = vand.u32 %v5728, 4294901760
        %v6574 = vsub.f32 %v5728, %v6573
        %6575 = vmatmul.f32.gmra.mxu0 %v6574
        %v6576 = vpop.f32.mrf.mxu0
        %v6577 = vadd.f32 %v6345, %v6576
        %v6578 = vand.u32 %v5731, 4294901760
        %v6579 = vsub.f32 %v5731, %v6578
        %6580 = vmatmul.f32.gmra.mxu0 %v6579
        %v6581 = vpop.f32.mrf.mxu0
        %v6582 = vadd.f32 %v6349, %v6581
        %v6583 = vand.u32 %v5734, 4294901760
        %v6584 = vsub.f32 %v5734, %v6583
        %6585 = vmatmul.f32.gmra.mxu0 %v6584
        %v6586 = vpop.f32.mrf.mxu0
        %v6587 = vadd.f32 %v6353, %v6586
        %v6588 = vand.u32 %v5737, 4294901760
        %v6589 = vsub.f32 %v5737, %v6588
        %6590 = vmatmul.f32.gmra.mxu0 %v6589
        %v6591 = vpop.f32.mrf.mxu0
        %v6592 = vadd.f32 %v6357, %v6591
        %v6593 = vand.u32 %v5740, 4294901760
        %v6594 = vsub.f32 %v5740, %v6593
        %6595 = vmatmul.f32.gmra.mxu0 %v6594
        %v6596 = vpop.f32.mrf.mxu0
        %v6597 = vadd.f32 %v6361, %v6596
        %v6598 = vand.u32 %v5743, 4294901760
        %v6599 = vsub.f32 %v5743, %v6598
        %6600 = vmatmul.f32.gmra.mxu0 %v6599
        %v6601 = vpop.f32.mrf.mxu0
        %v6602 = vadd.f32 %v6365, %v6601
        %v6603 = vand.u32 %v5746, 4294901760
        %v6604 = vsub.f32 %v5746, %v6603
        %6605 = vmatmul.f32.gmra.mxu0 %v6604
        %v6606 = vpop.f32.mrf.mxu0
        %v6607 = vadd.f32 %v6369, %v6606
        %v6608 = vand.u32 %v5749, 4294901760
        %v6609 = vsub.f32 %v5749, %v6608
        %6610 = vmatmul.f32.gmra.mxu0 %v6609
        %v6611 = vpop.f32.mrf.mxu0
        %v6612 = vadd.f32 %v6373, %v6611
        %v6613 = vand.u32 %v5752, 4294901760
        %v6614 = vsub.f32 %v5752, %v6613
        %6615 = vmatmul.f32.gmra.mxu0 %v6614
        %v6616 = vpop.f32.mrf.mxu0
        %v6617 = vadd.f32 %v6377, %v6616
        %v6618 = vand.u32 %v5755, 4294901760
        %v6619 = vsub.f32 %v5755, %v6618
        %6620 = vmatmul.f32.gmra.mxu0 %v6619
        %v6621 = vpop.f32.mrf.mxu0
        %v6622 = vadd.f32 %v6381, %v6621
        %v6623 = vand.u32 %v5758, 4294901760
        %v6624 = vsub.f32 %v5758, %v6623
        %6625 = vmatmul.f32.gmra.mxu0 %v6624
        %v6626 = vpop.f32.mrf.mxu0
        %v6627 = vadd.f32 %v6385, %v6626
        %v6628 = vand.u32 %v5761, 4294901760
        %v6629 = vsub.f32 %v5761, %v6628
        %6630 = vmatmul.f32.gmra.mxu0 %v6629
        %v6631 = vpop.f32.mrf.mxu0
        %v6632 = vadd.f32 %v6389, %v6631
        %v6633 = vand.u32 %v5764, 4294901760
        %v6634 = vsub.f32 %v5764, %v6633
        %6635 = vmatmul.f32.gmra.mxu0 %v6634
        %v6636 = vpop.f32.mrf.mxu0
        %v6637 = vadd.f32 %v6393, %v6636
        %v6638 = vand.u32 %v5767, 4294901760
        %v6639 = vsub.f32 %v5767, %v6638
        %6640 = vmatmul.f32.gmra.mxu0 %v6639
        %v6641 = vpop.f32.mrf.mxu0
        %v6642 = vadd.f32 %v6397, %v6641
        %v6643 = vand.u32 %v5770, 4294901760
        %v6644 = vsub.f32 %v5770, %v6643
        %6645 = vmatmul.f32.gmra.mxu0 %v6644
        %v6646 = vpop.f32.mrf.mxu0
        %v6647 = vadd.f32 %v6401, %v6646
        %v6648 = vand.u32 %v5773, 4294901760
        %v6649 = vsub.f32 %v5773, %v6648
        %6650 = vmatmul.f32.gmra.mxu0 %v6649
        %v6651 = vpop.f32.mrf.mxu0
        %v6652 = vadd.f32 %v6405, %v6651
        %v6653 = vand.u32 %v5776, 4294901760
        %v6654 = vsub.f32 %v5776, %v6653
        %6655 = vmatmul.f32.gmra.mxu0 %v6654
        %v6656 = vpop.f32.mrf.mxu0
        %v6657 = vadd.f32 %v6409, %v6656
        %v6658 = vand.u32 %v5779, 4294901760
        %v6659 = vsub.f32 %v5779, %v6658
        %6660 = vmatmul.f32.gmra.mxu0 %v6659
        %v6661 = vpop.f32.mrf.mxu0
        %v6662 = vadd.f32 %v6413, %v6661
        %v6663 = vand.u32 %v5782, 4294901760
        %v6664 = vsub.f32 %v5782, %v6663
        %6665 = vmatmul.f32.gmra.mxu0 %v6664
        %v6666 = vpop.f32.mrf.mxu0
        %v6667 = vadd.f32 %v6417, %v6666
        %v6668 = vand.u32 %v5785, 4294901760
        %v6669 = vsub.f32 %v5785, %v6668
        %6670 = vmatmul.f32.gmra.mxu0 %v6669
        %v6671 = vpop.f32.mrf.mxu0
        %v6672 = vadd.f32 %v6421, %v6671
        %v6673 = vand.u32 %v5788, 4294901760
        %v6674 = vsub.f32 %v5788, %v6673
        %6675 = vmatmul.f32.gmra.mxu0 %v6674
        %v6676 = vpop.f32.mrf.mxu0
        %v6677 = vadd.f32 %v6425, %v6676
        %v6678 = vand.u32 %v5791, 4294901760
        %v6679 = vsub.f32 %v5791, %v6678
        %6680 = vmatmul.f32.gmra.mxu0 %v6679
        %v6681 = vpop.f32.mrf.mxu0
        %v6682 = vadd.f32 %v6429, %v6681
        %v6683 = vand.u32 %v5794, 4294901760
        %v6684 = vsub.f32 %v5794, %v6683
        %6685 = vmatmul.f32.gmra.mxu0 %v6684
        %v6686 = vpop.f32.mrf.mxu0
        %v6687 = vadd.f32 %v6433, %v6686
        %v6688 = vand.u32 %v5797, 4294901760
        %v6689 = vsub.f32 %v5797, %v6688
        %6690 = vmatmul.f32.gmra.mxu0 %v6689
        %v6691 = vpop.f32.mrf.mxu0
        %v6692 = vadd.f32 %v6437, %v6691
        %v6693 = vand.u32 %v5800, 4294901760
        %v6694 = vsub.f32 %v5800, %v6693
        %6695 = vmatmul.f32.gmra.mxu0 %v6694
        %v6696 = vpop.f32.mrf.mxu0
        %v6697 = vadd.f32 %v6441, %v6696
        %v6698 = vand.u32 %v5803, 4294901760
        %v6699 = vsub.f32 %v5803, %v6698
        %6700 = vmatmul.f32.gmra.mxu0 %v6699
        %v6701 = vpop.f32.mrf.mxu0
        %v6702 = vadd.f32 %v6445, %v6701
        %v6703 = vand.u32 %v5806, 4294901760
        %v6704 = vsub.f32 %v5806, %v6703
        %6705 = vmatmul.f32.gmra.mxu0 %v6704
        %v6706 = vpop.f32.mrf.mxu0
        %v6707 = vadd.f32 %v6449, %v6706
        %v6708 = vand.u32 %v5809, 4294901760
        %v6709 = vsub.f32 %v5809, %v6708
        %6710 = vmatmul.f32.gmra.mxu0 %v6709
        %v6711 = vpop.f32.mrf.mxu0
        %v6712 = vadd.f32 %v6453, %v6711
        %v6713 = vand.u32 %v5812, 4294901760
        %v6714 = vsub.f32 %v5812, %v6713
        %6715 = vmatmul.f32.gmra.mxu0 %v6714
        %v6716 = vpop.f32.mrf.mxu0
        %v6717 = vadd.f32 %v6457, %v6716
        %v6718 = vand.u32 %v5815, 4294901760
        %v6719 = vsub.f32 %v5815, %v6718
        %6720 = vmatmul.f32.gmra.mxu0 %v6719
        %v6721 = vpop.f32.mrf.mxu0
        %v6722 = vadd.f32 %v6461, %v6721
        %v6723 = vand.u32 %v5818, 4294901760
        %v6724 = vsub.f32 %v5818, %v6723
        %6725 = vmatmul.f32.gmra.mxu0 %v6724
        %v6726 = vpop.f32.mrf.mxu0
        %v6727 = vadd.f32 %v6465, %v6726
        %v6728 = vand.u32 %v5821, 4294901760
        %v6729 = vsub.f32 %v5821, %v6728
        %6730 = vmatmul.f32.gmra.mxu0 %v6729
        %v6731 = vpop.f32.mrf.mxu0
        %v6732 = vadd.f32 %v6469, %v6731
        %v6733 = vand.u32 %v5824, 4294901760
        %v6734 = vsub.f32 %v5824, %v6733
        %6735 = vmatmul.f32.gmra.mxu0 %v6734
        %v6736 = vpop.f32.mrf.mxu0
        %v6737 = vadd.f32 %v6473, %v6736
        %v6738 = vand.u32 %v5827, 4294901760
        %v6739 = vsub.f32 %v5827, %v6738
        %6740 = vmatmul.f32.gmra.mxu0 %v6739
        %v6741 = vpop.f32.mrf.mxu0
        %v6742 = vadd.f32 %v6477, %v6741
        %v6743 = vand.u32 %v5830, 4294901760
        %v6744 = vsub.f32 %v5830, %v6743
        %6745 = vmatmul.f32.gmra.mxu0 %v6744
        %v6746 = vpop.f32.mrf.mxu0
        %v6747 = vadd.f32 %v6481, %v6746
        %v6748 = vand.u32 %v5833, 4294901760
        %v6749 = vsub.f32 %v5833, %v6748
        %6750 = vmatmul.f32.gmra.mxu0 %v6749
        %v6751 = vpop.f32.mrf.mxu0
        %v6752 = vadd.f32 %v6485, %v6751
        %v6753 = vand.u32 %v5836, 4294901760
        %v6754 = vsub.f32 %v5836, %v6753
        %6755 = vmatmul.f32.gmra.mxu0 %v6754
        %v6756 = vpop.f32.mrf.mxu0
        %v6757 = vadd.f32 %v6489, %v6756
        %v6758 = vand.u32 %v5839, 4294901760
        %v6759 = vsub.f32 %v5839, %v6758
        %6760 = vmatmul.f32.gmra.mxu0 %v6759
        %v6761 = vpop.f32.mrf.mxu0
        %v6762 = vadd.f32 %v6493, %v6761
        %v6763 = vand.u32 %v5842, 4294901760
        %v6764 = vsub.f32 %v5842, %v6763
        %6765 = vmatmul.f32.gmra.mxu0 %v6764
        %v6766 = vpop.f32.mrf.mxu0
        %v6767 = vadd.f32 %v6497, %v6766
        %v6768 = vand.u32 %v5845, 4294901760
        %v6769 = vsub.f32 %v5845, %v6768
        %6770 = vmatmul.f32.gmra.mxu0 %v6769
        %v6771 = vpop.f32.mrf.mxu0
        %v6772 = vadd.f32 %v6501, %v6771
        %v6773 = vand.u32 %v5848, 4294901760
        %v6774 = vsub.f32 %v5848, %v6773
        %6775 = vmatmul.f32.gmra.mxu0 %v6774
        %v6776 = vpop.f32.mrf.mxu0
        %v6777 = vadd.f32 %v6505, %v6776
        %v6778 = vand.u32 %v5851, 4294901760
        %v6779 = vsub.f32 %v5851, %v6778
        %6780 = vmatmul.f32.gmra.mxu0 %v6779
        %v6781 = vpop.f32.mrf.mxu0
        %v6782 = vadd.f32 %v6509, %v6781
        %6783 = vdwg.mxu0
        %6784 = vmatpush.msra.mxu0 0.0
        %6785 = vmatpush.msra.mxu0 0.0
        %6786 = vmatpush.msra.mxu0 0.0
        %6787 = vmatpush.msra.mxu0 0.0
        %6788 = vmatpush.msra.mxu0 0.0
        %6789 = vmatpush.msra.mxu0 0.0
        %6790 = vmatpush.msra.mxu0 0.0
        %6791 = vmatpush.msra.mxu0 0.0
        %v6792 = vand.u32 %v5706, 4294901760
        %6793 = vmatpush.msra.mxu0 %v6792
        %v6794 = vand.u32 %v5703, 4294901760
        %6795 = vmatpush.msra.mxu0 %v6794
        %v6796 = vand.u32 %v5700, 4294901760
        %6797 = vmatpush.msra.mxu0 %v6796
        %v6798 = vand.u32 %v5697, 4294901760
        %6799 = vmatpush.msra.mxu0 %v6798
        %v6800 = vand.u32 %v5694, 4294901760
        %6801 = vmatpush.msra.mxu0 %v6800
        %v6802 = vand.u32 %v5691, 4294901760
        %6803 = vmatpush.msra.mxu0 %v6802
        %v6804 = vand.u32 %v5688, 4294901760
        %6805 = vmatpush.msra.mxu0 %v6804
        %v6806 = vand.u32 %v5685, 4294901760
        %6807 = vmatpush.msra.mxu0 %v6806
        %v6808 = vand.u32 %v5710, 4294901760
        %v6809 = vsub.f32 %v5710, %v6808
        %v6810 = vand.u32 %v6809, 4294901760
        %6811 = vmatmul.f32.gmra.mxu0 %v6810
        %v6812 = vpop.f32.mrf.mxu0
        %v6813 = vadd.f32 %v6547, %v6812
        %v6814 = vand.u32 %v5713, 4294901760
        %v6815 = vsub.f32 %v5713, %v6814
        %v6816 = vand.u32 %v6815, 4294901760
        %6817 = vmatmul.f32.gmra.mxu0 %v6816
        %v6818 = vpop.f32.mrf.mxu0
        %v6819 = vadd.f32 %v6552, %v6818
        %v6820 = vand.u32 %v5716, 4294901760
        %v6821 = vsub.f32 %v5716, %v6820
        %v6822 = vand.u32 %v6821, 4294901760
        %6823 = vmatmul.f32.gmra.mxu0 %v6822
        %v6824 = vpop.f32.mrf.mxu0
        %v6825 = vadd.f32 %v6557, %v6824
        %v6826 = vand.u32 %v5719, 4294901760
        %v6827 = vsub.f32 %v5719, %v6826
        %v6828 = vand.u32 %v6827, 4294901760
        %6829 = vmatmul.f32.gmra.mxu0 %v6828
        %v6830 = vpop.f32.mrf.mxu0
        %v6831 = vadd.f32 %v6562, %v6830
        %v6832 = vand.u32 %v5722, 4294901760
        %v6833 = vsub.f32 %v5722, %v6832
        %v6834 = vand.u32 %v6833, 4294901760
        %6835 = vmatmul.f32.gmra.mxu0 %v6834
        %v6836 = vpop.f32.mrf.mxu0
        %v6837 = vadd.f32 %v6567, %v6836
        %v6838 = vand.u32 %v5725, 4294901760
        %v6839 = vsub.f32 %v5725, %v6838
        %v6840 = vand.u32 %v6839, 4294901760
        %6841 = vmatmul.f32.gmra.mxu0 %v6840
        %v6842 = vpop.f32.mrf.mxu0
        %v6843 = vadd.f32 %v6572, %v6842
        %v6844 = vand.u32 %v5728, 4294901760
        %v6845 = vsub.f32 %v5728, %v6844
        %v6846 = vand.u32 %v6845, 4294901760
        %6847 = vmatmul.f32.gmra.mxu0 %v6846
        %v6848 = vpop.f32.mrf.mxu0
        %v6849 = vadd.f32 %v6577, %v6848
        %v6850 = vand.u32 %v5731, 4294901760
        %v6851 = vsub.f32 %v5731, %v6850
        %v6852 = vand.u32 %v6851, 4294901760
        %6853 = vmatmul.f32.gmra.mxu0 %v6852
        %v6854 = vpop.f32.mrf.mxu0
        %v6855 = vadd.f32 %v6582, %v6854
        %v6856 = vand.u32 %v5734, 4294901760
        %v6857 = vsub.f32 %v5734, %v6856
        %v6858 = vand.u32 %v6857, 4294901760
        %6859 = vmatmul.f32.gmra.mxu0 %v6858
        %v6860 = vpop.f32.mrf.mxu0
        %v6861 = vadd.f32 %v6587, %v6860
        %v6862 = vand.u32 %v5737, 4294901760
        %v6863 = vsub.f32 %v5737, %v6862
        %v6864 = vand.u32 %v6863, 4294901760
        %6865 = vmatmul.f32.gmra.mxu0 %v6864
        %v6866 = vpop.f32.mrf.mxu0
        %v6867 = vadd.f32 %v6592, %v6866
        %v6868 = vand.u32 %v5740, 4294901760
        %v6869 = vsub.f32 %v5740, %v6868
        %v6870 = vand.u32 %v6869, 4294901760
        %6871 = vmatmul.f32.gmra.mxu0 %v6870
        %v6872 = vpop.f32.mrf.mxu0
        %v6873 = vadd.f32 %v6597, %v6872
        %v6874 = vand.u32 %v5743, 4294901760
        %v6875 = vsub.f32 %v5743, %v6874
        %v6876 = vand.u32 %v6875, 4294901760
        %6877 = vmatmul.f32.gmra.mxu0 %v6876
        %v6878 = vpop.f32.mrf.mxu0
        %v6879 = vadd.f32 %v6602, %v6878
        %v6880 = vand.u32 %v5746, 4294901760
        %v6881 = vsub.f32 %v5746, %v6880
        %v6882 = vand.u32 %v6881, 4294901760
        %6883 = vmatmul.f32.gmra.mxu0 %v6882
        %v6884 = vpop.f32.mrf.mxu0
        %v6885 = vadd.f32 %v6607, %v6884
        %v6886 = vand.u32 %v5749, 4294901760
        %v6887 = vsub.f32 %v5749, %v6886
        %v6888 = vand.u32 %v6887, 4294901760
        %6889 = vmatmul.f32.gmra.mxu0 %v6888
        %v6890 = vpop.f32.mrf.mxu0
        %v6891 = vadd.f32 %v6612, %v6890
        %v6892 = vand.u32 %v5752, 4294901760
        %v6893 = vsub.f32 %v5752, %v6892
        %v6894 = vand.u32 %v6893, 4294901760
        %6895 = vmatmul.f32.gmra.mxu0 %v6894
        %v6896 = vpop.f32.mrf.mxu0
        %v6897 = vadd.f32 %v6617, %v6896
        %v6898 = vand.u32 %v5755, 4294901760
        %v6899 = vsub.f32 %v5755, %v6898
        %v6900 = vand.u32 %v6899, 4294901760
        %6901 = vmatmul.f32.gmra.mxu0 %v6900
        %v6902 = vpop.f32.mrf.mxu0
        %v6903 = vadd.f32 %v6622, %v6902
        %v6904 = vand.u32 %v5758, 4294901760
        %v6905 = vsub.f32 %v5758, %v6904
        %v6906 = vand.u32 %v6905, 4294901760
        %6907 = vmatmul.f32.gmra.mxu0 %v6906
        %v6908 = vpop.f32.mrf.mxu0
        %v6909 = vadd.f32 %v6627, %v6908
        %v6910 = vand.u32 %v5761, 4294901760
        %v6911 = vsub.f32 %v5761, %v6910
        %v6912 = vand.u32 %v6911, 4294901760
        %6913 = vmatmul.f32.gmra.mxu0 %v6912
        %v6914 = vpop.f32.mrf.mxu0
        %v6915 = vadd.f32 %v6632, %v6914
        %v6916 = vand.u32 %v5764, 4294901760
        %v6917 = vsub.f32 %v5764, %v6916
        %v6918 = vand.u32 %v6917, 4294901760
        %6919 = vmatmul.f32.gmra.mxu0 %v6918
        %v6920 = vpop.f32.mrf.mxu0
        %v6921 = vadd.f32 %v6637, %v6920
        %v6922 = vand.u32 %v5767, 4294901760
        %v6923 = vsub.f32 %v5767, %v6922
        %v6924 = vand.u32 %v6923, 4294901760
        %6925 = vmatmul.f32.gmra.mxu0 %v6924
        %v6926 = vpop.f32.mrf.mxu0
        %v6927 = vadd.f32 %v6642, %v6926
        %v6928 = vand.u32 %v5770, 4294901760
        %v6929 = vsub.f32 %v5770, %v6928
        %v6930 = vand.u32 %v6929, 4294901760
        %6931 = vmatmul.f32.gmra.mxu0 %v6930
        %v6932 = vpop.f32.mrf.mxu0
        %v6933 = vadd.f32 %v6647, %v6932
        %v6934 = vand.u32 %v5773, 4294901760
        %v6935 = vsub.f32 %v5773, %v6934
        %v6936 = vand.u32 %v6935, 4294901760
        %6937 = vmatmul.f32.gmra.mxu0 %v6936
        %v6938 = vpop.f32.mrf.mxu0
        %v6939 = vadd.f32 %v6652, %v6938
        %v6940 = vand.u32 %v5776, 4294901760
        %v6941 = vsub.f32 %v5776, %v6940
        %v6942 = vand.u32 %v6941, 4294901760
        %6943 = vmatmul.f32.gmra.mxu0 %v6942
        %v6944 = vpop.f32.mrf.mxu0
        %v6945 = vadd.f32 %v6657, %v6944
        %v6946 = vand.u32 %v5779, 4294901760
        %v6947 = vsub.f32 %v5779, %v6946
        %v6948 = vand.u32 %v6947, 4294901760
        %6949 = vmatmul.f32.gmra.mxu0 %v6948
        %v6950 = vpop.f32.mrf.mxu0
        %v6951 = vadd.f32 %v6662, %v6950
        %v6952 = vand.u32 %v5782, 4294901760
        %v6953 = vsub.f32 %v5782, %v6952
        %v6954 = vand.u32 %v6953, 4294901760
        %6955 = vmatmul.f32.gmra.mxu0 %v6954
        %v6956 = vpop.f32.mrf.mxu0
        %v6957 = vadd.f32 %v6667, %v6956
        %v6958 = vand.u32 %v5785, 4294901760
        %v6959 = vsub.f32 %v5785, %v6958
        %v6960 = vand.u32 %v6959, 4294901760
        %6961 = vmatmul.f32.gmra.mxu0 %v6960
        %v6962 = vpop.f32.mrf.mxu0
        %v6963 = vadd.f32 %v6672, %v6962
        %v6964 = vand.u32 %v5788, 4294901760
        %v6965 = vsub.f32 %v5788, %v6964
        %v6966 = vand.u32 %v6965, 4294901760
        %6967 = vmatmul.f32.gmra.mxu0 %v6966
        %v6968 = vpop.f32.mrf.mxu0
        %v6969 = vadd.f32 %v6677, %v6968
        %v6970 = vand.u32 %v5791, 4294901760
        %v6971 = vsub.f32 %v5791, %v6970
        %v6972 = vand.u32 %v6971, 4294901760
        %6973 = vmatmul.f32.gmra.mxu0 %v6972
        %v6974 = vpop.f32.mrf.mxu0
        %v6975 = vadd.f32 %v6682, %v6974
        %v6976 = vand.u32 %v5794, 4294901760
        %v6977 = vsub.f32 %v5794, %v6976
        %v6978 = vand.u32 %v6977, 4294901760
        %6979 = vmatmul.f32.gmra.mxu0 %v6978
        %v6980 = vpop.f32.mrf.mxu0
        %v6981 = vadd.f32 %v6687, %v6980
        %v6982 = vand.u32 %v5797, 4294901760
        %v6983 = vsub.f32 %v5797, %v6982
        %v6984 = vand.u32 %v6983, 4294901760
        %6985 = vmatmul.f32.gmra.mxu0 %v6984
        %v6986 = vpop.f32.mrf.mxu0
        %v6987 = vadd.f32 %v6692, %v6986
        %v6988 = vand.u32 %v5800, 4294901760
        %v6989 = vsub.f32 %v5800, %v6988
        %v6990 = vand.u32 %v6989, 4294901760
        %6991 = vmatmul.f32.gmra.mxu0 %v6990
        %v6992 = vpop.f32.mrf.mxu0
        %v6993 = vadd.f32 %v6697, %v6992
        %v6994 = vand.u32 %v5803, 4294901760
        %v6995 = vsub.f32 %v5803, %v6994
        %v6996 = vand.u32 %v6995, 4294901760
        %6997 = vmatmul.f32.gmra.mxu0 %v6996
        %v6998 = vpop.f32.mrf.mxu0
        %v6999 = vadd.f32 %v6702, %v6998
        %v7000 = vand.u32 %v5806, 4294901760
        %v7001 = vsub.f32 %v5806, %v7000
        %v7002 = vand.u32 %v7001, 4294901760
        %7003 = vmatmul.f32.gmra.mxu0 %v7002
        %v7004 = vpop.f32.mrf.mxu0
        %v7005 = vadd.f32 %v6707, %v7004
        %v7006 = vand.u32 %v5809, 4294901760
        %v7007 = vsub.f32 %v5809, %v7006
        %v7008 = vand.u32 %v7007, 4294901760
        %7009 = vmatmul.f32.gmra.mxu0 %v7008
        %v7010 = vpop.f32.mrf.mxu0
        %v7011 = vadd.f32 %v6712, %v7010
        %v7012 = vand.u32 %v5812, 4294901760
        %v7013 = vsub.f32 %v5812, %v7012
        %v7014 = vand.u32 %v7013, 4294901760
        %7015 = vmatmul.f32.gmra.mxu0 %v7014
        %v7016 = vpop.f32.mrf.mxu0
        %v7017 = vadd.f32 %v6717, %v7016
        %v7018 = vand.u32 %v5815, 4294901760
        %v7019 = vsub.f32 %v5815, %v7018
        %v7020 = vand.u32 %v7019, 4294901760
        %7021 = vmatmul.f32.gmra.mxu0 %v7020
        %v7022 = vpop.f32.mrf.mxu0
        %v7023 = vadd.f32 %v6722, %v7022
        %v7024 = vand.u32 %v5818, 4294901760
        %v7025 = vsub.f32 %v5818, %v7024
        %v7026 = vand.u32 %v7025, 4294901760
        %7027 = vmatmul.f32.gmra.mxu0 %v7026
        %v7028 = vpop.f32.mrf.mxu0
        %v7029 = vadd.f32 %v6727, %v7028
        %v7030 = vand.u32 %v5821, 4294901760
        %v7031 = vsub.f32 %v5821, %v7030
        %v7032 = vand.u32 %v7031, 4294901760
        %7033 = vmatmul.f32.gmra.mxu0 %v7032
        %v7034 = vpop.f32.mrf.mxu0
        %v7035 = vadd.f32 %v6732, %v7034
        %v7036 = vand.u32 %v5824, 4294901760
        %v7037 = vsub.f32 %v5824, %v7036
        %v7038 = vand.u32 %v7037, 4294901760
        %7039 = vmatmul.f32.gmra.mxu0 %v7038
        %v7040 = vpop.f32.mrf.mxu0
        %v7041 = vadd.f32 %v6737, %v7040
        %v7042 = vand.u32 %v5827, 4294901760
        %v7043 = vsub.f32 %v5827, %v7042
        %v7044 = vand.u32 %v7043, 4294901760
        %7045 = vmatmul.f32.gmra.mxu0 %v7044
        %v7046 = vpop.f32.mrf.mxu0
        %v7047 = vadd.f32 %v6742, %v7046
        %v7048 = vand.u32 %v5830, 4294901760
        %v7049 = vsub.f32 %v5830, %v7048
        %v7050 = vand.u32 %v7049, 4294901760
        %7051 = vmatmul.f32.gmra.mxu0 %v7050
        %v7052 = vpop.f32.mrf.mxu0
        %v7053 = vadd.f32 %v6747, %v7052
        %v7054 = vand.u32 %v5833, 4294901760
        %v7055 = vsub.f32 %v5833, %v7054
        %v7056 = vand.u32 %v7055, 4294901760
        %7057 = vmatmul.f32.gmra.mxu0 %v7056
        %v7058 = vpop.f32.mrf.mxu0
        %v7059 = vadd.f32 %v6752, %v7058
        %v7060 = vand.u32 %v5836, 4294901760
        %v7061 = vsub.f32 %v5836, %v7060
        %v7062 = vand.u32 %v7061, 4294901760
        %7063 = vmatmul.f32.gmra.mxu0 %v7062
        %v7064 = vpop.f32.mrf.mxu0
        %v7065 = vadd.f32 %v6757, %v7064
        %v7066 = vand.u32 %v5839, 4294901760
        %v7067 = vsub.f32 %v5839, %v7066
        %v7068 = vand.u32 %v7067, 4294901760
        %7069 = vmatmul.f32.gmra.mxu0 %v7068
        %v7070 = vpop.f32.mrf.mxu0
        %v7071 = vadd.f32 %v6762, %v7070
        %v7072 = vand.u32 %v5842, 4294901760
        %v7073 = vsub.f32 %v5842, %v7072
        %v7074 = vand.u32 %v7073, 4294901760
        %7075 = vmatmul.f32.gmra.mxu0 %v7074
        %v7076 = vpop.f32.mrf.mxu0
        %v7077 = vadd.f32 %v6767, %v7076
        %v7078 = vand.u32 %v5845, 4294901760
        %v7079 = vsub.f32 %v5845, %v7078
        %v7080 = vand.u32 %v7079, 4294901760
        %7081 = vmatmul.f32.gmra.mxu0 %v7080
        %v7082 = vpop.f32.mrf.mxu0
        %v7083 = vadd.f32 %v6772, %v7082
        %v7084 = vand.u32 %v5848, 4294901760
        %v7085 = vsub.f32 %v5848, %v7084
        %v7086 = vand.u32 %v7085, 4294901760
        %7087 = vmatmul.f32.gmra.mxu0 %v7086
        %v7088 = vpop.f32.mrf.mxu0
        %v7089 = vadd.f32 %v6777, %v7088
        %v7090 = vand.u32 %v5851, 4294901760
        %v7091 = vsub.f32 %v5851, %v7090
        %v7092 = vand.u32 %v7091, 4294901760
        %7093 = vmatmul.f32.gmra.mxu0 %v7092
        %v7094 = vpop.f32.mrf.mxu0
        %v7095 = vadd.f32 %v6782, %v7094
        %7096 = vdwg.mxu0
        %7097 = vmatpush.msra.mxu0 0.0
        %7098 = vmatpush.msra.mxu0 0.0
        %7099 = vmatpush.msra.mxu0 0.0
        %7100 = vmatpush.msra.mxu0 0.0
        %7101 = vmatpush.msra.mxu0 0.0
        %7102 = vmatpush.msra.mxu0 0.0
        %7103 = vmatpush.msra.mxu0 0.0
        %7104 = vmatpush.msra.mxu0 0.0
        %v7105 = vand.u32 %v5706, 4294901760
        %v7106 = vsub.f32 %v5706, %v7105
        %v7107 = vand.u32 %v7106, 4294901760
        %7108 = vmatpush.msra.mxu0 %v7107
        %v7109 = vand.u32 %v5703, 4294901760
        %v7110 = vsub.f32 %v5703, %v7109
        %v7111 = vand.u32 %v7110, 4294901760
        %7112 = vmatpush.msra.mxu0 %v7111
        %v7113 = vand.u32 %v5700, 4294901760
        %v7114 = vsub.f32 %v5700, %v7113
        %v7115 = vand.u32 %v7114, 4294901760
        %7116 = vmatpush.msra.mxu0 %v7115
        %v7117 = vand.u32 %v5697, 4294901760
        %v7118 = vsub.f32 %v5697, %v7117
        %v7119 = vand.u32 %v7118, 4294901760
        %7120 = vmatpush.msra.mxu0 %v7119
        %v7121 = vand.u32 %v5694, 4294901760
        %v7122 = vsub.f32 %v5694, %v7121
        %v7123 = vand.u32 %v7122, 4294901760
        %7124 = vmatpush.msra.mxu0 %v7123
        %v7125 = vand.u32 %v5691, 4294901760
        %v7126 = vsub.f32 %v5691, %v7125
        %v7127 = vand.u32 %v7126, 4294901760
        %7128 = vmatpush.msra.mxu0 %v7127
        %v7129 = vand.u32 %v5688, 4294901760
        %v7130 = vsub.f32 %v5688, %v7129
        %v7131 = vand.u32 %v7130, 4294901760
        %7132 = vmatpush.msra.mxu0 %v7131
        %v7133 = vand.u32 %v5685, 4294901760
        %v7134 = vsub.f32 %v5685, %v7133
        %v7135 = vand.u32 %v7134, 4294901760
        %7136 = vmatpush.msra.mxu0 %v7135
        %v7137 = vand.u32 %v5710, 4294901760
        %7138 = vmatmul.f32.gmra.mxu0 %v7137
        %v7139 = vpop.f32.mrf.mxu0
        %v7140 = vadd.f32 %v6813, %v7139
        %v7141 = vand.u32 %v5713, 4294901760
        %7142 = vmatmul.f32.gmra.mxu0 %v7141
        %v7143 = vpop.f32.mrf.mxu0
        %v7144 = vadd.f32 %v6819, %v7143
        %v7145 = vand.u32 %v5716, 4294901760
        %7146 = vmatmul.f32.gmra.mxu0 %v7145
        %v7147 = vpop.f32.mrf.mxu0
        %v7148 = vadd.f32 %v6825, %v7147
        %v7149 = vand.u32 %v5719, 4294901760
        %7150 = vmatmul.f32.gmra.mxu0 %v7149
        %v7151 = vpop.f32.mrf.mxu0
        %v7152 = vadd.f32 %v6831, %v7151
        %v7153 = vand.u32 %v5722, 4294901760
        %7154 = vmatmul.f32.gmra.mxu0 %v7153
        %v7155 = vpop.f32.mrf.mxu0
        %v7156 = vadd.f32 %v6837, %v7155
        %v7157 = vand.u32 %v5725, 4294901760
        %7158 = vmatmul.f32.gmra.mxu0 %v7157
        %v7159 = vpop.f32.mrf.mxu0
        %v7160 = vadd.f32 %v6843, %v7159
        %v7161 = vand.u32 %v5728, 4294901760
        %7162 = vmatmul.f32.gmra.mxu0 %v7161
        %v7163 = vpop.f32.mrf.mxu0
        %v7164 = vadd.f32 %v6849, %v7163
        %v7165 = vand.u32 %v5731, 4294901760
        %7166 = vmatmul.f32.gmra.mxu0 %v7165
        %v7167 = vpop.f32.mrf.mxu0
        %v7168 = vadd.f32 %v6855, %v7167
        %v7169 = vand.u32 %v5734, 4294901760
        %7170 = vmatmul.f32.gmra.mxu0 %v7169
        %v7171 = vpop.f32.mrf.mxu0
        %v7172 = vadd.f32 %v6861, %v7171
        %v7173 = vand.u32 %v5737, 4294901760
        %7174 = vmatmul.f32.gmra.mxu0 %v7173
        %v7175 = vpop.f32.mrf.mxu0
        %v7176 = vadd.f32 %v6867, %v7175
        %v7177 = vand.u32 %v5740, 4294901760
        %7178 = vmatmul.f32.gmra.mxu0 %v7177
        %v7179 = vpop.f32.mrf.mxu0
        %v7180 = vadd.f32 %v6873, %v7179
        %v7181 = vand.u32 %v5743, 4294901760
        %7182 = vmatmul.f32.gmra.mxu0 %v7181
        %v7183 = vpop.f32.mrf.mxu0
        %v7184 = vadd.f32 %v6879, %v7183
        %v7185 = vand.u32 %v5746, 4294901760
        %7186 = vmatmul.f32.gmra.mxu0 %v7185
        %v7187 = vpop.f32.mrf.mxu0
        %v7188 = vadd.f32 %v6885, %v7187
        %v7189 = vand.u32 %v5749, 4294901760
        %7190 = vmatmul.f32.gmra.mxu0 %v7189
        %v7191 = vpop.f32.mrf.mxu0
        %v7192 = vadd.f32 %v6891, %v7191
        %v7193 = vand.u32 %v5752, 4294901760
        %7194 = vmatmul.f32.gmra.mxu0 %v7193
        %v7195 = vpop.f32.mrf.mxu0
        %v7196 = vadd.f32 %v6897, %v7195
        %v7197 = vand.u32 %v5755, 4294901760
        %7198 = vmatmul.f32.gmra.mxu0 %v7197
        %v7199 = vpop.f32.mrf.mxu0
        %v7200 = vadd.f32 %v6903, %v7199
        %v7201 = vand.u32 %v5758, 4294901760
        %7202 = vmatmul.f32.gmra.mxu0 %v7201
        %v7203 = vpop.f32.mrf.mxu0
        %v7204 = vadd.f32 %v6909, %v7203
        %v7205 = vand.u32 %v5761, 4294901760
        %7206 = vmatmul.f32.gmra.mxu0 %v7205
        %v7207 = vpop.f32.mrf.mxu0
        %v7208 = vadd.f32 %v6915, %v7207
        %v7209 = vand.u32 %v5764, 4294901760
        %7210 = vmatmul.f32.gmra.mxu0 %v7209
        %v7211 = vpop.f32.mrf.mxu0
        %v7212 = vadd.f32 %v6921, %v7211
        %v7213 = vand.u32 %v5767, 4294901760
        %7214 = vmatmul.f32.gmra.mxu0 %v7213
        %v7215 = vpop.f32.mrf.mxu0
        %v7216 = vadd.f32 %v6927, %v7215
        %v7217 = vand.u32 %v5770, 4294901760
        %7218 = vmatmul.f32.gmra.mxu0 %v7217
        %v7219 = vpop.f32.mrf.mxu0
        %v7220 = vadd.f32 %v6933, %v7219
        %v7221 = vand.u32 %v5773, 4294901760
        %7222 = vmatmul.f32.gmra.mxu0 %v7221
        %v7223 = vpop.f32.mrf.mxu0
        %v7224 = vadd.f32 %v6939, %v7223
        %v7225 = vand.u32 %v5776, 4294901760
        %7226 = vmatmul.f32.gmra.mxu0 %v7225
        %v7227 = vpop.f32.mrf.mxu0
        %v7228 = vadd.f32 %v6945, %v7227
        %v7229 = vand.u32 %v5779, 4294901760
        %7230 = vmatmul.f32.gmra.mxu0 %v7229
        %v7231 = vpop.f32.mrf.mxu0
        %v7232 = vadd.f32 %v6951, %v7231
        %v7233 = vand.u32 %v5782, 4294901760
        %7234 = vmatmul.f32.gmra.mxu0 %v7233
        %v7235 = vpop.f32.mrf.mxu0
        %v7236 = vadd.f32 %v6957, %v7235
        %v7237 = vand.u32 %v5785, 4294901760
        %7238 = vmatmul.f32.gmra.mxu0 %v7237
        %v7239 = vpop.f32.mrf.mxu0
        %v7240 = vadd.f32 %v6963, %v7239
        %v7241 = vand.u32 %v5788, 4294901760
        %7242 = vmatmul.f32.gmra.mxu0 %v7241
        %v7243 = vpop.f32.mrf.mxu0
        %v7244 = vadd.f32 %v6969, %v7243
        %v7245 = vand.u32 %v5791, 4294901760
        %7246 = vmatmul.f32.gmra.mxu0 %v7245
        %v7247 = vpop.f32.mrf.mxu0
        %v7248 = vadd.f32 %v6975, %v7247
        %v7249 = vand.u32 %v5794, 4294901760
        %7250 = vmatmul.f32.gmra.mxu0 %v7249
        %v7251 = vpop.f32.mrf.mxu0
        %v7252 = vadd.f32 %v6981, %v7251
        %v7253 = vand.u32 %v5797, 4294901760
        %7254 = vmatmul.f32.gmra.mxu0 %v7253
        %v7255 = vpop.f32.mrf.mxu0
        %v7256 = vadd.f32 %v6987, %v7255
        %v7257 = vand.u32 %v5800, 4294901760
        %7258 = vmatmul.f32.gmra.mxu0 %v7257
        %v7259 = vpop.f32.mrf.mxu0
        %v7260 = vadd.f32 %v6993, %v7259
        %v7261 = vand.u32 %v5803, 4294901760
        %7262 = vmatmul.f32.gmra.mxu0 %v7261
        %v7263 = vpop.f32.mrf.mxu0
        %v7264 = vadd.f32 %v6999, %v7263
        %v7265 = vand.u32 %v5806, 4294901760
        %7266 = vmatmul.f32.gmra.mxu0 %v7265
        %v7267 = vpop.f32.mrf.mxu0
        %v7268 = vadd.f32 %v7005, %v7267
        %v7269 = vand.u32 %v5809, 4294901760
        %7270 = vmatmul.f32.gmra.mxu0 %v7269
        %v7271 = vpop.f32.mrf.mxu0
        %v7272 = vadd.f32 %v7011, %v7271
        %v7273 = vand.u32 %v5812, 4294901760
        %7274 = vmatmul.f32.gmra.mxu0 %v7273
        %v7275 = vpop.f32.mrf.mxu0
        %v7276 = vadd.f32 %v7017, %v7275
        %v7277 = vand.u32 %v5815, 4294901760
        %7278 = vmatmul.f32.gmra.mxu0 %v7277
        %v7279 = vpop.f32.mrf.mxu0
        %v7280 = vadd.f32 %v7023, %v7279
        %v7281 = vand.u32 %v5818, 4294901760
        %7282 = vmatmul.f32.gmra.mxu0 %v7281
        %v7283 = vpop.f32.mrf.mxu0
        %v7284 = vadd.f32 %v7029, %v7283
        %v7285 = vand.u32 %v5821, 4294901760
        %7286 = vmatmul.f32.gmra.mxu0 %v7285
        %v7287 = vpop.f32.mrf.mxu0
        %v7288 = vadd.f32 %v7035, %v7287
        %v7289 = vand.u32 %v5824, 4294901760
        %7290 = vmatmul.f32.gmra.mxu0 %v7289
        %v7291 = vpop.f32.mrf.mxu0
        %v7292 = vadd.f32 %v7041, %v7291
        %v7293 = vand.u32 %v5827, 4294901760
        %7294 = vmatmul.f32.gmra.mxu0 %v7293
        %v7295 = vpop.f32.mrf.mxu0
        %v7296 = vadd.f32 %v7047, %v7295
        %v7297 = vand.u32 %v5830, 4294901760
        %7298 = vmatmul.f32.gmra.mxu0 %v7297
        %v7299 = vpop.f32.mrf.mxu0
        %v7300 = vadd.f32 %v7053, %v7299
        %v7301 = vand.u32 %v5833, 4294901760
        %7302 = vmatmul.f32.gmra.mxu0 %v7301
        %v7303 = vpop.f32.mrf.mxu0
        %v7304 = vadd.f32 %v7059, %v7303
        %v7305 = vand.u32 %v5836, 4294901760
        %7306 = vmatmul.f32.gmra.mxu0 %v7305
        %v7307 = vpop.f32.mrf.mxu0
        %v7308 = vadd.f32 %v7065, %v7307
        %v7309 = vand.u32 %v5839, 4294901760
        %7310 = vmatmul.f32.gmra.mxu0 %v7309
        %v7311 = vpop.f32.mrf.mxu0
        %v7312 = vadd.f32 %v7071, %v7311
        %v7313 = vand.u32 %v5842, 4294901760
        %7314 = vmatmul.f32.gmra.mxu0 %v7313
        %v7315 = vpop.f32.mrf.mxu0
        %v7316 = vadd.f32 %v7077, %v7315
        %v7317 = vand.u32 %v5845, 4294901760
        %7318 = vmatmul.f32.gmra.mxu0 %v7317
        %v7319 = vpop.f32.mrf.mxu0
        %v7320 = vadd.f32 %v7083, %v7319
        %v7321 = vand.u32 %v5848, 4294901760
        %7322 = vmatmul.f32.gmra.mxu0 %v7321
        %v7323 = vpop.f32.mrf.mxu0
        %v7324 = vadd.f32 %v7089, %v7323
        %v7325 = vand.u32 %v5851, 4294901760
        %7326 = vmatmul.f32.gmra.mxu0 %v7325
        %v7327 = vpop.f32.mrf.mxu0
        %v7328 = vadd.f32 %v7095, %v7327
        %7329 = vdwg.mxu0
        %7330 = vmatpush.msra.mxu0 0.0
        %7331 = vmatpush.msra.mxu0 0.0
        %7332 = vmatpush.msra.mxu0 0.0
        %7333 = vmatpush.msra.mxu0 0.0
        %7334 = vmatpush.msra.mxu0 0.0
        %7335 = vmatpush.msra.mxu0 0.0
        %7336 = vmatpush.msra.mxu0 0.0
        %7337 = vmatpush.msra.mxu0 0.0
        %v7338 = vand.u32 %v5706, 4294901760
        %7339 = vmatpush.msra.mxu0 %v7338
        %v7340 = vand.u32 %v5703, 4294901760
        %7341 = vmatpush.msra.mxu0 %v7340
        %v7342 = vand.u32 %v5700, 4294901760
        %7343 = vmatpush.msra.mxu0 %v7342
        %v7344 = vand.u32 %v5697, 4294901760
        %7345 = vmatpush.msra.mxu0 %v7344
        %v7346 = vand.u32 %v5694, 4294901760
        %7347 = vmatpush.msra.mxu0 %v7346
        %v7348 = vand.u32 %v5691, 4294901760
        %7349 = vmatpush.msra.mxu0 %v7348
        %v7350 = vand.u32 %v5688, 4294901760
        %7351 = vmatpush.msra.mxu0 %v7350
        %v7352 = vand.u32 %v5685, 4294901760
        %7353 = vmatpush.msra.mxu0 %v7352
        %v7354 = vand.u32 %v5710, 4294901760
        %7355 = vmatmul.f32.gmra.mxu0 %v7354
        %v7356 = vpop.f32.mrf.mxu0
        %v7357 = vadd.f32 %v7140, %v7356
        %v7358 = vand.u32 %v5713, 4294901760
        %7359 = vmatmul.f32.gmra.mxu0 %v7358
        %v7360 = vpop.f32.mrf.mxu0
        %v7361 = vadd.f32 %v7144, %v7360
        %v7362 = vand.u32 %v5716, 4294901760
        %7363 = vmatmul.f32.gmra.mxu0 %v7362
        %v7364 = vpop.f32.mrf.mxu0
        %v7365 = vadd.f32 %v7148, %v7364
        %v7366 = vand.u32 %v5719, 4294901760
        %7367 = vmatmul.f32.gmra.mxu0 %v7366
        %v7368 = vpop.f32.mrf.mxu0
        %v7369 = vadd.f32 %v7152, %v7368
        %v7370 = vand.u32 %v5722, 4294901760
        %7371 = vmatmul.f32.gmra.mxu0 %v7370
        %v7372 = vpop.f32.mrf.mxu0
        %v7373 = vadd.f32 %v7156, %v7372
        %v7374 = vand.u32 %v5725, 4294901760
        %7375 = vmatmul.f32.gmra.mxu0 %v7374
        %v7376 = vpop.f32.mrf.mxu0
        %v7377 = vadd.f32 %v7160, %v7376
        %v7378 = vand.u32 %v5728, 4294901760
        %7379 = vmatmul.f32.gmra.mxu0 %v7378
        %v7380 = vpop.f32.mrf.mxu0
        %v7381 = vadd.f32 %v7164, %v7380
        %v7382 = vand.u32 %v5731, 4294901760
        %7383 = vmatmul.f32.gmra.mxu0 %v7382
        %v7384 = vpop.f32.mrf.mxu0
        %v7385 = vadd.f32 %v7168, %v7384
        %v7386 = vand.u32 %v5734, 4294901760
        %7387 = vmatmul.f32.gmra.mxu0 %v7386
        %v7388 = vpop.f32.mrf.mxu0
        %v7389 = vadd.f32 %v7172, %v7388
        %v7390 = vand.u32 %v5737, 4294901760
        %7391 = vmatmul.f32.gmra.mxu0 %v7390
        %v7392 = vpop.f32.mrf.mxu0
        %v7393 = vadd.f32 %v7176, %v7392
        %v7394 = vand.u32 %v5740, 4294901760
        %7395 = vmatmul.f32.gmra.mxu0 %v7394
        %v7396 = vpop.f32.mrf.mxu0
        %v7397 = vadd.f32 %v7180, %v7396
        %v7398 = vand.u32 %v5743, 4294901760
        %7399 = vmatmul.f32.gmra.mxu0 %v7398
        %v7400 = vpop.f32.mrf.mxu0
        %v7401 = vadd.f32 %v7184, %v7400
        %v7402 = vand.u32 %v5746, 4294901760
        %7403 = vmatmul.f32.gmra.mxu0 %v7402
        %v7404 = vpop.f32.mrf.mxu0
        %v7405 = vadd.f32 %v7188, %v7404
        %v7406 = vand.u32 %v5749, 4294901760
        %7407 = vmatmul.f32.gmra.mxu0 %v7406
        %v7408 = vpop.f32.mrf.mxu0
        %v7409 = vadd.f32 %v7192, %v7408
        %v7410 = vand.u32 %v5752, 4294901760
        %7411 = vmatmul.f32.gmra.mxu0 %v7410
        %v7412 = vpop.f32.mrf.mxu0
        %v7413 = vadd.f32 %v7196, %v7412
        %v7414 = vand.u32 %v5755, 4294901760
        %7415 = vmatmul.f32.gmra.mxu0 %v7414
        %v7416 = vpop.f32.mrf.mxu0
        %v7417 = vadd.f32 %v7200, %v7416
        %v7418 = vand.u32 %v5758, 4294901760
        %7419 = vmatmul.f32.gmra.mxu0 %v7418
        %v7420 = vpop.f32.mrf.mxu0
        %v7421 = vadd.f32 %v7204, %v7420
        %v7422 = vand.u32 %v5761, 4294901760
        %7423 = vmatmul.f32.gmra.mxu0 %v7422
        %v7424 = vpop.f32.mrf.mxu0
        %v7425 = vadd.f32 %v7208, %v7424
        %v7426 = vand.u32 %v5764, 4294901760
        %7427 = vmatmul.f32.gmra.mxu0 %v7426
        %v7428 = vpop.f32.mrf.mxu0
        %v7429 = vadd.f32 %v7212, %v7428
        %v7430 = vand.u32 %v5767, 4294901760
        %7431 = vmatmul.f32.gmra.mxu0 %v7430
        %v7432 = vpop.f32.mrf.mxu0
        %v7433 = vadd.f32 %v7216, %v7432
        %v7434 = vand.u32 %v5770, 4294901760
        %7435 = vmatmul.f32.gmra.mxu0 %v7434
        %v7436 = vpop.f32.mrf.mxu0
        %v7437 = vadd.f32 %v7220, %v7436
        %v7438 = vand.u32 %v5773, 4294901760
        %7439 = vmatmul.f32.gmra.mxu0 %v7438
        %v7440 = vpop.f32.mrf.mxu0
        %v7441 = vadd.f32 %v7224, %v7440
        %v7442 = vand.u32 %v5776, 4294901760
        %7443 = vmatmul.f32.gmra.mxu0 %v7442
        %v7444 = vpop.f32.mrf.mxu0
        %v7445 = vadd.f32 %v7228, %v7444
        %v7446 = vand.u32 %v5779, 4294901760
        %7447 = vmatmul.f32.gmra.mxu0 %v7446
        %v7448 = vpop.f32.mrf.mxu0
        %v7449 = vadd.f32 %v7232, %v7448
        %v7450 = vand.u32 %v5782, 4294901760
        %7451 = vmatmul.f32.gmra.mxu0 %v7450
        %v7452 = vpop.f32.mrf.mxu0
        %v7453 = vadd.f32 %v7236, %v7452
        %v7454 = vand.u32 %v5785, 4294901760
        %7455 = vmatmul.f32.gmra.mxu0 %v7454
        %v7456 = vpop.f32.mrf.mxu0
        %v7457 = vadd.f32 %v7240, %v7456
        %v7458 = vand.u32 %v5788, 4294901760
        %7459 = vmatmul.f32.gmra.mxu0 %v7458
        %v7460 = vpop.f32.mrf.mxu0
        %v7461 = vadd.f32 %v7244, %v7460
        %v7462 = vand.u32 %v5791, 4294901760
        %7463 = vmatmul.f32.gmra.mxu0 %v7462
        %v7464 = vpop.f32.mrf.mxu0
        %v7465 = vadd.f32 %v7248, %v7464
        %v7466 = vand.u32 %v5794, 4294901760
        %7467 = vmatmul.f32.gmra.mxu0 %v7466
        %v7468 = vpop.f32.mrf.mxu0
        %v7469 = vadd.f32 %v7252, %v7468
        %v7470 = vand.u32 %v5797, 4294901760
        %7471 = vmatmul.f32.gmra.mxu0 %v7470
        %v7472 = vpop.f32.mrf.mxu0
        %v7473 = vadd.f32 %v7256, %v7472
        %v7474 = vand.u32 %v5800, 4294901760
        %7475 = vmatmul.f32.gmra.mxu0 %v7474
        %v7476 = vpop.f32.mrf.mxu0
        %v7477 = vadd.f32 %v7260, %v7476
        %v7478 = vand.u32 %v5803, 4294901760
        %7479 = vmatmul.f32.gmra.mxu0 %v7478
        %v7480 = vpop.f32.mrf.mxu0
        %v7481 = vadd.f32 %v7264, %v7480
        %v7482 = vand.u32 %v5806, 4294901760
        %7483 = vmatmul.f32.gmra.mxu0 %v7482
        %v7484 = vpop.f32.mrf.mxu0
        %v7485 = vadd.f32 %v7268, %v7484
        %v7486 = vand.u32 %v5809, 4294901760
        %7487 = vmatmul.f32.gmra.mxu0 %v7486
        %v7488 = vpop.f32.mrf.mxu0
        %v7489 = vadd.f32 %v7272, %v7488
        %v7490 = vand.u32 %v5812, 4294901760
        %7491 = vmatmul.f32.gmra.mxu0 %v7490
        %v7492 = vpop.f32.mrf.mxu0
        %v7493 = vadd.f32 %v7276, %v7492
        %v7494 = vand.u32 %v5815, 4294901760
        %7495 = vmatmul.f32.gmra.mxu0 %v7494
        %v7496 = vpop.f32.mrf.mxu0
        %v7497 = vadd.f32 %v7280, %v7496
        %v7498 = vand.u32 %v5818, 4294901760
        %7499 = vmatmul.f32.gmra.mxu0 %v7498
        %v7500 = vpop.f32.mrf.mxu0
        %v7501 = vadd.f32 %v7284, %v7500
        %v7502 = vand.u32 %v5821, 4294901760
        %7503 = vmatmul.f32.gmra.mxu0 %v7502
        %v7504 = vpop.f32.mrf.mxu0
        %v7505 = vadd.f32 %v7288, %v7504
        %v7506 = vand.u32 %v5824, 4294901760
        %7507 = vmatmul.f32.gmra.mxu0 %v7506
        %v7508 = vpop.f32.mrf.mxu0
        %v7509 = vadd.f32 %v7292, %v7508
        %v7510 = vand.u32 %v5827, 4294901760
        %7511 = vmatmul.f32.gmra.mxu0 %v7510
        %v7512 = vpop.f32.mrf.mxu0
        %v7513 = vadd.f32 %v7296, %v7512
        %v7514 = vand.u32 %v5830, 4294901760
        %7515 = vmatmul.f32.gmra.mxu0 %v7514
        %v7516 = vpop.f32.mrf.mxu0
        %v7517 = vadd.f32 %v7300, %v7516
        %v7518 = vand.u32 %v5833, 4294901760
        %7519 = vmatmul.f32.gmra.mxu0 %v7518
        %v7520 = vpop.f32.mrf.mxu0
        %v7521 = vadd.f32 %v7304, %v7520
        %v7522 = vand.u32 %v5836, 4294901760
        %7523 = vmatmul.f32.gmra.mxu0 %v7522
        %v7524 = vpop.f32.mrf.mxu0
        %v7525 = vadd.f32 %v7308, %v7524
        %v7526 = vand.u32 %v5839, 4294901760
        %7527 = vmatmul.f32.gmra.mxu0 %v7526
        %v7528 = vpop.f32.mrf.mxu0
        %v7529 = vadd.f32 %v7312, %v7528
        %v7530 = vand.u32 %v5842, 4294901760
        %7531 = vmatmul.f32.gmra.mxu0 %v7530
        %v7532 = vpop.f32.mrf.mxu0
        %v7533 = vadd.f32 %v7316, %v7532
        %v7534 = vand.u32 %v5845, 4294901760
        %7535 = vmatmul.f32.gmra.mxu0 %v7534
        %v7536 = vpop.f32.mrf.mxu0
        %v7537 = vadd.f32 %v7320, %v7536
        %v7538 = vand.u32 %v5848, 4294901760
        %7539 = vmatmul.f32.gmra.mxu0 %v7538
        %v7540 = vpop.f32.mrf.mxu0
        %v7541 = vadd.f32 %v7324, %v7540
        %v7542 = vand.u32 %v5851, 4294901760
        %7543 = vmatmul.f32.gmra.mxu0 %v7542
        %v7544 = vpop.f32.mrf.mxu0
        %v7545 = vadd.f32 %v7328, %v7544
        %7546 = vdwg.mxu0
        %7547 = vmatpush.msra.mxu0 0.0
        %7548 = vmatpush.msra.mxu0 0.0
        %7549 = vmatpush.msra.mxu0 0.0
        %7550 = vmatpush.msra.mxu0 0.0
        %7551 = vmatpush.msra.mxu0 0.0
        %7552 = vmatpush.msra.mxu0 0.0
        %7553 = vmatpush.msra.mxu0 0.0
        %7554 = vmatpush.msra.mxu0 0.0
        %v7555 = vand.u32 %v5707, 4294901760
        %7556 = vmatpush.msra.mxu0 %v7555
        %v7557 = vand.u32 %v5704, 4294901760
        %7558 = vmatpush.msra.mxu0 %v7557
        %v7559 = vand.u32 %v5701, 4294901760
        %7560 = vmatpush.msra.mxu0 %v7559
        %v7561 = vand.u32 %v5698, 4294901760
        %7562 = vmatpush.msra.mxu0 %v7561
        %v7563 = vand.u32 %v5695, 4294901760
        %7564 = vmatpush.msra.mxu0 %v7563
        %v7565 = vand.u32 %v5692, 4294901760
        %7566 = vmatpush.msra.mxu0 %v7565
        %v7567 = vand.u32 %v5689, 4294901760
        %7568 = vmatpush.msra.mxu0 %v7567
        %v7569 = vand.u32 %v5686, 4294901760
        %7570 = vmatpush.msra.mxu0 %v7569
        %v7571 = vand.u32 %v5710, 4294901760
        %v7572 = vsub.f32 %v5710, %v7571
        %v7573 = vand.u32 %v7572, 4294901760
        %v7574 = vsub.f32 %v7572, %v7573
        %v7575 = vand.u32 %v7574, 4294901760
        %7576 = vmatmul.f32.gmra.mxu0 %v7575
        %v7577 = vpop.f32.mrf.mxu0
        %v7578 = vadd.f32 0.0, %v7577
        %v7579 = vand.u32 %v5713, 4294901760
        %v7580 = vsub.f32 %v5713, %v7579
        %v7581 = vand.u32 %v7580, 4294901760
        %v7582 = vsub.f32 %v7580, %v7581
        %v7583 = vand.u32 %v7582, 4294901760
        %7584 = vmatmul.f32.gmra.mxu0 %v7583
        %v7585 = vpop.f32.mrf.mxu0
        %v7586 = vadd.f32 0.0, %v7585
        %v7587 = vand.u32 %v5716, 4294901760
        %v7588 = vsub.f32 %v5716, %v7587
        %v7589 = vand.u32 %v7588, 4294901760
        %v7590 = vsub.f32 %v7588, %v7589
        %v7591 = vand.u32 %v7590, 4294901760
        %7592 = vmatmul.f32.gmra.mxu0 %v7591
        %v7593 = vpop.f32.mrf.mxu0
        %v7594 = vadd.f32 0.0, %v7593
        %v7595 = vand.u32 %v5719, 4294901760
        %v7596 = vsub.f32 %v5719, %v7595
        %v7597 = vand.u32 %v7596, 4294901760
        %v7598 = vsub.f32 %v7596, %v7597
        %v7599 = vand.u32 %v7598, 4294901760
        %7600 = vmatmul.f32.gmra.mxu0 %v7599
        %v7601 = vpop.f32.mrf.mxu0
        %v7602 = vadd.f32 0.0, %v7601
        %v7603 = vand.u32 %v5722, 4294901760
        %v7604 = vsub.f32 %v5722, %v7603
        %v7605 = vand.u32 %v7604, 4294901760
        %v7606 = vsub.f32 %v7604, %v7605
        %v7607 = vand.u32 %v7606, 4294901760
        %7608 = vmatmul.f32.gmra.mxu0 %v7607
        %v7609 = vpop.f32.mrf.mxu0
        %v7610 = vadd.f32 0.0, %v7609
        %v7611 = vand.u32 %v5725, 4294901760
        %v7612 = vsub.f32 %v5725, %v7611
        %v7613 = vand.u32 %v7612, 4294901760
        %v7614 = vsub.f32 %v7612, %v7613
        %v7615 = vand.u32 %v7614, 4294901760
        %7616 = vmatmul.f32.gmra.mxu0 %v7615
        %v7617 = vpop.f32.mrf.mxu0
        %v7618 = vadd.f32 0.0, %v7617
        %v7619 = vand.u32 %v5728, 4294901760
        %v7620 = vsub.f32 %v5728, %v7619
        %v7621 = vand.u32 %v7620, 4294901760
        %v7622 = vsub.f32 %v7620, %v7621
        %v7623 = vand.u32 %v7622, 4294901760
        %7624 = vmatmul.f32.gmra.mxu0 %v7623
        %v7625 = vpop.f32.mrf.mxu0
        %v7626 = vadd.f32 0.0, %v7625
        %v7627 = vand.u32 %v5731, 4294901760
        %v7628 = vsub.f32 %v5731, %v7627
        %v7629 = vand.u32 %v7628, 4294901760
        %v7630 = vsub.f32 %v7628, %v7629
        %v7631 = vand.u32 %v7630, 4294901760
        %7632 = vmatmul.f32.gmra.mxu0 %v7631
        %v7633 = vpop.f32.mrf.mxu0
        %v7634 = vadd.f32 0.0, %v7633
        %v7635 = vand.u32 %v5734, 4294901760
        %v7636 = vsub.f32 %v5734, %v7635
        %v7637 = vand.u32 %v7636, 4294901760
        %v7638 = vsub.f32 %v7636, %v7637
        %v7639 = vand.u32 %v7638, 4294901760
        %7640 = vmatmul.f32.gmra.mxu0 %v7639
        %v7641 = vpop.f32.mrf.mxu0
        %v7642 = vadd.f32 0.0, %v7641
        %v7643 = vand.u32 %v5737, 4294901760
        %v7644 = vsub.f32 %v5737, %v7643
        %v7645 = vand.u32 %v7644, 4294901760
        %v7646 = vsub.f32 %v7644, %v7645
        %v7647 = vand.u32 %v7646, 4294901760
        %7648 = vmatmul.f32.gmra.mxu0 %v7647
        %v7649 = vpop.f32.mrf.mxu0
        %v7650 = vadd.f32 0.0, %v7649
        %v7651 = vand.u32 %v5740, 4294901760
        %v7652 = vsub.f32 %v5740, %v7651
        %v7653 = vand.u32 %v7652, 4294901760
        %v7654 = vsub.f32 %v7652, %v7653
        %v7655 = vand.u32 %v7654, 4294901760
        %7656 = vmatmul.f32.gmra.mxu0 %v7655
        %v7657 = vpop.f32.mrf.mxu0
        %v7658 = vadd.f32 0.0, %v7657
        %v7659 = vand.u32 %v5743, 4294901760
        %v7660 = vsub.f32 %v5743, %v7659
        %v7661 = vand.u32 %v7660, 4294901760
        %v7662 = vsub.f32 %v7660, %v7661
        %v7663 = vand.u32 %v7662, 4294901760
        %7664 = vmatmul.f32.gmra.mxu0 %v7663
        %v7665 = vpop.f32.mrf.mxu0
        %v7666 = vadd.f32 0.0, %v7665
        %v7667 = vand.u32 %v5746, 4294901760
        %v7668 = vsub.f32 %v5746, %v7667
        %v7669 = vand.u32 %v7668, 4294901760
        %v7670 = vsub.f32 %v7668, %v7669
        %v7671 = vand.u32 %v7670, 4294901760
        %7672 = vmatmul.f32.gmra.mxu0 %v7671
        %v7673 = vpop.f32.mrf.mxu0
        %v7674 = vadd.f32 0.0, %v7673
        %v7675 = vand.u32 %v5749, 4294901760
        %v7676 = vsub.f32 %v5749, %v7675
        %v7677 = vand.u32 %v7676, 4294901760
        %v7678 = vsub.f32 %v7676, %v7677
        %v7679 = vand.u32 %v7678, 4294901760
        %7680 = vmatmul.f32.gmra.mxu0 %v7679
        %v7681 = vpop.f32.mrf.mxu0
        %v7682 = vadd.f32 0.0, %v7681
        %v7683 = vand.u32 %v5752, 4294901760
        %v7684 = vsub.f32 %v5752, %v7683
        %v7685 = vand.u32 %v7684, 4294901760
        %v7686 = vsub.f32 %v7684, %v7685
        %v7687 = vand.u32 %v7686, 4294901760
        %7688 = vmatmul.f32.gmra.mxu0 %v7687
        %v7689 = vpop.f32.mrf.mxu0
        %v7690 = vadd.f32 0.0, %v7689
        %v7691 = vand.u32 %v5755, 4294901760
        %v7692 = vsub.f32 %v5755, %v7691
        %v7693 = vand.u32 %v7692, 4294901760
        %v7694 = vsub.f32 %v7692, %v7693
        %v7695 = vand.u32 %v7694, 4294901760
        %7696 = vmatmul.f32.gmra.mxu0 %v7695
        %v7697 = vpop.f32.mrf.mxu0
        %v7698 = vadd.f32 0.0, %v7697
        %v7699 = vand.u32 %v5758, 4294901760
        %v7700 = vsub.f32 %v5758, %v7699
        %v7701 = vand.u32 %v7700, 4294901760
        %v7702 = vsub.f32 %v7700, %v7701
        %v7703 = vand.u32 %v7702, 4294901760
        %7704 = vmatmul.f32.gmra.mxu0 %v7703
        %v7705 = vpop.f32.mrf.mxu0
        %v7706 = vadd.f32 0.0, %v7705
        %v7707 = vand.u32 %v5761, 4294901760
        %v7708 = vsub.f32 %v5761, %v7707
        %v7709 = vand.u32 %v7708, 4294901760
        %v7710 = vsub.f32 %v7708, %v7709
        %v7711 = vand.u32 %v7710, 4294901760
        %7712 = vmatmul.f32.gmra.mxu0 %v7711
        %v7713 = vpop.f32.mrf.mxu0
        %v7714 = vadd.f32 0.0, %v7713
        %v7715 = vand.u32 %v5764, 4294901760
        %v7716 = vsub.f32 %v5764, %v7715
        %v7717 = vand.u32 %v7716, 4294901760
        %v7718 = vsub.f32 %v7716, %v7717
        %v7719 = vand.u32 %v7718, 4294901760
        %7720 = vmatmul.f32.gmra.mxu0 %v7719
        %v7721 = vpop.f32.mrf.mxu0
        %v7722 = vadd.f32 0.0, %v7721
        %v7723 = vand.u32 %v5767, 4294901760
        %v7724 = vsub.f32 %v5767, %v7723
        %v7725 = vand.u32 %v7724, 4294901760
        %v7726 = vsub.f32 %v7724, %v7725
        %v7727 = vand.u32 %v7726, 4294901760
        %7728 = vmatmul.f32.gmra.mxu0 %v7727
        %v7729 = vpop.f32.mrf.mxu0
        %v7730 = vadd.f32 0.0, %v7729
        %v7731 = vand.u32 %v5770, 4294901760
        %v7732 = vsub.f32 %v5770, %v7731
        %v7733 = vand.u32 %v7732, 4294901760
        %v7734 = vsub.f32 %v7732, %v7733
        %v7735 = vand.u32 %v7734, 4294901760
        %7736 = vmatmul.f32.gmra.mxu0 %v7735
        %v7737 = vpop.f32.mrf.mxu0
        %v7738 = vadd.f32 0.0, %v7737
        %v7739 = vand.u32 %v5773, 4294901760
        %v7740 = vsub.f32 %v5773, %v7739
        %v7741 = vand.u32 %v7740, 4294901760
        %v7742 = vsub.f32 %v7740, %v7741
        %v7743 = vand.u32 %v7742, 4294901760
        %7744 = vmatmul.f32.gmra.mxu0 %v7743
        %v7745 = vpop.f32.mrf.mxu0
        %v7746 = vadd.f32 0.0, %v7745
        %v7747 = vand.u32 %v5776, 4294901760
        %v7748 = vsub.f32 %v5776, %v7747
        %v7749 = vand.u32 %v7748, 4294901760
        %v7750 = vsub.f32 %v7748, %v7749
        %v7751 = vand.u32 %v7750, 4294901760
        %7752 = vmatmul.f32.gmra.mxu0 %v7751
        %v7753 = vpop.f32.mrf.mxu0
        %v7754 = vadd.f32 0.0, %v7753
        %v7755 = vand.u32 %v5779, 4294901760
        %v7756 = vsub.f32 %v5779, %v7755
        %v7757 = vand.u32 %v7756, 4294901760
        %v7758 = vsub.f32 %v7756, %v7757
        %v7759 = vand.u32 %v7758, 4294901760
        %7760 = vmatmul.f32.gmra.mxu0 %v7759
        %v7761 = vpop.f32.mrf.mxu0
        %v7762 = vadd.f32 0.0, %v7761
        %v7763 = vand.u32 %v5782, 4294901760
        %v7764 = vsub.f32 %v5782, %v7763
        %v7765 = vand.u32 %v7764, 4294901760
        %v7766 = vsub.f32 %v7764, %v7765
        %v7767 = vand.u32 %v7766, 4294901760
        %7768 = vmatmul.f32.gmra.mxu0 %v7767
        %v7769 = vpop.f32.mrf.mxu0
        %v7770 = vadd.f32 0.0, %v7769
        %v7771 = vand.u32 %v5785, 4294901760
        %v7772 = vsub.f32 %v5785, %v7771
        %v7773 = vand.u32 %v7772, 4294901760
        %v7774 = vsub.f32 %v7772, %v7773
        %v7775 = vand.u32 %v7774, 4294901760
        %7776 = vmatmul.f32.gmra.mxu0 %v7775
        %v7777 = vpop.f32.mrf.mxu0
        %v7778 = vadd.f32 0.0, %v7777
        %v7779 = vand.u32 %v5788, 4294901760
        %v7780 = vsub.f32 %v5788, %v7779
        %v7781 = vand.u32 %v7780, 4294901760
        %v7782 = vsub.f32 %v7780, %v7781
        %v7783 = vand.u32 %v7782, 4294901760
        %7784 = vmatmul.f32.gmra.mxu0 %v7783
        %v7785 = vpop.f32.mrf.mxu0
        %v7786 = vadd.f32 0.0, %v7785
        %v7787 = vand.u32 %v5791, 4294901760
        %v7788 = vsub.f32 %v5791, %v7787
        %v7789 = vand.u32 %v7788, 4294901760
        %v7790 = vsub.f32 %v7788, %v7789
        %v7791 = vand.u32 %v7790, 4294901760
        %7792 = vmatmul.f32.gmra.mxu0 %v7791
        %v7793 = vpop.f32.mrf.mxu0
        %v7794 = vadd.f32 0.0, %v7793
        %v7795 = vand.u32 %v5794, 4294901760
        %v7796 = vsub.f32 %v5794, %v7795
        %v7797 = vand.u32 %v7796, 4294901760
        %v7798 = vsub.f32 %v7796, %v7797
        %v7799 = vand.u32 %v7798, 4294901760
        %7800 = vmatmul.f32.gmra.mxu0 %v7799
        %v7801 = vpop.f32.mrf.mxu0
        %v7802 = vadd.f32 0.0, %v7801
        %v7803 = vand.u32 %v5797, 4294901760
        %v7804 = vsub.f32 %v5797, %v7803
        %v7805 = vand.u32 %v7804, 4294901760
        %v7806 = vsub.f32 %v7804, %v7805
        %v7807 = vand.u32 %v7806, 4294901760
        %7808 = vmatmul.f32.gmra.mxu0 %v7807
        %v7809 = vpop.f32.mrf.mxu0
        %v7810 = vadd.f32 0.0, %v7809
        %v7811 = vand.u32 %v5800, 4294901760
        %v7812 = vsub.f32 %v5800, %v7811
        %v7813 = vand.u32 %v7812, 4294901760
        %v7814 = vsub.f32 %v7812, %v7813
        %v7815 = vand.u32 %v7814, 4294901760
        %7816 = vmatmul.f32.gmra.mxu0 %v7815
        %v7817 = vpop.f32.mrf.mxu0
        %v7818 = vadd.f32 0.0, %v7817
        %v7819 = vand.u32 %v5803, 4294901760
        %v7820 = vsub.f32 %v5803, %v7819
        %v7821 = vand.u32 %v7820, 4294901760
        %v7822 = vsub.f32 %v7820, %v7821
        %v7823 = vand.u32 %v7822, 4294901760
        %7824 = vmatmul.f32.gmra.mxu0 %v7823
        %v7825 = vpop.f32.mrf.mxu0
        %v7826 = vadd.f32 0.0, %v7825
        %v7827 = vand.u32 %v5806, 4294901760
        %v7828 = vsub.f32 %v5806, %v7827
        %v7829 = vand.u32 %v7828, 4294901760
        %v7830 = vsub.f32 %v7828, %v7829
        %v7831 = vand.u32 %v7830, 4294901760
        %7832 = vmatmul.f32.gmra.mxu0 %v7831
        %v7833 = vpop.f32.mrf.mxu0
        %v7834 = vadd.f32 0.0, %v7833
        %v7835 = vand.u32 %v5809, 4294901760
        %v7836 = vsub.f32 %v5809, %v7835
        %v7837 = vand.u32 %v7836, 4294901760
        %v7838 = vsub.f32 %v7836, %v7837
        %v7839 = vand.u32 %v7838, 4294901760
        %7840 = vmatmul.f32.gmra.mxu0 %v7839
        %v7841 = vpop.f32.mrf.mxu0
        %v7842 = vadd.f32 0.0, %v7841
        %v7843 = vand.u32 %v5812, 4294901760
        %v7844 = vsub.f32 %v5812, %v7843
        %v7845 = vand.u32 %v7844, 4294901760
        %v7846 = vsub.f32 %v7844, %v7845
        %v7847 = vand.u32 %v7846, 4294901760
        %7848 = vmatmul.f32.gmra.mxu0 %v7847
        %v7849 = vpop.f32.mrf.mxu0
        %v7850 = vadd.f32 0.0, %v7849
        %v7851 = vand.u32 %v5815, 4294901760
        %v7852 = vsub.f32 %v5815, %v7851
        %v7853 = vand.u32 %v7852, 4294901760
        %v7854 = vsub.f32 %v7852, %v7853
        %v7855 = vand.u32 %v7854, 4294901760
        %7856 = vmatmul.f32.gmra.mxu0 %v7855
        %v7857 = vpop.f32.mrf.mxu0
        %v7858 = vadd.f32 0.0, %v7857
        %v7859 = vand.u32 %v5818, 4294901760
        %v7860 = vsub.f32 %v5818, %v7859
        %v7861 = vand.u32 %v7860, 4294901760
        %v7862 = vsub.f32 %v7860, %v7861
        %v7863 = vand.u32 %v7862, 4294901760
        %7864 = vmatmul.f32.gmra.mxu0 %v7863
        %v7865 = vpop.f32.mrf.mxu0
        %v7866 = vadd.f32 0.0, %v7865
        %v7867 = vand.u32 %v5821, 4294901760
        %v7868 = vsub.f32 %v5821, %v7867
        %v7869 = vand.u32 %v7868, 4294901760
        %v7870 = vsub.f32 %v7868, %v7869
        %v7871 = vand.u32 %v7870, 4294901760
        %7872 = vmatmul.f32.gmra.mxu0 %v7871
        %v7873 = vpop.f32.mrf.mxu0
        %v7874 = vadd.f32 0.0, %v7873
        %v7875 = vand.u32 %v5824, 4294901760
        %v7876 = vsub.f32 %v5824, %v7875
        %v7877 = vand.u32 %v7876, 4294901760
        %v7878 = vsub.f32 %v7876, %v7877
        %v7879 = vand.u32 %v7878, 4294901760
        %7880 = vmatmul.f32.gmra.mxu0 %v7879
        %v7881 = vpop.f32.mrf.mxu0
        %v7882 = vadd.f32 0.0, %v7881
        %v7883 = vand.u32 %v5827, 4294901760
        %v7884 = vsub.f32 %v5827, %v7883
        %v7885 = vand.u32 %v7884, 4294901760
        %v7886 = vsub.f32 %v7884, %v7885
        %v7887 = vand.u32 %v7886, 4294901760
        %7888 = vmatmul.f32.gmra.mxu0 %v7887
        %v7889 = vpop.f32.mrf.mxu0
        %v7890 = vadd.f32 0.0, %v7889
        %v7891 = vand.u32 %v5830, 4294901760
        %v7892 = vsub.f32 %v5830, %v7891
        %v7893 = vand.u32 %v7892, 4294901760
        %v7894 = vsub.f32 %v7892, %v7893
        %v7895 = vand.u32 %v7894, 4294901760
        %7896 = vmatmul.f32.gmra.mxu0 %v7895
        %v7897 = vpop.f32.mrf.mxu0
        %v7898 = vadd.f32 0.0, %v7897
        %v7899 = vand.u32 %v5833, 4294901760
        %v7900 = vsub.f32 %v5833, %v7899
        %v7901 = vand.u32 %v7900, 4294901760
        %v7902 = vsub.f32 %v7900, %v7901
        %v7903 = vand.u32 %v7902, 4294901760
        %7904 = vmatmul.f32.gmra.mxu0 %v7903
        %v7905 = vpop.f32.mrf.mxu0
        %v7906 = vadd.f32 0.0, %v7905
        %v7907 = vand.u32 %v5836, 4294901760
        %v7908 = vsub.f32 %v5836, %v7907
        %v7909 = vand.u32 %v7908, 4294901760
        %v7910 = vsub.f32 %v7908, %v7909
        %v7911 = vand.u32 %v7910, 4294901760
        %7912 = vmatmul.f32.gmra.mxu0 %v7911
        %v7913 = vpop.f32.mrf.mxu0
        %v7914 = vadd.f32 0.0, %v7913
        %v7915 = vand.u32 %v5839, 4294901760
        %v7916 = vsub.f32 %v5839, %v7915
        %v7917 = vand.u32 %v7916, 4294901760
        %v7918 = vsub.f32 %v7916, %v7917
        %v7919 = vand.u32 %v7918, 4294901760
        %7920 = vmatmul.f32.gmra.mxu0 %v7919
        %v7921 = vpop.f32.mrf.mxu0
        %v7922 = vadd.f32 0.0, %v7921
        %v7923 = vand.u32 %v5842, 4294901760
        %v7924 = vsub.f32 %v5842, %v7923
        %v7925 = vand.u32 %v7924, 4294901760
        %v7926 = vsub.f32 %v7924, %v7925
        %v7927 = vand.u32 %v7926, 4294901760
        %7928 = vmatmul.f32.gmra.mxu0 %v7927
        %v7929 = vpop.f32.mrf.mxu0
        %v7930 = vadd.f32 0.0, %v7929
        %v7931 = vand.u32 %v5845, 4294901760
        %v7932 = vsub.f32 %v5845, %v7931
        %v7933 = vand.u32 %v7932, 4294901760
        %v7934 = vsub.f32 %v7932, %v7933
        %v7935 = vand.u32 %v7934, 4294901760
        %7936 = vmatmul.f32.gmra.mxu0 %v7935
        %v7937 = vpop.f32.mrf.mxu0
        %v7938 = vadd.f32 0.0, %v7937
        %v7939 = vand.u32 %v5848, 4294901760
        %v7940 = vsub.f32 %v5848, %v7939
        %v7941 = vand.u32 %v7940, 4294901760
        %v7942 = vsub.f32 %v7940, %v7941
        %v7943 = vand.u32 %v7942, 4294901760
        %7944 = vmatmul.f32.gmra.mxu0 %v7943
        %v7945 = vpop.f32.mrf.mxu0
        %v7946 = vadd.f32 0.0, %v7945
        %v7947 = vand.u32 %v5851, 4294901760
        %v7948 = vsub.f32 %v5851, %v7947
        %v7949 = vand.u32 %v7948, 4294901760
        %v7950 = vsub.f32 %v7948, %v7949
        %v7951 = vand.u32 %v7950, 4294901760
        %7952 = vmatmul.f32.gmra.mxu0 %v7951
        %v7953 = vpop.f32.mrf.mxu0
        %v7954 = vadd.f32 0.0, %v7953
        %7955 = vdwg.mxu0
        %7956 = vmatpush.msra.mxu0 0.0
        %7957 = vmatpush.msra.mxu0 0.0
        %7958 = vmatpush.msra.mxu0 0.0
        %7959 = vmatpush.msra.mxu0 0.0
        %7960 = vmatpush.msra.mxu0 0.0
        %7961 = vmatpush.msra.mxu0 0.0
        %7962 = vmatpush.msra.mxu0 0.0
        %7963 = vmatpush.msra.mxu0 0.0
        %v7964 = vand.u32 %v5707, 4294901760
        %v7965 = vsub.f32 %v5707, %v7964
        %v7966 = vand.u32 %v7965, 4294901760
        %v7967 = vsub.f32 %v7965, %v7966
        %v7968 = vand.u32 %v7967, 4294901760
        %7969 = vmatpush.msra.mxu0 %v7968
        %v7970 = vand.u32 %v5704, 4294901760
        %v7971 = vsub.f32 %v5704, %v7970
        %v7972 = vand.u32 %v7971, 4294901760
        %v7973 = vsub.f32 %v7971, %v7972
        %v7974 = vand.u32 %v7973, 4294901760
        %7975 = vmatpush.msra.mxu0 %v7974
        %v7976 = vand.u32 %v5701, 4294901760
        %v7977 = vsub.f32 %v5701, %v7976
        %v7978 = vand.u32 %v7977, 4294901760
        %v7979 = vsub.f32 %v7977, %v7978
        %v7980 = vand.u32 %v7979, 4294901760
        %7981 = vmatpush.msra.mxu0 %v7980
        %v7982 = vand.u32 %v5698, 4294901760
        %v7983 = vsub.f32 %v5698, %v7982
        %v7984 = vand.u32 %v7983, 4294901760
        %v7985 = vsub.f32 %v7983, %v7984
        %v7986 = vand.u32 %v7985, 4294901760
        %7987 = vmatpush.msra.mxu0 %v7986
        %v7988 = vand.u32 %v5695, 4294901760
        %v7989 = vsub.f32 %v5695, %v7988
        %v7990 = vand.u32 %v7989, 4294901760
        %v7991 = vsub.f32 %v7989, %v7990
        %v7992 = vand.u32 %v7991, 4294901760
        %7993 = vmatpush.msra.mxu0 %v7992
        %v7994 = vand.u32 %v5692, 4294901760
        %v7995 = vsub.f32 %v5692, %v7994
        %v7996 = vand.u32 %v7995, 4294901760
        %v7997 = vsub.f32 %v7995, %v7996
        %v7998 = vand.u32 %v7997, 4294901760
        %7999 = vmatpush.msra.mxu0 %v7998
        %v8000 = vand.u32 %v5689, 4294901760
        %v8001 = vsub.f32 %v5689, %v8000
        %v8002 = vand.u32 %v8001, 4294901760
        %v8003 = vsub.f32 %v8001, %v8002
        %v8004 = vand.u32 %v8003, 4294901760
        %8005 = vmatpush.msra.mxu0 %v8004
        %v8006 = vand.u32 %v5686, 4294901760
        %v8007 = vsub.f32 %v5686, %v8006
        %v8008 = vand.u32 %v8007, 4294901760
        %v8009 = vsub.f32 %v8007, %v8008
        %v8010 = vand.u32 %v8009, 4294901760
        %8011 = vmatpush.msra.mxu0 %v8010
        %v8012 = vand.u32 %v5710, 4294901760
        %8013 = vmatmul.f32.gmra.mxu0 %v8012
        %v8014 = vpop.f32.mrf.mxu0
        %v8015 = vadd.f32 %v7578, %v8014
        %v8016 = vand.u32 %v5713, 4294901760
        %8017 = vmatmul.f32.gmra.mxu0 %v8016
        %v8018 = vpop.f32.mrf.mxu0
        %v8019 = vadd.f32 %v7586, %v8018
        %v8020 = vand.u32 %v5716, 4294901760
        %8021 = vmatmul.f32.gmra.mxu0 %v8020
        %v8022 = vpop.f32.mrf.mxu0
        %v8023 = vadd.f32 %v7594, %v8022
        %v8024 = vand.u32 %v5719, 4294901760
        %8025 = vmatmul.f32.gmra.mxu0 %v8024
        %v8026 = vpop.f32.mrf.mxu0
        %v8027 = vadd.f32 %v7602, %v8026
        %v8028 = vand.u32 %v5722, 4294901760
        %8029 = vmatmul.f32.gmra.mxu0 %v8028
        %v8030 = vpop.f32.mrf.mxu0
        %v8031 = vadd.f32 %v7610, %v8030
        %v8032 = vand.u32 %v5725, 4294901760
        %8033 = vmatmul.f32.gmra.mxu0 %v8032
        %v8034 = vpop.f32.mrf.mxu0
        %v8035 = vadd.f32 %v7618, %v8034
        %v8036 = vand.u32 %v5728, 4294901760
        %8037 = vmatmul.f32.gmra.mxu0 %v8036
        %v8038 = vpop.f32.mrf.mxu0
        %v8039 = vadd.f32 %v7626, %v8038
        %v8040 = vand.u32 %v5731, 4294901760
        %8041 = vmatmul.f32.gmra.mxu0 %v8040
        %v8042 = vpop.f32.mrf.mxu0
        %v8043 = vadd.f32 %v7634, %v8042
        %v8044 = vand.u32 %v5734, 4294901760
        %8045 = vmatmul.f32.gmra.mxu0 %v8044
        %v8046 = vpop.f32.mrf.mxu0
        %v8047 = vadd.f32 %v7642, %v8046
        %v8048 = vand.u32 %v5737, 4294901760
        %8049 = vmatmul.f32.gmra.mxu0 %v8048
        %v8050 = vpop.f32.mrf.mxu0
        %v8051 = vadd.f32 %v7650, %v8050
        %v8052 = vand.u32 %v5740, 4294901760
        %8053 = vmatmul.f32.gmra.mxu0 %v8052
        %v8054 = vpop.f32.mrf.mxu0
        %v8055 = vadd.f32 %v7658, %v8054
        %v8056 = vand.u32 %v5743, 4294901760
        %8057 = vmatmul.f32.gmra.mxu0 %v8056
        %v8058 = vpop.f32.mrf.mxu0
        %v8059 = vadd.f32 %v7666, %v8058
        %v8060 = vand.u32 %v5746, 4294901760
        %8061 = vmatmul.f32.gmra.mxu0 %v8060
        %v8062 = vpop.f32.mrf.mxu0
        %v8063 = vadd.f32 %v7674, %v8062
        %v8064 = vand.u32 %v5749, 4294901760
        %8065 = vmatmul.f32.gmra.mxu0 %v8064
        %v8066 = vpop.f32.mrf.mxu0
        %v8067 = vadd.f32 %v7682, %v8066
        %v8068 = vand.u32 %v5752, 4294901760
        %8069 = vmatmul.f32.gmra.mxu0 %v8068
        %v8070 = vpop.f32.mrf.mxu0
        %v8071 = vadd.f32 %v7690, %v8070
        %v8072 = vand.u32 %v5755, 4294901760
        %8073 = vmatmul.f32.gmra.mxu0 %v8072
        %v8074 = vpop.f32.mrf.mxu0
        %v8075 = vadd.f32 %v7698, %v8074
        %v8076 = vand.u32 %v5758, 4294901760
        %8077 = vmatmul.f32.gmra.mxu0 %v8076
        %v8078 = vpop.f32.mrf.mxu0
        %v8079 = vadd.f32 %v7706, %v8078
        %v8080 = vand.u32 %v5761, 4294901760
        %8081 = vmatmul.f32.gmra.mxu0 %v8080
        %v8082 = vpop.f32.mrf.mxu0
        %v8083 = vadd.f32 %v7714, %v8082
        %v8084 = vand.u32 %v5764, 4294901760
        %8085 = vmatmul.f32.gmra.mxu0 %v8084
        %v8086 = vpop.f32.mrf.mxu0
        %v8087 = vadd.f32 %v7722, %v8086
        %v8088 = vand.u32 %v5767, 4294901760
        %8089 = vmatmul.f32.gmra.mxu0 %v8088
        %v8090 = vpop.f32.mrf.mxu0
        %v8091 = vadd.f32 %v7730, %v8090
        %v8092 = vand.u32 %v5770, 4294901760
        %8093 = vmatmul.f32.gmra.mxu0 %v8092
        %v8094 = vpop.f32.mrf.mxu0
        %v8095 = vadd.f32 %v7738, %v8094
        %v8096 = vand.u32 %v5773, 4294901760
        %8097 = vmatmul.f32.gmra.mxu0 %v8096
        %v8098 = vpop.f32.mrf.mxu0
        %v8099 = vadd.f32 %v7746, %v8098
        %v8100 = vand.u32 %v5776, 4294901760
        %8101 = vmatmul.f32.gmra.mxu0 %v8100
        %v8102 = vpop.f32.mrf.mxu0
        %v8103 = vadd.f32 %v7754, %v8102
        %v8104 = vand.u32 %v5779, 4294901760
        %8105 = vmatmul.f32.gmra.mxu0 %v8104
        %v8106 = vpop.f32.mrf.mxu0
        %v8107 = vadd.f32 %v7762, %v8106
        %v8108 = vand.u32 %v5782, 4294901760
        %8109 = vmatmul.f32.gmra.mxu0 %v8108
        %v8110 = vpop.f32.mrf.mxu0
        %v8111 = vadd.f32 %v7770, %v8110
        %v8112 = vand.u32 %v5785, 4294901760
        %8113 = vmatmul.f32.gmra.mxu0 %v8112
        %v8114 = vpop.f32.mrf.mxu0
        %v8115 = vadd.f32 %v7778, %v8114
        %v8116 = vand.u32 %v5788, 4294901760
        %8117 = vmatmul.f32.gmra.mxu0 %v8116
        %v8118 = vpop.f32.mrf.mxu0
        %v8119 = vadd.f32 %v7786, %v8118
        %v8120 = vand.u32 %v5791, 4294901760
        %8121 = vmatmul.f32.gmra.mxu0 %v8120
        %v8122 = vpop.f32.mrf.mxu0
        %v8123 = vadd.f32 %v7794, %v8122
        %v8124 = vand.u32 %v5794, 4294901760
        %8125 = vmatmul.f32.gmra.mxu0 %v8124
        %v8126 = vpop.f32.mrf.mxu0
        %v8127 = vadd.f32 %v7802, %v8126
        %v8128 = vand.u32 %v5797, 4294901760
        %8129 = vmatmul.f32.gmra.mxu0 %v8128
        %v8130 = vpop.f32.mrf.mxu0
        %v8131 = vadd.f32 %v7810, %v8130
        %v8132 = vand.u32 %v5800, 4294901760
        %8133 = vmatmul.f32.gmra.mxu0 %v8132
        %v8134 = vpop.f32.mrf.mxu0
        %v8135 = vadd.f32 %v7818, %v8134
        %v8136 = vand.u32 %v5803, 4294901760
        %8137 = vmatmul.f32.gmra.mxu0 %v8136
        %v8138 = vpop.f32.mrf.mxu0
        %v8139 = vadd.f32 %v7826, %v8138
        %v8140 = vand.u32 %v5806, 4294901760
        %8141 = vmatmul.f32.gmra.mxu0 %v8140
        %v8142 = vpop.f32.mrf.mxu0
        %v8143 = vadd.f32 %v7834, %v8142
        %v8144 = vand.u32 %v5809, 4294901760
        %8145 = vmatmul.f32.gmra.mxu0 %v8144
        %v8146 = vpop.f32.mrf.mxu0
        %v8147 = vadd.f32 %v7842, %v8146
        %v8148 = vand.u32 %v5812, 4294901760
        %8149 = vmatmul.f32.gmra.mxu0 %v8148
        %v8150 = vpop.f32.mrf.mxu0
        %v8151 = vadd.f32 %v7850, %v8150
        %v8152 = vand.u32 %v5815, 4294901760
        %8153 = vmatmul.f32.gmra.mxu0 %v8152
        %v8154 = vpop.f32.mrf.mxu0
        %v8155 = vadd.f32 %v7858, %v8154
        %v8156 = vand.u32 %v5818, 4294901760
        %8157 = vmatmul.f32.gmra.mxu0 %v8156
        %v8158 = vpop.f32.mrf.mxu0
        %v8159 = vadd.f32 %v7866, %v8158
        %v8160 = vand.u32 %v5821, 4294901760
        %8161 = vmatmul.f32.gmra.mxu0 %v8160
        %v8162 = vpop.f32.mrf.mxu0
        %v8163 = vadd.f32 %v7874, %v8162
        %v8164 = vand.u32 %v5824, 4294901760
        %8165 = vmatmul.f32.gmra.mxu0 %v8164
        %v8166 = vpop.f32.mrf.mxu0
        %v8167 = vadd.f32 %v7882, %v8166
        %v8168 = vand.u32 %v5827, 4294901760
        %8169 = vmatmul.f32.gmra.mxu0 %v8168
        %v8170 = vpop.f32.mrf.mxu0
        %v8171 = vadd.f32 %v7890, %v8170
        %v8172 = vand.u32 %v5830, 4294901760
        %8173 = vmatmul.f32.gmra.mxu0 %v8172
        %v8174 = vpop.f32.mrf.mxu0
        %v8175 = vadd.f32 %v7898, %v8174
        %v8176 = vand.u32 %v5833, 4294901760
        %8177 = vmatmul.f32.gmra.mxu0 %v8176
        %v8178 = vpop.f32.mrf.mxu0
        %v8179 = vadd.f32 %v7906, %v8178
        %v8180 = vand.u32 %v5836, 4294901760
        %8181 = vmatmul.f32.gmra.mxu0 %v8180
        %v8182 = vpop.f32.mrf.mxu0
        %v8183 = vadd.f32 %v7914, %v8182
        %v8184 = vand.u32 %v5839, 4294901760
        %8185 = vmatmul.f32.gmra.mxu0 %v8184
        %v8186 = vpop.f32.mrf.mxu0
        %v8187 = vadd.f32 %v7922, %v8186
        %v8188 = vand.u32 %v5842, 4294901760
        %8189 = vmatmul.f32.gmra.mxu0 %v8188
        %v8190 = vpop.f32.mrf.mxu0
        %v8191 = vadd.f32 %v7930, %v8190
        %v8192 = vand.u32 %v5845, 4294901760
        %8193 = vmatmul.f32.gmra.mxu0 %v8192
        %v8194 = vpop.f32.mrf.mxu0
        %v8195 = vadd.f32 %v7938, %v8194
        %v8196 = vand.u32 %v5848, 4294901760
        %8197 = vmatmul.f32.gmra.mxu0 %v8196
        %v8198 = vpop.f32.mrf.mxu0
        %v8199 = vadd.f32 %v7946, %v8198
        %v8200 = vand.u32 %v5851, 4294901760
        %8201 = vmatmul.f32.gmra.mxu0 %v8200
        %v8202 = vpop.f32.mrf.mxu0
        %v8203 = vadd.f32 %v7954, %v8202
        %8204 = vdwg.mxu0
        %8205 = vmatpush.msra.mxu0 0.0
        %8206 = vmatpush.msra.mxu0 0.0
        %8207 = vmatpush.msra.mxu0 0.0
        %8208 = vmatpush.msra.mxu0 0.0
        %8209 = vmatpush.msra.mxu0 0.0
        %8210 = vmatpush.msra.mxu0 0.0
        %8211 = vmatpush.msra.mxu0 0.0
        %8212 = vmatpush.msra.mxu0 0.0
        %v8213 = vand.u32 %v5707, 4294901760
        %v8214 = vsub.f32 %v5707, %v8213
        %8215 = vmatpush.msra.mxu0 %v8214
        %v8216 = vand.u32 %v5704, 4294901760
        %v8217 = vsub.f32 %v5704, %v8216
        %8218 = vmatpush.msra.mxu0 %v8217
        %v8219 = vand.u32 %v5701, 4294901760
        %v8220 = vsub.f32 %v5701, %v8219
        %8221 = vmatpush.msra.mxu0 %v8220
        %v8222 = vand.u32 %v5698, 4294901760
        %v8223 = vsub.f32 %v5698, %v8222
        %8224 = vmatpush.msra.mxu0 %v8223
        %v8225 = vand.u32 %v5695, 4294901760
        %v8226 = vsub.f32 %v5695, %v8225
        %8227 = vmatpush.msra.mxu0 %v8226
        %v8228 = vand.u32 %v5692, 4294901760
        %v8229 = vsub.f32 %v5692, %v8228
        %8230 = vmatpush.msra.mxu0 %v8229
        %v8231 = vand.u32 %v5689, 4294901760
        %v8232 = vsub.f32 %v5689, %v8231
        %8233 = vmatpush.msra.mxu0 %v8232
        %v8234 = vand.u32 %v5686, 4294901760
        %v8235 = vsub.f32 %v5686, %v8234
        %8236 = vmatpush.msra.mxu0 %v8235
        %v8237 = vand.u32 %v5710, 4294901760
        %v8238 = vsub.f32 %v5710, %v8237
        %8239 = vmatmul.f32.gmra.mxu0 %v8238
        %v8240 = vpop.f32.mrf.mxu0
        %v8241 = vadd.f32 %v8015, %v8240
        %v8242 = vand.u32 %v5713, 4294901760
        %v8243 = vsub.f32 %v5713, %v8242
        %8244 = vmatmul.f32.gmra.mxu0 %v8243
        %v8245 = vpop.f32.mrf.mxu0
        %v8246 = vadd.f32 %v8019, %v8245
        %v8247 = vand.u32 %v5716, 4294901760
        %v8248 = vsub.f32 %v5716, %v8247
        %8249 = vmatmul.f32.gmra.mxu0 %v8248
        %v8250 = vpop.f32.mrf.mxu0
        %v8251 = vadd.f32 %v8023, %v8250
        %v8252 = vand.u32 %v5719, 4294901760
        %v8253 = vsub.f32 %v5719, %v8252
        %8254 = vmatmul.f32.gmra.mxu0 %v8253
        %v8255 = vpop.f32.mrf.mxu0
        %v8256 = vadd.f32 %v8027, %v8255
        %v8257 = vand.u32 %v5722, 4294901760
        %v8258 = vsub.f32 %v5722, %v8257
        %8259 = vmatmul.f32.gmra.mxu0 %v8258
        %v8260 = vpop.f32.mrf.mxu0
        %v8261 = vadd.f32 %v8031, %v8260
        %v8262 = vand.u32 %v5725, 4294901760
        %v8263 = vsub.f32 %v5725, %v8262
        %8264 = vmatmul.f32.gmra.mxu0 %v8263
        %v8265 = vpop.f32.mrf.mxu0
        %v8266 = vadd.f32 %v8035, %v8265
        %v8267 = vand.u32 %v5728, 4294901760
        %v8268 = vsub.f32 %v5728, %v8267
        %8269 = vmatmul.f32.gmra.mxu0 %v8268
        %v8270 = vpop.f32.mrf.mxu0
        %v8271 = vadd.f32 %v8039, %v8270
        %v8272 = vand.u32 %v5731, 4294901760
        %v8273 = vsub.f32 %v5731, %v8272
        %8274 = vmatmul.f32.gmra.mxu0 %v8273
        %v8275 = vpop.f32.mrf.mxu0
        %v8276 = vadd.f32 %v8043, %v8275
        %v8277 = vand.u32 %v5734, 4294901760
        %v8278 = vsub.f32 %v5734, %v8277
        %8279 = vmatmul.f32.gmra.mxu0 %v8278
        %v8280 = vpop.f32.mrf.mxu0
        %v8281 = vadd.f32 %v8047, %v8280
        %v8282 = vand.u32 %v5737, 4294901760
        %v8283 = vsub.f32 %v5737, %v8282
        %8284 = vmatmul.f32.gmra.mxu0 %v8283
        %v8285 = vpop.f32.mrf.mxu0
        %v8286 = vadd.f32 %v8051, %v8285
        %v8287 = vand.u32 %v5740, 4294901760
        %v8288 = vsub.f32 %v5740, %v8287
        %8289 = vmatmul.f32.gmra.mxu0 %v8288
        %v8290 = vpop.f32.mrf.mxu0
        %v8291 = vadd.f32 %v8055, %v8290
        %v8292 = vand.u32 %v5743, 4294901760
        %v8293 = vsub.f32 %v5743, %v8292
        %8294 = vmatmul.f32.gmra.mxu0 %v8293
        %v8295 = vpop.f32.mrf.mxu0
        %v8296 = vadd.f32 %v8059, %v8295
        %v8297 = vand.u32 %v5746, 4294901760
        %v8298 = vsub.f32 %v5746, %v8297
        %8299 = vmatmul.f32.gmra.mxu0 %v8298
        %v8300 = vpop.f32.mrf.mxu0
        %v8301 = vadd.f32 %v8063, %v8300
        %v8302 = vand.u32 %v5749, 4294901760
        %v8303 = vsub.f32 %v5749, %v8302
        %8304 = vmatmul.f32.gmra.mxu0 %v8303
        %v8305 = vpop.f32.mrf.mxu0
        %v8306 = vadd.f32 %v8067, %v8305
        %v8307 = vand.u32 %v5752, 4294901760
        %v8308 = vsub.f32 %v5752, %v8307
        %8309 = vmatmul.f32.gmra.mxu0 %v8308
        %v8310 = vpop.f32.mrf.mxu0
        %v8311 = vadd.f32 %v8071, %v8310
        %v8312 = vand.u32 %v5755, 4294901760
        %v8313 = vsub.f32 %v5755, %v8312
        %8314 = vmatmul.f32.gmra.mxu0 %v8313
        %v8315 = vpop.f32.mrf.mxu0
        %v8316 = vadd.f32 %v8075, %v8315
        %v8317 = vand.u32 %v5758, 4294901760
        %v8318 = vsub.f32 %v5758, %v8317
        %8319 = vmatmul.f32.gmra.mxu0 %v8318
        %v8320 = vpop.f32.mrf.mxu0
        %v8321 = vadd.f32 %v8079, %v8320
        %v8322 = vand.u32 %v5761, 4294901760
        %v8323 = vsub.f32 %v5761, %v8322
        %8324 = vmatmul.f32.gmra.mxu0 %v8323
        %v8325 = vpop.f32.mrf.mxu0
        %v8326 = vadd.f32 %v8083, %v8325
        %v8327 = vand.u32 %v5764, 4294901760
        %v8328 = vsub.f32 %v5764, %v8327
        %8329 = vmatmul.f32.gmra.mxu0 %v8328
        %v8330 = vpop.f32.mrf.mxu0
        %v8331 = vadd.f32 %v8087, %v8330
        %v8332 = vand.u32 %v5767, 4294901760
        %v8333 = vsub.f32 %v5767, %v8332
        %8334 = vmatmul.f32.gmra.mxu0 %v8333
        %v8335 = vpop.f32.mrf.mxu0
        %v8336 = vadd.f32 %v8091, %v8335
        %v8337 = vand.u32 %v5770, 4294901760
        %v8338 = vsub.f32 %v5770, %v8337
        %8339 = vmatmul.f32.gmra.mxu0 %v8338
        %v8340 = vpop.f32.mrf.mxu0
        %v8341 = vadd.f32 %v8095, %v8340
        %v8342 = vand.u32 %v5773, 4294901760
        %v8343 = vsub.f32 %v5773, %v8342
        %8344 = vmatmul.f32.gmra.mxu0 %v8343
        %v8345 = vpop.f32.mrf.mxu0
        %v8346 = vadd.f32 %v8099, %v8345
        %v8347 = vand.u32 %v5776, 4294901760
        %v8348 = vsub.f32 %v5776, %v8347
        %8349 = vmatmul.f32.gmra.mxu0 %v8348
        %v8350 = vpop.f32.mrf.mxu0
        %v8351 = vadd.f32 %v8103, %v8350
        %v8352 = vand.u32 %v5779, 4294901760
        %v8353 = vsub.f32 %v5779, %v8352
        %8354 = vmatmul.f32.gmra.mxu0 %v8353
        %v8355 = vpop.f32.mrf.mxu0
        %v8356 = vadd.f32 %v8107, %v8355
        %v8357 = vand.u32 %v5782, 4294901760
        %v8358 = vsub.f32 %v5782, %v8357
        %8359 = vmatmul.f32.gmra.mxu0 %v8358
        %v8360 = vpop.f32.mrf.mxu0
        %v8361 = vadd.f32 %v8111, %v8360
        %v8362 = vand.u32 %v5785, 4294901760
        %v8363 = vsub.f32 %v5785, %v8362
        %8364 = vmatmul.f32.gmra.mxu0 %v8363
        %v8365 = vpop.f32.mrf.mxu0
        %v8366 = vadd.f32 %v8115, %v8365
        %v8367 = vand.u32 %v5788, 4294901760
        %v8368 = vsub.f32 %v5788, %v8367
        %8369 = vmatmul.f32.gmra.mxu0 %v8368
        %v8370 = vpop.f32.mrf.mxu0
        %v8371 = vadd.f32 %v8119, %v8370
        %v8372 = vand.u32 %v5791, 4294901760
        %v8373 = vsub.f32 %v5791, %v8372
        %8374 = vmatmul.f32.gmra.mxu0 %v8373
        %v8375 = vpop.f32.mrf.mxu0
        %v8376 = vadd.f32 %v8123, %v8375
        %v8377 = vand.u32 %v5794, 4294901760
        %v8378 = vsub.f32 %v5794, %v8377
        %8379 = vmatmul.f32.gmra.mxu0 %v8378
        %v8380 = vpop.f32.mrf.mxu0
        %v8381 = vadd.f32 %v8127, %v8380
        %v8382 = vand.u32 %v5797, 4294901760
        %v8383 = vsub.f32 %v5797, %v8382
        %8384 = vmatmul.f32.gmra.mxu0 %v8383
        %v8385 = vpop.f32.mrf.mxu0
        %v8386 = vadd.f32 %v8131, %v8385
        %v8387 = vand.u32 %v5800, 4294901760
        %v8388 = vsub.f32 %v5800, %v8387
        %8389 = vmatmul.f32.gmra.mxu0 %v8388
        %v8390 = vpop.f32.mrf.mxu0
        %v8391 = vadd.f32 %v8135, %v8390
        %v8392 = vand.u32 %v5803, 4294901760
        %v8393 = vsub.f32 %v5803, %v8392
        %8394 = vmatmul.f32.gmra.mxu0 %v8393
        %v8395 = vpop.f32.mrf.mxu0
        %v8396 = vadd.f32 %v8139, %v8395
        %v8397 = vand.u32 %v5806, 4294901760
        %v8398 = vsub.f32 %v5806, %v8397
        %8399 = vmatmul.f32.gmra.mxu0 %v8398
        %v8400 = vpop.f32.mrf.mxu0
        %v8401 = vadd.f32 %v8143, %v8400
        %v8402 = vand.u32 %v5809, 4294901760
        %v8403 = vsub.f32 %v5809, %v8402
        %8404 = vmatmul.f32.gmra.mxu0 %v8403
        %v8405 = vpop.f32.mrf.mxu0
        %v8406 = vadd.f32 %v8147, %v8405
        %v8407 = vand.u32 %v5812, 4294901760
        %v8408 = vsub.f32 %v5812, %v8407
        %8409 = vmatmul.f32.gmra.mxu0 %v8408
        %v8410 = vpop.f32.mrf.mxu0
        %v8411 = vadd.f32 %v8151, %v8410
        %v8412 = vand.u32 %v5815, 4294901760
        %v8413 = vsub.f32 %v5815, %v8412
        %8414 = vmatmul.f32.gmra.mxu0 %v8413
        %v8415 = vpop.f32.mrf.mxu0
        %v8416 = vadd.f32 %v8155, %v8415
        %v8417 = vand.u32 %v5818, 4294901760
        %v8418 = vsub.f32 %v5818, %v8417
        %8419 = vmatmul.f32.gmra.mxu0 %v8418
        %v8420 = vpop.f32.mrf.mxu0
        %v8421 = vadd.f32 %v8159, %v8420
        %v8422 = vand.u32 %v5821, 4294901760
        %v8423 = vsub.f32 %v5821, %v8422
        %8424 = vmatmul.f32.gmra.mxu0 %v8423
        %v8425 = vpop.f32.mrf.mxu0
        %v8426 = vadd.f32 %v8163, %v8425
        %v8427 = vand.u32 %v5824, 4294901760
        %v8428 = vsub.f32 %v5824, %v8427
        %8429 = vmatmul.f32.gmra.mxu0 %v8428
        %v8430 = vpop.f32.mrf.mxu0
        %v8431 = vadd.f32 %v8167, %v8430
        %v8432 = vand.u32 %v5827, 4294901760
        %v8433 = vsub.f32 %v5827, %v8432
        %8434 = vmatmul.f32.gmra.mxu0 %v8433
        %v8435 = vpop.f32.mrf.mxu0
        %v8436 = vadd.f32 %v8171, %v8435
        %v8437 = vand.u32 %v5830, 4294901760
        %v8438 = vsub.f32 %v5830, %v8437
        %8439 = vmatmul.f32.gmra.mxu0 %v8438
        %v8440 = vpop.f32.mrf.mxu0
        %v8441 = vadd.f32 %v8175, %v8440
        %v8442 = vand.u32 %v5833, 4294901760
        %v8443 = vsub.f32 %v5833, %v8442
        %8444 = vmatmul.f32.gmra.mxu0 %v8443
        %v8445 = vpop.f32.mrf.mxu0
        %v8446 = vadd.f32 %v8179, %v8445
        %v8447 = vand.u32 %v5836, 4294901760
        %v8448 = vsub.f32 %v5836, %v8447
        %8449 = vmatmul.f32.gmra.mxu0 %v8448
        %v8450 = vpop.f32.mrf.mxu0
        %v8451 = vadd.f32 %v8183, %v8450
        %v8452 = vand.u32 %v5839, 4294901760
        %v8453 = vsub.f32 %v5839, %v8452
        %8454 = vmatmul.f32.gmra.mxu0 %v8453
        %v8455 = vpop.f32.mrf.mxu0
        %v8456 = vadd.f32 %v8187, %v8455
        %v8457 = vand.u32 %v5842, 4294901760
        %v8458 = vsub.f32 %v5842, %v8457
        %8459 = vmatmul.f32.gmra.mxu0 %v8458
        %v8460 = vpop.f32.mrf.mxu0
        %v8461 = vadd.f32 %v8191, %v8460
        %v8462 = vand.u32 %v5845, 4294901760
        %v8463 = vsub.f32 %v5845, %v8462
        %8464 = vmatmul.f32.gmra.mxu0 %v8463
        %v8465 = vpop.f32.mrf.mxu0
        %v8466 = vadd.f32 %v8195, %v8465
        %v8467 = vand.u32 %v5848, 4294901760
        %v8468 = vsub.f32 %v5848, %v8467
        %8469 = vmatmul.f32.gmra.mxu0 %v8468
        %v8470 = vpop.f32.mrf.mxu0
        %v8471 = vadd.f32 %v8199, %v8470
        %v8472 = vand.u32 %v5851, 4294901760
        %v8473 = vsub.f32 %v5851, %v8472
        %8474 = vmatmul.f32.gmra.mxu0 %v8473
        %v8475 = vpop.f32.mrf.mxu0
        %v8476 = vadd.f32 %v8203, %v8475
        %8477 = vdwg.mxu0
        %8478 = vmatpush.msra.mxu0 0.0
        %8479 = vmatpush.msra.mxu0 0.0
        %8480 = vmatpush.msra.mxu0 0.0
        %8481 = vmatpush.msra.mxu0 0.0
        %8482 = vmatpush.msra.mxu0 0.0
        %8483 = vmatpush.msra.mxu0 0.0
        %8484 = vmatpush.msra.mxu0 0.0
        %8485 = vmatpush.msra.mxu0 0.0
        %v8486 = vand.u32 %v5707, 4294901760
        %8487 = vmatpush.msra.mxu0 %v8486
        %v8488 = vand.u32 %v5704, 4294901760
        %8489 = vmatpush.msra.mxu0 %v8488
        %v8490 = vand.u32 %v5701, 4294901760
        %8491 = vmatpush.msra.mxu0 %v8490
        %v8492 = vand.u32 %v5698, 4294901760
        %8493 = vmatpush.msra.mxu0 %v8492
        %v8494 = vand.u32 %v5695, 4294901760
        %8495 = vmatpush.msra.mxu0 %v8494
        %v8496 = vand.u32 %v5692, 4294901760
        %8497 = vmatpush.msra.mxu0 %v8496
        %v8498 = vand.u32 %v5689, 4294901760
        %8499 = vmatpush.msra.mxu0 %v8498
        %v8500 = vand.u32 %v5686, 4294901760
        %8501 = vmatpush.msra.mxu0 %v8500
        %v8502 = vand.u32 %v5710, 4294901760
        %v8503 = vsub.f32 %v5710, %v8502
        %v8504 = vand.u32 %v8503, 4294901760
        %8505 = vmatmul.f32.gmra.mxu0 %v8504
        %v8506 = vpop.f32.mrf.mxu0
        %v8507 = vadd.f32 %v8241, %v8506
        %v8508 = vand.u32 %v5713, 4294901760
        %v8509 = vsub.f32 %v5713, %v8508
        %v8510 = vand.u32 %v8509, 4294901760
        %8511 = vmatmul.f32.gmra.mxu0 %v8510
        %v8512 = vpop.f32.mrf.mxu0
        %v8513 = vadd.f32 %v8246, %v8512
        %v8514 = vand.u32 %v5716, 4294901760
        %v8515 = vsub.f32 %v5716, %v8514
        %v8516 = vand.u32 %v8515, 4294901760
        %8517 = vmatmul.f32.gmra.mxu0 %v8516
        %v8518 = vpop.f32.mrf.mxu0
        %v8519 = vadd.f32 %v8251, %v8518
        %v8520 = vand.u32 %v5719, 4294901760
        %v8521 = vsub.f32 %v5719, %v8520
        %v8522 = vand.u32 %v8521, 4294901760
        %8523 = vmatmul.f32.gmra.mxu0 %v8522
        %v8524 = vpop.f32.mrf.mxu0
        %v8525 = vadd.f32 %v8256, %v8524
        %v8526 = vand.u32 %v5722, 4294901760
        %v8527 = vsub.f32 %v5722, %v8526
        %v8528 = vand.u32 %v8527, 4294901760
        %8529 = vmatmul.f32.gmra.mxu0 %v8528
        %v8530 = vpop.f32.mrf.mxu0
        %v8531 = vadd.f32 %v8261, %v8530
        %v8532 = vand.u32 %v5725, 4294901760
        %v8533 = vsub.f32 %v5725, %v8532
        %v8534 = vand.u32 %v8533, 4294901760
        %8535 = vmatmul.f32.gmra.mxu0 %v8534
        %v8536 = vpop.f32.mrf.mxu0
        %v8537 = vadd.f32 %v8266, %v8536
        %v8538 = vand.u32 %v5728, 4294901760
        %v8539 = vsub.f32 %v5728, %v8538
        %v8540 = vand.u32 %v8539, 4294901760
        %8541 = vmatmul.f32.gmra.mxu0 %v8540
        %v8542 = vpop.f32.mrf.mxu0
        %v8543 = vadd.f32 %v8271, %v8542
        %v8544 = vand.u32 %v5731, 4294901760
        %v8545 = vsub.f32 %v5731, %v8544
        %v8546 = vand.u32 %v8545, 4294901760
        %8547 = vmatmul.f32.gmra.mxu0 %v8546
        %v8548 = vpop.f32.mrf.mxu0
        %v8549 = vadd.f32 %v8276, %v8548
        %v8550 = vand.u32 %v5734, 4294901760
        %v8551 = vsub.f32 %v5734, %v8550
        %v8552 = vand.u32 %v8551, 4294901760
        %8553 = vmatmul.f32.gmra.mxu0 %v8552
        %v8554 = vpop.f32.mrf.mxu0
        %v8555 = vadd.f32 %v8281, %v8554
        %v8556 = vand.u32 %v5737, 4294901760
        %v8557 = vsub.f32 %v5737, %v8556
        %v8558 = vand.u32 %v8557, 4294901760
        %8559 = vmatmul.f32.gmra.mxu0 %v8558
        %v8560 = vpop.f32.mrf.mxu0
        %v8561 = vadd.f32 %v8286, %v8560
        %v8562 = vand.u32 %v5740, 4294901760
        %v8563 = vsub.f32 %v5740, %v8562
        %v8564 = vand.u32 %v8563, 4294901760
        %8565 = vmatmul.f32.gmra.mxu0 %v8564
        %v8566 = vpop.f32.mrf.mxu0
        %v8567 = vadd.f32 %v8291, %v8566
        %v8568 = vand.u32 %v5743, 4294901760
        %v8569 = vsub.f32 %v5743, %v8568
        %v8570 = vand.u32 %v8569, 4294901760
        %8571 = vmatmul.f32.gmra.mxu0 %v8570
        %v8572 = vpop.f32.mrf.mxu0
        %v8573 = vadd.f32 %v8296, %v8572
        %v8574 = vand.u32 %v5746, 4294901760
        %v8575 = vsub.f32 %v5746, %v8574
        %v8576 = vand.u32 %v8575, 4294901760
        %8577 = vmatmul.f32.gmra.mxu0 %v8576
        %v8578 = vpop.f32.mrf.mxu0
        %v8579 = vadd.f32 %v8301, %v8578
        %v8580 = vand.u32 %v5749, 4294901760
        %v8581 = vsub.f32 %v5749, %v8580
        %v8582 = vand.u32 %v8581, 4294901760
        %8583 = vmatmul.f32.gmra.mxu0 %v8582
        %v8584 = vpop.f32.mrf.mxu0
        %v8585 = vadd.f32 %v8306, %v8584
        %v8586 = vand.u32 %v5752, 4294901760
        %v8587 = vsub.f32 %v5752, %v8586
        %v8588 = vand.u32 %v8587, 4294901760
        %8589 = vmatmul.f32.gmra.mxu0 %v8588
        %v8590 = vpop.f32.mrf.mxu0
        %v8591 = vadd.f32 %v8311, %v8590
        %v8592 = vand.u32 %v5755, 4294901760
        %v8593 = vsub.f32 %v5755, %v8592
        %v8594 = vand.u32 %v8593, 4294901760
        %8595 = vmatmul.f32.gmra.mxu0 %v8594
        %v8596 = vpop.f32.mrf.mxu0
        %v8597 = vadd.f32 %v8316, %v8596
        %v8598 = vand.u32 %v5758, 4294901760
        %v8599 = vsub.f32 %v5758, %v8598
        %v8600 = vand.u32 %v8599, 4294901760
        %8601 = vmatmul.f32.gmra.mxu0 %v8600
        %v8602 = vpop.f32.mrf.mxu0
        %v8603 = vadd.f32 %v8321, %v8602
        %v8604 = vand.u32 %v5761, 4294901760
        %v8605 = vsub.f32 %v5761, %v8604
        %v8606 = vand.u32 %v8605, 4294901760
        %8607 = vmatmul.f32.gmra.mxu0 %v8606
        %v8608 = vpop.f32.mrf.mxu0
        %v8609 = vadd.f32 %v8326, %v8608
        %v8610 = vand.u32 %v5764, 4294901760
        %v8611 = vsub.f32 %v5764, %v8610
        %v8612 = vand.u32 %v8611, 4294901760
        %8613 = vmatmul.f32.gmra.mxu0 %v8612
        %v8614 = vpop.f32.mrf.mxu0
        %v8615 = vadd.f32 %v8331, %v8614
        %v8616 = vand.u32 %v5767, 4294901760
        %v8617 = vsub.f32 %v5767, %v8616
        %v8618 = vand.u32 %v8617, 4294901760
        %8619 = vmatmul.f32.gmra.mxu0 %v8618
        %v8620 = vpop.f32.mrf.mxu0
        %v8621 = vadd.f32 %v8336, %v8620
        %v8622 = vand.u32 %v5770, 4294901760
        %v8623 = vsub.f32 %v5770, %v8622
        %v8624 = vand.u32 %v8623, 4294901760
        %8625 = vmatmul.f32.gmra.mxu0 %v8624
        %v8626 = vpop.f32.mrf.mxu0
        %v8627 = vadd.f32 %v8341, %v8626
        %v8628 = vand.u32 %v5773, 4294901760
        %v8629 = vsub.f32 %v5773, %v8628
        %v8630 = vand.u32 %v8629, 4294901760
        %8631 = vmatmul.f32.gmra.mxu0 %v8630
        %v8632 = vpop.f32.mrf.mxu0
        %v8633 = vadd.f32 %v8346, %v8632
        %v8634 = vand.u32 %v5776, 4294901760
        %v8635 = vsub.f32 %v5776, %v8634
        %v8636 = vand.u32 %v8635, 4294901760
        %8637 = vmatmul.f32.gmra.mxu0 %v8636
        %v8638 = vpop.f32.mrf.mxu0
        %v8639 = vadd.f32 %v8351, %v8638
        %v8640 = vand.u32 %v5779, 4294901760
        %v8641 = vsub.f32 %v5779, %v8640
        %v8642 = vand.u32 %v8641, 4294901760
        %8643 = vmatmul.f32.gmra.mxu0 %v8642
        %v8644 = vpop.f32.mrf.mxu0
        %v8645 = vadd.f32 %v8356, %v8644
        %v8646 = vand.u32 %v5782, 4294901760
        %v8647 = vsub.f32 %v5782, %v8646
        %v8648 = vand.u32 %v8647, 4294901760
        %8649 = vmatmul.f32.gmra.mxu0 %v8648
        %v8650 = vpop.f32.mrf.mxu0
        %v8651 = vadd.f32 %v8361, %v8650
        %v8652 = vand.u32 %v5785, 4294901760
        %v8653 = vsub.f32 %v5785, %v8652
        %v8654 = vand.u32 %v8653, 4294901760
        %8655 = vmatmul.f32.gmra.mxu0 %v8654
        %v8656 = vpop.f32.mrf.mxu0
        %v8657 = vadd.f32 %v8366, %v8656
        %v8658 = vand.u32 %v5788, 4294901760
        %v8659 = vsub.f32 %v5788, %v8658
        %v8660 = vand.u32 %v8659, 4294901760
        %8661 = vmatmul.f32.gmra.mxu0 %v8660
        %v8662 = vpop.f32.mrf.mxu0
        %v8663 = vadd.f32 %v8371, %v8662
        %v8664 = vand.u32 %v5791, 4294901760
        %v8665 = vsub.f32 %v5791, %v8664
        %v8666 = vand.u32 %v8665, 4294901760
        %8667 = vmatmul.f32.gmra.mxu0 %v8666
        %v8668 = vpop.f32.mrf.mxu0
        %v8669 = vadd.f32 %v8376, %v8668
        %v8670 = vand.u32 %v5794, 4294901760
        %v8671 = vsub.f32 %v5794, %v8670
        %v8672 = vand.u32 %v8671, 4294901760
        %8673 = vmatmul.f32.gmra.mxu0 %v8672
        %v8674 = vpop.f32.mrf.mxu0
        %v8675 = vadd.f32 %v8381, %v8674
        %v8676 = vand.u32 %v5797, 4294901760
        %v8677 = vsub.f32 %v5797, %v8676
        %v8678 = vand.u32 %v8677, 4294901760
        %8679 = vmatmul.f32.gmra.mxu0 %v8678
        %v8680 = vpop.f32.mrf.mxu0
        %v8681 = vadd.f32 %v8386, %v8680
        %v8682 = vand.u32 %v5800, 4294901760
        %v8683 = vsub.f32 %v5800, %v8682
        %v8684 = vand.u32 %v8683, 4294901760
        %8685 = vmatmul.f32.gmra.mxu0 %v8684
        %v8686 = vpop.f32.mrf.mxu0
        %v8687 = vadd.f32 %v8391, %v8686
        %v8688 = vand.u32 %v5803, 4294901760
        %v8689 = vsub.f32 %v5803, %v8688
        %v8690 = vand.u32 %v8689, 4294901760
        %8691 = vmatmul.f32.gmra.mxu0 %v8690
        %v8692 = vpop.f32.mrf.mxu0
        %v8693 = vadd.f32 %v8396, %v8692
        %v8694 = vand.u32 %v5806, 4294901760
        %v8695 = vsub.f32 %v5806, %v8694
        %v8696 = vand.u32 %v8695, 4294901760
        %8697 = vmatmul.f32.gmra.mxu0 %v8696
        %v8698 = vpop.f32.mrf.mxu0
        %v8699 = vadd.f32 %v8401, %v8698
        %v8700 = vand.u32 %v5809, 4294901760
        %v8701 = vsub.f32 %v5809, %v8700
        %v8702 = vand.u32 %v8701, 4294901760
        %8703 = vmatmul.f32.gmra.mxu0 %v8702
        %v8704 = vpop.f32.mrf.mxu0
        %v8705 = vadd.f32 %v8406, %v8704
        %v8706 = vand.u32 %v5812, 4294901760
        %v8707 = vsub.f32 %v5812, %v8706
        %v8708 = vand.u32 %v8707, 4294901760
        %8709 = vmatmul.f32.gmra.mxu0 %v8708
        %v8710 = vpop.f32.mrf.mxu0
        %v8711 = vadd.f32 %v8411, %v8710
        %v8712 = vand.u32 %v5815, 4294901760
        %v8713 = vsub.f32 %v5815, %v8712
        %v8714 = vand.u32 %v8713, 4294901760
        %8715 = vmatmul.f32.gmra.mxu0 %v8714
        %v8716 = vpop.f32.mrf.mxu0
        %v8717 = vadd.f32 %v8416, %v8716
        %v8718 = vand.u32 %v5818, 4294901760
        %v8719 = vsub.f32 %v5818, %v8718
        %v8720 = vand.u32 %v8719, 4294901760
        %8721 = vmatmul.f32.gmra.mxu0 %v8720
        %v8722 = vpop.f32.mrf.mxu0
        %v8723 = vadd.f32 %v8421, %v8722
        %v8724 = vand.u32 %v5821, 4294901760
        %v8725 = vsub.f32 %v5821, %v8724
        %v8726 = vand.u32 %v8725, 4294901760
        %8727 = vmatmul.f32.gmra.mxu0 %v8726
        %v8728 = vpop.f32.mrf.mxu0
        %v8729 = vadd.f32 %v8426, %v8728
        %v8730 = vand.u32 %v5824, 4294901760
        %v8731 = vsub.f32 %v5824, %v8730
        %v8732 = vand.u32 %v8731, 4294901760
        %8733 = vmatmul.f32.gmra.mxu0 %v8732
        %v8734 = vpop.f32.mrf.mxu0
        %v8735 = vadd.f32 %v8431, %v8734
        %v8736 = vand.u32 %v5827, 4294901760
        %v8737 = vsub.f32 %v5827, %v8736
        %v8738 = vand.u32 %v8737, 4294901760
        %8739 = vmatmul.f32.gmra.mxu0 %v8738
        %v8740 = vpop.f32.mrf.mxu0
        %v8741 = vadd.f32 %v8436, %v8740
        %v8742 = vand.u32 %v5830, 4294901760
        %v8743 = vsub.f32 %v5830, %v8742
        %v8744 = vand.u32 %v8743, 4294901760
        %8745 = vmatmul.f32.gmra.mxu0 %v8744
        %v8746 = vpop.f32.mrf.mxu0
        %v8747 = vadd.f32 %v8441, %v8746
        %v8748 = vand.u32 %v5833, 4294901760
        %v8749 = vsub.f32 %v5833, %v8748
        %v8750 = vand.u32 %v8749, 4294901760
        %8751 = vmatmul.f32.gmra.mxu0 %v8750
        %v8752 = vpop.f32.mrf.mxu0
        %v8753 = vadd.f32 %v8446, %v8752
        %v8754 = vand.u32 %v5836, 4294901760
        %v8755 = vsub.f32 %v5836, %v8754
        %v8756 = vand.u32 %v8755, 4294901760
        %8757 = vmatmul.f32.gmra.mxu0 %v8756
        %v8758 = vpop.f32.mrf.mxu0
        %v8759 = vadd.f32 %v8451, %v8758
        %v8760 = vand.u32 %v5839, 4294901760
        %v8761 = vsub.f32 %v5839, %v8760
        %v8762 = vand.u32 %v8761, 4294901760
        %8763 = vmatmul.f32.gmra.mxu0 %v8762
        %v8764 = vpop.f32.mrf.mxu0
        %v8765 = vadd.f32 %v8456, %v8764
        %v8766 = vand.u32 %v5842, 4294901760
        %v8767 = vsub.f32 %v5842, %v8766
        %v8768 = vand.u32 %v8767, 4294901760
        %8769 = vmatmul.f32.gmra.mxu0 %v8768
        %v8770 = vpop.f32.mrf.mxu0
        %v8771 = vadd.f32 %v8461, %v8770
        %v8772 = vand.u32 %v5845, 4294901760
        %v8773 = vsub.f32 %v5845, %v8772
        %v8774 = vand.u32 %v8773, 4294901760
        %8775 = vmatmul.f32.gmra.mxu0 %v8774
        %v8776 = vpop.f32.mrf.mxu0
        %v8777 = vadd.f32 %v8466, %v8776
        %v8778 = vand.u32 %v5848, 4294901760
        %v8779 = vsub.f32 %v5848, %v8778
        %v8780 = vand.u32 %v8779, 4294901760
        %8781 = vmatmul.f32.gmra.mxu0 %v8780
        %v8782 = vpop.f32.mrf.mxu0
        %v8783 = vadd.f32 %v8471, %v8782
        %v8784 = vand.u32 %v5851, 4294901760
        %v8785 = vsub.f32 %v5851, %v8784
        %v8786 = vand.u32 %v8785, 4294901760
        %8787 = vmatmul.f32.gmra.mxu0 %v8786
        %v8788 = vpop.f32.mrf.mxu0
        %v8789 = vadd.f32 %v8476, %v8788
        %8790 = vdwg.mxu0
        %8791 = vmatpush.msra.mxu0 0.0
        %8792 = vmatpush.msra.mxu0 0.0
        %8793 = vmatpush.msra.mxu0 0.0
        %8794 = vmatpush.msra.mxu0 0.0
        %8795 = vmatpush.msra.mxu0 0.0
        %8796 = vmatpush.msra.mxu0 0.0
        %8797 = vmatpush.msra.mxu0 0.0
        %8798 = vmatpush.msra.mxu0 0.0
        %v8799 = vand.u32 %v5707, 4294901760
        %v8800 = vsub.f32 %v5707, %v8799
        %v8801 = vand.u32 %v8800, 4294901760
        %8802 = vmatpush.msra.mxu0 %v8801
        %v8803 = vand.u32 %v5704, 4294901760
        %v8804 = vsub.f32 %v5704, %v8803
        %v8805 = vand.u32 %v8804, 4294901760
        %8806 = vmatpush.msra.mxu0 %v8805
        %v8807 = vand.u32 %v5701, 4294901760
        %v8808 = vsub.f32 %v5701, %v8807
        %v8809 = vand.u32 %v8808, 4294901760
        %8810 = vmatpush.msra.mxu0 %v8809
        %v8811 = vand.u32 %v5698, 4294901760
        %v8812 = vsub.f32 %v5698, %v8811
        %v8813 = vand.u32 %v8812, 4294901760
        %8814 = vmatpush.msra.mxu0 %v8813
        %v8815 = vand.u32 %v5695, 4294901760
        %v8816 = vsub.f32 %v5695, %v8815
        %v8817 = vand.u32 %v8816, 4294901760
        %8818 = vmatpush.msra.mxu0 %v8817
        %v8819 = vand.u32 %v5692, 4294901760
        %v8820 = vsub.f32 %v5692, %v8819
        %v8821 = vand.u32 %v8820, 4294901760
        %8822 = vmatpush.msra.mxu0 %v8821
        %v8823 = vand.u32 %v5689, 4294901760
        %v8824 = vsub.f32 %v5689, %v8823
        %v8825 = vand.u32 %v8824, 4294901760
        %8826 = vmatpush.msra.mxu0 %v8825
        %v8827 = vand.u32 %v5686, 4294901760
        %v8828 = vsub.f32 %v5686, %v8827
        %v8829 = vand.u32 %v8828, 4294901760
        %8830 = vmatpush.msra.mxu0 %v8829
        %v8831 = vand.u32 %v5710, 4294901760
        %8832 = vmatmul.f32.gmra.mxu0 %v8831
        %v8833 = vpop.f32.mrf.mxu0
        %v8834 = vadd.f32 %v8507, %v8833
        %v8835 = vand.u32 %v5713, 4294901760
        %8836 = vmatmul.f32.gmra.mxu0 %v8835
        %v8837 = vpop.f32.mrf.mxu0
        %v8838 = vadd.f32 %v8513, %v8837
        %v8839 = vand.u32 %v5716, 4294901760
        %8840 = vmatmul.f32.gmra.mxu0 %v8839
        %v8841 = vpop.f32.mrf.mxu0
        %v8842 = vadd.f32 %v8519, %v8841
        %v8843 = vand.u32 %v5719, 4294901760
        %8844 = vmatmul.f32.gmra.mxu0 %v8843
        %v8845 = vpop.f32.mrf.mxu0
        %v8846 = vadd.f32 %v8525, %v8845
        %v8847 = vand.u32 %v5722, 4294901760
        %8848 = vmatmul.f32.gmra.mxu0 %v8847
        %v8849 = vpop.f32.mrf.mxu0
        %v8850 = vadd.f32 %v8531, %v8849
        %v8851 = vand.u32 %v5725, 4294901760
        %8852 = vmatmul.f32.gmra.mxu0 %v8851
        %v8853 = vpop.f32.mrf.mxu0
        %v8854 = vadd.f32 %v8537, %v8853
        %v8855 = vand.u32 %v5728, 4294901760
        %8856 = vmatmul.f32.gmra.mxu0 %v8855
        %v8857 = vpop.f32.mrf.mxu0
        %v8858 = vadd.f32 %v8543, %v8857
        %v8859 = vand.u32 %v5731, 4294901760
        %8860 = vmatmul.f32.gmra.mxu0 %v8859
        %v8861 = vpop.f32.mrf.mxu0
        %v8862 = vadd.f32 %v8549, %v8861
        %v8863 = vand.u32 %v5734, 4294901760
        %8864 = vmatmul.f32.gmra.mxu0 %v8863
        %v8865 = vpop.f32.mrf.mxu0
        %v8866 = vadd.f32 %v8555, %v8865
        %v8867 = vand.u32 %v5737, 4294901760
        %8868 = vmatmul.f32.gmra.mxu0 %v8867
        %v8869 = vpop.f32.mrf.mxu0
        %v8870 = vadd.f32 %v8561, %v8869
        %v8871 = vand.u32 %v5740, 4294901760
        %8872 = vmatmul.f32.gmra.mxu0 %v8871
        %v8873 = vpop.f32.mrf.mxu0
        %v8874 = vadd.f32 %v8567, %v8873
        %v8875 = vand.u32 %v5743, 4294901760
        %8876 = vmatmul.f32.gmra.mxu0 %v8875
        %v8877 = vpop.f32.mrf.mxu0
        %v8878 = vadd.f32 %v8573, %v8877
        %v8879 = vand.u32 %v5746, 4294901760
        %8880 = vmatmul.f32.gmra.mxu0 %v8879
        %v8881 = vpop.f32.mrf.mxu0
        %v8882 = vadd.f32 %v8579, %v8881
        %v8883 = vand.u32 %v5749, 4294901760
        %8884 = vmatmul.f32.gmra.mxu0 %v8883
        %v8885 = vpop.f32.mrf.mxu0
        %v8886 = vadd.f32 %v8585, %v8885
        %v8887 = vand.u32 %v5752, 4294901760
        %8888 = vmatmul.f32.gmra.mxu0 %v8887
        %v8889 = vpop.f32.mrf.mxu0
        %v8890 = vadd.f32 %v8591, %v8889
        %v8891 = vand.u32 %v5755, 4294901760
        %8892 = vmatmul.f32.gmra.mxu0 %v8891
        %v8893 = vpop.f32.mrf.mxu0
        %v8894 = vadd.f32 %v8597, %v8893
        %v8895 = vand.u32 %v5758, 4294901760
        %8896 = vmatmul.f32.gmra.mxu0 %v8895
        %v8897 = vpop.f32.mrf.mxu0
        %v8898 = vadd.f32 %v8603, %v8897
        %v8899 = vand.u32 %v5761, 4294901760
        %8900 = vmatmul.f32.gmra.mxu0 %v8899
        %v8901 = vpop.f32.mrf.mxu0
        %v8902 = vadd.f32 %v8609, %v8901
        %v8903 = vand.u32 %v5764, 4294901760
        %8904 = vmatmul.f32.gmra.mxu0 %v8903
        %v8905 = vpop.f32.mrf.mxu0
        %v8906 = vadd.f32 %v8615, %v8905
        %v8907 = vand.u32 %v5767, 4294901760
        %8908 = vmatmul.f32.gmra.mxu0 %v8907
        %v8909 = vpop.f32.mrf.mxu0
        %v8910 = vadd.f32 %v8621, %v8909
        %v8911 = vand.u32 %v5770, 4294901760
        %8912 = vmatmul.f32.gmra.mxu0 %v8911
        %v8913 = vpop.f32.mrf.mxu0
        %v8914 = vadd.f32 %v8627, %v8913
        %v8915 = vand.u32 %v5773, 4294901760
        %8916 = vmatmul.f32.gmra.mxu0 %v8915
        %v8917 = vpop.f32.mrf.mxu0
        %v8918 = vadd.f32 %v8633, %v8917
        %v8919 = vand.u32 %v5776, 4294901760
        %8920 = vmatmul.f32.gmra.mxu0 %v8919
        %v8921 = vpop.f32.mrf.mxu0
        %v8922 = vadd.f32 %v8639, %v8921
        %v8923 = vand.u32 %v5779, 4294901760
        %8924 = vmatmul.f32.gmra.mxu0 %v8923
        %v8925 = vpop.f32.mrf.mxu0
        %v8926 = vadd.f32 %v8645, %v8925
        %v8927 = vand.u32 %v5782, 4294901760
        %8928 = vmatmul.f32.gmra.mxu0 %v8927
        %v8929 = vpop.f32.mrf.mxu0
        %v8930 = vadd.f32 %v8651, %v8929
        %v8931 = vand.u32 %v5785, 4294901760
        %8932 = vmatmul.f32.gmra.mxu0 %v8931
        %v8933 = vpop.f32.mrf.mxu0
        %v8934 = vadd.f32 %v8657, %v8933
        %v8935 = vand.u32 %v5788, 4294901760
        %8936 = vmatmul.f32.gmra.mxu0 %v8935
        %v8937 = vpop.f32.mrf.mxu0
        %v8938 = vadd.f32 %v8663, %v8937
        %v8939 = vand.u32 %v5791, 4294901760
        %8940 = vmatmul.f32.gmra.mxu0 %v8939
        %v8941 = vpop.f32.mrf.mxu0
        %v8942 = vadd.f32 %v8669, %v8941
        %v8943 = vand.u32 %v5794, 4294901760
        %8944 = vmatmul.f32.gmra.mxu0 %v8943
        %v8945 = vpop.f32.mrf.mxu0
        %v8946 = vadd.f32 %v8675, %v8945
        %v8947 = vand.u32 %v5797, 4294901760
        %8948 = vmatmul.f32.gmra.mxu0 %v8947
        %v8949 = vpop.f32.mrf.mxu0
        %v8950 = vadd.f32 %v8681, %v8949
        %v8951 = vand.u32 %v5800, 4294901760
        %8952 = vmatmul.f32.gmra.mxu0 %v8951
        %v8953 = vpop.f32.mrf.mxu0
        %v8954 = vadd.f32 %v8687, %v8953
        %v8955 = vand.u32 %v5803, 4294901760
        %8956 = vmatmul.f32.gmra.mxu0 %v8955
        %v8957 = vpop.f32.mrf.mxu0
        %v8958 = vadd.f32 %v8693, %v8957
        %v8959 = vand.u32 %v5806, 4294901760
        %8960 = vmatmul.f32.gmra.mxu0 %v8959
        %v8961 = vpop.f32.mrf.mxu0
        %v8962 = vadd.f32 %v8699, %v8961
        %v8963 = vand.u32 %v5809, 4294901760
        %8964 = vmatmul.f32.gmra.mxu0 %v8963
        %v8965 = vpop.f32.mrf.mxu0
        %v8966 = vadd.f32 %v8705, %v8965
        %v8967 = vand.u32 %v5812, 4294901760
        %8968 = vmatmul.f32.gmra.mxu0 %v8967
        %v8969 = vpop.f32.mrf.mxu0
        %v8970 = vadd.f32 %v8711, %v8969
        %v8971 = vand.u32 %v5815, 4294901760
        %8972 = vmatmul.f32.gmra.mxu0 %v8971
        %v8973 = vpop.f32.mrf.mxu0
        %v8974 = vadd.f32 %v8717, %v8973
        %v8975 = vand.u32 %v5818, 4294901760
        %8976 = vmatmul.f32.gmra.mxu0 %v8975
        %v8977 = vpop.f32.mrf.mxu0
        %v8978 = vadd.f32 %v8723, %v8977
        %v8979 = vand.u32 %v5821, 4294901760
        %8980 = vmatmul.f32.gmra.mxu0 %v8979
        %v8981 = vpop.f32.mrf.mxu0
        %v8982 = vadd.f32 %v8729, %v8981
        %v8983 = vand.u32 %v5824, 4294901760
        %8984 = vmatmul.f32.gmra.mxu0 %v8983
        %v8985 = vpop.f32.mrf.mxu0
        %v8986 = vadd.f32 %v8735, %v8985
        %v8987 = vand.u32 %v5827, 4294901760
        %8988 = vmatmul.f32.gmra.mxu0 %v8987
        %v8989 = vpop.f32.mrf.mxu0
        %v8990 = vadd.f32 %v8741, %v8989
        %v8991 = vand.u32 %v5830, 4294901760
        %8992 = vmatmul.f32.gmra.mxu0 %v8991
        %v8993 = vpop.f32.mrf.mxu0
        %v8994 = vadd.f32 %v8747, %v8993
        %v8995 = vand.u32 %v5833, 4294901760
        %8996 = vmatmul.f32.gmra.mxu0 %v8995
        %v8997 = vpop.f32.mrf.mxu0
        %v8998 = vadd.f32 %v8753, %v8997
        %v8999 = vand.u32 %v5836, 4294901760
        %9000 = vmatmul.f32.gmra.mxu0 %v8999
        %v9001 = vpop.f32.mrf.mxu0
        %v9002 = vadd.f32 %v8759, %v9001
        %v9003 = vand.u32 %v5839, 4294901760
        %9004 = vmatmul.f32.gmra.mxu0 %v9003
        %v9005 = vpop.f32.mrf.mxu0
        %v9006 = vadd.f32 %v8765, %v9005
        %v9007 = vand.u32 %v5842, 4294901760
        %9008 = vmatmul.f32.gmra.mxu0 %v9007
        %v9009 = vpop.f32.mrf.mxu0
        %v9010 = vadd.f32 %v8771, %v9009
        %v9011 = vand.u32 %v5845, 4294901760
        %9012 = vmatmul.f32.gmra.mxu0 %v9011
        %v9013 = vpop.f32.mrf.mxu0
        %v9014 = vadd.f32 %v8777, %v9013
        %v9015 = vand.u32 %v5848, 4294901760
        %9016 = vmatmul.f32.gmra.mxu0 %v9015
        %v9017 = vpop.f32.mrf.mxu0
        %v9018 = vadd.f32 %v8783, %v9017
        %v9019 = vand.u32 %v5851, 4294901760
        %9020 = vmatmul.f32.gmra.mxu0 %v9019
        %v9021 = vpop.f32.mrf.mxu0
        %v9022 = vadd.f32 %v8789, %v9021
        %9023 = vdwg.mxu0
        %9024 = vmatpush.msra.mxu0 0.0
        %9025 = vmatpush.msra.mxu0 0.0
        %9026 = vmatpush.msra.mxu0 0.0
        %9027 = vmatpush.msra.mxu0 0.0
        %9028 = vmatpush.msra.mxu0 0.0
        %9029 = vmatpush.msra.mxu0 0.0
        %9030 = vmatpush.msra.mxu0 0.0
        %9031 = vmatpush.msra.mxu0 0.0
        %v9032 = vand.u32 %v5707, 4294901760
        %9033 = vmatpush.msra.mxu0 %v9032
        %v9034 = vand.u32 %v5704, 4294901760
        %9035 = vmatpush.msra.mxu0 %v9034
        %v9036 = vand.u32 %v5701, 4294901760
        %9037 = vmatpush.msra.mxu0 %v9036
        %v9038 = vand.u32 %v5698, 4294901760
        %9039 = vmatpush.msra.mxu0 %v9038
        %v9040 = vand.u32 %v5695, 4294901760
        %9041 = vmatpush.msra.mxu0 %v9040
        %v9042 = vand.u32 %v5692, 4294901760
        %9043 = vmatpush.msra.mxu0 %v9042
        %v9044 = vand.u32 %v5689, 4294901760
        %9045 = vmatpush.msra.mxu0 %v9044
        %v9046 = vand.u32 %v5686, 4294901760
        %9047 = vmatpush.msra.mxu0 %v9046
        %v9048 = vand.u32 %v5710, 4294901760
        %9049 = vmatmul.f32.gmra.mxu0 %v9048
        %v9050 = vpop.f32.mrf.mxu0
        %v9051 = vadd.f32 %v8834, %v9050
        %v9052 = vand.u32 %v5713, 4294901760
        %9053 = vmatmul.f32.gmra.mxu0 %v9052
        %v9054 = vpop.f32.mrf.mxu0
        %v9055 = vadd.f32 %v8838, %v9054
        %v9056 = vand.u32 %v5716, 4294901760
        %9057 = vmatmul.f32.gmra.mxu0 %v9056
        %v9058 = vpop.f32.mrf.mxu0
        %v9059 = vadd.f32 %v8842, %v9058
        %v9060 = vand.u32 %v5719, 4294901760
        %9061 = vmatmul.f32.gmra.mxu0 %v9060
        %v9062 = vpop.f32.mrf.mxu0
        %v9063 = vadd.f32 %v8846, %v9062
        %v9064 = vand.u32 %v5722, 4294901760
        %9065 = vmatmul.f32.gmra.mxu0 %v9064
        %v9066 = vpop.f32.mrf.mxu0
        %v9067 = vadd.f32 %v8850, %v9066
        %v9068 = vand.u32 %v5725, 4294901760
        %9069 = vmatmul.f32.gmra.mxu0 %v9068
        %v9070 = vpop.f32.mrf.mxu0
        %v9071 = vadd.f32 %v8854, %v9070
        %v9072 = vand.u32 %v5728, 4294901760
        %9073 = vmatmul.f32.gmra.mxu0 %v9072
        %v9074 = vpop.f32.mrf.mxu0
        %v9075 = vadd.f32 %v8858, %v9074
        %v9076 = vand.u32 %v5731, 4294901760
        %9077 = vmatmul.f32.gmra.mxu0 %v9076
        %v9078 = vpop.f32.mrf.mxu0
        %v9079 = vadd.f32 %v8862, %v9078
        %v9080 = vand.u32 %v5734, 4294901760
        %9081 = vmatmul.f32.gmra.mxu0 %v9080
        %v9082 = vpop.f32.mrf.mxu0
        %v9083 = vadd.f32 %v8866, %v9082
        %v9084 = vand.u32 %v5737, 4294901760
        %9085 = vmatmul.f32.gmra.mxu0 %v9084
        %v9086 = vpop.f32.mrf.mxu0
        %v9087 = vadd.f32 %v8870, %v9086
        %v9088 = vand.u32 %v5740, 4294901760
        %9089 = vmatmul.f32.gmra.mxu0 %v9088
        %v9090 = vpop.f32.mrf.mxu0
        %v9091 = vadd.f32 %v8874, %v9090
        %v9092 = vand.u32 %v5743, 4294901760
        %9093 = vmatmul.f32.gmra.mxu0 %v9092
        %v9094 = vpop.f32.mrf.mxu0
        %v9095 = vadd.f32 %v8878, %v9094
        %v9096 = vand.u32 %v5746, 4294901760
        %9097 = vmatmul.f32.gmra.mxu0 %v9096
        %v9098 = vpop.f32.mrf.mxu0
        %v9099 = vadd.f32 %v8882, %v9098
        %v9100 = vand.u32 %v5749, 4294901760
        %9101 = vmatmul.f32.gmra.mxu0 %v9100
        %v9102 = vpop.f32.mrf.mxu0
        %v9103 = vadd.f32 %v8886, %v9102
        %v9104 = vand.u32 %v5752, 4294901760
        %9105 = vmatmul.f32.gmra.mxu0 %v9104
        %v9106 = vpop.f32.mrf.mxu0
        %v9107 = vadd.f32 %v8890, %v9106
        %v9108 = vand.u32 %v5755, 4294901760
        %9109 = vmatmul.f32.gmra.mxu0 %v9108
        %v9110 = vpop.f32.mrf.mxu0
        %v9111 = vadd.f32 %v8894, %v9110
        %v9112 = vand.u32 %v5758, 4294901760
        %9113 = vmatmul.f32.gmra.mxu0 %v9112
        %v9114 = vpop.f32.mrf.mxu0
        %v9115 = vadd.f32 %v8898, %v9114
        %v9116 = vand.u32 %v5761, 4294901760
        %9117 = vmatmul.f32.gmra.mxu0 %v9116
        %v9118 = vpop.f32.mrf.mxu0
        %v9119 = vadd.f32 %v8902, %v9118
        %v9120 = vand.u32 %v5764, 4294901760
        %9121 = vmatmul.f32.gmra.mxu0 %v9120
        %v9122 = vpop.f32.mrf.mxu0
        %v9123 = vadd.f32 %v8906, %v9122
        %v9124 = vand.u32 %v5767, 4294901760
        %9125 = vmatmul.f32.gmra.mxu0 %v9124
        %v9126 = vpop.f32.mrf.mxu0
        %v9127 = vadd.f32 %v8910, %v9126
        %v9128 = vand.u32 %v5770, 4294901760
        %9129 = vmatmul.f32.gmra.mxu0 %v9128
        %v9130 = vpop.f32.mrf.mxu0
        %v9131 = vadd.f32 %v8914, %v9130
        %v9132 = vand.u32 %v5773, 4294901760
        %9133 = vmatmul.f32.gmra.mxu0 %v9132
        %v9134 = vpop.f32.mrf.mxu0
        %v9135 = vadd.f32 %v8918, %v9134
        %v9136 = vand.u32 %v5776, 4294901760
        %9137 = vmatmul.f32.gmra.mxu0 %v9136
        %v9138 = vpop.f32.mrf.mxu0
        %v9139 = vadd.f32 %v8922, %v9138
        %v9140 = vand.u32 %v5779, 4294901760
        %9141 = vmatmul.f32.gmra.mxu0 %v9140
        %v9142 = vpop.f32.mrf.mxu0
        %v9143 = vadd.f32 %v8926, %v9142
        %v9144 = vand.u32 %v5782, 4294901760
        %9145 = vmatmul.f32.gmra.mxu0 %v9144
        %v9146 = vpop.f32.mrf.mxu0
        %v9147 = vadd.f32 %v8930, %v9146
        %v9148 = vand.u32 %v5785, 4294901760
        %9149 = vmatmul.f32.gmra.mxu0 %v9148
        %v9150 = vpop.f32.mrf.mxu0
        %v9151 = vadd.f32 %v8934, %v9150
        %v9152 = vand.u32 %v5788, 4294901760
        %9153 = vmatmul.f32.gmra.mxu0 %v9152
        %v9154 = vpop.f32.mrf.mxu0
        %v9155 = vadd.f32 %v8938, %v9154
        %v9156 = vand.u32 %v5791, 4294901760
        %9157 = vmatmul.f32.gmra.mxu0 %v9156
        %v9158 = vpop.f32.mrf.mxu0
        %v9159 = vadd.f32 %v8942, %v9158
        %v9160 = vand.u32 %v5794, 4294901760
        %9161 = vmatmul.f32.gmra.mxu0 %v9160
        %v9162 = vpop.f32.mrf.mxu0
        %v9163 = vadd.f32 %v8946, %v9162
        %v9164 = vand.u32 %v5797, 4294901760
        %9165 = vmatmul.f32.gmra.mxu0 %v9164
        %v9166 = vpop.f32.mrf.mxu0
        %v9167 = vadd.f32 %v8950, %v9166
        %v9168 = vand.u32 %v5800, 4294901760
        %9169 = vmatmul.f32.gmra.mxu0 %v9168
        %v9170 = vpop.f32.mrf.mxu0
        %v9171 = vadd.f32 %v8954, %v9170
        %v9172 = vand.u32 %v5803, 4294901760
        %9173 = vmatmul.f32.gmra.mxu0 %v9172
        %v9174 = vpop.f32.mrf.mxu0
        %v9175 = vadd.f32 %v8958, %v9174
        %v9176 = vand.u32 %v5806, 4294901760
        %9177 = vmatmul.f32.gmra.mxu0 %v9176
        %v9178 = vpop.f32.mrf.mxu0
        %v9179 = vadd.f32 %v8962, %v9178
        %v9180 = vand.u32 %v5809, 4294901760
        %9181 = vmatmul.f32.gmra.mxu0 %v9180
        %v9182 = vpop.f32.mrf.mxu0
        %v9183 = vadd.f32 %v8966, %v9182
        %v9184 = vand.u32 %v5812, 4294901760
        %9185 = vmatmul.f32.gmra.mxu0 %v9184
        %v9186 = vpop.f32.mrf.mxu0
        %v9187 = vadd.f32 %v8970, %v9186
        %v9188 = vand.u32 %v5815, 4294901760
        %9189 = vmatmul.f32.gmra.mxu0 %v9188
        %v9190 = vpop.f32.mrf.mxu0
        %v9191 = vadd.f32 %v8974, %v9190
        %v9192 = vand.u32 %v5818, 4294901760
        %9193 = vmatmul.f32.gmra.mxu0 %v9192
        %v9194 = vpop.f32.mrf.mxu0
        %v9195 = vadd.f32 %v8978, %v9194
        %v9196 = vand.u32 %v5821, 4294901760
        %9197 = vmatmul.f32.gmra.mxu0 %v9196
        %v9198 = vpop.f32.mrf.mxu0
        %v9199 = vadd.f32 %v8982, %v9198
        %v9200 = vand.u32 %v5824, 4294901760
        %9201 = vmatmul.f32.gmra.mxu0 %v9200
        %v9202 = vpop.f32.mrf.mxu0
        %v9203 = vadd.f32 %v8986, %v9202
        %v9204 = vand.u32 %v5827, 4294901760
        %9205 = vmatmul.f32.gmra.mxu0 %v9204
        %v9206 = vpop.f32.mrf.mxu0
        %v9207 = vadd.f32 %v8990, %v9206
        %v9208 = vand.u32 %v5830, 4294901760
        %9209 = vmatmul.f32.gmra.mxu0 %v9208
        %v9210 = vpop.f32.mrf.mxu0
        %v9211 = vadd.f32 %v8994, %v9210
        %v9212 = vand.u32 %v5833, 4294901760
        %9213 = vmatmul.f32.gmra.mxu0 %v9212
        %v9214 = vpop.f32.mrf.mxu0
        %v9215 = vadd.f32 %v8998, %v9214
        %v9216 = vand.u32 %v5836, 4294901760
        %9217 = vmatmul.f32.gmra.mxu0 %v9216
        %v9218 = vpop.f32.mrf.mxu0
        %v9219 = vadd.f32 %v9002, %v9218
        %v9220 = vand.u32 %v5839, 4294901760
        %9221 = vmatmul.f32.gmra.mxu0 %v9220
        %v9222 = vpop.f32.mrf.mxu0
        %v9223 = vadd.f32 %v9006, %v9222
        %v9224 = vand.u32 %v5842, 4294901760
        %9225 = vmatmul.f32.gmra.mxu0 %v9224
        %v9226 = vpop.f32.mrf.mxu0
        %v9227 = vadd.f32 %v9010, %v9226
        %v9228 = vand.u32 %v5845, 4294901760
        %9229 = vmatmul.f32.gmra.mxu0 %v9228
        %v9230 = vpop.f32.mrf.mxu0
        %v9231 = vadd.f32 %v9014, %v9230
        %v9232 = vand.u32 %v5848, 4294901760
        %9233 = vmatmul.f32.gmra.mxu0 %v9232
        %v9234 = vpop.f32.mrf.mxu0
        %v9235 = vadd.f32 %v9018, %v9234
        %v9236 = vand.u32 %v5851, 4294901760
        %9237 = vmatmul.f32.gmra.mxu0 %v9236
        %v9238 = vpop.f32.mrf.mxu0
        %v9239 = vadd.f32 %v9022, %v9238
        %9240 = vdwg.mxu0
        %9241 = vmatpush.msra.mxu0 0.0
        %9242 = vmatpush.msra.mxu0 0.0
        %9243 = vmatpush.msra.mxu0 0.0
        %9244 = vmatpush.msra.mxu0 0.0
        %9245 = vmatpush.msra.mxu0 0.0
        %9246 = vmatpush.msra.mxu0 0.0
        %9247 = vmatpush.msra.mxu0 0.0
        %9248 = vmatpush.msra.mxu0 0.0
        %v9249 = vand.u32 %v5708, 4294901760
        %9250 = vmatpush.msra.mxu0 %v9249
        %v9251 = vand.u32 %v5705, 4294901760
        %9252 = vmatpush.msra.mxu0 %v9251
        %v9253 = vand.u32 %v5702, 4294901760
        %9254 = vmatpush.msra.mxu0 %v9253
        %v9255 = vand.u32 %v5699, 4294901760
        %9256 = vmatpush.msra.mxu0 %v9255
        %v9257 = vand.u32 %v5696, 4294901760
        %9258 = vmatpush.msra.mxu0 %v9257
        %v9259 = vand.u32 %v5693, 4294901760
        %9260 = vmatpush.msra.mxu0 %v9259
        %v9261 = vand.u32 %v5690, 4294901760
        %9262 = vmatpush.msra.mxu0 %v9261
        %v9263 = vand.u32 %v5687, 4294901760
        %9264 = vmatpush.msra.mxu0 %v9263
        %v9265 = vand.u32 %v5710, 4294901760
        %v9266 = vsub.f32 %v5710, %v9265
        %v9267 = vand.u32 %v9266, 4294901760
        %v9268 = vsub.f32 %v9266, %v9267
        %v9269 = vand.u32 %v9268, 4294901760
        %9270 = vmatmul.f32.gmra.mxu0 %v9269
        %v9271 = vpop.f32.mrf.mxu0
        %v9272 = vadd.f32 0.0, %v9271
        %v9273 = vand.u32 %v5713, 4294901760
        %v9274 = vsub.f32 %v5713, %v9273
        %v9275 = vand.u32 %v9274, 4294901760
        %v9276 = vsub.f32 %v9274, %v9275
        %v9277 = vand.u32 %v9276, 4294901760
        %9278 = vmatmul.f32.gmra.mxu0 %v9277
        %v9279 = vpop.f32.mrf.mxu0
        %v9280 = vadd.f32 0.0, %v9279
        %v9281 = vand.u32 %v5716, 4294901760
        %v9282 = vsub.f32 %v5716, %v9281
        %v9283 = vand.u32 %v9282, 4294901760
        %v9284 = vsub.f32 %v9282, %v9283
        %v9285 = vand.u32 %v9284, 4294901760
        %9286 = vmatmul.f32.gmra.mxu0 %v9285
        %v9287 = vpop.f32.mrf.mxu0
        %v9288 = vadd.f32 0.0, %v9287
        %v9289 = vand.u32 %v5719, 4294901760
        %v9290 = vsub.f32 %v5719, %v9289
        %v9291 = vand.u32 %v9290, 4294901760
        %v9292 = vsub.f32 %v9290, %v9291
        %v9293 = vand.u32 %v9292, 4294901760
        %9294 = vmatmul.f32.gmra.mxu0 %v9293
        %v9295 = vpop.f32.mrf.mxu0
        %v9296 = vadd.f32 0.0, %v9295
        %v9297 = vand.u32 %v5722, 4294901760
        %v9298 = vsub.f32 %v5722, %v9297
        %v9299 = vand.u32 %v9298, 4294901760
        %v9300 = vsub.f32 %v9298, %v9299
        %v9301 = vand.u32 %v9300, 4294901760
        %9302 = vmatmul.f32.gmra.mxu0 %v9301
        %v9303 = vpop.f32.mrf.mxu0
        %v9304 = vadd.f32 0.0, %v9303
        %v9305 = vand.u32 %v5725, 4294901760
        %v9306 = vsub.f32 %v5725, %v9305
        %v9307 = vand.u32 %v9306, 4294901760
        %v9308 = vsub.f32 %v9306, %v9307
        %v9309 = vand.u32 %v9308, 4294901760
        %9310 = vmatmul.f32.gmra.mxu0 %v9309
        %v9311 = vpop.f32.mrf.mxu0
        %v9312 = vadd.f32 0.0, %v9311
        %v9313 = vand.u32 %v5728, 4294901760
        %v9314 = vsub.f32 %v5728, %v9313
        %v9315 = vand.u32 %v9314, 4294901760
        %v9316 = vsub.f32 %v9314, %v9315
        %v9317 = vand.u32 %v9316, 4294901760
        %9318 = vmatmul.f32.gmra.mxu0 %v9317
        %v9319 = vpop.f32.mrf.mxu0
        %v9320 = vadd.f32 0.0, %v9319
        %v9321 = vand.u32 %v5731, 4294901760
        %v9322 = vsub.f32 %v5731, %v9321
        %v9323 = vand.u32 %v9322, 4294901760
        %v9324 = vsub.f32 %v9322, %v9323
        %v9325 = vand.u32 %v9324, 4294901760
        %9326 = vmatmul.f32.gmra.mxu0 %v9325
        %v9327 = vpop.f32.mrf.mxu0
        %v9328 = vadd.f32 0.0, %v9327
        %v9329 = vand.u32 %v5734, 4294901760
        %v9330 = vsub.f32 %v5734, %v9329
        %v9331 = vand.u32 %v9330, 4294901760
        %v9332 = vsub.f32 %v9330, %v9331
        %v9333 = vand.u32 %v9332, 4294901760
        %9334 = vmatmul.f32.gmra.mxu0 %v9333
        %v9335 = vpop.f32.mrf.mxu0
        %v9336 = vadd.f32 0.0, %v9335
        %v9337 = vand.u32 %v5737, 4294901760
        %v9338 = vsub.f32 %v5737, %v9337
        %v9339 = vand.u32 %v9338, 4294901760
        %v9340 = vsub.f32 %v9338, %v9339
        %v9341 = vand.u32 %v9340, 4294901760
        %9342 = vmatmul.f32.gmra.mxu0 %v9341
        %v9343 = vpop.f32.mrf.mxu0
        %v9344 = vadd.f32 0.0, %v9343
        %v9345 = vand.u32 %v5740, 4294901760
        %v9346 = vsub.f32 %v5740, %v9345
        %v9347 = vand.u32 %v9346, 4294901760
        %v9348 = vsub.f32 %v9346, %v9347
        %v9349 = vand.u32 %v9348, 4294901760
        %9350 = vmatmul.f32.gmra.mxu0 %v9349
        %v9351 = vpop.f32.mrf.mxu0
        %v9352 = vadd.f32 0.0, %v9351
        %v9353 = vand.u32 %v5743, 4294901760
        %v9354 = vsub.f32 %v5743, %v9353
        %v9355 = vand.u32 %v9354, 4294901760
        %v9356 = vsub.f32 %v9354, %v9355
        %v9357 = vand.u32 %v9356, 4294901760
        %9358 = vmatmul.f32.gmra.mxu0 %v9357
        %v9359 = vpop.f32.mrf.mxu0
        %v9360 = vadd.f32 0.0, %v9359
        %v9361 = vand.u32 %v5746, 4294901760
        %v9362 = vsub.f32 %v5746, %v9361
        %v9363 = vand.u32 %v9362, 4294901760
        %v9364 = vsub.f32 %v9362, %v9363
        %v9365 = vand.u32 %v9364, 4294901760
        %9366 = vmatmul.f32.gmra.mxu0 %v9365
        %v9367 = vpop.f32.mrf.mxu0
        %v9368 = vadd.f32 0.0, %v9367
        %v9369 = vand.u32 %v5749, 4294901760
        %v9370 = vsub.f32 %v5749, %v9369
        %v9371 = vand.u32 %v9370, 4294901760
        %v9372 = vsub.f32 %v9370, %v9371
        %v9373 = vand.u32 %v9372, 4294901760
        %9374 = vmatmul.f32.gmra.mxu0 %v9373
        %v9375 = vpop.f32.mrf.mxu0
        %v9376 = vadd.f32 0.0, %v9375
        %v9377 = vand.u32 %v5752, 4294901760
        %v9378 = vsub.f32 %v5752, %v9377
        %v9379 = vand.u32 %v9378, 4294901760
        %v9380 = vsub.f32 %v9378, %v9379
        %v9381 = vand.u32 %v9380, 4294901760
        %9382 = vmatmul.f32.gmra.mxu0 %v9381
        %v9383 = vpop.f32.mrf.mxu0
        %v9384 = vadd.f32 0.0, %v9383
        %v9385 = vand.u32 %v5755, 4294901760
        %v9386 = vsub.f32 %v5755, %v9385
        %v9387 = vand.u32 %v9386, 4294901760
        %v9388 = vsub.f32 %v9386, %v9387
        %v9389 = vand.u32 %v9388, 4294901760
        %9390 = vmatmul.f32.gmra.mxu0 %v9389
        %v9391 = vpop.f32.mrf.mxu0
        %v9392 = vadd.f32 0.0, %v9391
        %v9393 = vand.u32 %v5758, 4294901760
        %v9394 = vsub.f32 %v5758, %v9393
        %v9395 = vand.u32 %v9394, 4294901760
        %v9396 = vsub.f32 %v9394, %v9395
        %v9397 = vand.u32 %v9396, 4294901760
        %9398 = vmatmul.f32.gmra.mxu0 %v9397
        %v9399 = vpop.f32.mrf.mxu0
        %v9400 = vadd.f32 0.0, %v9399
        %v9401 = vand.u32 %v5761, 4294901760
        %v9402 = vsub.f32 %v5761, %v9401
        %v9403 = vand.u32 %v9402, 4294901760
        %v9404 = vsub.f32 %v9402, %v9403
        %v9405 = vand.u32 %v9404, 4294901760
        %9406 = vmatmul.f32.gmra.mxu0 %v9405
        %v9407 = vpop.f32.mrf.mxu0
        %v9408 = vadd.f32 0.0, %v9407
        %v9409 = vand.u32 %v5764, 4294901760
        %v9410 = vsub.f32 %v5764, %v9409
        %v9411 = vand.u32 %v9410, 4294901760
        %v9412 = vsub.f32 %v9410, %v9411
        %v9413 = vand.u32 %v9412, 4294901760
        %9414 = vmatmul.f32.gmra.mxu0 %v9413
        %v9415 = vpop.f32.mrf.mxu0
        %v9416 = vadd.f32 0.0, %v9415
        %v9417 = vand.u32 %v5767, 4294901760
        %v9418 = vsub.f32 %v5767, %v9417
        %v9419 = vand.u32 %v9418, 4294901760
        %v9420 = vsub.f32 %v9418, %v9419
        %v9421 = vand.u32 %v9420, 4294901760
        %9422 = vmatmul.f32.gmra.mxu0 %v9421
        %v9423 = vpop.f32.mrf.mxu0
        %v9424 = vadd.f32 0.0, %v9423
        %v9425 = vand.u32 %v5770, 4294901760
        %v9426 = vsub.f32 %v5770, %v9425
        %v9427 = vand.u32 %v9426, 4294901760
        %v9428 = vsub.f32 %v9426, %v9427
        %v9429 = vand.u32 %v9428, 4294901760
        %9430 = vmatmul.f32.gmra.mxu0 %v9429
        %v9431 = vpop.f32.mrf.mxu0
        %v9432 = vadd.f32 0.0, %v9431
        %v9433 = vand.u32 %v5773, 4294901760
        %v9434 = vsub.f32 %v5773, %v9433
        %v9435 = vand.u32 %v9434, 4294901760
        %v9436 = vsub.f32 %v9434, %v9435
        %v9437 = vand.u32 %v9436, 4294901760
        %9438 = vmatmul.f32.gmra.mxu0 %v9437
        %v9439 = vpop.f32.mrf.mxu0
        %v9440 = vadd.f32 0.0, %v9439
        %v9441 = vand.u32 %v5776, 4294901760
        %v9442 = vsub.f32 %v5776, %v9441
        %v9443 = vand.u32 %v9442, 4294901760
        %v9444 = vsub.f32 %v9442, %v9443
        %v9445 = vand.u32 %v9444, 4294901760
        %9446 = vmatmul.f32.gmra.mxu0 %v9445
        %v9447 = vpop.f32.mrf.mxu0
        %v9448 = vadd.f32 0.0, %v9447
        %v9449 = vand.u32 %v5779, 4294901760
        %v9450 = vsub.f32 %v5779, %v9449
        %v9451 = vand.u32 %v9450, 4294901760
        %v9452 = vsub.f32 %v9450, %v9451
        %v9453 = vand.u32 %v9452, 4294901760
        %9454 = vmatmul.f32.gmra.mxu0 %v9453
        %v9455 = vpop.f32.mrf.mxu0
        %v9456 = vadd.f32 0.0, %v9455
        %v9457 = vand.u32 %v5782, 4294901760
        %v9458 = vsub.f32 %v5782, %v9457
        %v9459 = vand.u32 %v9458, 4294901760
        %v9460 = vsub.f32 %v9458, %v9459
        %v9461 = vand.u32 %v9460, 4294901760
        %9462 = vmatmul.f32.gmra.mxu0 %v9461
        %v9463 = vpop.f32.mrf.mxu0
        %v9464 = vadd.f32 0.0, %v9463
        %v9465 = vand.u32 %v5785, 4294901760
        %v9466 = vsub.f32 %v5785, %v9465
        %v9467 = vand.u32 %v9466, 4294901760
        %v9468 = vsub.f32 %v9466, %v9467
        %v9469 = vand.u32 %v9468, 4294901760
        %9470 = vmatmul.f32.gmra.mxu0 %v9469
        %v9471 = vpop.f32.mrf.mxu0
        %v9472 = vadd.f32 0.0, %v9471
        %v9473 = vand.u32 %v5788, 4294901760
        %v9474 = vsub.f32 %v5788, %v9473
        %v9475 = vand.u32 %v9474, 4294901760
        %v9476 = vsub.f32 %v9474, %v9475
        %v9477 = vand.u32 %v9476, 4294901760
        %9478 = vmatmul.f32.gmra.mxu0 %v9477
        %v9479 = vpop.f32.mrf.mxu0
        %v9480 = vadd.f32 0.0, %v9479
        %v9481 = vand.u32 %v5791, 4294901760
        %v9482 = vsub.f32 %v5791, %v9481
        %v9483 = vand.u32 %v9482, 4294901760
        %v9484 = vsub.f32 %v9482, %v9483
        %v9485 = vand.u32 %v9484, 4294901760
        %9486 = vmatmul.f32.gmra.mxu0 %v9485
        %v9487 = vpop.f32.mrf.mxu0
        %v9488 = vadd.f32 0.0, %v9487
        %v9489 = vand.u32 %v5794, 4294901760
        %v9490 = vsub.f32 %v5794, %v9489
        %v9491 = vand.u32 %v9490, 4294901760
        %v9492 = vsub.f32 %v9490, %v9491
        %v9493 = vand.u32 %v9492, 4294901760
        %9494 = vmatmul.f32.gmra.mxu0 %v9493
        %v9495 = vpop.f32.mrf.mxu0
        %v9496 = vadd.f32 0.0, %v9495
        %v9497 = vand.u32 %v5797, 4294901760
        %v9498 = vsub.f32 %v5797, %v9497
        %v9499 = vand.u32 %v9498, 4294901760
        %v9500 = vsub.f32 %v9498, %v9499
        %v9501 = vand.u32 %v9500, 4294901760
        %9502 = vmatmul.f32.gmra.mxu0 %v9501
        %v9503 = vpop.f32.mrf.mxu0
        %v9504 = vadd.f32 0.0, %v9503
        %v9505 = vand.u32 %v5800, 4294901760
        %v9506 = vsub.f32 %v5800, %v9505
        %v9507 = vand.u32 %v9506, 4294901760
        %v9508 = vsub.f32 %v9506, %v9507
        %v9509 = vand.u32 %v9508, 4294901760
        %9510 = vmatmul.f32.gmra.mxu0 %v9509
        %v9511 = vpop.f32.mrf.mxu0
        %v9512 = vadd.f32 0.0, %v9511
        %v9513 = vand.u32 %v5803, 4294901760
        %v9514 = vsub.f32 %v5803, %v9513
        %v9515 = vand.u32 %v9514, 4294901760
        %v9516 = vsub.f32 %v9514, %v9515
        %v9517 = vand.u32 %v9516, 4294901760
        %9518 = vmatmul.f32.gmra.mxu0 %v9517
        %v9519 = vpop.f32.mrf.mxu0
        %v9520 = vadd.f32 0.0, %v9519
        %v9521 = vand.u32 %v5806, 4294901760
        %v9522 = vsub.f32 %v5806, %v9521
        %v9523 = vand.u32 %v9522, 4294901760
        %v9524 = vsub.f32 %v9522, %v9523
        %v9525 = vand.u32 %v9524, 4294901760
        %9526 = vmatmul.f32.gmra.mxu0 %v9525
        %v9527 = vpop.f32.mrf.mxu0
        %v9528 = vadd.f32 0.0, %v9527
        %v9529 = vand.u32 %v5809, 4294901760
        %v9530 = vsub.f32 %v5809, %v9529
        %v9531 = vand.u32 %v9530, 4294901760
        %v9532 = vsub.f32 %v9530, %v9531
        %v9533 = vand.u32 %v9532, 4294901760
        %9534 = vmatmul.f32.gmra.mxu0 %v9533
        %v9535 = vpop.f32.mrf.mxu0
        %v9536 = vadd.f32 0.0, %v9535
        %v9537 = vand.u32 %v5812, 4294901760
        %v9538 = vsub.f32 %v5812, %v9537
        %v9539 = vand.u32 %v9538, 4294901760
        %v9540 = vsub.f32 %v9538, %v9539
        %v9541 = vand.u32 %v9540, 4294901760
        %9542 = vmatmul.f32.gmra.mxu0 %v9541
        %v9543 = vpop.f32.mrf.mxu0
        %v9544 = vadd.f32 0.0, %v9543
        %v9545 = vand.u32 %v5815, 4294901760
        %v9546 = vsub.f32 %v5815, %v9545
        %v9547 = vand.u32 %v9546, 4294901760
        %v9548 = vsub.f32 %v9546, %v9547
        %v9549 = vand.u32 %v9548, 4294901760
        %9550 = vmatmul.f32.gmra.mxu0 %v9549
        %v9551 = vpop.f32.mrf.mxu0
        %v9552 = vadd.f32 0.0, %v9551
        %v9553 = vand.u32 %v5818, 4294901760
        %v9554 = vsub.f32 %v5818, %v9553
        %v9555 = vand.u32 %v9554, 4294901760
        %v9556 = vsub.f32 %v9554, %v9555
        %v9557 = vand.u32 %v9556, 4294901760
        %9558 = vmatmul.f32.gmra.mxu0 %v9557
        %v9559 = vpop.f32.mrf.mxu0
        %v9560 = vadd.f32 0.0, %v9559
        %v9561 = vand.u32 %v5821, 4294901760
        %v9562 = vsub.f32 %v5821, %v9561
        %v9563 = vand.u32 %v9562, 4294901760
        %v9564 = vsub.f32 %v9562, %v9563
        %v9565 = vand.u32 %v9564, 4294901760
        %9566 = vmatmul.f32.gmra.mxu0 %v9565
        %v9567 = vpop.f32.mrf.mxu0
        %v9568 = vadd.f32 0.0, %v9567
        %v9569 = vand.u32 %v5824, 4294901760
        %v9570 = vsub.f32 %v5824, %v9569
        %v9571 = vand.u32 %v9570, 4294901760
        %v9572 = vsub.f32 %v9570, %v9571
        %v9573 = vand.u32 %v9572, 4294901760
        %9574 = vmatmul.f32.gmra.mxu0 %v9573
        %v9575 = vpop.f32.mrf.mxu0
        %v9576 = vadd.f32 0.0, %v9575
        %v9577 = vand.u32 %v5827, 4294901760
        %v9578 = vsub.f32 %v5827, %v9577
        %v9579 = vand.u32 %v9578, 4294901760
        %v9580 = vsub.f32 %v9578, %v9579
        %v9581 = vand.u32 %v9580, 4294901760
        %9582 = vmatmul.f32.gmra.mxu0 %v9581
        %v9583 = vpop.f32.mrf.mxu0
        %v9584 = vadd.f32 0.0, %v9583
        %v9585 = vand.u32 %v5830, 4294901760
        %v9586 = vsub.f32 %v5830, %v9585
        %v9587 = vand.u32 %v9586, 4294901760
        %v9588 = vsub.f32 %v9586, %v9587
        %v9589 = vand.u32 %v9588, 4294901760
        %9590 = vmatmul.f32.gmra.mxu0 %v9589
        %v9591 = vpop.f32.mrf.mxu0
        %v9592 = vadd.f32 0.0, %v9591
        %v9593 = vand.u32 %v5833, 4294901760
        %v9594 = vsub.f32 %v5833, %v9593
        %v9595 = vand.u32 %v9594, 4294901760
        %v9596 = vsub.f32 %v9594, %v9595
        %v9597 = vand.u32 %v9596, 4294901760
        %9598 = vmatmul.f32.gmra.mxu0 %v9597
        %v9599 = vpop.f32.mrf.mxu0
        %v9600 = vadd.f32 0.0, %v9599
        %v9601 = vand.u32 %v5836, 4294901760
        %v9602 = vsub.f32 %v5836, %v9601
        %v9603 = vand.u32 %v9602, 4294901760
        %v9604 = vsub.f32 %v9602, %v9603
        %v9605 = vand.u32 %v9604, 4294901760
        %9606 = vmatmul.f32.gmra.mxu0 %v9605
        %v9607 = vpop.f32.mrf.mxu0
        %v9608 = vadd.f32 0.0, %v9607
        %v9609 = vand.u32 %v5839, 4294901760
        %v9610 = vsub.f32 %v5839, %v9609
        %v9611 = vand.u32 %v9610, 4294901760
        %v9612 = vsub.f32 %v9610, %v9611
        %v9613 = vand.u32 %v9612, 4294901760
        %9614 = vmatmul.f32.gmra.mxu0 %v9613
        %v9615 = vpop.f32.mrf.mxu0
        %v9616 = vadd.f32 0.0, %v9615
        %v9617 = vand.u32 %v5842, 4294901760
        %v9618 = vsub.f32 %v5842, %v9617
        %v9619 = vand.u32 %v9618, 4294901760
        %v9620 = vsub.f32 %v9618, %v9619
        %v9621 = vand.u32 %v9620, 4294901760
        %9622 = vmatmul.f32.gmra.mxu0 %v9621
        %v9623 = vpop.f32.mrf.mxu0
        %v9624 = vadd.f32 0.0, %v9623
        %v9625 = vand.u32 %v5845, 4294901760
        %v9626 = vsub.f32 %v5845, %v9625
        %v9627 = vand.u32 %v9626, 4294901760
        %v9628 = vsub.f32 %v9626, %v9627
        %v9629 = vand.u32 %v9628, 4294901760
        %9630 = vmatmul.f32.gmra.mxu0 %v9629
        %v9631 = vpop.f32.mrf.mxu0
        %v9632 = vadd.f32 0.0, %v9631
        %v9633 = vand.u32 %v5848, 4294901760
        %v9634 = vsub.f32 %v5848, %v9633
        %v9635 = vand.u32 %v9634, 4294901760
        %v9636 = vsub.f32 %v9634, %v9635
        %v9637 = vand.u32 %v9636, 4294901760
        %9638 = vmatmul.f32.gmra.mxu0 %v9637
        %v9639 = vpop.f32.mrf.mxu0
        %v9640 = vadd.f32 0.0, %v9639
        %v9641 = vand.u32 %v5851, 4294901760
        %v9642 = vsub.f32 %v5851, %v9641
        %v9643 = vand.u32 %v9642, 4294901760
        %v9644 = vsub.f32 %v9642, %v9643
        %v9645 = vand.u32 %v9644, 4294901760
        %9646 = vmatmul.f32.gmra.mxu0 %v9645
        %v9647 = vpop.f32.mrf.mxu0
        %v9648 = vadd.f32 0.0, %v9647
        %9649 = vdwg.mxu0
        %9650 = vmatpush.msra.mxu0 0.0
        %9651 = vmatpush.msra.mxu0 0.0
        %9652 = vmatpush.msra.mxu0 0.0
        %9653 = vmatpush.msra.mxu0 0.0
        %9654 = vmatpush.msra.mxu0 0.0
        %9655 = vmatpush.msra.mxu0 0.0
        %9656 = vmatpush.msra.mxu0 0.0
        %9657 = vmatpush.msra.mxu0 0.0
        %v9658 = vand.u32 %v5708, 4294901760
        %v9659 = vsub.f32 %v5708, %v9658
        %v9660 = vand.u32 %v9659, 4294901760
        %v9661 = vsub.f32 %v9659, %v9660
        %v9662 = vand.u32 %v9661, 4294901760
        %9663 = vmatpush.msra.mxu0 %v9662
        %v9664 = vand.u32 %v5705, 4294901760
        %v9665 = vsub.f32 %v5705, %v9664
        %v9666 = vand.u32 %v9665, 4294901760
        %v9667 = vsub.f32 %v9665, %v9666
        %v9668 = vand.u32 %v9667, 4294901760
        %9669 = vmatpush.msra.mxu0 %v9668
        %v9670 = vand.u32 %v5702, 4294901760
        %v9671 = vsub.f32 %v5702, %v9670
        %v9672 = vand.u32 %v9671, 4294901760
        %v9673 = vsub.f32 %v9671, %v9672
        %v9674 = vand.u32 %v9673, 4294901760
        %9675 = vmatpush.msra.mxu0 %v9674
        %v9676 = vand.u32 %v5699, 4294901760
        %v9677 = vsub.f32 %v5699, %v9676
        %v9678 = vand.u32 %v9677, 4294901760
        %v9679 = vsub.f32 %v9677, %v9678
        %v9680 = vand.u32 %v9679, 4294901760
        %9681 = vmatpush.msra.mxu0 %v9680
        %v9682 = vand.u32 %v5696, 4294901760
        %v9683 = vsub.f32 %v5696, %v9682
        %v9684 = vand.u32 %v9683, 4294901760
        %v9685 = vsub.f32 %v9683, %v9684
        %v9686 = vand.u32 %v9685, 4294901760
        %9687 = vmatpush.msra.mxu0 %v9686
        %v9688 = vand.u32 %v5693, 4294901760
        %v9689 = vsub.f32 %v5693, %v9688
        %v9690 = vand.u32 %v9689, 4294901760
        %v9691 = vsub.f32 %v9689, %v9690
        %v9692 = vand.u32 %v9691, 4294901760
        %9693 = vmatpush.msra.mxu0 %v9692
        %v9694 = vand.u32 %v5690, 4294901760
        %v9695 = vsub.f32 %v5690, %v9694
        %v9696 = vand.u32 %v9695, 4294901760
        %v9697 = vsub.f32 %v9695, %v9696
        %v9698 = vand.u32 %v9697, 4294901760
        %9699 = vmatpush.msra.mxu0 %v9698
        %v9700 = vand.u32 %v5687, 4294901760
        %v9701 = vsub.f32 %v5687, %v9700
        %v9702 = vand.u32 %v9701, 4294901760
        %v9703 = vsub.f32 %v9701, %v9702
        %v9704 = vand.u32 %v9703, 4294901760
        %9705 = vmatpush.msra.mxu0 %v9704
        %v9706 = vand.u32 %v5710, 4294901760
        %9707 = vmatmul.f32.gmra.mxu0 %v9706
        %v9708 = vpop.f32.mrf.mxu0
        %v9709 = vadd.f32 %v9272, %v9708
        %v9710 = vand.u32 %v5713, 4294901760
        %9711 = vmatmul.f32.gmra.mxu0 %v9710
        %v9712 = vpop.f32.mrf.mxu0
        %v9713 = vadd.f32 %v9280, %v9712
        %v9714 = vand.u32 %v5716, 4294901760
        %9715 = vmatmul.f32.gmra.mxu0 %v9714
        %v9716 = vpop.f32.mrf.mxu0
        %v9717 = vadd.f32 %v9288, %v9716
        %v9718 = vand.u32 %v5719, 4294901760
        %9719 = vmatmul.f32.gmra.mxu0 %v9718
        %v9720 = vpop.f32.mrf.mxu0
        %v9721 = vadd.f32 %v9296, %v9720
        %v9722 = vand.u32 %v5722, 4294901760
        %9723 = vmatmul.f32.gmra.mxu0 %v9722
        %v9724 = vpop.f32.mrf.mxu0
        %v9725 = vadd.f32 %v9304, %v9724
        %v9726 = vand.u32 %v5725, 4294901760
        %9727 = vmatmul.f32.gmra.mxu0 %v9726
        %v9728 = vpop.f32.mrf.mxu0
        %v9729 = vadd.f32 %v9312, %v9728
        %v9730 = vand.u32 %v5728, 4294901760
        %9731 = vmatmul.f32.gmra.mxu0 %v9730
        %v9732 = vpop.f32.mrf.mxu0
        %v9733 = vadd.f32 %v9320, %v9732
        %v9734 = vand.u32 %v5731, 4294901760
        %9735 = vmatmul.f32.gmra.mxu0 %v9734
        %v9736 = vpop.f32.mrf.mxu0
        %v9737 = vadd.f32 %v9328, %v9736
        %v9738 = vand.u32 %v5734, 4294901760
        %9739 = vmatmul.f32.gmra.mxu0 %v9738
        %v9740 = vpop.f32.mrf.mxu0
        %v9741 = vadd.f32 %v9336, %v9740
        %v9742 = vand.u32 %v5737, 4294901760
        %9743 = vmatmul.f32.gmra.mxu0 %v9742
        %v9744 = vpop.f32.mrf.mxu0
        %v9745 = vadd.f32 %v9344, %v9744
        %v9746 = vand.u32 %v5740, 4294901760
        %9747 = vmatmul.f32.gmra.mxu0 %v9746
        %v9748 = vpop.f32.mrf.mxu0
        %v9749 = vadd.f32 %v9352, %v9748
        %v9750 = vand.u32 %v5743, 4294901760
        %9751 = vmatmul.f32.gmra.mxu0 %v9750
        %v9752 = vpop.f32.mrf.mxu0
        %v9753 = vadd.f32 %v9360, %v9752
        %v9754 = vand.u32 %v5746, 4294901760
        %9755 = vmatmul.f32.gmra.mxu0 %v9754
        %v9756 = vpop.f32.mrf.mxu0
        %v9757 = vadd.f32 %v9368, %v9756
        %v9758 = vand.u32 %v5749, 4294901760
        %9759 = vmatmul.f32.gmra.mxu0 %v9758
        %v9760 = vpop.f32.mrf.mxu0
        %v9761 = vadd.f32 %v9376, %v9760
        %v9762 = vand.u32 %v5752, 4294901760
        %9763 = vmatmul.f32.gmra.mxu0 %v9762
        %v9764 = vpop.f32.mrf.mxu0
        %v9765 = vadd.f32 %v9384, %v9764
        %v9766 = vand.u32 %v5755, 4294901760
        %9767 = vmatmul.f32.gmra.mxu0 %v9766
        %v9768 = vpop.f32.mrf.mxu0
        %v9769 = vadd.f32 %v9392, %v9768
        %v9770 = vand.u32 %v5758, 4294901760
        %9771 = vmatmul.f32.gmra.mxu0 %v9770
        %v9772 = vpop.f32.mrf.mxu0
        %v9773 = vadd.f32 %v9400, %v9772
        %v9774 = vand.u32 %v5761, 4294901760
        %9775 = vmatmul.f32.gmra.mxu0 %v9774
        %v9776 = vpop.f32.mrf.mxu0
        %v9777 = vadd.f32 %v9408, %v9776
        %v9778 = vand.u32 %v5764, 4294901760
        %9779 = vmatmul.f32.gmra.mxu0 %v9778
        %v9780 = vpop.f32.mrf.mxu0
        %v9781 = vadd.f32 %v9416, %v9780
        %v9782 = vand.u32 %v5767, 4294901760
        %9783 = vmatmul.f32.gmra.mxu0 %v9782
        %v9784 = vpop.f32.mrf.mxu0
        %v9785 = vadd.f32 %v9424, %v9784
        %v9786 = vand.u32 %v5770, 4294901760
        %9787 = vmatmul.f32.gmra.mxu0 %v9786
        %v9788 = vpop.f32.mrf.mxu0
        %v9789 = vadd.f32 %v9432, %v9788
        %v9790 = vand.u32 %v5773, 4294901760
        %9791 = vmatmul.f32.gmra.mxu0 %v9790
        %v9792 = vpop.f32.mrf.mxu0
        %v9793 = vadd.f32 %v9440, %v9792
        %v9794 = vand.u32 %v5776, 4294901760
        %9795 = vmatmul.f32.gmra.mxu0 %v9794
        %v9796 = vpop.f32.mrf.mxu0
        %v9797 = vadd.f32 %v9448, %v9796
        %v9798 = vand.u32 %v5779, 4294901760
        %9799 = vmatmul.f32.gmra.mxu0 %v9798
        %v9800 = vpop.f32.mrf.mxu0
        %v9801 = vadd.f32 %v9456, %v9800
        %v9802 = vand.u32 %v5782, 4294901760
        %9803 = vmatmul.f32.gmra.mxu0 %v9802
        %v9804 = vpop.f32.mrf.mxu0
        %v9805 = vadd.f32 %v9464, %v9804
        %v9806 = vand.u32 %v5785, 4294901760
        %9807 = vmatmul.f32.gmra.mxu0 %v9806
        %v9808 = vpop.f32.mrf.mxu0
        %v9809 = vadd.f32 %v9472, %v9808
        %v9810 = vand.u32 %v5788, 4294901760
        %9811 = vmatmul.f32.gmra.mxu0 %v9810
        %v9812 = vpop.f32.mrf.mxu0
        %v9813 = vadd.f32 %v9480, %v9812
        %v9814 = vand.u32 %v5791, 4294901760
        %9815 = vmatmul.f32.gmra.mxu0 %v9814
        %v9816 = vpop.f32.mrf.mxu0
        %v9817 = vadd.f32 %v9488, %v9816
        %v9818 = vand.u32 %v5794, 4294901760
        %9819 = vmatmul.f32.gmra.mxu0 %v9818
        %v9820 = vpop.f32.mrf.mxu0
        %v9821 = vadd.f32 %v9496, %v9820
        %v9822 = vand.u32 %v5797, 4294901760
        %9823 = vmatmul.f32.gmra.mxu0 %v9822
        %v9824 = vpop.f32.mrf.mxu0
        %v9825 = vadd.f32 %v9504, %v9824
        %v9826 = vand.u32 %v5800, 4294901760
        %9827 = vmatmul.f32.gmra.mxu0 %v9826
        %v9828 = vpop.f32.mrf.mxu0
        %v9829 = vadd.f32 %v9512, %v9828
        %v9830 = vand.u32 %v5803, 4294901760
        %9831 = vmatmul.f32.gmra.mxu0 %v9830
        %v9832 = vpop.f32.mrf.mxu0
        %v9833 = vadd.f32 %v9520, %v9832
        %v9834 = vand.u32 %v5806, 4294901760
        %9835 = vmatmul.f32.gmra.mxu0 %v9834
        %v9836 = vpop.f32.mrf.mxu0
        %v9837 = vadd.f32 %v9528, %v9836
        %v9838 = vand.u32 %v5809, 4294901760
        %9839 = vmatmul.f32.gmra.mxu0 %v9838
        %v9840 = vpop.f32.mrf.mxu0
        %v9841 = vadd.f32 %v9536, %v9840
        %v9842 = vand.u32 %v5812, 4294901760
        %9843 = vmatmul.f32.gmra.mxu0 %v9842
        %v9844 = vpop.f32.mrf.mxu0
        %v9845 = vadd.f32 %v9544, %v9844
        %v9846 = vand.u32 %v5815, 4294901760
        %9847 = vmatmul.f32.gmra.mxu0 %v9846
        %v9848 = vpop.f32.mrf.mxu0
        %v9849 = vadd.f32 %v9552, %v9848
        %v9850 = vand.u32 %v5818, 4294901760
        %9851 = vmatmul.f32.gmra.mxu0 %v9850
        %v9852 = vpop.f32.mrf.mxu0
        %v9853 = vadd.f32 %v9560, %v9852
        %v9854 = vand.u32 %v5821, 4294901760
        %9855 = vmatmul.f32.gmra.mxu0 %v9854
        %v9856 = vpop.f32.mrf.mxu0
        %v9857 = vadd.f32 %v9568, %v9856
        %v9858 = vand.u32 %v5824, 4294901760
        %9859 = vmatmul.f32.gmra.mxu0 %v9858
        %v9860 = vpop.f32.mrf.mxu0
        %v9861 = vadd.f32 %v9576, %v9860
        %v9862 = vand.u32 %v5827, 4294901760
        %9863 = vmatmul.f32.gmra.mxu0 %v9862
        %v9864 = vpop.f32.mrf.mxu0
        %v9865 = vadd.f32 %v9584, %v9864
        %v9866 = vand.u32 %v5830, 4294901760
        %9867 = vmatmul.f32.gmra.mxu0 %v9866
        %v9868 = vpop.f32.mrf.mxu0
        %v9869 = vadd.f32 %v9592, %v9868
        %v9870 = vand.u32 %v5833, 4294901760
        %9871 = vmatmul.f32.gmra.mxu0 %v9870
        %v9872 = vpop.f32.mrf.mxu0
        %v9873 = vadd.f32 %v9600, %v9872
        %v9874 = vand.u32 %v5836, 4294901760
        %9875 = vmatmul.f32.gmra.mxu0 %v9874
        %v9876 = vpop.f32.mrf.mxu0
        %v9877 = vadd.f32 %v9608, %v9876
        %v9878 = vand.u32 %v5839, 4294901760
        %9879 = vmatmul.f32.gmra.mxu0 %v9878
        %v9880 = vpop.f32.mrf.mxu0
        %v9881 = vadd.f32 %v9616, %v9880
        %v9882 = vand.u32 %v5842, 4294901760
        %9883 = vmatmul.f32.gmra.mxu0 %v9882
        %v9884 = vpop.f32.mrf.mxu0
        %v9885 = vadd.f32 %v9624, %v9884
        %v9886 = vand.u32 %v5845, 4294901760
        %9887 = vmatmul.f32.gmra.mxu0 %v9886
        %v9888 = vpop.f32.mrf.mxu0
        %v9889 = vadd.f32 %v9632, %v9888
        %v9890 = vand.u32 %v5848, 4294901760
        %9891 = vmatmul.f32.gmra.mxu0 %v9890
        %v9892 = vpop.f32.mrf.mxu0
        %v9893 = vadd.f32 %v9640, %v9892
        %v9894 = vand.u32 %v5851, 4294901760
        %9895 = vmatmul.f32.gmra.mxu0 %v9894
        %v9896 = vpop.f32.mrf.mxu0
        %v9897 = vadd.f32 %v9648, %v9896
        %9898 = vdwg.mxu0
        %9899 = vmatpush.msra.mxu0 0.0
        %9900 = vmatpush.msra.mxu0 0.0
        %9901 = vmatpush.msra.mxu0 0.0
        %9902 = vmatpush.msra.mxu0 0.0
        %9903 = vmatpush.msra.mxu0 0.0
        %9904 = vmatpush.msra.mxu0 0.0
        %9905 = vmatpush.msra.mxu0 0.0
        %9906 = vmatpush.msra.mxu0 0.0
        %v9907 = vand.u32 %v5708, 4294901760
        %v9908 = vsub.f32 %v5708, %v9907
        %9909 = vmatpush.msra.mxu0 %v9908
        %v9910 = vand.u32 %v5705, 4294901760
        %v9911 = vsub.f32 %v5705, %v9910
        %9912 = vmatpush.msra.mxu0 %v9911
        %v9913 = vand.u32 %v5702, 4294901760
        %v9914 = vsub.f32 %v5702, %v9913
        %9915 = vmatpush.msra.mxu0 %v9914
        %v9916 = vand.u32 %v5699, 4294901760
        %v9917 = vsub.f32 %v5699, %v9916
        %9918 = vmatpush.msra.mxu0 %v9917
        %v9919 = vand.u32 %v5696, 4294901760
        %v9920 = vsub.f32 %v5696, %v9919
        %9921 = vmatpush.msra.mxu0 %v9920
        %v9922 = vand.u32 %v5693, 4294901760
        %v9923 = vsub.f32 %v5693, %v9922
        %9924 = vmatpush.msra.mxu0 %v9923
        %v9925 = vand.u32 %v5690, 4294901760
        %v9926 = vsub.f32 %v5690, %v9925
        %9927 = vmatpush.msra.mxu0 %v9926
        %v9928 = vand.u32 %v5687, 4294901760
        %v9929 = vsub.f32 %v5687, %v9928
        %9930 = vmatpush.msra.mxu0 %v9929
        %v9931 = vand.u32 %v5710, 4294901760
        %v9932 = vsub.f32 %v5710, %v9931
        %9933 = vmatmul.f32.gmra.mxu0 %v9932
        %v9934 = vpop.f32.mrf.mxu0
        %v9935 = vadd.f32 %v9709, %v9934
        %v9936 = vand.u32 %v5713, 4294901760
        %v9937 = vsub.f32 %v5713, %v9936
        %9938 = vmatmul.f32.gmra.mxu0 %v9937
        %v9939 = vpop.f32.mrf.mxu0
        %v9940 = vadd.f32 %v9713, %v9939
        %v9941 = vand.u32 %v5716, 4294901760
        %v9942 = vsub.f32 %v5716, %v9941
        %9943 = vmatmul.f32.gmra.mxu0 %v9942
        %v9944 = vpop.f32.mrf.mxu0
        %v9945 = vadd.f32 %v9717, %v9944
        %v9946 = vand.u32 %v5719, 4294901760
        %v9947 = vsub.f32 %v5719, %v9946
        %9948 = vmatmul.f32.gmra.mxu0 %v9947
        %v9949 = vpop.f32.mrf.mxu0
        %v9950 = vadd.f32 %v9721, %v9949
        %v9951 = vand.u32 %v5722, 4294901760
        %v9952 = vsub.f32 %v5722, %v9951
        %9953 = vmatmul.f32.gmra.mxu0 %v9952
        %v9954 = vpop.f32.mrf.mxu0
        %v9955 = vadd.f32 %v9725, %v9954
        %v9956 = vand.u32 %v5725, 4294901760
        %v9957 = vsub.f32 %v5725, %v9956
        %9958 = vmatmul.f32.gmra.mxu0 %v9957
        %v9959 = vpop.f32.mrf.mxu0
        %v9960 = vadd.f32 %v9729, %v9959
        %v9961 = vand.u32 %v5728, 4294901760
        %v9962 = vsub.f32 %v5728, %v9961
        %9963 = vmatmul.f32.gmra.mxu0 %v9962
        %v9964 = vpop.f32.mrf.mxu0
        %v9965 = vadd.f32 %v9733, %v9964
        %v9966 = vand.u32 %v5731, 4294901760
        %v9967 = vsub.f32 %v5731, %v9966
        %9968 = vmatmul.f32.gmra.mxu0 %v9967
        %v9969 = vpop.f32.mrf.mxu0
        %v9970 = vadd.f32 %v9737, %v9969
        %v9971 = vand.u32 %v5734, 4294901760
        %v9972 = vsub.f32 %v5734, %v9971
        %9973 = vmatmul.f32.gmra.mxu0 %v9972
        %v9974 = vpop.f32.mrf.mxu0
        %v9975 = vadd.f32 %v9741, %v9974
        %v9976 = vand.u32 %v5737, 4294901760
        %v9977 = vsub.f32 %v5737, %v9976
        %9978 = vmatmul.f32.gmra.mxu0 %v9977
        %v9979 = vpop.f32.mrf.mxu0
        %v9980 = vadd.f32 %v9745, %v9979
        %v9981 = vand.u32 %v5740, 4294901760
        %v9982 = vsub.f32 %v5740, %v9981
        %9983 = vmatmul.f32.gmra.mxu0 %v9982
        %v9984 = vpop.f32.mrf.mxu0
        %v9985 = vadd.f32 %v9749, %v9984
        %v9986 = vand.u32 %v5743, 4294901760
        %v9987 = vsub.f32 %v5743, %v9986
        %9988 = vmatmul.f32.gmra.mxu0 %v9987
        %v9989 = vpop.f32.mrf.mxu0
        %v9990 = vadd.f32 %v9753, %v9989
        %v9991 = vand.u32 %v5746, 4294901760
        %v9992 = vsub.f32 %v5746, %v9991
        %9993 = vmatmul.f32.gmra.mxu0 %v9992
        %v9994 = vpop.f32.mrf.mxu0
        %v9995 = vadd.f32 %v9757, %v9994
        %v9996 = vand.u32 %v5749, 4294901760
        %v9997 = vsub.f32 %v5749, %v9996
        %9998 = vmatmul.f32.gmra.mxu0 %v9997
        %v9999 = vpop.f32.mrf.mxu0
        %v10000 = vadd.f32 %v9761, %v9999
        %v10001 = vand.u32 %v5752, 4294901760
        %v10002 = vsub.f32 %v5752, %v10001
        %10003 = vmatmul.f32.gmra.mxu0 %v10002
        %v10004 = vpop.f32.mrf.mxu0
        %v10005 = vadd.f32 %v9765, %v10004
        %v10006 = vand.u32 %v5755, 4294901760
        %v10007 = vsub.f32 %v5755, %v10006
        %10008 = vmatmul.f32.gmra.mxu0 %v10007
        %v10009 = vpop.f32.mrf.mxu0
        %v10010 = vadd.f32 %v9769, %v10009
        %v10011 = vand.u32 %v5758, 4294901760
        %v10012 = vsub.f32 %v5758, %v10011
        %10013 = vmatmul.f32.gmra.mxu0 %v10012
        %v10014 = vpop.f32.mrf.mxu0
        %v10015 = vadd.f32 %v9773, %v10014
        %v10016 = vand.u32 %v5761, 4294901760
        %v10017 = vsub.f32 %v5761, %v10016
        %10018 = vmatmul.f32.gmra.mxu0 %v10017
        %v10019 = vpop.f32.mrf.mxu0
        %v10020 = vadd.f32 %v9777, %v10019
        %v10021 = vand.u32 %v5764, 4294901760
        %v10022 = vsub.f32 %v5764, %v10021
        %10023 = vmatmul.f32.gmra.mxu0 %v10022
        %v10024 = vpop.f32.mrf.mxu0
        %v10025 = vadd.f32 %v9781, %v10024
        %v10026 = vand.u32 %v5767, 4294901760
        %v10027 = vsub.f32 %v5767, %v10026
        %10028 = vmatmul.f32.gmra.mxu0 %v10027
        %v10029 = vpop.f32.mrf.mxu0
        %v10030 = vadd.f32 %v9785, %v10029
        %v10031 = vand.u32 %v5770, 4294901760
        %v10032 = vsub.f32 %v5770, %v10031
        %10033 = vmatmul.f32.gmra.mxu0 %v10032
        %v10034 = vpop.f32.mrf.mxu0
        %v10035 = vadd.f32 %v9789, %v10034
        %v10036 = vand.u32 %v5773, 4294901760
        %v10037 = vsub.f32 %v5773, %v10036
        %10038 = vmatmul.f32.gmra.mxu0 %v10037
        %v10039 = vpop.f32.mrf.mxu0
        %v10040 = vadd.f32 %v9793, %v10039
        %v10041 = vand.u32 %v5776, 4294901760
        %v10042 = vsub.f32 %v5776, %v10041
        %10043 = vmatmul.f32.gmra.mxu0 %v10042
        %v10044 = vpop.f32.mrf.mxu0
        %v10045 = vadd.f32 %v9797, %v10044
        %v10046 = vand.u32 %v5779, 4294901760
        %v10047 = vsub.f32 %v5779, %v10046
        %10048 = vmatmul.f32.gmra.mxu0 %v10047
        %v10049 = vpop.f32.mrf.mxu0
        %v10050 = vadd.f32 %v9801, %v10049
        %v10051 = vand.u32 %v5782, 4294901760
        %v10052 = vsub.f32 %v5782, %v10051
        %10053 = vmatmul.f32.gmra.mxu0 %v10052
        %v10054 = vpop.f32.mrf.mxu0
        %v10055 = vadd.f32 %v9805, %v10054
        %v10056 = vand.u32 %v5785, 4294901760
        %v10057 = vsub.f32 %v5785, %v10056
        %10058 = vmatmul.f32.gmra.mxu0 %v10057
        %v10059 = vpop.f32.mrf.mxu0
        %v10060 = vadd.f32 %v9809, %v10059
        %v10061 = vand.u32 %v5788, 4294901760
        %v10062 = vsub.f32 %v5788, %v10061
        %10063 = vmatmul.f32.gmra.mxu0 %v10062
        %v10064 = vpop.f32.mrf.mxu0
        %v10065 = vadd.f32 %v9813, %v10064
        %v10066 = vand.u32 %v5791, 4294901760
        %v10067 = vsub.f32 %v5791, %v10066
        %10068 = vmatmul.f32.gmra.mxu0 %v10067
        %v10069 = vpop.f32.mrf.mxu0
        %v10070 = vadd.f32 %v9817, %v10069
        %v10071 = vand.u32 %v5794, 4294901760
        %v10072 = vsub.f32 %v5794, %v10071
        %10073 = vmatmul.f32.gmra.mxu0 %v10072
        %v10074 = vpop.f32.mrf.mxu0
        %v10075 = vadd.f32 %v9821, %v10074
        %v10076 = vand.u32 %v5797, 4294901760
        %v10077 = vsub.f32 %v5797, %v10076
        %10078 = vmatmul.f32.gmra.mxu0 %v10077
        %v10079 = vpop.f32.mrf.mxu0
        %v10080 = vadd.f32 %v9825, %v10079
        %v10081 = vand.u32 %v5800, 4294901760
        %v10082 = vsub.f32 %v5800, %v10081
        %10083 = vmatmul.f32.gmra.mxu0 %v10082
        %v10084 = vpop.f32.mrf.mxu0
        %v10085 = vadd.f32 %v9829, %v10084
        %v10086 = vand.u32 %v5803, 4294901760
        %v10087 = vsub.f32 %v5803, %v10086
        %10088 = vmatmul.f32.gmra.mxu0 %v10087
        %v10089 = vpop.f32.mrf.mxu0
        %v10090 = vadd.f32 %v9833, %v10089
        %v10091 = vand.u32 %v5806, 4294901760
        %v10092 = vsub.f32 %v5806, %v10091
        %10093 = vmatmul.f32.gmra.mxu0 %v10092
        %v10094 = vpop.f32.mrf.mxu0
        %v10095 = vadd.f32 %v9837, %v10094
        %v10096 = vand.u32 %v5809, 4294901760
        %v10097 = vsub.f32 %v5809, %v10096
        %10098 = vmatmul.f32.gmra.mxu0 %v10097
        %v10099 = vpop.f32.mrf.mxu0
        %v10100 = vadd.f32 %v9841, %v10099
        %v10101 = vand.u32 %v5812, 4294901760
        %v10102 = vsub.f32 %v5812, %v10101
        %10103 = vmatmul.f32.gmra.mxu0 %v10102
        %v10104 = vpop.f32.mrf.mxu0
        %v10105 = vadd.f32 %v9845, %v10104
        %v10106 = vand.u32 %v5815, 4294901760
        %v10107 = vsub.f32 %v5815, %v10106
        %10108 = vmatmul.f32.gmra.mxu0 %v10107
        %v10109 = vpop.f32.mrf.mxu0
        %v10110 = vadd.f32 %v9849, %v10109
        %v10111 = vand.u32 %v5818, 4294901760
        %v10112 = vsub.f32 %v5818, %v10111
        %10113 = vmatmul.f32.gmra.mxu0 %v10112
        %v10114 = vpop.f32.mrf.mxu0
        %v10115 = vadd.f32 %v9853, %v10114
        %v10116 = vand.u32 %v5821, 4294901760
        %v10117 = vsub.f32 %v5821, %v10116
        %10118 = vmatmul.f32.gmra.mxu0 %v10117
        %v10119 = vpop.f32.mrf.mxu0
        %v10120 = vadd.f32 %v9857, %v10119
        %v10121 = vand.u32 %v5824, 4294901760
        %v10122 = vsub.f32 %v5824, %v10121
        %10123 = vmatmul.f32.gmra.mxu0 %v10122
        %v10124 = vpop.f32.mrf.mxu0
        %v10125 = vadd.f32 %v9861, %v10124
        %v10126 = vand.u32 %v5827, 4294901760
        %v10127 = vsub.f32 %v5827, %v10126
        %10128 = vmatmul.f32.gmra.mxu0 %v10127
        %v10129 = vpop.f32.mrf.mxu0
        %v10130 = vadd.f32 %v9865, %v10129
        %v10131 = vand.u32 %v5830, 4294901760
        %v10132 = vsub.f32 %v5830, %v10131
        %10133 = vmatmul.f32.gmra.mxu0 %v10132
        %v10134 = vpop.f32.mrf.mxu0
        %v10135 = vadd.f32 %v9869, %v10134
        %v10136 = vand.u32 %v5833, 4294901760
        %v10137 = vsub.f32 %v5833, %v10136
        %10138 = vmatmul.f32.gmra.mxu0 %v10137
        %v10139 = vpop.f32.mrf.mxu0
        %v10140 = vadd.f32 %v9873, %v10139
        %v10141 = vand.u32 %v5836, 4294901760
        %v10142 = vsub.f32 %v5836, %v10141
        %10143 = vmatmul.f32.gmra.mxu0 %v10142
        %v10144 = vpop.f32.mrf.mxu0
        %v10145 = vadd.f32 %v9877, %v10144
        %v10146 = vand.u32 %v5839, 4294901760
        %v10147 = vsub.f32 %v5839, %v10146
        %10148 = vmatmul.f32.gmra.mxu0 %v10147
        %v10149 = vpop.f32.mrf.mxu0
        %v10150 = vadd.f32 %v9881, %v10149
        %v10151 = vand.u32 %v5842, 4294901760
        %v10152 = vsub.f32 %v5842, %v10151
        %10153 = vmatmul.f32.gmra.mxu0 %v10152
        %v10154 = vpop.f32.mrf.mxu0
        %v10155 = vadd.f32 %v9885, %v10154
        %v10156 = vand.u32 %v5845, 4294901760
        %v10157 = vsub.f32 %v5845, %v10156
        %10158 = vmatmul.f32.gmra.mxu0 %v10157
        %v10159 = vpop.f32.mrf.mxu0
        %v10160 = vadd.f32 %v9889, %v10159
        %v10161 = vand.u32 %v5848, 4294901760
        %v10162 = vsub.f32 %v5848, %v10161
        %10163 = vmatmul.f32.gmra.mxu0 %v10162
        %v10164 = vpop.f32.mrf.mxu0
        %v10165 = vadd.f32 %v9893, %v10164
        %v10166 = vand.u32 %v5851, 4294901760
        %v10167 = vsub.f32 %v5851, %v10166
        %10168 = vmatmul.f32.gmra.mxu0 %v10167
        %v10169 = vpop.f32.mrf.mxu0
        %v10170 = vadd.f32 %v9897, %v10169
        %10171 = vdwg.mxu0
        %10172 = vmatpush.msra.mxu0 0.0
        %10173 = vmatpush.msra.mxu0 0.0
        %10174 = vmatpush.msra.mxu0 0.0
        %10175 = vmatpush.msra.mxu0 0.0
        %10176 = vmatpush.msra.mxu0 0.0
        %10177 = vmatpush.msra.mxu0 0.0
        %10178 = vmatpush.msra.mxu0 0.0
        %10179 = vmatpush.msra.mxu0 0.0
        %v10180 = vand.u32 %v5708, 4294901760
        %10181 = vmatpush.msra.mxu0 %v10180
        %v10182 = vand.u32 %v5705, 4294901760
        %10183 = vmatpush.msra.mxu0 %v10182
        %v10184 = vand.u32 %v5702, 4294901760
        %10185 = vmatpush.msra.mxu0 %v10184
        %v10186 = vand.u32 %v5699, 4294901760
        %10187 = vmatpush.msra.mxu0 %v10186
        %v10188 = vand.u32 %v5696, 4294901760
        %10189 = vmatpush.msra.mxu0 %v10188
        %v10190 = vand.u32 %v5693, 4294901760
        %10191 = vmatpush.msra.mxu0 %v10190
        %v10192 = vand.u32 %v5690, 4294901760
        %10193 = vmatpush.msra.mxu0 %v10192
        %v10194 = vand.u32 %v5687, 4294901760
        %10195 = vmatpush.msra.mxu0 %v10194
        %v10196 = vand.u32 %v5710, 4294901760
        %v10197 = vsub.f32 %v5710, %v10196
        %v10198 = vand.u32 %v10197, 4294901760
        %10199 = vmatmul.f32.gmra.mxu0 %v10198
        %v10200 = vpop.f32.mrf.mxu0
        %v10201 = vadd.f32 %v9935, %v10200
        %v10202 = vand.u32 %v5713, 4294901760
        %v10203 = vsub.f32 %v5713, %v10202
        %v10204 = vand.u32 %v10203, 4294901760
        %10205 = vmatmul.f32.gmra.mxu0 %v10204
        %v10206 = vpop.f32.mrf.mxu0
        %v10207 = vadd.f32 %v9940, %v10206
        %v10208 = vand.u32 %v5716, 4294901760
        %v10209 = vsub.f32 %v5716, %v10208
        %v10210 = vand.u32 %v10209, 4294901760
        %10211 = vmatmul.f32.gmra.mxu0 %v10210
        %v10212 = vpop.f32.mrf.mxu0
        %v10213 = vadd.f32 %v9945, %v10212
        %v10214 = vand.u32 %v5719, 4294901760
        %v10215 = vsub.f32 %v5719, %v10214
        %v10216 = vand.u32 %v10215, 4294901760
        %10217 = vmatmul.f32.gmra.mxu0 %v10216
        %v10218 = vpop.f32.mrf.mxu0
        %v10219 = vadd.f32 %v9950, %v10218
        %v10220 = vand.u32 %v5722, 4294901760
        %v10221 = vsub.f32 %v5722, %v10220
        %v10222 = vand.u32 %v10221, 4294901760
        %10223 = vmatmul.f32.gmra.mxu0 %v10222
        %v10224 = vpop.f32.mrf.mxu0
        %v10225 = vadd.f32 %v9955, %v10224
        %v10226 = vand.u32 %v5725, 4294901760
        %v10227 = vsub.f32 %v5725, %v10226
        %v10228 = vand.u32 %v10227, 4294901760
        %10229 = vmatmul.f32.gmra.mxu0 %v10228
        %v10230 = vpop.f32.mrf.mxu0
        %v10231 = vadd.f32 %v9960, %v10230
        %v10232 = vand.u32 %v5728, 4294901760
        %v10233 = vsub.f32 %v5728, %v10232
        %v10234 = vand.u32 %v10233, 4294901760
        %10235 = vmatmul.f32.gmra.mxu0 %v10234
        %v10236 = vpop.f32.mrf.mxu0
        %v10237 = vadd.f32 %v9965, %v10236
        %v10238 = vand.u32 %v5731, 4294901760
        %v10239 = vsub.f32 %v5731, %v10238
        %v10240 = vand.u32 %v10239, 4294901760
        %10241 = vmatmul.f32.gmra.mxu0 %v10240
        %v10242 = vpop.f32.mrf.mxu0
        %v10243 = vadd.f32 %v9970, %v10242
        %v10244 = vand.u32 %v5734, 4294901760
        %v10245 = vsub.f32 %v5734, %v10244
        %v10246 = vand.u32 %v10245, 4294901760
        %10247 = vmatmul.f32.gmra.mxu0 %v10246
        %v10248 = vpop.f32.mrf.mxu0
        %v10249 = vadd.f32 %v9975, %v10248
        %v10250 = vand.u32 %v5737, 4294901760
        %v10251 = vsub.f32 %v5737, %v10250
        %v10252 = vand.u32 %v10251, 4294901760
        %10253 = vmatmul.f32.gmra.mxu0 %v10252
        %v10254 = vpop.f32.mrf.mxu0
        %v10255 = vadd.f32 %v9980, %v10254
        %v10256 = vand.u32 %v5740, 4294901760
        %v10257 = vsub.f32 %v5740, %v10256
        %v10258 = vand.u32 %v10257, 4294901760
        %10259 = vmatmul.f32.gmra.mxu0 %v10258
        %v10260 = vpop.f32.mrf.mxu0
        %v10261 = vadd.f32 %v9985, %v10260
        %v10262 = vand.u32 %v5743, 4294901760
        %v10263 = vsub.f32 %v5743, %v10262
        %v10264 = vand.u32 %v10263, 4294901760
        %10265 = vmatmul.f32.gmra.mxu0 %v10264
        %v10266 = vpop.f32.mrf.mxu0
        %v10267 = vadd.f32 %v9990, %v10266
        %v10268 = vand.u32 %v5746, 4294901760
        %v10269 = vsub.f32 %v5746, %v10268
        %v10270 = vand.u32 %v10269, 4294901760
        %10271 = vmatmul.f32.gmra.mxu0 %v10270
        %v10272 = vpop.f32.mrf.mxu0
        %v10273 = vadd.f32 %v9995, %v10272
        %v10274 = vand.u32 %v5749, 4294901760
        %v10275 = vsub.f32 %v5749, %v10274
        %v10276 = vand.u32 %v10275, 4294901760
        %10277 = vmatmul.f32.gmra.mxu0 %v10276
        %v10278 = vpop.f32.mrf.mxu0
        %v10279 = vadd.f32 %v10000, %v10278
        %v10280 = vand.u32 %v5752, 4294901760
        %v10281 = vsub.f32 %v5752, %v10280
        %v10282 = vand.u32 %v10281, 4294901760
        %10283 = vmatmul.f32.gmra.mxu0 %v10282
        %v10284 = vpop.f32.mrf.mxu0
        %v10285 = vadd.f32 %v10005, %v10284
        %v10286 = vand.u32 %v5755, 4294901760
        %v10287 = vsub.f32 %v5755, %v10286
        %v10288 = vand.u32 %v10287, 4294901760
        %10289 = vmatmul.f32.gmra.mxu0 %v10288
        %v10290 = vpop.f32.mrf.mxu0
        %v10291 = vadd.f32 %v10010, %v10290
        %v10292 = vand.u32 %v5758, 4294901760
        %v10293 = vsub.f32 %v5758, %v10292
        %v10294 = vand.u32 %v10293, 4294901760
        %10295 = vmatmul.f32.gmra.mxu0 %v10294
        %v10296 = vpop.f32.mrf.mxu0
        %v10297 = vadd.f32 %v10015, %v10296
        %v10298 = vand.u32 %v5761, 4294901760
        %v10299 = vsub.f32 %v5761, %v10298
        %v10300 = vand.u32 %v10299, 4294901760
        %10301 = vmatmul.f32.gmra.mxu0 %v10300
        %v10302 = vpop.f32.mrf.mxu0
        %v10303 = vadd.f32 %v10020, %v10302
        %v10304 = vand.u32 %v5764, 4294901760
        %v10305 = vsub.f32 %v5764, %v10304
        %v10306 = vand.u32 %v10305, 4294901760
        %10307 = vmatmul.f32.gmra.mxu0 %v10306
        %v10308 = vpop.f32.mrf.mxu0
        %v10309 = vadd.f32 %v10025, %v10308
        %v10310 = vand.u32 %v5767, 4294901760
        %v10311 = vsub.f32 %v5767, %v10310
        %v10312 = vand.u32 %v10311, 4294901760
        %10313 = vmatmul.f32.gmra.mxu0 %v10312
        %v10314 = vpop.f32.mrf.mxu0
        %v10315 = vadd.f32 %v10030, %v10314
        %v10316 = vand.u32 %v5770, 4294901760
        %v10317 = vsub.f32 %v5770, %v10316
        %v10318 = vand.u32 %v10317, 4294901760
        %10319 = vmatmul.f32.gmra.mxu0 %v10318
        %v10320 = vpop.f32.mrf.mxu0
        %v10321 = vadd.f32 %v10035, %v10320
        %v10322 = vand.u32 %v5773, 4294901760
        %v10323 = vsub.f32 %v5773, %v10322
        %v10324 = vand.u32 %v10323, 4294901760
        %10325 = vmatmul.f32.gmra.mxu0 %v10324
        %v10326 = vpop.f32.mrf.mxu0
        %v10327 = vadd.f32 %v10040, %v10326
        %v10328 = vand.u32 %v5776, 4294901760
        %v10329 = vsub.f32 %v5776, %v10328
        %v10330 = vand.u32 %v10329, 4294901760
        %10331 = vmatmul.f32.gmra.mxu0 %v10330
        %v10332 = vpop.f32.mrf.mxu0
        %v10333 = vadd.f32 %v10045, %v10332
        %v10334 = vand.u32 %v5779, 4294901760
        %v10335 = vsub.f32 %v5779, %v10334
        %v10336 = vand.u32 %v10335, 4294901760
        %10337 = vmatmul.f32.gmra.mxu0 %v10336
        %v10338 = vpop.f32.mrf.mxu0
        %v10339 = vadd.f32 %v10050, %v10338
        %v10340 = vand.u32 %v5782, 4294901760
        %v10341 = vsub.f32 %v5782, %v10340
        %v10342 = vand.u32 %v10341, 4294901760
        %10343 = vmatmul.f32.gmra.mxu0 %v10342
        %v10344 = vpop.f32.mrf.mxu0
        %v10345 = vadd.f32 %v10055, %v10344
        %v10346 = vand.u32 %v5785, 4294901760
        %v10347 = vsub.f32 %v5785, %v10346
        %v10348 = vand.u32 %v10347, 4294901760
        %10349 = vmatmul.f32.gmra.mxu0 %v10348
        %v10350 = vpop.f32.mrf.mxu0
        %v10351 = vadd.f32 %v10060, %v10350
        %v10352 = vand.u32 %v5788, 4294901760
        %v10353 = vsub.f32 %v5788, %v10352
        %v10354 = vand.u32 %v10353, 4294901760
        %10355 = vmatmul.f32.gmra.mxu0 %v10354
        %v10356 = vpop.f32.mrf.mxu0
        %v10357 = vadd.f32 %v10065, %v10356
        %v10358 = vand.u32 %v5791, 4294901760
        %v10359 = vsub.f32 %v5791, %v10358
        %v10360 = vand.u32 %v10359, 4294901760
        %10361 = vmatmul.f32.gmra.mxu0 %v10360
        %v10362 = vpop.f32.mrf.mxu0
        %v10363 = vadd.f32 %v10070, %v10362
        %v10364 = vand.u32 %v5794, 4294901760
        %v10365 = vsub.f32 %v5794, %v10364
        %v10366 = vand.u32 %v10365, 4294901760
        %10367 = vmatmul.f32.gmra.mxu0 %v10366
        %v10368 = vpop.f32.mrf.mxu0
        %v10369 = vadd.f32 %v10075, %v10368
        %v10370 = vand.u32 %v5797, 4294901760
        %v10371 = vsub.f32 %v5797, %v10370
        %v10372 = vand.u32 %v10371, 4294901760
        %10373 = vmatmul.f32.gmra.mxu0 %v10372
        %v10374 = vpop.f32.mrf.mxu0
        %v10375 = vadd.f32 %v10080, %v10374
        %v10376 = vand.u32 %v5800, 4294901760
        %v10377 = vsub.f32 %v5800, %v10376
        %v10378 = vand.u32 %v10377, 4294901760
        %10379 = vmatmul.f32.gmra.mxu0 %v10378
        %v10380 = vpop.f32.mrf.mxu0
        %v10381 = vadd.f32 %v10085, %v10380
        %v10382 = vand.u32 %v5803, 4294901760
        %v10383 = vsub.f32 %v5803, %v10382
        %v10384 = vand.u32 %v10383, 4294901760
        %10385 = vmatmul.f32.gmra.mxu0 %v10384
        %v10386 = vpop.f32.mrf.mxu0
        %v10387 = vadd.f32 %v10090, %v10386
        %v10388 = vand.u32 %v5806, 4294901760
        %v10389 = vsub.f32 %v5806, %v10388
        %v10390 = vand.u32 %v10389, 4294901760
        %10391 = vmatmul.f32.gmra.mxu0 %v10390
        %v10392 = vpop.f32.mrf.mxu0
        %v10393 = vadd.f32 %v10095, %v10392
        %v10394 = vand.u32 %v5809, 4294901760
        %v10395 = vsub.f32 %v5809, %v10394
        %v10396 = vand.u32 %v10395, 4294901760
        %10397 = vmatmul.f32.gmra.mxu0 %v10396
        %v10398 = vpop.f32.mrf.mxu0
        %v10399 = vadd.f32 %v10100, %v10398
        %v10400 = vand.u32 %v5812, 4294901760
        %v10401 = vsub.f32 %v5812, %v10400
        %v10402 = vand.u32 %v10401, 4294901760
        %10403 = vmatmul.f32.gmra.mxu0 %v10402
        %v10404 = vpop.f32.mrf.mxu0
        %v10405 = vadd.f32 %v10105, %v10404
        %v10406 = vand.u32 %v5815, 4294901760
        %v10407 = vsub.f32 %v5815, %v10406
        %v10408 = vand.u32 %v10407, 4294901760
        %10409 = vmatmul.f32.gmra.mxu0 %v10408
        %v10410 = vpop.f32.mrf.mxu0
        %v10411 = vadd.f32 %v10110, %v10410
        %v10412 = vand.u32 %v5818, 4294901760
        %v10413 = vsub.f32 %v5818, %v10412
        %v10414 = vand.u32 %v10413, 4294901760
        %10415 = vmatmul.f32.gmra.mxu0 %v10414
        %v10416 = vpop.f32.mrf.mxu0
        %v10417 = vadd.f32 %v10115, %v10416
        %v10418 = vand.u32 %v5821, 4294901760
        %v10419 = vsub.f32 %v5821, %v10418
        %v10420 = vand.u32 %v10419, 4294901760
        %10421 = vmatmul.f32.gmra.mxu0 %v10420
        %v10422 = vpop.f32.mrf.mxu0
        %v10423 = vadd.f32 %v10120, %v10422
        %v10424 = vand.u32 %v5824, 4294901760
        %v10425 = vsub.f32 %v5824, %v10424
        %v10426 = vand.u32 %v10425, 4294901760
        %10427 = vmatmul.f32.gmra.mxu0 %v10426
        %v10428 = vpop.f32.mrf.mxu0
        %v10429 = vadd.f32 %v10125, %v10428
        %v10430 = vand.u32 %v5827, 4294901760
        %v10431 = vsub.f32 %v5827, %v10430
        %v10432 = vand.u32 %v10431, 4294901760
        %10433 = vmatmul.f32.gmra.mxu0 %v10432
        %v10434 = vpop.f32.mrf.mxu0
        %v10435 = vadd.f32 %v10130, %v10434
        %v10436 = vand.u32 %v5830, 4294901760
        %v10437 = vsub.f32 %v5830, %v10436
        %v10438 = vand.u32 %v10437, 4294901760
        %10439 = vmatmul.f32.gmra.mxu0 %v10438
        %v10440 = vpop.f32.mrf.mxu0
        %v10441 = vadd.f32 %v10135, %v10440
        %v10442 = vand.u32 %v5833, 4294901760
        %v10443 = vsub.f32 %v5833, %v10442
        %v10444 = vand.u32 %v10443, 4294901760
        %10445 = vmatmul.f32.gmra.mxu0 %v10444
        %v10446 = vpop.f32.mrf.mxu0
        %v10447 = vadd.f32 %v10140, %v10446
        %v10448 = vand.u32 %v5836, 4294901760
        %v10449 = vsub.f32 %v5836, %v10448
        %v10450 = vand.u32 %v10449, 4294901760
        %10451 = vmatmul.f32.gmra.mxu0 %v10450
        %v10452 = vpop.f32.mrf.mxu0
        %v10453 = vadd.f32 %v10145, %v10452
        %v10454 = vand.u32 %v5839, 4294901760
        %v10455 = vsub.f32 %v5839, %v10454
        %v10456 = vand.u32 %v10455, 4294901760
        %10457 = vmatmul.f32.gmra.mxu0 %v10456
        %v10458 = vpop.f32.mrf.mxu0
        %v10459 = vadd.f32 %v10150, %v10458
        %v10460 = vand.u32 %v5842, 4294901760
        %v10461 = vsub.f32 %v5842, %v10460
        %v10462 = vand.u32 %v10461, 4294901760
        %10463 = vmatmul.f32.gmra.mxu0 %v10462
        %v10464 = vpop.f32.mrf.mxu0
        %v10465 = vadd.f32 %v10155, %v10464
        %v10466 = vand.u32 %v5845, 4294901760
        %v10467 = vsub.f32 %v5845, %v10466
        %v10468 = vand.u32 %v10467, 4294901760
        %10469 = vmatmul.f32.gmra.mxu0 %v10468
        %v10470 = vpop.f32.mrf.mxu0
        %v10471 = vadd.f32 %v10160, %v10470
        %v10472 = vand.u32 %v5848, 4294901760
        %v10473 = vsub.f32 %v5848, %v10472
        %v10474 = vand.u32 %v10473, 4294901760
        %10475 = vmatmul.f32.gmra.mxu0 %v10474
        %v10476 = vpop.f32.mrf.mxu0
        %v10477 = vadd.f32 %v10165, %v10476
        %v10478 = vand.u32 %v5851, 4294901760
        %v10479 = vsub.f32 %v5851, %v10478
        %v10480 = vand.u32 %v10479, 4294901760
        %10481 = vmatmul.f32.gmra.mxu0 %v10480
        %v10482 = vpop.f32.mrf.mxu0
        %v10483 = vadd.f32 %v10170, %v10482
        %10484 = vdwg.mxu0
        %10485 = vmatpush.msra.mxu0 0.0
        %10486 = vmatpush.msra.mxu0 0.0
        %10487 = vmatpush.msra.mxu0 0.0
        %10488 = vmatpush.msra.mxu0 0.0
        %10489 = vmatpush.msra.mxu0 0.0
        %10490 = vmatpush.msra.mxu0 0.0
        %10491 = vmatpush.msra.mxu0 0.0
        %10492 = vmatpush.msra.mxu0 0.0
        %v10493 = vand.u32 %v5708, 4294901760
        %v10494 = vsub.f32 %v5708, %v10493
        %v10495 = vand.u32 %v10494, 4294901760
        %10496 = vmatpush.msra.mxu0 %v10495
        %v10497 = vand.u32 %v5705, 4294901760
        %v10498 = vsub.f32 %v5705, %v10497
        %v10499 = vand.u32 %v10498, 4294901760
        %10500 = vmatpush.msra.mxu0 %v10499
        %v10501 = vand.u32 %v5702, 4294901760
        %v10502 = vsub.f32 %v5702, %v10501
        %v10503 = vand.u32 %v10502, 4294901760
        %10504 = vmatpush.msra.mxu0 %v10503
        %v10505 = vand.u32 %v5699, 4294901760
        %v10506 = vsub.f32 %v5699, %v10505
        %v10507 = vand.u32 %v10506, 4294901760
        %10508 = vmatpush.msra.mxu0 %v10507
        %v10509 = vand.u32 %v5696, 4294901760
        %v10510 = vsub.f32 %v5696, %v10509
        %v10511 = vand.u32 %v10510, 4294901760
        %10512 = vmatpush.msra.mxu0 %v10511
        %v10513 = vand.u32 %v5693, 4294901760
        %v10514 = vsub.f32 %v5693, %v10513
        %v10515 = vand.u32 %v10514, 4294901760
        %10516 = vmatpush.msra.mxu0 %v10515
        %v10517 = vand.u32 %v5690, 4294901760
        %v10518 = vsub.f32 %v5690, %v10517
        %v10519 = vand.u32 %v10518, 4294901760
        %10520 = vmatpush.msra.mxu0 %v10519
        %v10521 = vand.u32 %v5687, 4294901760
        %v10522 = vsub.f32 %v5687, %v10521
        %v10523 = vand.u32 %v10522, 4294901760
        %10524 = vmatpush.msra.mxu0 %v10523
        %v10525 = vand.u32 %v5710, 4294901760
        %10526 = vmatmul.f32.gmra.mxu0 %v10525
        %v10527 = vpop.f32.mrf.mxu0
        %v10528 = vadd.f32 %v10201, %v10527
        %v10529 = vand.u32 %v5713, 4294901760
        %10530 = vmatmul.f32.gmra.mxu0 %v10529
        %v10531 = vpop.f32.mrf.mxu0
        %v10532 = vadd.f32 %v10207, %v10531
        %v10533 = vand.u32 %v5716, 4294901760
        %10534 = vmatmul.f32.gmra.mxu0 %v10533
        %v10535 = vpop.f32.mrf.mxu0
        %v10536 = vadd.f32 %v10213, %v10535
        %v10537 = vand.u32 %v5719, 4294901760
        %10538 = vmatmul.f32.gmra.mxu0 %v10537
        %v10539 = vpop.f32.mrf.mxu0
        %v10540 = vadd.f32 %v10219, %v10539
        %v10541 = vand.u32 %v5722, 4294901760
        %10542 = vmatmul.f32.gmra.mxu0 %v10541
        %v10543 = vpop.f32.mrf.mxu0
        %v10544 = vadd.f32 %v10225, %v10543
        %v10545 = vand.u32 %v5725, 4294901760
        %10546 = vmatmul.f32.gmra.mxu0 %v10545
        %v10547 = vpop.f32.mrf.mxu0
        %v10548 = vadd.f32 %v10231, %v10547
        %v10549 = vand.u32 %v5728, 4294901760
        %10550 = vmatmul.f32.gmra.mxu0 %v10549
        %v10551 = vpop.f32.mrf.mxu0
        %v10552 = vadd.f32 %v10237, %v10551
        %v10553 = vand.u32 %v5731, 4294901760
        %10554 = vmatmul.f32.gmra.mxu0 %v10553
        %v10555 = vpop.f32.mrf.mxu0
        %v10556 = vadd.f32 %v10243, %v10555
        %v10557 = vand.u32 %v5734, 4294901760
        %10558 = vmatmul.f32.gmra.mxu0 %v10557
        %v10559 = vpop.f32.mrf.mxu0
        %v10560 = vadd.f32 %v10249, %v10559
        %v10561 = vand.u32 %v5737, 4294901760
        %10562 = vmatmul.f32.gmra.mxu0 %v10561
        %v10563 = vpop.f32.mrf.mxu0
        %v10564 = vadd.f32 %v10255, %v10563
        %v10565 = vand.u32 %v5740, 4294901760
        %10566 = vmatmul.f32.gmra.mxu0 %v10565
        %v10567 = vpop.f32.mrf.mxu0
        %v10568 = vadd.f32 %v10261, %v10567
        %v10569 = vand.u32 %v5743, 4294901760
        %10570 = vmatmul.f32.gmra.mxu0 %v10569
        %v10571 = vpop.f32.mrf.mxu0
        %v10572 = vadd.f32 %v10267, %v10571
        %v10573 = vand.u32 %v5746, 4294901760
        %10574 = vmatmul.f32.gmra.mxu0 %v10573
        %v10575 = vpop.f32.mrf.mxu0
        %v10576 = vadd.f32 %v10273, %v10575
        %v10577 = vand.u32 %v5749, 4294901760
        %10578 = vmatmul.f32.gmra.mxu0 %v10577
        %v10579 = vpop.f32.mrf.mxu0
        %v10580 = vadd.f32 %v10279, %v10579
        %v10581 = vand.u32 %v5752, 4294901760
        %10582 = vmatmul.f32.gmra.mxu0 %v10581
        %v10583 = vpop.f32.mrf.mxu0
        %v10584 = vadd.f32 %v10285, %v10583
        %v10585 = vand.u32 %v5755, 4294901760
        %10586 = vmatmul.f32.gmra.mxu0 %v10585
        %v10587 = vpop.f32.mrf.mxu0
        %v10588 = vadd.f32 %v10291, %v10587
        %v10589 = vand.u32 %v5758, 4294901760
        %10590 = vmatmul.f32.gmra.mxu0 %v10589
        %v10591 = vpop.f32.mrf.mxu0
        %v10592 = vadd.f32 %v10297, %v10591
        %v10593 = vand.u32 %v5761, 4294901760
        %10594 = vmatmul.f32.gmra.mxu0 %v10593
        %v10595 = vpop.f32.mrf.mxu0
        %v10596 = vadd.f32 %v10303, %v10595
        %v10597 = vand.u32 %v5764, 4294901760
        %10598 = vmatmul.f32.gmra.mxu0 %v10597
        %v10599 = vpop.f32.mrf.mxu0
        %v10600 = vadd.f32 %v10309, %v10599
        %v10601 = vand.u32 %v5767, 4294901760
        %10602 = vmatmul.f32.gmra.mxu0 %v10601
        %v10603 = vpop.f32.mrf.mxu0
        %v10604 = vadd.f32 %v10315, %v10603
        %v10605 = vand.u32 %v5770, 4294901760
        %10606 = vmatmul.f32.gmra.mxu0 %v10605
        %v10607 = vpop.f32.mrf.mxu0
        %v10608 = vadd.f32 %v10321, %v10607
        %v10609 = vand.u32 %v5773, 4294901760
        %10610 = vmatmul.f32.gmra.mxu0 %v10609
        %v10611 = vpop.f32.mrf.mxu0
        %v10612 = vadd.f32 %v10327, %v10611
        %v10613 = vand.u32 %v5776, 4294901760
        %10614 = vmatmul.f32.gmra.mxu0 %v10613
        %v10615 = vpop.f32.mrf.mxu0
        %v10616 = vadd.f32 %v10333, %v10615
        %v10617 = vand.u32 %v5779, 4294901760
        %10618 = vmatmul.f32.gmra.mxu0 %v10617
        %v10619 = vpop.f32.mrf.mxu0
        %v10620 = vadd.f32 %v10339, %v10619
        %v10621 = vand.u32 %v5782, 4294901760
        %10622 = vmatmul.f32.gmra.mxu0 %v10621
        %v10623 = vpop.f32.mrf.mxu0
        %v10624 = vadd.f32 %v10345, %v10623
        %v10625 = vand.u32 %v5785, 4294901760
        %10626 = vmatmul.f32.gmra.mxu0 %v10625
        %v10627 = vpop.f32.mrf.mxu0
        %v10628 = vadd.f32 %v10351, %v10627
        %v10629 = vand.u32 %v5788, 4294901760
        %10630 = vmatmul.f32.gmra.mxu0 %v10629
        %v10631 = vpop.f32.mrf.mxu0
        %v10632 = vadd.f32 %v10357, %v10631
        %v10633 = vand.u32 %v5791, 4294901760
        %10634 = vmatmul.f32.gmra.mxu0 %v10633
        %v10635 = vpop.f32.mrf.mxu0
        %v10636 = vadd.f32 %v10363, %v10635
        %v10637 = vand.u32 %v5794, 4294901760
        %10638 = vmatmul.f32.gmra.mxu0 %v10637
        %v10639 = vpop.f32.mrf.mxu0
        %v10640 = vadd.f32 %v10369, %v10639
        %v10641 = vand.u32 %v5797, 4294901760
        %10642 = vmatmul.f32.gmra.mxu0 %v10641
        %v10643 = vpop.f32.mrf.mxu0
        %v10644 = vadd.f32 %v10375, %v10643
        %v10645 = vand.u32 %v5800, 4294901760
        %10646 = vmatmul.f32.gmra.mxu0 %v10645
        %v10647 = vpop.f32.mrf.mxu0
        %v10648 = vadd.f32 %v10381, %v10647
        %v10649 = vand.u32 %v5803, 4294901760
        %10650 = vmatmul.f32.gmra.mxu0 %v10649
        %v10651 = vpop.f32.mrf.mxu0
        %v10652 = vadd.f32 %v10387, %v10651
        %v10653 = vand.u32 %v5806, 4294901760
        %10654 = vmatmul.f32.gmra.mxu0 %v10653
        %v10655 = vpop.f32.mrf.mxu0
        %v10656 = vadd.f32 %v10393, %v10655
        %v10657 = vand.u32 %v5809, 4294901760
        %10658 = vmatmul.f32.gmra.mxu0 %v10657
        %v10659 = vpop.f32.mrf.mxu0
        %v10660 = vadd.f32 %v10399, %v10659
        %v10661 = vand.u32 %v5812, 4294901760
        %10662 = vmatmul.f32.gmra.mxu0 %v10661
        %v10663 = vpop.f32.mrf.mxu0
        %v10664 = vadd.f32 %v10405, %v10663
        %v10665 = vand.u32 %v5815, 4294901760
        %10666 = vmatmul.f32.gmra.mxu0 %v10665
        %v10667 = vpop.f32.mrf.mxu0
        %v10668 = vadd.f32 %v10411, %v10667
        %v10669 = vand.u32 %v5818, 4294901760
        %10670 = vmatmul.f32.gmra.mxu0 %v10669
        %v10671 = vpop.f32.mrf.mxu0
        %v10672 = vadd.f32 %v10417, %v10671
        %v10673 = vand.u32 %v5821, 4294901760
        %10674 = vmatmul.f32.gmra.mxu0 %v10673
        %v10675 = vpop.f32.mrf.mxu0
        %v10676 = vadd.f32 %v10423, %v10675
        %v10677 = vand.u32 %v5824, 4294901760
        %10678 = vmatmul.f32.gmra.mxu0 %v10677
        %v10679 = vpop.f32.mrf.mxu0
        %v10680 = vadd.f32 %v10429, %v10679
        %v10681 = vand.u32 %v5827, 4294901760
        %10682 = vmatmul.f32.gmra.mxu0 %v10681
        %v10683 = vpop.f32.mrf.mxu0
        %v10684 = vadd.f32 %v10435, %v10683
        %v10685 = vand.u32 %v5830, 4294901760
        %10686 = vmatmul.f32.gmra.mxu0 %v10685
        %v10687 = vpop.f32.mrf.mxu0
        %v10688 = vadd.f32 %v10441, %v10687
        %v10689 = vand.u32 %v5833, 4294901760
        %10690 = vmatmul.f32.gmra.mxu0 %v10689
        %v10691 = vpop.f32.mrf.mxu0
        %v10692 = vadd.f32 %v10447, %v10691
        %v10693 = vand.u32 %v5836, 4294901760
        %10694 = vmatmul.f32.gmra.mxu0 %v10693
        %v10695 = vpop.f32.mrf.mxu0
        %v10696 = vadd.f32 %v10453, %v10695
        %v10697 = vand.u32 %v5839, 4294901760
        %10698 = vmatmul.f32.gmra.mxu0 %v10697
        %v10699 = vpop.f32.mrf.mxu0
        %v10700 = vadd.f32 %v10459, %v10699
        %v10701 = vand.u32 %v5842, 4294901760
        %10702 = vmatmul.f32.gmra.mxu0 %v10701
        %v10703 = vpop.f32.mrf.mxu0
        %v10704 = vadd.f32 %v10465, %v10703
        %v10705 = vand.u32 %v5845, 4294901760
        %10706 = vmatmul.f32.gmra.mxu0 %v10705
        %v10707 = vpop.f32.mrf.mxu0
        %v10708 = vadd.f32 %v10471, %v10707
        %v10709 = vand.u32 %v5848, 4294901760
        %10710 = vmatmul.f32.gmra.mxu0 %v10709
        %v10711 = vpop.f32.mrf.mxu0
        %v10712 = vadd.f32 %v10477, %v10711
        %v10713 = vand.u32 %v5851, 4294901760
        %10714 = vmatmul.f32.gmra.mxu0 %v10713
        %v10715 = vpop.f32.mrf.mxu0
        %v10716 = vadd.f32 %v10483, %v10715
        %10717 = vdwg.mxu0
        %10718 = vmatpush.msra.mxu0 0.0
        %10719 = vmatpush.msra.mxu0 0.0
        %10720 = vmatpush.msra.mxu0 0.0
        %10721 = vmatpush.msra.mxu0 0.0
        %10722 = vmatpush.msra.mxu0 0.0
        %10723 = vmatpush.msra.mxu0 0.0
        %10724 = vmatpush.msra.mxu0 0.0
        %10725 = vmatpush.msra.mxu0 0.0
        %v10726 = vand.u32 %v5708, 4294901760
        %10727 = vmatpush.msra.mxu0 %v10726
        %v10728 = vand.u32 %v5705, 4294901760
        %10729 = vmatpush.msra.mxu0 %v10728
        %v10730 = vand.u32 %v5702, 4294901760
        %10731 = vmatpush.msra.mxu0 %v10730
        %v10732 = vand.u32 %v5699, 4294901760
        %10733 = vmatpush.msra.mxu0 %v10732
        %v10734 = vand.u32 %v5696, 4294901760
        %10735 = vmatpush.msra.mxu0 %v10734
        %v10736 = vand.u32 %v5693, 4294901760
        %10737 = vmatpush.msra.mxu0 %v10736
        %v10738 = vand.u32 %v5690, 4294901760
        %10739 = vmatpush.msra.mxu0 %v10738
        %v10740 = vand.u32 %v5687, 4294901760
        %10741 = vmatpush.msra.mxu0 %v10740
        %v10742 = vand.u32 %v5710, 4294901760
        %10743 = vmatmul.f32.gmra.mxu0 %v10742
        %v10744 = vpop.f32.mrf.mxu0
        %v10745 = vadd.f32 %v10528, %v10744
        %v10746 = vand.u32 %v5713, 4294901760
        %10747 = vmatmul.f32.gmra.mxu0 %v10746
        %v10748 = vpop.f32.mrf.mxu0
        %v10749 = vadd.f32 %v10532, %v10748
        %v10750 = vand.u32 %v5716, 4294901760
        %10751 = vmatmul.f32.gmra.mxu0 %v10750
        %v10752 = vpop.f32.mrf.mxu0
        %v10753 = vadd.f32 %v10536, %v10752
        %v10754 = vand.u32 %v5719, 4294901760
        %10755 = vmatmul.f32.gmra.mxu0 %v10754
        %v10756 = vpop.f32.mrf.mxu0
        %v10757 = vadd.f32 %v10540, %v10756
        %v10758 = vand.u32 %v5722, 4294901760
        %10759 = vmatmul.f32.gmra.mxu0 %v10758
        %v10760 = vpop.f32.mrf.mxu0
        %v10761 = vadd.f32 %v10544, %v10760
        %v10762 = vand.u32 %v5725, 4294901760
        %10763 = vmatmul.f32.gmra.mxu0 %v10762
        %v10764 = vpop.f32.mrf.mxu0
        %v10765 = vadd.f32 %v10548, %v10764
        %v10766 = vand.u32 %v5728, 4294901760
        %10767 = vmatmul.f32.gmra.mxu0 %v10766
        %v10768 = vpop.f32.mrf.mxu0
        %v10769 = vadd.f32 %v10552, %v10768
        %v10770 = vand.u32 %v5731, 4294901760
        %10771 = vmatmul.f32.gmra.mxu0 %v10770
        %v10772 = vpop.f32.mrf.mxu0
        %v10773 = vadd.f32 %v10556, %v10772
        %v10774 = vand.u32 %v5734, 4294901760
        %10775 = vmatmul.f32.gmra.mxu0 %v10774
        %v10776 = vpop.f32.mrf.mxu0
        %v10777 = vadd.f32 %v10560, %v10776
        %v10778 = vand.u32 %v5737, 4294901760
        %10779 = vmatmul.f32.gmra.mxu0 %v10778
        %v10780 = vpop.f32.mrf.mxu0
        %v10781 = vadd.f32 %v10564, %v10780
        %v10782 = vand.u32 %v5740, 4294901760
        %10783 = vmatmul.f32.gmra.mxu0 %v10782
        %v10784 = vpop.f32.mrf.mxu0
        %v10785 = vadd.f32 %v10568, %v10784
        %v10786 = vand.u32 %v5743, 4294901760
        %10787 = vmatmul.f32.gmra.mxu0 %v10786
        %v10788 = vpop.f32.mrf.mxu0
        %v10789 = vadd.f32 %v10572, %v10788
        %v10790 = vand.u32 %v5746, 4294901760
        %10791 = vmatmul.f32.gmra.mxu0 %v10790
        %v10792 = vpop.f32.mrf.mxu0
        %v10793 = vadd.f32 %v10576, %v10792
        %v10794 = vand.u32 %v5749, 4294901760
        %10795 = vmatmul.f32.gmra.mxu0 %v10794
        %v10796 = vpop.f32.mrf.mxu0
        %v10797 = vadd.f32 %v10580, %v10796
        %v10798 = vand.u32 %v5752, 4294901760
        %10799 = vmatmul.f32.gmra.mxu0 %v10798
        %v10800 = vpop.f32.mrf.mxu0
        %v10801 = vadd.f32 %v10584, %v10800
        %v10802 = vand.u32 %v5755, 4294901760
        %10803 = vmatmul.f32.gmra.mxu0 %v10802
        %v10804 = vpop.f32.mrf.mxu0
        %v10805 = vadd.f32 %v10588, %v10804
        %v10806 = vand.u32 %v5758, 4294901760
        %10807 = vmatmul.f32.gmra.mxu0 %v10806
        %v10808 = vpop.f32.mrf.mxu0
        %v10809 = vadd.f32 %v10592, %v10808
        %v10810 = vand.u32 %v5761, 4294901760
        %10811 = vmatmul.f32.gmra.mxu0 %v10810
        %v10812 = vpop.f32.mrf.mxu0
        %v10813 = vadd.f32 %v10596, %v10812
        %v10814 = vand.u32 %v5764, 4294901760
        %10815 = vmatmul.f32.gmra.mxu0 %v10814
        %v10816 = vpop.f32.mrf.mxu0
        %v10817 = vadd.f32 %v10600, %v10816
        %v10818 = vand.u32 %v5767, 4294901760
        %10819 = vmatmul.f32.gmra.mxu0 %v10818
        %v10820 = vpop.f32.mrf.mxu0
        %v10821 = vadd.f32 %v10604, %v10820
        %v10822 = vand.u32 %v5770, 4294901760
        %10823 = vmatmul.f32.gmra.mxu0 %v10822
        %v10824 = vpop.f32.mrf.mxu0
        %v10825 = vadd.f32 %v10608, %v10824
        %v10826 = vand.u32 %v5773, 4294901760
        %10827 = vmatmul.f32.gmra.mxu0 %v10826
        %v10828 = vpop.f32.mrf.mxu0
        %v10829 = vadd.f32 %v10612, %v10828
        %v10830 = vand.u32 %v5776, 4294901760
        %10831 = vmatmul.f32.gmra.mxu0 %v10830
        %v10832 = vpop.f32.mrf.mxu0
        %v10833 = vadd.f32 %v10616, %v10832
        %v10834 = vand.u32 %v5779, 4294901760
        %10835 = vmatmul.f32.gmra.mxu0 %v10834
        %v10836 = vpop.f32.mrf.mxu0
        %v10837 = vadd.f32 %v10620, %v10836
        %v10838 = vand.u32 %v5782, 4294901760
        %10839 = vmatmul.f32.gmra.mxu0 %v10838
        %v10840 = vpop.f32.mrf.mxu0
        %v10841 = vadd.f32 %v10624, %v10840
        %v10842 = vand.u32 %v5785, 4294901760
        %10843 = vmatmul.f32.gmra.mxu0 %v10842
        %v10844 = vpop.f32.mrf.mxu0
        %v10845 = vadd.f32 %v10628, %v10844
        %v10846 = vand.u32 %v5788, 4294901760
        %10847 = vmatmul.f32.gmra.mxu0 %v10846
        %v10848 = vpop.f32.mrf.mxu0
        %v10849 = vadd.f32 %v10632, %v10848
        %v10850 = vand.u32 %v5791, 4294901760
        %10851 = vmatmul.f32.gmra.mxu0 %v10850
        %v10852 = vpop.f32.mrf.mxu0
        %v10853 = vadd.f32 %v10636, %v10852
        %v10854 = vand.u32 %v5794, 4294901760
        %10855 = vmatmul.f32.gmra.mxu0 %v10854
        %v10856 = vpop.f32.mrf.mxu0
        %v10857 = vadd.f32 %v10640, %v10856
        %v10858 = vand.u32 %v5797, 4294901760
        %10859 = vmatmul.f32.gmra.mxu0 %v10858
        %v10860 = vpop.f32.mrf.mxu0
        %v10861 = vadd.f32 %v10644, %v10860
        %v10862 = vand.u32 %v5800, 4294901760
        %10863 = vmatmul.f32.gmra.mxu0 %v10862
        %v10864 = vpop.f32.mrf.mxu0
        %v10865 = vadd.f32 %v10648, %v10864
        %v10866 = vand.u32 %v5803, 4294901760
        %10867 = vmatmul.f32.gmra.mxu0 %v10866
        %v10868 = vpop.f32.mrf.mxu0
        %v10869 = vadd.f32 %v10652, %v10868
        %v10870 = vand.u32 %v5806, 4294901760
        %10871 = vmatmul.f32.gmra.mxu0 %v10870
        %v10872 = vpop.f32.mrf.mxu0
        %v10873 = vadd.f32 %v10656, %v10872
        %v10874 = vand.u32 %v5809, 4294901760
        %10875 = vmatmul.f32.gmra.mxu0 %v10874
        %v10876 = vpop.f32.mrf.mxu0
        %v10877 = vadd.f32 %v10660, %v10876
        %v10878 = vand.u32 %v5812, 4294901760
        %10879 = vmatmul.f32.gmra.mxu0 %v10878
        %v10880 = vpop.f32.mrf.mxu0
        %v10881 = vadd.f32 %v10664, %v10880
        %v10882 = vand.u32 %v5815, 4294901760
        %10883 = vmatmul.f32.gmra.mxu0 %v10882
        %v10884 = vpop.f32.mrf.mxu0
        %v10885 = vadd.f32 %v10668, %v10884
        %v10886 = vand.u32 %v5818, 4294901760
        %10887 = vmatmul.f32.gmra.mxu0 %v10886
        %v10888 = vpop.f32.mrf.mxu0
        %v10889 = vadd.f32 %v10672, %v10888
        %v10890 = vand.u32 %v5821, 4294901760
        %10891 = vmatmul.f32.gmra.mxu0 %v10890
        %v10892 = vpop.f32.mrf.mxu0
        %v10893 = vadd.f32 %v10676, %v10892
        %v10894 = vand.u32 %v5824, 4294901760
        %10895 = vmatmul.f32.gmra.mxu0 %v10894
        %v10896 = vpop.f32.mrf.mxu0
        %v10897 = vadd.f32 %v10680, %v10896
        %v10898 = vand.u32 %v5827, 4294901760
        %10899 = vmatmul.f32.gmra.mxu0 %v10898
        %v10900 = vpop.f32.mrf.mxu0
        %v10901 = vadd.f32 %v10684, %v10900
        %v10902 = vand.u32 %v5830, 4294901760
        %10903 = vmatmul.f32.gmra.mxu0 %v10902
        %v10904 = vpop.f32.mrf.mxu0
        %v10905 = vadd.f32 %v10688, %v10904
        %v10906 = vand.u32 %v5833, 4294901760
        %10907 = vmatmul.f32.gmra.mxu0 %v10906
        %v10908 = vpop.f32.mrf.mxu0
        %v10909 = vadd.f32 %v10692, %v10908
        %v10910 = vand.u32 %v5836, 4294901760
        %10911 = vmatmul.f32.gmra.mxu0 %v10910
        %v10912 = vpop.f32.mrf.mxu0
        %v10913 = vadd.f32 %v10696, %v10912
        %v10914 = vand.u32 %v5839, 4294901760
        %10915 = vmatmul.f32.gmra.mxu0 %v10914
        %v10916 = vpop.f32.mrf.mxu0
        %v10917 = vadd.f32 %v10700, %v10916
        %v10918 = vand.u32 %v5842, 4294901760
        %10919 = vmatmul.f32.gmra.mxu0 %v10918
        %v10920 = vpop.f32.mrf.mxu0
        %v10921 = vadd.f32 %v10704, %v10920
        %v10922 = vand.u32 %v5845, 4294901760
        %10923 = vmatmul.f32.gmra.mxu0 %v10922
        %v10924 = vpop.f32.mrf.mxu0
        %v10925 = vadd.f32 %v10708, %v10924
        %v10926 = vand.u32 %v5848, 4294901760
        %10927 = vmatmul.f32.gmra.mxu0 %v10926
        %v10928 = vpop.f32.mrf.mxu0
        %v10929 = vadd.f32 %v10712, %v10928
        %v10930 = vand.u32 %v5851, 4294901760
        %10931 = vmatmul.f32.gmra.mxu0 %v10930
        %v10932 = vpop.f32.mrf.mxu0
        %v10933 = vadd.f32 %v10716, %v10932
        %10934 = vdwg.mxu0
        %s10935 = scalar_lea.vmem %s182, 1152 [#allocation5]
        %10936 = vst [vmem:[%s10935] sm:$0xff] %v7357
        %10937 = vst [vmem:[%s10935 + $0x8] sm:$0xff] %v9051
        %10938 = vst [vmem:[%s10935 + $0x10] sm:$0xff] %v10745
        %10939 = vst [vmem:[%s10935 + $0x18] sm:$0xff] %v7361
        %10940 = vst [vmem:[%s10935 + $0x20] sm:$0xff] %v9055
        %10941 = vst [vmem:[%s10935 + $0x28] sm:$0xff] %v10749
        %10942 = vst [vmem:[%s10935 + $0x30] sm:$0xff] %v7365
        %10943 = vst [vmem:[%s10935 + $0x38] sm:$0xff] %v9059
        %10944 = vst [vmem:[%s10935 + $0x40] sm:$0xff] %v10753
        %10945 = vst [vmem:[%s10935 + $0x48] sm:$0xff] %v7369
        %10946 = vst [vmem:[%s10935 + $0x50] sm:$0xff] %v9063
        %10947 = vst [vmem:[%s10935 + $0x58] sm:$0xff] %v10757
        %10948 = vst [vmem:[%s10935 + $0x60] sm:$0xff] %v7373
        %10949 = vst [vmem:[%s10935 + $0x68] sm:$0xff] %v9067
        %10950 = vst [vmem:[%s10935 + $0x70] sm:$0xff] %v10761
        %10951 = vst [vmem:[%s10935 + $0x78] sm:$0xff] %v7377
        %10952 = vst [vmem:[%s10935 + $0x80] sm:$0xff] %v9071
        %10953 = vst [vmem:[%s10935 + $0x88] sm:$0xff] %v10765
        %10954 = vst [vmem:[%s10935 + $0x90] sm:$0xff] %v7381
        %10955 = vst [vmem:[%s10935 + $0x98] sm:$0xff] %v9075
        %10956 = vst [vmem:[%s10935 + $0xa0] sm:$0xff] %v10769
        %10957 = vst [vmem:[%s10935 + $0xa8] sm:$0xff] %v7385
        %10958 = vst [vmem:[%s10935 + $0xb0] sm:$0xff] %v9079
        %10959 = vst [vmem:[%s10935 + $0xb8] sm:$0xff] %v10773
        %10960 = vst [vmem:[%s10935 + $0xc0] sm:$0xff] %v7389
        %10961 = vst [vmem:[%s10935 + $0xc8] sm:$0xff] %v9083
        %10962 = vst [vmem:[%s10935 + $0xd0] sm:$0xff] %v10777
        %10963 = vst [vmem:[%s10935 + $0xd8] sm:$0xff] %v7393
        %10964 = vst [vmem:[%s10935 + $0xe0] sm:$0xff] %v9087
        %10965 = vst [vmem:[%s10935 + $0xe8] sm:$0xff] %v10781
        %10966 = vst [vmem:[%s10935 + $0xf0] sm:$0xff] %v7397
        %10967 = vst [vmem:[%s10935 + $0xf8] sm:$0xff] %v9091
        %10968 = vst [vmem:[%s10935 + $0x100] sm:$0xff] %v10785
        %10969 = vst [vmem:[%s10935 + $0x108] sm:$0xff] %v7401
        %10970 = vst [vmem:[%s10935 + $0x110] sm:$0xff] %v9095
        %10971 = vst [vmem:[%s10935 + $0x118] sm:$0xff] %v10789
        %10972 = vst [vmem:[%s10935 + $0x120] sm:$0xff] %v7405
        %10973 = vst [vmem:[%s10935 + $0x128] sm:$0xff] %v9099
        %10974 = vst [vmem:[%s10935 + $0x130] sm:$0xff] %v10793
        %10975 = vst [vmem:[%s10935 + $0x138] sm:$0xff] %v7409
        %10976 = vst [vmem:[%s10935 + $0x140] sm:$0xff] %v9103
        %10977 = vst [vmem:[%s10935 + $0x148] sm:$0xff] %v10797
        %10978 = vst [vmem:[%s10935 + $0x150] sm:$0xff] %v7413
        %10979 = vst [vmem:[%s10935 + $0x158] sm:$0xff] %v9107
        %10980 = vst [vmem:[%s10935 + $0x160] sm:$0xff] %v10801
        %10981 = vst [vmem:[%s10935 + $0x168] sm:$0xff] %v7417
        %10982 = vst [vmem:[%s10935 + $0x170] sm:$0xff] %v9111
        %10983 = vst [vmem:[%s10935 + $0x178] sm:$0xff] %v10805
        %10984 = vst [vmem:[%s10935 + $0x180] sm:$0xff] %v7421
        %10985 = vst [vmem:[%s10935 + $0x188] sm:$0xff] %v9115
        %10986 = vst [vmem:[%s10935 + $0x190] sm:$0xff] %v10809
        %10987 = vst [vmem:[%s10935 + $0x198] sm:$0xff] %v7425
        %10988 = vst [vmem:[%s10935 + $0x1a0] sm:$0xff] %v9119
        %10989 = vst [vmem:[%s10935 + $0x1a8] sm:$0xff] %v10813
        %10990 = vst [vmem:[%s10935 + $0x1b0] sm:$0xff] %v7429
        %10991 = vst [vmem:[%s10935 + $0x1b8] sm:$0xff] %v9123
        %10992 = vst [vmem:[%s10935 + $0x1c0] sm:$0xff] %v10817
        %10993 = vst [vmem:[%s10935 + $0x1c8] sm:$0xff] %v7433
        %10994 = vst [vmem:[%s10935 + $0x1d0] sm:$0xff] %v9127
        %10995 = vst [vmem:[%s10935 + $0x1d8] sm:$0xff] %v10821
        %10996 = vst [vmem:[%s10935 + $0x1e0] sm:$0xff] %v7437
        %10997 = vst [vmem:[%s10935 + $0x1e8] sm:$0xff] %v9131
        %10998 = vst [vmem:[%s10935 + $0x1f0] sm:$0xff] %v10825
        %10999 = vst [vmem:[%s10935 + $0x1f8] sm:$0xff] %v7441
        %11000 = vst [vmem:[%s10935 + $0x200] sm:$0xff] %v9135
        %11001 = vst [vmem:[%s10935 + $0x208] sm:$0xff] %v10829
        %11002 = vst [vmem:[%s10935 + $0x210] sm:$0xff] %v7445
        %11003 = vst [vmem:[%s10935 + $0x218] sm:$0xff] %v9139
        %11004 = vst [vmem:[%s10935 + $0x220] sm:$0xff] %v10833
        %11005 = vst [vmem:[%s10935 + $0x228] sm:$0xff] %v7449
        %11006 = vst [vmem:[%s10935 + $0x230] sm:$0xff] %v9143
        %11007 = vst [vmem:[%s10935 + $0x238] sm:$0xff] %v10837
        %11008 = vst [vmem:[%s10935 + $0x240] sm:$0xff] %v7453
        %11009 = vst [vmem:[%s10935 + $0x248] sm:$0xff] %v9147
        %11010 = vst [vmem:[%s10935 + $0x250] sm:$0xff] %v10841
        %11011 = vst [vmem:[%s10935 + $0x258] sm:$0xff] %v7457
        %11012 = vst [vmem:[%s10935 + $0x260] sm:$0xff] %v9151
        %11013 = vst [vmem:[%s10935 + $0x268] sm:$0xff] %v10845
        %11014 = vst [vmem:[%s10935 + $0x270] sm:$0xff] %v7461
        %11015 = vst [vmem:[%s10935 + $0x278] sm:$0xff] %v9155
        %11016 = vst [vmem:[%s10935 + $0x280] sm:$0xff] %v10849
        %11017 = vst [vmem:[%s10935 + $0x288] sm:$0xff] %v7465
        %11018 = vst [vmem:[%s10935 + $0x290] sm:$0xff] %v9159
        %11019 = vst [vmem:[%s10935 + $0x298] sm:$0xff] %v10853
        %11020 = vst [vmem:[%s10935 + $0x2a0] sm:$0xff] %v7469
        %11021 = vst [vmem:[%s10935 + $0x2a8] sm:$0xff] %v9163
        %11022 = vst [vmem:[%s10935 + $0x2b0] sm:$0xff] %v10857
        %11023 = vst [vmem:[%s10935 + $0x2b8] sm:$0xff] %v7473
        %11024 = vst [vmem:[%s10935 + $0x2c0] sm:$0xff] %v9167
        %11025 = vst [vmem:[%s10935 + $0x2c8] sm:$0xff] %v10861
        %11026 = vst [vmem:[%s10935 + $0x2d0] sm:$0xff] %v7477
        %11027 = vst [vmem:[%s10935 + $0x2d8] sm:$0xff] %v9171
        %11028 = vst [vmem:[%s10935 + $0x2e0] sm:$0xff] %v10865
        %11029 = vst [vmem:[%s10935 + $0x2e8] sm:$0xff] %v7481
        %11030 = vst [vmem:[%s10935 + $0x2f0] sm:$0xff] %v9175
        %11031 = vst [vmem:[%s10935 + $0x2f8] sm:$0xff] %v10869
        %11032 = vst [vmem:[%s10935 + $0x300] sm:$0xff] %v7485
        %11033 = vst [vmem:[%s10935 + $0x308] sm:$0xff] %v9179
        %11034 = vst [vmem:[%s10935 + $0x310] sm:$0xff] %v10873
        %11035 = vst [vmem:[%s10935 + $0x318] sm:$0xff] %v7489
        %11036 = vst [vmem:[%s10935 + $0x320] sm:$0xff] %v9183
        %11037 = vst [vmem:[%s10935 + $0x328] sm:$0xff] %v10877
        %11038 = vst [vmem:[%s10935 + $0x330] sm:$0xff] %v7493
        %11039 = vst [vmem:[%s10935 + $0x338] sm:$0xff] %v9187
        %11040 = vst [vmem:[%s10935 + $0x340] sm:$0xff] %v10881
        %11041 = vst [vmem:[%s10935 + $0x348] sm:$0xff] %v7497
        %11042 = vst [vmem:[%s10935 + $0x350] sm:$0xff] %v9191
        %11043 = vst [vmem:[%s10935 + $0x358] sm:$0xff] %v10885
        %11044 = vst [vmem:[%s10935 + $0x360] sm:$0xff] %v7501
        %11045 = vst [vmem:[%s10935 + $0x368] sm:$0xff] %v9195
        %11046 = vst [vmem:[%s10935 + $0x370] sm:$0xff] %v10889
        %11047 = vst [vmem:[%s10935 + $0x378] sm:$0xff] %v7505
        %11048 = vst [vmem:[%s10935 + $0x380] sm:$0xff] %v9199
        %11049 = vst [vmem:[%s10935 + $0x388] sm:$0xff] %v10893
        %11050 = vst [vmem:[%s10935 + $0x390] sm:$0xff] %v7509
        %11051 = vst [vmem:[%s10935 + $0x398] sm:$0xff] %v9203
        %11052 = vst [vmem:[%s10935 + $0x3a0] sm:$0xff] %v10897
        %11053 = vst [vmem:[%s10935 + $0x3a8] sm:$0xff] %v7513
        %11054 = vst [vmem:[%s10935 + $0x3b0] sm:$0xff] %v9207
        %11055 = vst [vmem:[%s10935 + $0x3b8] sm:$0xff] %v10901
        %11056 = vst [vmem:[%s10935 + $0x3c0] sm:$0xff] %v7517
        %11057 = vst [vmem:[%s10935 + $0x3c8] sm:$0xff] %v9211
        %11058 = vst [vmem:[%s10935 + $0x3d0] sm:$0xff] %v10905
        %11059 = vst [vmem:[%s10935 + $0x3d8] sm:$0xff] %v7521
        %11060 = vst [vmem:[%s10935 + $0x3e0] sm:$0xff] %v9215
        %11061 = vst [vmem:[%s10935 + $0x3e8] sm:$0xff] %v10909
        %11062 = vst [vmem:[%s10935 + $0x3f0] sm:$0xff] %v7525
        %11063 = vst [vmem:[%s10935 + $0x3f8] sm:$0xff] %v9219
        %11064 = vst [vmem:[%s10935 + $0x400] sm:$0xff] %v10913
        %11065 = vst [vmem:[%s10935 + $0x408] sm:$0xff] %v7529
        %11066 = vst [vmem:[%s10935 + $0x410] sm:$0xff] %v9223
        %11067 = vst [vmem:[%s10935 + $0x418] sm:$0xff] %v10917
        %11068 = vst [vmem:[%s10935 + $0x420] sm:$0xff] %v7533
        %11069 = vst [vmem:[%s10935 + $0x428] sm:$0xff] %v9227
        %11070 = vst [vmem:[%s10935 + $0x430] sm:$0xff] %v10921
        %11071 = vst [vmem:[%s10935 + $0x438] sm:$0xff] %v7537
        %11072 = vst [vmem:[%s10935 + $0x440] sm:$0xff] %v9231
        %11073 = vst [vmem:[%s10935 + $0x448] sm:$0xff] %v10925
        %11074 = vst [vmem:[%s10935 + $0x450] sm:$0xff] %v7541
        %11075 = vst [vmem:[%s10935 + $0x458] sm:$0xff] %v9235
        %11076 = vst [vmem:[%s10935 + $0x460] sm:$0xff] %v10929
        %11077 = vst [vmem:[%s10935 + $0x468] sm:$0xff] %v7545
        %11078 = vst [vmem:[%s10935 + $0x470] sm:$0xff] %v9239
        %11079 = vst [vmem:[%s10935 + $0x478] sm:$0xff] %v10933
        %s11080 = sand.u32 %s79, 1
        %s11081 = scalar_lea.sflag [#allocation4], %s11080
        %s11082 = sand.u32 %s79, 1
        %s11083 = smul.addr %s11082, 2304
        %s11084 = scalar_lea.vmem [#allocation5], %s11083
        // Predicated region
        $region33: #{tpu_custom_call.1} parent=27 // pred_check
          %p11085 = pneg %p89
        $region34: #{tpu_custom_call.1} parent=27 // pred_check_branch
          %11087 = sbr.rel (%p11085) target = $region36
        $region35: #{tpu_custom_call.1} parent=27 // pred_region
          %s11088 = smul.u32 2, %s19
          %11090 = vsyncadd %s11081, 0
          %s11091 = smul.addr %s11088, 144
          %s11092 = smul.addr %s11091, 8
          %s11093 = scalar_lea.hbm %s2, %s11092
          %s11094 = sshll.u32 %s11084, 4
          %s11095 = int_to_ptr.vmem [resolvable:$true] %s11094
          %s11096 = sshll.u32 %s11093, 4
          %s11097 = int_to_ptr.hbm [resolvable:$true] %s11096
          %11102 = dma.vmem_to_hbm [thread:$0]  %s11095, 36864, %s11097, %s11081, 384, 384, 24
        $region36: #{tpu_custom_call.1} parent=27 // pred_fallthru
          _
      $region28: #{tpu_custom_call.1} parent=5 // pred_fallthru
        _
      %p11103 = scmp.le.s32.totalorder 2, %s14
      // Predicated region
      $region37: #{tpu_custom_call.1} parent=5 // pred_check
        %p11104 = pneg %p11103
      $region38: #{tpu_custom_call.1} parent=5 // pred_check_branch
        %11106 = sbr.rel (%p11104) target = $region40
      $region39: #{tpu_custom_call.1} parent=5 // pred_region
        %s11107 = ssub.s32 %s14, 2
        // Predicated region
        $region41: #{tpu_custom_call.1} parent=39 // pred_check
          %p11108 = pneg %p95
        $region42: #{tpu_custom_call.1} parent=39 // pred_check_branch
          %11110 = sbr.rel (%p11108) target = $region44
        $region43: #{tpu_custom_call.1} parent=39 // pred_region
          %s11111 = sand.u32 %s80, 1
          %s11112 = scalar_lea.sflag [#allocation4], %s11111
          %s11113 = sand.u32 %s80, 1
          %s11114 = smul.addr %s11113, 2304
          %s11115 = scalar_lea.vmem [#allocation5], %s11114
          %11117 = dma.done %s11112, 36864
        $region44: #{tpu_custom_call.1} parent=39 // pred_fallthru
          _
      $region40: #{tpu_custom_call.1} parent=5 // pred_fallthru
        _
    $region6: #{tpu_custom_call.1} parent=1 // loop_footer
      %s18 = sadd.s32 1, %s14
    $region7: #{tpu_custom_call.1} parent=1 // loop_footer_branch
      %13 = sbr.rel target = $region3
    $region8: #{tpu_custom_call.1} parent=1 // loop_exit
      _
    %11118 = vsyncpa [#allocation3], 1
    %s11119 = scalar_lea.sflag [#allocation3], 1
    %11120 = vsyncpa %s11119, 1
    %11121 = vsyncpa [#allocation4], 1
    %s11122 = scalar_lea.sflag [#allocation4], 1
    %11123 = vsyncpa %s11122, 1

</llo_original>
